<compile_context>
chip_gen: v7x
topology: tpu7x:2x2x1
jax: 0.10.0
libtpu: 0.0.40
codegen_flags: <defaults>
</compile_context>

<pallas_src>
import jax
import jax.numpy as jnp
from jax.experimental import pallas as pl
from jax.experimental.pallas import tpu as pltpu


# ----------------------------------------------------------------------------
# Fused Pallas kernel: Conv3x3(pad=1) + bias + ReLU + flatten(NCHW) + Linear
# ----------------------------------------------------------------------------
def fused_cnn_kernel(xp_ref, w9_ref, cb_ref, lw_ref, lb_ref, o_ref):
    """All operands VMEM-resident; single grid-less invocation.

    xp_ref: (N, H+2, W+2, C)   zero-padded NHWC input
    w9_ref: (9, C, Cout)       conv taps, w9[di*3+dj] = conv_w[:, :, di, dj].T
    cb_ref: (1, Cout)          conv bias
    lw_ref: (Cout*H*W, hidden) linear weight (rows in NCHW-flatten order,
                               i.e. PyTorch weight transposed, unpermuted)
    lb_ref: (1, hidden)        linear bias
    o_ref : (N, hidden)
    """
    N, Hp, Wp, C = xp_ref.shape
    H, W = Hp - 2, Wp - 2
    HW = H * W
    Cout = w9_ref.shape[2]
    hidden = o_ref.shape[1]

    # ---- conv as 9 shifted matmuls (in-kernel im2col), f32 accumulation ----
    # Window slices only touch leading / sublane dims (C stays on lanes), and
    # the (N, H, W, C)->(N*HW, C) reshape only merges leading dims into
    # sublanes, so no lane relayout is ever needed.
    acc = jnp.zeros((N * HW, Cout), jnp.float32)
    for idx in range(9):                                  # static, unrolled
        di, dj = idx // 3, idx % 3
        xs = xp_ref[:, di:di + H, dj:dj + W, :]           # (N, H, W, C)
        xs = xs.reshape(N * HW, C)                        # rows = (n, h, w)
        acc = acc + jnp.dot(xs, w9_ref[idx],
                            preferred_element_type=jnp.float32)
    acc = jnp.maximum(acc + cb_ref[...], 0.0)             # bias + ReLU

    # ---- flatten (NCHW order) + linear --------------------------------------
    # accT[c, n*HW + p] == relu_conv[n, c, p].  Each conv channel is
    # contracted against the matching static 256-row slice of lin_w (rows are
    # c*HW + p), so the PyTorch flatten order is honoured with the weight
    # layout unchanged and no (N*HW, Cout)->(N, Cout*HW) lane relayout.
    # Lane slices start at multiples of HW (= 256, a 128-multiple) and the
    # concat stacks on sublanes only -> cheap, lowering-safe.
    accT = acc.T                                          # (Cout, N*HW)
    out = jnp.broadcast_to(lb_ref[...], (N, hidden)).astype(jnp.float32)
    for c in range(Cout):                                 # static, unrolled
        lhs = jnp.concatenate(
            [accT[c:c + 1, n * HW:(n + 1) * HW] for n in range(N)], axis=0)
        out = out + jnp.dot(lhs, lw_ref[c * HW:(c + 1) * HW, :],
                            preferred_element_type=jnp.float32)
    o_ref[...] = out.astype(o_ref.dtype)


# ----------------------------------------------------------------------------
# Wrapper: tiny trace-time glue + one pallas_call
# ----------------------------------------------------------------------------
def base_cnn_forward(x_nchw, params):
    """x_nchw: (N, C, H, W) -> (N, hidden). Single fused Pallas kernel."""
    conv_w, conv_b, lin_w, lin_b = params
    N, C, H, W = x_nchw.shape
    Cout = conv_w.shape[0]
    hidden = lin_w.shape[1]
    assert conv_w.shape == (Cout, C, 3, 3)
    assert lin_w.shape == (Cout * H * W, hidden)

    # Trace-time glue (tiny): zero-pad + NHWC so every in-kernel window slice
    # stays off the lane dimension; per-tap (C, Cout) conv weight slices.
    xp = jnp.pad(x_nchw, ((0, 0), (0, 0), (1, 1), (1, 1))).transpose(0, 2, 3, 1)
    w9 = conv_w.transpose(2, 3, 1, 0).reshape(9, C, Cout)
    cb = conv_b.reshape(1, Cout)
    lb = lin_b.reshape(1, hidden)

    # All operands (~300 KiB) fit trivially in VMEM on v5e/v6e/v7x, so a
    # single grid-less invocation with whole-array blocks is the right
    # structure at this (latency/launch-bound) size.
    return pl.pallas_call(
        fused_cnn_kernel,
        out_shape=jax.ShapeDtypeStruct((N, hidden), jnp.float32),
        in_specs=[pl.BlockSpec(memory_space=pltpu.MemorySpace.VMEM)] * 5,
        out_specs=pl.BlockSpec(memory_space=pltpu.MemorySpace.VMEM),
    )(xp, w9, cb, lin_w, lb)


# ----------------------------------------------------------------------------
# Parameter init (deterministic, matching BaseCNN._init_weights semantics)
# ----------------------------------------------------------------------------
def init_params(key, c_in=4, c_out=8, h=16, w=16, hidden=32):
    k1, k2 = jax.random.split(key)
    # Conv2d: kaiming_normal_, mode='fan_out', relu -> std = sqrt(2 / (Cout*kh*kw))
    fan_out = c_out * 3 * 3
    conv_w = jax.random.normal(k1, (c_out, c_in, 3, 3), jnp.float32) * jnp.sqrt(
        2.0 / fan_out)
    conv_b = jnp.zeros((c_out,), jnp.float32)
    # Linear: normal_(mean=0, std=0.02), zero bias.  Stored as (in, out), i.e.
    # PyTorch's (out, in) weight transposed once at init time.
    k_feat = c_out * h * w
    lin_w = jax.random.normal(k2, (k_feat, hidden), jnp.float32) * 0.02
    lin_b = jnp.zeros((hidden,), jnp.float32)
    return conv_w, conv_b, lin_w, lin_b


# ----------------------------------------------------------------------------
if __name__ == "__main__":
    key = jax.random.PRNGKey(0)
    kx, kp = jax.random.split(key)

    N, C, H, W = 2, 4, 16, 16
    x = jax.random.normal(kx, (N, C, H, W), jnp.float32)
    params = init_params(kp, c_in=C, h=H, w=W)

    fwd = jax.jit(base_cnn_forward)
    out = jax.block_until_ready(fwd(x, params))
    assert out.shape == (N, 32) and out.dtype == jnp.float32

    # Reference check against plain-JAX conv / linear (PyTorch semantics).
    conv_w, conv_b, lin_w, lin_b = params
    ref = jax.lax.conv_general_dilated(
        x, conv_w, window_strides=(1, 1), padding="SAME",
        dimension_numbers=("NCHW", "OIHW", "NCHW"),
        precision=jax.lax.Precision.HIGHEST)
    ref = jnp.maximum(ref + conv_b[None, :, None, None], 0.0)
    ref = jnp.dot(ref.reshape(N, -1), lin_w,
                  precision=jax.lax.Precision.HIGHEST) + lin_b
    assert jnp.allclose(out, ref, atol=2e-3, rtol=2e-3), (
        float(jnp.max(jnp.abs(out - ref))))

    print("KERNEL_OK")
</pallas_src>

<mosaic_0001>
module attributes {stable_mosaic.version = 11 : i64} {
  func.func @fused_cnn_kernel(%arg0: memref<2x18x18x4xf32, #tpu.memory_space<vmem>>, %arg1: memref<9x4x8xf32, #tpu.memory_space<vmem>>, %arg2: memref<1x8xf32, #tpu.memory_space<vmem>>, %arg3: memref<2048x32xf32, #tpu.memory_space<vmem>>, %arg4: memref<1x32xf32, #tpu.memory_space<vmem>>, %arg5: memref<2x32xf32, #tpu.memory_space<vmem>>) attributes {dimension_semantics = [], scalar_prefetch = 0 : i64, scratch_operands = 0 : i64, tpu.core_type = #tpu.core_type<tc>} {
    %cst = arith.constant 0.000000e+00 : f32
    %0 = vector.broadcast %cst : f32 to vector<512x8xf32>
    %c0 = arith.constant 0 : index
    %c0_0 = arith.constant 0 : index
    %c0_1 = arith.constant 0 : index
    %c0_2 = arith.constant 0 : index
    %1 = vector.load %arg0[%c0, %c0_0, %c0_1, %c0_2] : memref<2x18x18x4xf32, #tpu.memory_space<vmem>>, vector<2x16x16x4xf32>
    %2 = vector.shape_cast %1 : vector<2x16x16x4xf32> to vector<512x4xf32>
    %c0_3 = arith.constant 0 : index
    %c0_4 = arith.constant 0 : index
    %c0_5 = arith.constant 0 : index
    %3 = vector.load %arg1[%c0_3, %c0_4, %c0_5] : memref<9x4x8xf32, #tpu.memory_space<vmem>>, vector<1x4x8xf32>
    %4 = vector.shape_cast %3 : vector<1x4x8xf32> to vector<4x8xf32>
    %cst_6 = arith.constant dense<0.000000e+00> : vector<512x8xf32>
    %5 = tpu.matmul %2, %4, %cst_6 {dimension_numbers = #tpu.dot_dimension_numbers<[1], [0], [0], [1], [0, 0, 1, 1], [], []>} : vector<512x4xf32>, vector<4x8xf32>, vector<512x8xf32> -> vector<512x8xf32>
    %6 = arith.addf %0, %5 : vector<512x8xf32>
    %c0_7 = arith.constant 0 : index
    %c0_8 = arith.constant 0 : index
    %c1 = arith.constant 1 : index
    %c0_9 = arith.constant 0 : index
    %7 = vector.load %arg0[%c0_7, %c0_8, %c1, %c0_9] : memref<2x18x18x4xf32, #tpu.memory_space<vmem>>, vector<2x16x16x4xf32>
    %8 = vector.shape_cast %7 : vector<2x16x16x4xf32> to vector<512x4xf32>
    %c1_10 = arith.constant 1 : index
    %c0_11 = arith.constant 0 : index
    %c0_12 = arith.constant 0 : index
    %9 = vector.load %arg1[%c1_10, %c0_11, %c0_12] : memref<9x4x8xf32, #tpu.memory_space<vmem>>, vector<1x4x8xf32>
    %10 = vector.shape_cast %9 : vector<1x4x8xf32> to vector<4x8xf32>
    %cst_13 = arith.constant dense<0.000000e+00> : vector<512x8xf32>
    %11 = tpu.matmul %8, %10, %cst_13 {dimension_numbers = #tpu.dot_dimension_numbers<[1], [0], [0], [1], [0, 0, 1, 1], [], []>} : vector<512x4xf32>, vector<4x8xf32>, vector<512x8xf32> -> vector<512x8xf32>
    %12 = arith.addf %6, %11 : vector<512x8xf32>
    %c0_14 = arith.constant 0 : index
    %c0_15 = arith.constant 0 : index
    %c2 = arith.constant 2 : index
    %c0_16 = arith.constant 0 : index
    %13 = vector.load %arg0[%c0_14, %c0_15, %c2, %c0_16] : memref<2x18x18x4xf32, #tpu.memory_space<vmem>>, vector<2x16x16x4xf32>
    %14 = vector.shape_cast %13 : vector<2x16x16x4xf32> to vector<512x4xf32>
    %c2_17 = arith.constant 2 : index
    %c0_18 = arith.constant 0 : index
    %c0_19 = arith.constant 0 : index
    %15 = vector.load %arg1[%c2_17, %c0_18, %c0_19] : memref<9x4x8xf32, #tpu.memory_space<vmem>>, vector<1x4x8xf32>
    %16 = vector.shape_cast %15 : vector<1x4x8xf32> to vector<4x8xf32>
    %cst_20 = arith.constant dense<0.000000e+00> : vector<512x8xf32>
    %17 = tpu.matmul %14, %16, %cst_20 {dimension_numbers = #tpu.dot_dimension_numbers<[1], [0], [0], [1], [0, 0, 1, 1], [], []>} : vector<512x4xf32>, vector<4x8xf32>, vector<512x8xf32> -> vector<512x8xf32>
    %18 = arith.addf %12, %17 : vector<512x8xf32>
    %c0_21 = arith.constant 0 : index
    %c1_22 = arith.constant 1 : index
    %c0_23 = arith.constant 0 : index
    %c0_24 = arith.constant 0 : index
    %19 = vector.load %arg0[%c0_21, %c1_22, %c0_23, %c0_24] : memref<2x18x18x4xf32, #tpu.memory_space<vmem>>, vector<2x16x16x4xf32>
    %20 = vector.shape_cast %19 : vector<2x16x16x4xf32> to vector<512x4xf32>
    %c3 = arith.constant 3 : index
    %c0_25 = arith.constant 0 : index
    %c0_26 = arith.constant 0 : index
    %21 = vector.load %arg1[%c3, %c0_25, %c0_26] : memref<9x4x8xf32, #tpu.memory_space<vmem>>, vector<1x4x8xf32>
    %22 = vector.shape_cast %21 : vector<1x4x8xf32> to vector<4x8xf32>
    %cst_27 = arith.constant dense<0.000000e+00> : vector<512x8xf32>
    %23 = tpu.matmul %20, %22, %cst_27 {dimension_numbers = #tpu.dot_dimension_numbers<[1], [0], [0], [1], [0, 0, 1, 1], [], []>} : vector<512x4xf32>, vector<4x8xf32>, vector<512x8xf32> -> vector<512x8xf32>
    %24 = arith.addf %18, %23 : vector<512x8xf32>
    %c0_28 = arith.constant 0 : index
    %c1_29 = arith.constant 1 : index
    %c1_30 = arith.constant 1 : index
    %c0_31 = arith.constant 0 : index
    %25 = vector.load %arg0[%c0_28, %c1_29, %c1_30, %c0_31] : memref<2x18x18x4xf32, #tpu.memory_space<vmem>>, vector<2x16x16x4xf32>
    %26 = vector.shape_cast %25 : vector<2x16x16x4xf32> to vector<512x4xf32>
    %c4 = arith.constant 4 : index
    %c0_32 = arith.constant 0 : index
    %c0_33 = arith.constant 0 : index
    %27 = vector.load %arg1[%c4, %c0_32, %c0_33] : memref<9x4x8xf32, #tpu.memory_space<vmem>>, vector<1x4x8xf32>
    %28 = vector.shape_cast %27 : vector<1x4x8xf32> to vector<4x8xf32>
    %cst_34 = arith.constant dense<0.000000e+00> : vector<512x8xf32>
    %29 = tpu.matmul %26, %28, %cst_34 {dimension_numbers = #tpu.dot_dimension_numbers<[1], [0], [0], [1], [0, 0, 1, 1], [], []>} : vector<512x4xf32>, vector<4x8xf32>, vector<512x8xf32> -> vector<512x8xf32>
    %30 = arith.addf %24, %29 : vector<512x8xf32>
    %c0_35 = arith.constant 0 : index
    %c1_36 = arith.constant 1 : index
    %c2_37 = arith.constant 2 : index
    %c0_38 = arith.constant 0 : index
    %31 = vector.load %arg0[%c0_35, %c1_36, %c2_37, %c0_38] : memref<2x18x18x4xf32, #tpu.memory_space<vmem>>, vector<2x16x16x4xf32>
    %32 = vector.shape_cast %31 : vector<2x16x16x4xf32> to vector<512x4xf32>
    %c5 = arith.constant 5 : index
    %c0_39 = arith.constant 0 : index
    %c0_40 = arith.constant 0 : index
    %33 = vector.load %arg1[%c5, %c0_39, %c0_40] : memref<9x4x8xf32, #tpu.memory_space<vmem>>, vector<1x4x8xf32>
    %34 = vector.shape_cast %33 : vector<1x4x8xf32> to vector<4x8xf32>
    %cst_41 = arith.constant dense<0.000000e+00> : vector<512x8xf32>
    %35 = tpu.matmul %32, %34, %cst_41 {dimension_numbers = #tpu.dot_dimension_numbers<[1], [0], [0], [1], [0, 0, 1, 1], [], []>} : vector<512x4xf32>, vector<4x8xf32>, vector<512x8xf32> -> vector<512x8xf32>
    %36 = arith.addf %30, %35 : vector<512x8xf32>
    %c0_42 = arith.constant 0 : index
    %c2_43 = arith.constant 2 : index
    %c0_44 = arith.constant 0 : index
    %c0_45 = arith.constant 0 : index
    %37 = vector.load %arg0[%c0_42, %c2_43, %c0_44, %c0_45] : memref<2x18x18x4xf32, #tpu.memory_space<vmem>>, vector<2x16x16x4xf32>
    %38 = vector.shape_cast %37 : vector<2x16x16x4xf32> to vector<512x4xf32>
    %c6 = arith.constant 6 : index
    %c0_46 = arith.constant 0 : index
    %c0_47 = arith.constant 0 : index
    %39 = vector.load %arg1[%c6, %c0_46, %c0_47] : memref<9x4x8xf32, #tpu.memory_space<vmem>>, vector<1x4x8xf32>
    %40 = vector.shape_cast %39 : vector<1x4x8xf32> to vector<4x8xf32>
    %cst_48 = arith.constant dense<0.000000e+00> : vector<512x8xf32>
    %41 = tpu.matmul %38, %40, %cst_48 {dimension_numbers = #tpu.dot_dimension_numbers<[1], [0], [0], [1], [0, 0, 1, 1], [], []>} : vector<512x4xf32>, vector<4x8xf32>, vector<512x8xf32> -> vector<512x8xf32>
    %42 = arith.addf %36, %41 : vector<512x8xf32>
    %c0_49 = arith.constant 0 : index
    %c2_50 = arith.constant 2 : index
    %c1_51 = arith.constant 1 : index
    %c0_52 = arith.constant 0 : index
    %43 = vector.load %arg0[%c0_49, %c2_50, %c1_51, %c0_52] : memref<2x18x18x4xf32, #tpu.memory_space<vmem>>, vector<2x16x16x4xf32>
    %44 = vector.shape_cast %43 : vector<2x16x16x4xf32> to vector<512x4xf32>
    %c7 = arith.constant 7 : index
    %c0_53 = arith.constant 0 : index
    %c0_54 = arith.constant 0 : index
    %45 = vector.load %arg1[%c7, %c0_53, %c0_54] : memref<9x4x8xf32, #tpu.memory_space<vmem>>, vector<1x4x8xf32>
    %46 = vector.shape_cast %45 : vector<1x4x8xf32> to vector<4x8xf32>
    %cst_55 = arith.constant dense<0.000000e+00> : vector<512x8xf32>
    %47 = tpu.matmul %44, %46, %cst_55 {dimension_numbers = #tpu.dot_dimension_numbers<[1], [0], [0], [1], [0, 0, 1, 1], [], []>} : vector<512x4xf32>, vector<4x8xf32>, vector<512x8xf32> -> vector<512x8xf32>
    %48 = arith.addf %42, %47 : vector<512x8xf32>
    %c0_56 = arith.constant 0 : index
    %c2_57 = arith.constant 2 : index
    %c2_58 = arith.constant 2 : index
    %c0_59 = arith.constant 0 : index
    %49 = vector.load %arg0[%c0_56, %c2_57, %c2_58, %c0_59] : memref<2x18x18x4xf32, #tpu.memory_space<vmem>>, vector<2x16x16x4xf32>
    %50 = vector.shape_cast %49 : vector<2x16x16x4xf32> to vector<512x4xf32>
    %c8 = arith.constant 8 : index
    %c0_60 = arith.constant 0 : index
    %c0_61 = arith.constant 0 : index
    %51 = vector.load %arg1[%c8, %c0_60, %c0_61] : memref<9x4x8xf32, #tpu.memory_space<vmem>>, vector<1x4x8xf32>
    %52 = vector.shape_cast %51 : vector<1x4x8xf32> to vector<4x8xf32>
    %cst_62 = arith.constant dense<0.000000e+00> : vector<512x8xf32>
    %53 = tpu.matmul %50, %52, %cst_62 {dimension_numbers = #tpu.dot_dimension_numbers<[1], [0], [0], [1], [0, 0, 1, 1], [], []>} : vector<512x4xf32>, vector<4x8xf32>, vector<512x8xf32> -> vector<512x8xf32>
    %54 = arith.addf %48, %53 : vector<512x8xf32>
    %c0_63 = arith.constant 0 : index
    %c0_64 = arith.constant 0 : index
    %55 = vector.load %arg2[%c0_63, %c0_64] : memref<1x8xf32, #tpu.memory_space<vmem>>, vector<1x8xf32>
    %56 = vector.broadcast %55 : vector<1x8xf32> to vector<512x8xf32>
    %57 = arith.addf %54, %56 : vector<512x8xf32>
    %cst_65 = arith.constant 0.000000e+00 : f32
    %58 = vector.broadcast %cst_65 : f32 to vector<512x8xf32>
    %59 = arith.maximumf %57, %58 : vector<512x8xf32>
    %60 = tpu.transpose %59, [1, 0] : vector<512x8xf32> -> vector<8x512xf32>
    %c0_66 = arith.constant 0 : index
    %c0_67 = arith.constant 0 : index
    %61 = vector.load %arg4[%c0_66, %c0_67] : memref<1x32xf32, #tpu.memory_space<vmem>>, vector<1x32xf32>
    %62 = vector.shape_cast %61 : vector<1x32xf32> to vector<1x32xf32>
    %63 = vector.broadcast %62 : vector<1x32xf32> to vector<2x32xf32>
    %64 = vector.extract_strided_slice %60 {offsets = [0, 0], sizes = [1, 256], strides = [1, 1]} : vector<8x512xf32> to vector<1x256xf32>
    %65 = vector.extract_strided_slice %60 {offsets = [0, 256], sizes = [1, 256], strides = [1, 1]} : vector<8x512xf32> to vector<1x256xf32>
    %66 = tpu.concatenate %64, %65 in 0 : vector<1x256xf32>, vector<1x256xf32> -> vector<2x256xf32>
    %c0_68 = arith.constant 0 : index
    %c0_69 = arith.constant 0 : index
    %67 = vector.load %arg3[%c0_68, %c0_69] : memref<2048x32xf32, #tpu.memory_space<vmem>>, vector<256x32xf32>
    %cst_70 = arith.constant dense<0.000000e+00> : vector<2x32xf32>
    %68 = tpu.matmul %66, %67, %cst_70 {dimension_numbers = #tpu.dot_dimension_numbers<[1], [0], [0], [1], [0, 0, 1, 1], [], []>} : vector<2x256xf32>, vector<256x32xf32>, vector<2x32xf32> -> vector<2x32xf32>
    %69 = arith.addf %63, %68 : vector<2x32xf32>
    %70 = vector.extract_strided_slice %60 {offsets = [1, 0], sizes = [1, 256], strides = [1, 1]} : vector<8x512xf32> to vector<1x256xf32>
    %71 = vector.extract_strided_slice %60 {offsets = [1, 256], sizes = [1, 256], strides = [1, 1]} : vector<8x512xf32> to vector<1x256xf32>
    %72 = tpu.concatenate %70, %71 in 0 : vector<1x256xf32>, vector<1x256xf32> -> vector<2x256xf32>
    %c256 = arith.constant 256 : index
    %c0_71 = arith.constant 0 : index
    %73 = vector.load %arg3[%c256, %c0_71] : memref<2048x32xf32, #tpu.memory_space<vmem>>, vector<256x32xf32>
    %cst_72 = arith.constant dense<0.000000e+00> : vector<2x32xf32>
    %74 = tpu.matmul %72, %73, %cst_72 {dimension_numbers = #tpu.dot_dimension_numbers<[1], [0], [0], [1], [0, 0, 1, 1], [], []>} : vector<2x256xf32>, vector<256x32xf32>, vector<2x32xf32> -> vector<2x32xf32>
    %75 = arith.addf %69, %74 : vector<2x32xf32>
    %76 = vector.extract_strided_slice %60 {offsets = [2, 0], sizes = [1, 256], strides = [1, 1]} : vector<8x512xf32> to vector<1x256xf32>
    %77 = vector.extract_strided_slice %60 {offsets = [2, 256], sizes = [1, 256], strides = [1, 1]} : vector<8x512xf32> to vector<1x256xf32>
    %78 = tpu.concatenate %76, %77 in 0 : vector<1x256xf32>, vector<1x256xf32> -> vector<2x256xf32>
    %c512 = arith.constant 512 : index
    %c0_73 = arith.constant 0 : index
    %79 = vector.load %arg3[%c512, %c0_73] : memref<2048x32xf32, #tpu.memory_space<vmem>>, vector<256x32xf32>
    %cst_74 = arith.constant dense<0.000000e+00> : vector<2x32xf32>
    %80 = tpu.matmul %78, %79, %cst_74 {dimension_numbers = #tpu.dot_dimension_numbers<[1], [0], [0], [1], [0, 0, 1, 1], [], []>} : vector<2x256xf32>, vector<256x32xf32>, vector<2x32xf32> -> vector<2x32xf32>
    %81 = arith.addf %75, %80 : vector<2x32xf32>
    %82 = vector.extract_strided_slice %60 {offsets = [3, 0], sizes = [1, 256], strides = [1, 1]} : vector<8x512xf32> to vector<1x256xf32>
    %83 = vector.extract_strided_slice %60 {offsets = [3, 256], sizes = [1, 256], strides = [1, 1]} : vector<8x512xf32> to vector<1x256xf32>
    %84 = tpu.concatenate %82, %83 in 0 : vector<1x256xf32>, vector<1x256xf32> -> vector<2x256xf32>
    %c768 = arith.constant 768 : index
    %c0_75 = arith.constant 0 : index
    %85 = vector.load %arg3[%c768, %c0_75] : memref<2048x32xf32, #tpu.memory_space<vmem>>, vector<256x32xf32>
    %cst_76 = arith.constant dense<0.000000e+00> : vector<2x32xf32>
    %86 = tpu.matmul %84, %85, %cst_76 {dimension_numbers = #tpu.dot_dimension_numbers<[1], [0], [0], [1], [0, 0, 1, 1], [], []>} : vector<2x256xf32>, vector<256x32xf32>, vector<2x32xf32> -> vector<2x32xf32>
    %87 = arith.addf %81, %86 : vector<2x32xf32>
    %88 = vector.extract_strided_slice %60 {offsets = [4, 0], sizes = [1, 256], strides = [1, 1]} : vector<8x512xf32> to vector<1x256xf32>
    %89 = vector.extract_strided_slice %60 {offsets = [4, 256], sizes = [1, 256], strides = [1, 1]} : vector<8x512xf32> to vector<1x256xf32>
    %90 = tpu.concatenate %88, %89 in 0 : vector<1x256xf32>, vector<1x256xf32> -> vector<2x256xf32>
    %c1024 = arith.constant 1024 : index
    %c0_77 = arith.constant 0 : index
    %91 = vector.load %arg3[%c1024, %c0_77] : memref<2048x32xf32, #tpu.memory_space<vmem>>, vector<256x32xf32>
    %cst_78 = arith.constant dense<0.000000e+00> : vector<2x32xf32>
    %92 = tpu.matmul %90, %91, %cst_78 {dimension_numbers = #tpu.dot_dimension_numbers<[1], [0], [0], [1], [0, 0, 1, 1], [], []>} : vector<2x256xf32>, vector<256x32xf32>, vector<2x32xf32> -> vector<2x32xf32>
    %93 = arith.addf %87, %92 : vector<2x32xf32>
    %94 = vector.extract_strided_slice %60 {offsets = [5, 0], sizes = [1, 256], strides = [1, 1]} : vector<8x512xf32> to vector<1x256xf32>
    %95 = vector.extract_strided_slice %60 {offsets = [5, 256], sizes = [1, 256], strides = [1, 1]} : vector<8x512xf32> to vector<1x256xf32>
    %96 = tpu.concatenate %94, %95 in 0 : vector<1x256xf32>, vector<1x256xf32> -> vector<2x256xf32>
    %c1280 = arith.constant 1280 : index
    %c0_79 = arith.constant 0 : index
    %97 = vector.load %arg3[%c1280, %c0_79] : memref<2048x32xf32, #tpu.memory_space<vmem>>, vector<256x32xf32>
    %cst_80 = arith.constant dense<0.000000e+00> : vector<2x32xf32>
    %98 = tpu.matmul %96, %97, %cst_80 {dimension_numbers = #tpu.dot_dimension_numbers<[1], [0], [0], [1], [0, 0, 1, 1], [], []>} : vector<2x256xf32>, vector<256x32xf32>, vector<2x32xf32> -> vector<2x32xf32>
    %99 = arith.addf %93, %98 : vector<2x32xf32>
    %100 = vector.extract_strided_slice %60 {offsets = [6, 0], sizes = [1, 256], strides = [1, 1]} : vector<8x512xf32> to vector<1x256xf32>
    %101 = vector.extract_strided_slice %60 {offsets = [6, 256], sizes = [1, 256], strides = [1, 1]} : vector<8x512xf32> to vector<1x256xf32>
    %102 = tpu.concatenate %100, %101 in 0 : vector<1x256xf32>, vector<1x256xf32> -> vector<2x256xf32>
    %c1536 = arith.constant 1536 : index
    %c0_81 = arith.constant 0 : index
    %103 = vector.load %arg3[%c1536, %c0_81] : memref<2048x32xf32, #tpu.memory_space<vmem>>, vector<256x32xf32>
    %cst_82 = arith.constant dense<0.000000e+00> : vector<2x32xf32>
    %104 = tpu.matmul %102, %103, %cst_82 {dimension_numbers = #tpu.dot_dimension_numbers<[1], [0], [0], [1], [0, 0, 1, 1], [], []>} : vector<2x256xf32>, vector<256x32xf32>, vector<2x32xf32> -> vector<2x32xf32>
    %105 = arith.addf %99, %104 : vector<2x32xf32>
    %106 = vector.extract_strided_slice %60 {offsets = [7, 0], sizes = [1, 256], strides = [1, 1]} : vector<8x512xf32> to vector<1x256xf32>
    %107 = vector.extract_strided_slice %60 {offsets = [7, 256], sizes = [1, 256], strides = [1, 1]} : vector<8x512xf32> to vector<1x256xf32>
    %108 = tpu.concatenate %106, %107 in 0 : vector<1x256xf32>, vector<1x256xf32> -> vector<2x256xf32>
    %c1792 = arith.constant 1792 : index
    %c0_83 = arith.constant 0 : index
    %109 = vector.load %arg3[%c1792, %c0_83] : memref<2048x32xf32, #tpu.memory_space<vmem>>, vector<256x32xf32>
    %cst_84 = arith.constant dense<0.000000e+00> : vector<2x32xf32>
    %110 = tpu.matmul %108, %109, %cst_84 {dimension_numbers = #tpu.dot_dimension_numbers<[1], [0], [0], [1], [0, 0, 1, 1], [], []>} : vector<2x256xf32>, vector<256x32xf32>, vector<2x32xf32> -> vector<2x32xf32>
    %111 = arith.addf %105, %110 : vector<2x32xf32>
    %c0_85 = arith.constant 0 : index
    %c0_86 = arith.constant 0 : index
    %112 = vector.load %arg5[%c0_85, %c0_86] : memref<2x32xf32, #tpu.memory_space<vmem>>, vector<2x32xf32>
    tpu.vector_store %arg5[%c0_85, %c0_86], %111 {strides = array<i32>} : memref<2x32xf32, #tpu.memory_space<vmem>>, vector<2x32xf32>,
    return
  }
}

</mosaic_0001>

<llo_original>
// kernel: base_cnn_forward.1
$region0: #{base_cnn_forward.1}
  #allocation0 [shape = 'u32[]', space=smem, size = 0x4, offset = 0x4, fixed_abs, tag = 'smem constant byte address 0x4 - core index']
  #allocation1 [shape = 'u32[144,128]{1,0:T(1,128)}', space=vmem, size = 0x12000, scoped, tag = 'internal scratch']
  %s0 = inlined_call_operand.vmem [shape: f32[2,18,18,4], index: 0, kind: input, shape index: {}]
  %s1 = inlined_call_operand.vmem [shape: f32[9,4,8], index: 1, kind: input, shape index: {}]
  %s2 = inlined_call_operand.vmem [shape: f32[1,8], index: 2, kind: input, shape index: {}]
  %s3 = inlined_call_operand.vmem [shape: f32[2048,32], index: 3, kind: input, shape index: {}]
  %s4 = inlined_call_operand.vmem [shape: f32[1,32], index: 4, kind: input, shape index: {}]
  %s5 = inlined_call_operand.hbm [shape: f32[2,32], index: 5, kind: output, shape index: {}]
  %s6 = sld [smem:[#allocation0]]
  $region30: #{base_cnn_forward.1} parent=0
    _
  %s8 = ssub.s32 1, %s6
  %s9 = scalar_select 0, %s8, %s6
  $region1: #{base_cnn_forward.1} parent=0
    #allocation2 [shape = 'u8[1024]{0}', space=vmem, size = 0x400, scoped, tag = 'output window, operand 0, single buffered']
    #allocation3 [shape = 's32[1]{0}', space=sflag, size = 0x4, scoped, tag = 'scoped memory for base_cnn_forward.1']
    %10 = vsyncpa [#allocation3], 0
    // Predicated region
    $region2: #{base_cnn_forward.1} parent=1 // pred_check
      _
    $region3: #{base_cnn_forward.1} parent=1 // pred_check_branch
      %12 = sbr.rel (0) target = $region5
    $region4: #{base_cnn_forward.1} parent=1 // pred_region
      _
    $region5: #{base_cnn_forward.1} parent=1 // pred_fallthru
      _
    // Predicated region
    $region6: #{base_cnn_forward.1} parent=1 // pred_check
      _
    $region7: #{base_cnn_forward.1} parent=1 // pred_check_branch
      %14 = sbr.rel (0) target = $region9
    $region8: #{base_cnn_forward.1} parent=1 // pred_region
      _
    $region9: #{base_cnn_forward.1} parent=1 // pred_fallthru
      _
    // Predicated region
    $region10: #{base_cnn_forward.1} parent=1 // pred_check
      _
    $region11: #{base_cnn_forward.1} parent=1 // pred_check_branch
      %16 = sbr.rel (0) target = $region13
    $region12: #{base_cnn_forward.1} parent=1 // pred_region
      _
    $region13: #{base_cnn_forward.1} parent=1 // pred_fallthru
      _
    // Predicated region
    $region14: #{base_cnn_forward.1} parent=1 // pred_check
      _
    $region15: #{base_cnn_forward.1} parent=1 // pred_check_branch
      %18 = sbr.rel (0) target = $region17
    $region16: #{base_cnn_forward.1} parent=1 // pred_region
      _
    $region17: #{base_cnn_forward.1} parent=1 // pred_fallthru
      _
    // Predicated region
    $region18: #{base_cnn_forward.1} parent=1 // pred_check
      _
    $region19: #{base_cnn_forward.1} parent=1 // pred_check_branch
      %20 = sbr.rel (0) target = $region21
    $region20: #{base_cnn_forward.1} parent=1 // pred_region
      _
    $region21: #{base_cnn_forward.1} parent=1 // pred_fallthru
      _
    %v21 = vld [vmem:[%s0] sm:$0xff]
    %v22 = vld [vmem:[%s0 + $0x8] sm:$0xff]
    %v23 = vld [vmem:[%s0 + $0x18] sm:$0xff]
    %v24 = vld [vmem:[%s0 + $0x20] sm:$0xff]
    %v25 = vld [vmem:[%s0 + $0x30] sm:$0xff]
    %v26 = vld [vmem:[%s0 + $0x38] sm:$0xff]
    %v27 = vld [vmem:[%s0 + $0x48] sm:$0xff]
    %v28 = vld [vmem:[%s0 + $0x50] sm:$0xff]
    %v29 = vld [vmem:[%s0 + $0x60] sm:$0xff]
    %v30 = vld [vmem:[%s0 + $0x68] sm:$0xff]
    %v31 = vld [vmem:[%s0 + $0x78] sm:$0xff]
    %v32 = vld [vmem:[%s0 + $0x80] sm:$0xff]
    %v33 = vld [vmem:[%s0 + $0x90] sm:$0xff]
    %v34 = vld [vmem:[%s0 + $0x98] sm:$0xff]
    %v35 = vld [vmem:[%s0 + $0xa8] sm:$0xff]
    %v36 = vld [vmem:[%s0 + $0xb0] sm:$0xff]
    %v37 = vld [vmem:[%s0 + $0xc0] sm:$0xff]
    %v38 = vld [vmem:[%s0 + $0xc8] sm:$0xff]
    %v39 = vld [vmem:[%s0 + $0xd8] sm:$0xff]
    %v40 = vld [vmem:[%s0 + $0xe0] sm:$0xff]
    %v41 = vld [vmem:[%s0 + $0xf0] sm:$0xff]
    %v42 = vld [vmem:[%s0 + $0xf8] sm:$0xff]
    %v43 = vld [vmem:[%s0 + $0x108] sm:$0xff]
    %v44 = vld [vmem:[%s0 + $0x110] sm:$0xff]
    %v45 = vld [vmem:[%s0 + $0x120] sm:$0xff]
    %v46 = vld [vmem:[%s0 + $0x128] sm:$0xff]
    %v47 = vld [vmem:[%s0 + $0x138] sm:$0xff]
    %v48 = vld [vmem:[%s0 + $0x140] sm:$0xff]
    %v49 = vld [vmem:[%s0 + $0x150] sm:$0xff]
    %v50 = vld [vmem:[%s0 + $0x158] sm:$0xff]
    %v51 = vld [vmem:[%s0 + $0x168] sm:$0xff]
    %v52 = vld [vmem:[%s0 + $0x170] sm:$0xff]
    %v53 = vld [vmem:[%s0 + $0x1b0] sm:$0xff]
    %v54 = vld [vmem:[%s0 + $0x1b8] sm:$0xff]
    %v55 = vld [vmem:[%s0 + $0x1c8] sm:$0xff]
    %v56 = vld [vmem:[%s0 + $0x1d0] sm:$0xff]
    %v57 = vld [vmem:[%s0 + $0x1e0] sm:$0xff]
    %v58 = vld [vmem:[%s0 + $0x1e8] sm:$0xff]
    %v59 = vld [vmem:[%s0 + $0x1f8] sm:$0xff]
    %v60 = vld [vmem:[%s0 + $0x200] sm:$0xff]
    %v61 = vld [vmem:[%s0 + $0x210] sm:$0xff]
    %v62 = vld [vmem:[%s0 + $0x218] sm:$0xff]
    %v63 = vld [vmem:[%s0 + $0x228] sm:$0xff]
    %v64 = vld [vmem:[%s0 + $0x230] sm:$0xff]
    %v65 = vld [vmem:[%s0 + $0x240] sm:$0xff]
    %v66 = vld [vmem:[%s0 + $0x248] sm:$0xff]
    %v67 = vld [vmem:[%s0 + $0x258] sm:$0xff]
    %v68 = vld [vmem:[%s0 + $0x260] sm:$0xff]
    %v69 = vld [vmem:[%s0 + $0x270] sm:$0xff]
    %v70 = vld [vmem:[%s0 + $0x278] sm:$0xff]
    %v71 = vld [vmem:[%s0 + $0x288] sm:$0xff]
    %v72 = vld [vmem:[%s0 + $0x290] sm:$0xff]
    %v73 = vld [vmem:[%s0 + $0x2a0] sm:$0xff]
    %v74 = vld [vmem:[%s0 + $0x2a8] sm:$0xff]
    %v75 = vld [vmem:[%s0 + $0x2b8] sm:$0xff]
    %v76 = vld [vmem:[%s0 + $0x2c0] sm:$0xff]
    %v77 = vld [vmem:[%s0 + $0x2d0] sm:$0xff]
    %v78 = vld [vmem:[%s0 + $0x2d8] sm:$0xff]
    %v79 = vld [vmem:[%s0 + $0x2e8] sm:$0xff]
    %v80 = vld [vmem:[%s0 + $0x2f0] sm:$0xff]
    %v81 = vld [vmem:[%s0 + $0x300] sm:$0xff]
    %v82 = vld [vmem:[%s0 + $0x308] sm:$0xff]
    %v83 = vld [vmem:[%s0 + $0x318] sm:$0xff]
    %v84 = vld [vmem:[%s0 + $0x320] sm:$0xff]
    %v85 = vld [vmem:[%s1] sm:$0xf]
    %v86 = vld [vmem:[%s0 + $0x1] sm:$0xff]
    %v87 = vld [vmem:[%s0 + $0x9] sm:$0xff]
    %v88 = vld [vmem:[%s0 + $0x19] sm:$0xff]
    %v89 = vld [vmem:[%s0 + $0x21] sm:$0xff]
    %v90 = vld [vmem:[%s0 + $0x31] sm:$0xff]
    %v91 = vld [vmem:[%s0 + $0x39] sm:$0xff]
    %v92 = vld [vmem:[%s0 + $0x49] sm:$0xff]
    %v93 = vld [vmem:[%s0 + $0x51] sm:$0xff]
    %v94 = vld [vmem:[%s0 + $0x61] sm:$0xff]
    %v95 = vld [vmem:[%s0 + $0x69] sm:$0xff]
    %v96 = vld [vmem:[%s0 + $0x79] sm:$0xff]
    %v97 = vld [vmem:[%s0 + $0x81] sm:$0xff]
    %v98 = vld [vmem:[%s0 + $0x91] sm:$0xff]
    %v99 = vld [vmem:[%s0 + $0x99] sm:$0xff]
    %v100 = vld [vmem:[%s0 + $0xa9] sm:$0xff]
    %v101 = vld [vmem:[%s0 + $0xb1] sm:$0xff]
    %v102 = vld [vmem:[%s0 + $0xc1] sm:$0xff]
    %v103 = vld [vmem:[%s0 + $0xc9] sm:$0xff]
    %v104 = vld [vmem:[%s0 + $0xd9] sm:$0xff]
    %v105 = vld [vmem:[%s0 + $0xe1] sm:$0xff]
    %v106 = vld [vmem:[%s0 + $0xf1] sm:$0xff]
    %v107 = vld [vmem:[%s0 + $0xf9] sm:$0xff]
    %v108 = vld [vmem:[%s0 + $0x109] sm:$0xff]
    %v109 = vld [vmem:[%s0 + $0x111] sm:$0xff]
    %v110 = vld [vmem:[%s0 + $0x121] sm:$0xff]
    %v111 = vld [vmem:[%s0 + $0x129] sm:$0xff]
    %v112 = vld [vmem:[%s0 + $0x139] sm:$0xff]
    %v113 = vld [vmem:[%s0 + $0x141] sm:$0xff]
    %v114 = vld [vmem:[%s0 + $0x151] sm:$0xff]
    %v115 = vld [vmem:[%s0 + $0x159] sm:$0xff]
    %v116 = vld [vmem:[%s0 + $0x169] sm:$0xff]
    %v117 = vld [vmem:[%s0 + $0x171] sm:$0xff]
    %v118 = vld [vmem:[%s0 + $0x1b1] sm:$0xff]
    %v119 = vld [vmem:[%s0 + $0x1b9] sm:$0xff]
    %v120 = vld [vmem:[%s0 + $0x1c9] sm:$0xff]
    %v121 = vld [vmem:[%s0 + $0x1d1] sm:$0xff]
    %v122 = vld [vmem:[%s0 + $0x1e1] sm:$0xff]
    %v123 = vld [vmem:[%s0 + $0x1e9] sm:$0xff]
    %v124 = vld [vmem:[%s0 + $0x1f9] sm:$0xff]
    %v125 = vld [vmem:[%s0 + $0x201] sm:$0xff]
    %v126 = vld [vmem:[%s0 + $0x211] sm:$0xff]
    %v127 = vld [vmem:[%s0 + $0x219] sm:$0xff]
    %v128 = vld [vmem:[%s0 + $0x229] sm:$0xff]
    %v129 = vld [vmem:[%s0 + $0x231] sm:$0xff]
    %v130 = vld [vmem:[%s0 + $0x241] sm:$0xff]
    %v131 = vld [vmem:[%s0 + $0x249] sm:$0xff]
    %v132 = vld [vmem:[%s0 + $0x259] sm:$0xff]
    %v133 = vld [vmem:[%s0 + $0x261] sm:$0xff]
    %v134 = vld [vmem:[%s0 + $0x271] sm:$0xff]
    %v135 = vld [vmem:[%s0 + $0x279] sm:$0xff]
    %v136 = vld [vmem:[%s0 + $0x289] sm:$0xff]
    %v137 = vld [vmem:[%s0 + $0x291] sm:$0xff]
    %v138 = vld [vmem:[%s0 + $0x2a1] sm:$0xff]
    %v139 = vld [vmem:[%s0 + $0x2a9] sm:$0xff]
    %v140 = vld [vmem:[%s0 + $0x2b9] sm:$0xff]
    %v141 = vld [vmem:[%s0 + $0x2c1] sm:$0xff]
    %v142 = vld [vmem:[%s0 + $0x2d1] sm:$0xff]
    %v143 = vld [vmem:[%s0 + $0x2d9] sm:$0xff]
    %v144 = vld [vmem:[%s0 + $0x2e9] sm:$0xff]
    %v145 = vld [vmem:[%s0 + $0x2f1] sm:$0xff]
    %v146 = vld [vmem:[%s0 + $0x301] sm:$0xff]
    %v147 = vld [vmem:[%s0 + $0x309] sm:$0xff]
    %v148 = vld [vmem:[%s0 + $0x319] sm:$0xff]
    %v149 = vld [vmem:[%s0 + $0x321] sm:$0xff]
    %s150 = scalar_lea.vmem %s1, 4
    %v151 = vld [vmem:[%s150] sm:$0xf]
    %vm152 = vcmask 31744
    %v154 = vsel %vm152, %v86, 0
    %v157 = vsel %vm152, %v87, 0
    %v160 = vsel %vm152, %v88, 0
    %v163 = vsel %vm152, %v89, 0
    %v166 = vsel %vm152, %v90, 0
    %v169 = vsel %vm152, %v91, 0
    %v172 = vsel %vm152, %v92, 0
    %v175 = vsel %vm152, %v93, 0
    %v178 = vsel %vm152, %v94, 0
    %v181 = vsel %vm152, %v95, 0
    %v184 = vsel %vm152, %v96, 0
    %v187 = vsel %vm152, %v97, 0
    %v190 = vsel %vm152, %v98, 0
    %v193 = vsel %vm152, %v99, 0
    %v196 = vsel %vm152, %v100, 0
    %v199 = vsel %vm152, %v101, 0
    %v202 = vsel %vm152, %v102, 0
    %v205 = vsel %vm152, %v103, 0
    %v208 = vsel %vm152, %v104, 0
    %v211 = vsel %vm152, %v105, 0
    %v214 = vsel %vm152, %v106, 0
    %v217 = vsel %vm152, %v107, 0
    %v220 = vsel %vm152, %v108, 0
    %v223 = vsel %vm152, %v109, 0
    %v226 = vsel %vm152, %v110, 0
    %v229 = vsel %vm152, %v111, 0
    %v232 = vsel %vm152, %v112, 0
    %v235 = vsel %vm152, %v113, 0
    %v238 = vsel %vm152, %v114, 0
    %v241 = vsel %vm152, %v115, 0
    %v244 = vsel %vm152, %v116, 0
    %v247 = vsel %vm152, %v117, 0
    %v250 = vsel %vm152, %v118, 0
    %v253 = vsel %vm152, %v119, 0
    %v256 = vsel %vm152, %v120, 0
    %v259 = vsel %vm152, %v121, 0
    %v262 = vsel %vm152, %v122, 0
    %v265 = vsel %vm152, %v123, 0
    %v268 = vsel %vm152, %v124, 0
    %v271 = vsel %vm152, %v125, 0
    %v274 = vsel %vm152, %v126, 0
    %v277 = vsel %vm152, %v127, 0
    %v280 = vsel %vm152, %v128, 0
    %v283 = vsel %vm152, %v129, 0
    %v286 = vsel %vm152, %v130, 0
    %v289 = vsel %vm152, %v131, 0
    %v292 = vsel %vm152, %v132, 0
    %v295 = vsel %vm152, %v133, 0
    %v298 = vsel %vm152, %v134, 0
    %v301 = vsel %vm152, %v135, 0
    %v304 = vsel %vm152, %v136, 0
    %v307 = vsel %vm152, %v137, 0
    %v310 = vsel %vm152, %v138, 0
    %v313 = vsel %vm152, %v139, 0
    %v316 = vsel %vm152, %v140, 0
    %v319 = vsel %vm152, %v141, 0
    %v322 = vsel %vm152, %v142, 0
    %v325 = vsel %vm152, %v143, 0
    %v328 = vsel %vm152, %v144, 0
    %v331 = vsel %vm152, %v145, 0
    %v334 = vsel %vm152, %v146, 0
    %v337 = vsel %vm152, %v147, 0
    %v340 = vsel %vm152, %v148, 0
    %v343 = vsel %vm152, %v149, 0
    %vm345 = vcmask 1043456
    %v347 = vsel %vm345, %v151, 0
    %349 = vmatprep.subr.mxu0 0.0
    %350 = vmatpush1.msra.mxu0 %v347
    %351 = vmatprep.subr.mxu0 0.0
    %352 = vmatpush1.msra.mxu0 0.0
    %353 = vmatprep.subr.mxu0 0.0
    %354 = vmatpush1.msra.mxu0 0.0
    %355 = vmatprep.subr.mxu0 0.0
    %356 = vmatpush1.msra.mxu0 0.0
    %357 = vmatprep.subr.mxu0 0.0
    %358 = vmatpush1.msra.mxu0 0.0
    %359 = vmatprep.subr.mxu0 0.0
    %360 = vmatpush1.msra.mxu0 0.0
    %361 = vmatprep.subr.mxu0 0.0
    %362 = vmatpush1.msra.mxu0 0.0
    %363 = vmatprep.subr.mxu0 0.0
    %364 = vmatpush1.msra.mxu0 0.0
    %365 = vmatprep.subr.mxu0 0.0
    %366 = vmatpush1.msra.mxu0 0.0
    %367 = vmatprep.subr.mxu0 0.0
    %368 = vmatpush1.msra.mxu0 0.0
    %369 = vmatprep.subr.mxu0 0.0
    %370 = vmatpush1.msra.mxu0 0.0
    %371 = vmatprep.subr.mxu0 0.0
    %372 = vmatpush1.msra.mxu0 0.0
    %373 = vmatprep.subr.mxu0 0.0
    %374 = vmatpush1.msra.mxu0 0.0
    %375 = vmatprep.subr.mxu0 0.0
    %376 = vmatpush1.msra.mxu0 0.0
    %377 = vmatprep.subr.mxu0 0.0
    %378 = vmatpush1.msra.mxu0 0.0
    %379 = vmatprep.subr.mxu0 0.0
    %380 = vmatpush1.msra.mxu0 0.0
    %381 = vmatprep.subr.mxu0 0.0
    %382 = vmatpush1.msra.mxu0 0.0
    %383 = vmatprep.subr.mxu0 0.0
    %384 = vmatpush1.msra.mxu0 0.0
    %385 = vmatprep.subr.mxu0 0.0
    %386 = vmatpush1.msra.mxu0 0.0
    %387 = vmatprep.subr.mxu0 0.0
    %388 = vmatpush1.msra.mxu0 0.0
    %389 = vmatprep.subr.mxu0 0.0
    %390 = vmatpush1.msra.mxu0 0.0
    %391 = vmatprep.subr.mxu0 0.0
    %392 = vmatpush1.msra.mxu0 0.0
    %393 = vmatprep.subr.mxu0 0.0
    %394 = vmatpush1.msra.mxu0 0.0
    %395 = vmatprep.subr.mxu0 0.0
    %396 = vmatpush1.msra.mxu0 0.0
    %397 = vmatprep.subr.mxu0 0.0
    %398 = vmatpush1.msra.mxu0 0.0
    %399 = vmatprep.subr.mxu0 0.0
    %400 = vmatpush1.msra.mxu0 0.0
    %401 = vmatprep.subr.mxu0 0.0
    %402 = vmatpush1.msra.mxu0 0.0
    %403 = vmatprep.subr.mxu0 0.0
    %404 = vmatpush1.msra.mxu0 0.0
    %405 = vmatprep.subr.mxu0 0.0
    %406 = vmatpush1.msra.mxu0 0.0
    %407 = vmatprep.subr.mxu0 0.0
    %408 = vmatpush1.msra.mxu0 0.0
    %409 = vmatprep.subr.mxu0 0.0
    %410 = vmatpush1.msra.mxu0 0.0
    %411 = vmatprep.subr.mxu0 0.0
    %412 = vmatpush1.msra.mxu0 0.0
    %413 = vmatprep.mubr.f32.mxu0 0.0
    %414 = vmatmul.mubr.f32.gmra.mrb[0].mxu0 %v154
    %v415 = vpop.f32.mrb[0].mxu0
    %v416 = vadd.f32 0.0, %v415
    %v417 = vpop.f32.mrb[0].mxu0
    %418 = vmatprep.mubr.f32.mxu0 0.0
    %419 = vmatmul.mubr.f32.gmra.mrb[0].mxu0 %v157
    %v420 = vpop.f32.mrb[0].mxu0
    %v421 = vadd.f32 0.0, %v420
    %v422 = vpop.f32.mrb[0].mxu0
    %423 = vmatprep.mubr.f32.mxu0 0.0
    %424 = vmatmul.mubr.f32.gmra.mrb[0].mxu0 %v160
    %v425 = vpop.f32.mrb[0].mxu0
    %v426 = vadd.f32 0.0, %v425
    %v427 = vpop.f32.mrb[0].mxu0
    %428 = vmatprep.mubr.f32.mxu0 0.0
    %429 = vmatmul.mubr.f32.gmra.mrb[0].mxu0 %v163
    %v430 = vpop.f32.mrb[0].mxu0
    %v431 = vadd.f32 0.0, %v430
    %v432 = vpop.f32.mrb[0].mxu0
    %433 = vmatprep.mubr.f32.mxu0 0.0
    %434 = vmatmul.mubr.f32.gmra.mrb[0].mxu0 %v166
    %v435 = vpop.f32.mrb[0].mxu0
    %v436 = vadd.f32 0.0, %v435
    %v437 = vpop.f32.mrb[0].mxu0
    %438 = vmatprep.mubr.f32.mxu0 0.0
    %439 = vmatmul.mubr.f32.gmra.mrb[0].mxu0 %v169
    %v440 = vpop.f32.mrb[0].mxu0
    %v441 = vadd.f32 0.0, %v440
    %v442 = vpop.f32.mrb[0].mxu0
    %443 = vmatprep.mubr.f32.mxu0 0.0
    %444 = vmatmul.mubr.f32.gmra.mrb[0].mxu0 %v172
    %v445 = vpop.f32.mrb[0].mxu0
    %v446 = vadd.f32 0.0, %v445
    %v447 = vpop.f32.mrb[0].mxu0
    %448 = vmatprep.mubr.f32.mxu0 0.0
    %449 = vmatmul.mubr.f32.gmra.mrb[0].mxu0 %v175
    %v450 = vpop.f32.mrb[0].mxu0
    %v451 = vadd.f32 0.0, %v450
    %v452 = vpop.f32.mrb[0].mxu0
    %453 = vmatprep.mubr.f32.mxu0 0.0
    %454 = vmatmul.mubr.f32.gmra.mrb[0].mxu0 %v178
    %v455 = vpop.f32.mrb[0].mxu0
    %v456 = vadd.f32 0.0, %v455
    %v457 = vpop.f32.mrb[0].mxu0
    %458 = vmatprep.mubr.f32.mxu0 0.0
    %459 = vmatmul.mubr.f32.gmra.mrb[0].mxu0 %v181
    %v460 = vpop.f32.mrb[0].mxu0
    %v461 = vadd.f32 0.0, %v460
    %v462 = vpop.f32.mrb[0].mxu0
    %463 = vmatprep.mubr.f32.mxu0 0.0
    %464 = vmatmul.mubr.f32.gmra.mrb[0].mxu0 %v184
    %v465 = vpop.f32.mrb[0].mxu0
    %v466 = vadd.f32 0.0, %v465
    %v467 = vpop.f32.mrb[0].mxu0
    %468 = vmatprep.mubr.f32.mxu0 0.0
    %469 = vmatmul.mubr.f32.gmra.mrb[0].mxu0 %v187
    %v470 = vpop.f32.mrb[0].mxu0
    %v471 = vadd.f32 0.0, %v470
    %v472 = vpop.f32.mrb[0].mxu0
    %473 = vmatprep.mubr.f32.mxu0 0.0
    %474 = vmatmul.mubr.f32.gmra.mrb[0].mxu0 %v190
    %v475 = vpop.f32.mrb[0].mxu0
    %v476 = vadd.f32 0.0, %v475
    %v477 = vpop.f32.mrb[0].mxu0
    %478 = vmatprep.mubr.f32.mxu0 0.0
    %479 = vmatmul.mubr.f32.gmra.mrb[0].mxu0 %v193
    %v480 = vpop.f32.mrb[0].mxu0
    %v481 = vadd.f32 0.0, %v480
    %v482 = vpop.f32.mrb[0].mxu0
    %483 = vmatprep.mubr.f32.mxu0 0.0
    %484 = vmatmul.mubr.f32.gmra.mrb[0].mxu0 %v196
    %v485 = vpop.f32.mrb[0].mxu0
    %v486 = vadd.f32 0.0, %v485
    %v487 = vpop.f32.mrb[0].mxu0
    %488 = vmatprep.mubr.f32.mxu0 0.0
    %489 = vmatmul.mubr.f32.gmra.mrb[0].mxu0 %v199
    %v490 = vpop.f32.mrb[0].mxu0
    %v491 = vadd.f32 0.0, %v490
    %v492 = vpop.f32.mrb[0].mxu0
    %493 = vmatprep.mubr.f32.mxu0 0.0
    %494 = vmatmul.mubr.f32.gmra.mrb[0].mxu0 %v202
    %v495 = vpop.f32.mrb[0].mxu0
    %v496 = vadd.f32 0.0, %v495
    %v497 = vpop.f32.mrb[0].mxu0
    %498 = vmatprep.mubr.f32.mxu0 0.0
    %499 = vmatmul.mubr.f32.gmra.mrb[0].mxu0 %v205
    %v500 = vpop.f32.mrb[0].mxu0
    %v501 = vadd.f32 0.0, %v500
    %v502 = vpop.f32.mrb[0].mxu0
    %503 = vmatprep.mubr.f32.mxu0 0.0
    %504 = vmatmul.mubr.f32.gmra.mrb[0].mxu0 %v208
    %v505 = vpop.f32.mrb[0].mxu0
    %v506 = vadd.f32 0.0, %v505
    %v507 = vpop.f32.mrb[0].mxu0
    %508 = vmatprep.mubr.f32.mxu0 0.0
    %509 = vmatmul.mubr.f32.gmra.mrb[0].mxu0 %v211
    %v510 = vpop.f32.mrb[0].mxu0
    %v511 = vadd.f32 0.0, %v510
    %v512 = vpop.f32.mrb[0].mxu0
    %513 = vmatprep.mubr.f32.mxu0 0.0
    %514 = vmatmul.mubr.f32.gmra.mrb[0].mxu0 %v214
    %v515 = vpop.f32.mrb[0].mxu0
    %v516 = vadd.f32 0.0, %v515
    %v517 = vpop.f32.mrb[0].mxu0
    %518 = vmatprep.mubr.f32.mxu0 0.0
    %519 = vmatmul.mubr.f32.gmra.mrb[0].mxu0 %v217
    %v520 = vpop.f32.mrb[0].mxu0
    %v521 = vadd.f32 0.0, %v520
    %v522 = vpop.f32.mrb[0].mxu0
    %523 = vmatprep.mubr.f32.mxu0 0.0
    %524 = vmatmul.mubr.f32.gmra.mrb[0].mxu0 %v220
    %v525 = vpop.f32.mrb[0].mxu0
    %v526 = vadd.f32 0.0, %v525
    %v527 = vpop.f32.mrb[0].mxu0
    %528 = vmatprep.mubr.f32.mxu0 0.0
    %529 = vmatmul.mubr.f32.gmra.mrb[0].mxu0 %v223
    %v530 = vpop.f32.mrb[0].mxu0
    %v531 = vadd.f32 0.0, %v530
    %v532 = vpop.f32.mrb[0].mxu0
    %533 = vmatprep.mubr.f32.mxu0 0.0
    %534 = vmatmul.mubr.f32.gmra.mrb[0].mxu0 %v226
    %v535 = vpop.f32.mrb[0].mxu0
    %v536 = vadd.f32 0.0, %v535
    %v537 = vpop.f32.mrb[0].mxu0
    %538 = vmatprep.mubr.f32.mxu0 0.0
    %539 = vmatmul.mubr.f32.gmra.mrb[0].mxu0 %v229
    %v540 = vpop.f32.mrb[0].mxu0
    %v541 = vadd.f32 0.0, %v540
    %v542 = vpop.f32.mrb[0].mxu0
    %543 = vmatprep.mubr.f32.mxu0 0.0
    %544 = vmatmul.mubr.f32.gmra.mrb[0].mxu0 %v232
    %v545 = vpop.f32.mrb[0].mxu0
    %v546 = vadd.f32 0.0, %v545
    %v547 = vpop.f32.mrb[0].mxu0
    %548 = vmatprep.mubr.f32.mxu0 0.0
    %549 = vmatmul.mubr.f32.gmra.mrb[0].mxu0 %v235
    %v550 = vpop.f32.mrb[0].mxu0
    %v551 = vadd.f32 0.0, %v550
    %v552 = vpop.f32.mrb[0].mxu0
    %553 = vmatprep.mubr.f32.mxu0 0.0
    %554 = vmatmul.mubr.f32.gmra.mrb[0].mxu0 %v238
    %v555 = vpop.f32.mrb[0].mxu0
    %v556 = vadd.f32 0.0, %v555
    %v557 = vpop.f32.mrb[0].mxu0
    %558 = vmatprep.mubr.f32.mxu0 0.0
    %559 = vmatmul.mubr.f32.gmra.mrb[0].mxu0 %v241
    %v560 = vpop.f32.mrb[0].mxu0
    %v561 = vadd.f32 0.0, %v560
    %v562 = vpop.f32.mrb[0].mxu0
    %563 = vmatprep.mubr.f32.mxu0 0.0
    %564 = vmatmul.mubr.f32.gmra.mrb[0].mxu0 %v244
    %v565 = vpop.f32.mrb[0].mxu0
    %v566 = vadd.f32 0.0, %v565
    %v567 = vpop.f32.mrb[0].mxu0
    %568 = vmatprep.mubr.f32.mxu0 0.0
    %569 = vmatmul.mubr.f32.gmra.mrb[0].mxu0 %v247
    %v570 = vpop.f32.mrb[0].mxu0
    %v571 = vadd.f32 0.0, %v570
    %v572 = vpop.f32.mrb[0].mxu0
    %573 = vmatprep.mubr.f32.mxu0 0.0
    %574 = vmatmul.mubr.f32.gmra.mrb[0].mxu0 %v250
    %v575 = vpop.f32.mrb[0].mxu0
    %v576 = vadd.f32 0.0, %v575
    %v577 = vpop.f32.mrb[0].mxu0
    %578 = vmatprep.mubr.f32.mxu0 0.0
    %579 = vmatmul.mubr.f32.gmra.mrb[0].mxu0 %v253
    %v580 = vpop.f32.mrb[0].mxu0
    %v581 = vadd.f32 0.0, %v580
    %v582 = vpop.f32.mrb[0].mxu0
    %583 = vmatprep.mubr.f32.mxu0 0.0
    %584 = vmatmul.mubr.f32.gmra.mrb[0].mxu0 %v256
    %v585 = vpop.f32.mrb[0].mxu0
    %v586 = vadd.f32 0.0, %v585
    %v587 = vpop.f32.mrb[0].mxu0
    %588 = vmatprep.mubr.f32.mxu0 0.0
    %589 = vmatmul.mubr.f32.gmra.mrb[0].mxu0 %v259
    %v590 = vpop.f32.mrb[0].mxu0
    %v591 = vadd.f32 0.0, %v590
    %v592 = vpop.f32.mrb[0].mxu0
    %593 = vmatprep.mubr.f32.mxu0 0.0
    %594 = vmatmul.mubr.f32.gmra.mrb[0].mxu0 %v262
    %v595 = vpop.f32.mrb[0].mxu0
    %v596 = vadd.f32 0.0, %v595
    %v597 = vpop.f32.mrb[0].mxu0
    %598 = vmatprep.mubr.f32.mxu0 0.0
    %599 = vmatmul.mubr.f32.gmra.mrb[0].mxu0 %v265
    %v600 = vpop.f32.mrb[0].mxu0
    %v601 = vadd.f32 0.0, %v600
    %v602 = vpop.f32.mrb[0].mxu0
    %603 = vmatprep.mubr.f32.mxu0 0.0
    %604 = vmatmul.mubr.f32.gmra.mrb[0].mxu0 %v268
    %v605 = vpop.f32.mrb[0].mxu0
    %v606 = vadd.f32 0.0, %v605
    %v607 = vpop.f32.mrb[0].mxu0
    %608 = vmatprep.mubr.f32.mxu0 0.0
    %609 = vmatmul.mubr.f32.gmra.mrb[0].mxu0 %v271
    %v610 = vpop.f32.mrb[0].mxu0
    %v611 = vadd.f32 0.0, %v610
    %v612 = vpop.f32.mrb[0].mxu0
    %613 = vmatprep.mubr.f32.mxu0 0.0
    %614 = vmatmul.mubr.f32.gmra.mrb[0].mxu0 %v274
    %v615 = vpop.f32.mrb[0].mxu0
    %v616 = vadd.f32 0.0, %v615
    %v617 = vpop.f32.mrb[0].mxu0
    %618 = vmatprep.mubr.f32.mxu0 0.0
    %619 = vmatmul.mubr.f32.gmra.mrb[0].mxu0 %v277
    %v620 = vpop.f32.mrb[0].mxu0
    %v621 = vadd.f32 0.0, %v620
    %v622 = vpop.f32.mrb[0].mxu0
    %623 = vmatprep.mubr.f32.mxu0 0.0
    %624 = vmatmul.mubr.f32.gmra.mrb[0].mxu0 %v280
    %v625 = vpop.f32.mrb[0].mxu0
    %v626 = vadd.f32 0.0, %v625
    %v627 = vpop.f32.mrb[0].mxu0
    %628 = vmatprep.mubr.f32.mxu0 0.0
    %629 = vmatmul.mubr.f32.gmra.mrb[0].mxu0 %v283
    %v630 = vpop.f32.mrb[0].mxu0
    %v631 = vadd.f32 0.0, %v630
    %v632 = vpop.f32.mrb[0].mxu0
    %633 = vmatprep.mubr.f32.mxu0 0.0
    %634 = vmatmul.mubr.f32.gmra.mrb[0].mxu0 %v286
    %v635 = vpop.f32.mrb[0].mxu0
    %v636 = vadd.f32 0.0, %v635
    %v637 = vpop.f32.mrb[0].mxu0
    %638 = vmatprep.mubr.f32.mxu0 0.0
    %639 = vmatmul.mubr.f32.gmra.mrb[0].mxu0 %v289
    %v640 = vpop.f32.mrb[0].mxu0
    %v641 = vadd.f32 0.0, %v640
    %v642 = vpop.f32.mrb[0].mxu0
    %643 = vmatprep.mubr.f32.mxu0 0.0
    %644 = vmatmul.mubr.f32.gmra.mrb[0].mxu0 %v292
    %v645 = vpop.f32.mrb[0].mxu0
    %v646 = vadd.f32 0.0, %v645
    %v647 = vpop.f32.mrb[0].mxu0
    %648 = vmatprep.mubr.f32.mxu0 0.0
    %649 = vmatmul.mubr.f32.gmra.mrb[0].mxu0 %v295
    %v650 = vpop.f32.mrb[0].mxu0
    %v651 = vadd.f32 0.0, %v650
    %v652 = vpop.f32.mrb[0].mxu0
    %653 = vmatprep.mubr.f32.mxu0 0.0
    %654 = vmatmul.mubr.f32.gmra.mrb[0].mxu0 %v298
    %v655 = vpop.f32.mrb[0].mxu0
    %v656 = vadd.f32 0.0, %v655
    %v657 = vpop.f32.mrb[0].mxu0
    %658 = vmatprep.mubr.f32.mxu0 0.0
    %659 = vmatmul.mubr.f32.gmra.mrb[0].mxu0 %v301
    %v660 = vpop.f32.mrb[0].mxu0
    %v661 = vadd.f32 0.0, %v660
    %v662 = vpop.f32.mrb[0].mxu0
    %663 = vmatprep.mubr.f32.mxu0 0.0
    %664 = vmatmul.mubr.f32.gmra.mrb[0].mxu0 %v304
    %v665 = vpop.f32.mrb[0].mxu0
    %v666 = vadd.f32 0.0, %v665
    %v667 = vpop.f32.mrb[0].mxu0
    %668 = vmatprep.mubr.f32.mxu0 0.0
    %669 = vmatmul.mubr.f32.gmra.mrb[0].mxu0 %v307
    %v670 = vpop.f32.mrb[0].mxu0
    %v671 = vadd.f32 0.0, %v670
    %v672 = vpop.f32.mrb[0].mxu0
    %673 = vmatprep.mubr.f32.mxu0 0.0
    %674 = vmatmul.mubr.f32.gmra.mrb[0].mxu0 %v310
    %v675 = vpop.f32.mrb[0].mxu0
    %v676 = vadd.f32 0.0, %v675
    %v677 = vpop.f32.mrb[0].mxu0
    %678 = vmatprep.mubr.f32.mxu0 0.0
    %679 = vmatmul.mubr.f32.gmra.mrb[0].mxu0 %v313
    %v680 = vpop.f32.mrb[0].mxu0
    %v681 = vadd.f32 0.0, %v680
    %v682 = vpop.f32.mrb[0].mxu0
    %683 = vmatprep.mubr.f32.mxu0 0.0
    %684 = vmatmul.mubr.f32.gmra.mrb[0].mxu0 %v316
    %v685 = vpop.f32.mrb[0].mxu0
    %v686 = vadd.f32 0.0, %v685
    %v687 = vpop.f32.mrb[0].mxu0
    %688 = vmatprep.mubr.f32.mxu0 0.0
    %689 = vmatmul.mubr.f32.gmra.mrb[0].mxu0 %v319
    %v690 = vpop.f32.mrb[0].mxu0
    %v691 = vadd.f32 0.0, %v690
    %v692 = vpop.f32.mrb[0].mxu0
    %693 = vmatprep.mubr.f32.mxu0 0.0
    %694 = vmatmul.mubr.f32.gmra.mrb[0].mxu0 %v322
    %v695 = vpop.f32.mrb[0].mxu0
    %v696 = vadd.f32 0.0, %v695
    %v697 = vpop.f32.mrb[0].mxu0
    %698 = vmatprep.mubr.f32.mxu0 0.0
    %699 = vmatmul.mubr.f32.gmra.mrb[0].mxu0 %v325
    %v700 = vpop.f32.mrb[0].mxu0
    %v701 = vadd.f32 0.0, %v700
    %v702 = vpop.f32.mrb[0].mxu0
    %703 = vmatprep.mubr.f32.mxu0 0.0
    %704 = vmatmul.mubr.f32.gmra.mrb[0].mxu0 %v328
    %v705 = vpop.f32.mrb[0].mxu0
    %v706 = vadd.f32 0.0, %v705
    %v707 = vpop.f32.mrb[0].mxu0
    %708 = vmatprep.mubr.f32.mxu0 0.0
    %709 = vmatmul.mubr.f32.gmra.mrb[0].mxu0 %v331
    %v710 = vpop.f32.mrb[0].mxu0
    %v711 = vadd.f32 0.0, %v710
    %v712 = vpop.f32.mrb[0].mxu0
    %713 = vmatprep.mubr.f32.mxu0 0.0
    %714 = vmatmul.mubr.f32.gmra.mrb[0].mxu0 %v334
    %v715 = vpop.f32.mrb[0].mxu0
    %v716 = vadd.f32 0.0, %v715
    %v717 = vpop.f32.mrb[0].mxu0
    %718 = vmatprep.mubr.f32.mxu0 0.0
    %719 = vmatmul.mubr.f32.gmra.mrb[0].mxu0 %v337
    %v720 = vpop.f32.mrb[0].mxu0
    %v721 = vadd.f32 0.0, %v720
    %v722 = vpop.f32.mrb[0].mxu0
    %723 = vmatprep.mubr.f32.mxu0 0.0
    %724 = vmatmul.mubr.f32.gmra.mrb[0].mxu0 %v340
    %v725 = vpop.f32.mrb[0].mxu0
    %v726 = vadd.f32 0.0, %v725
    %v727 = vpop.f32.mrb[0].mxu0
    %728 = vmatprep.mubr.f32.mxu0 0.0
    %729 = vmatmul.mubr.f32.gmra.mrb[0].mxu0 %v343
    %v730 = vpop.f32.mrb[0].mxu0
    %v731 = vadd.f32 0.0, %v730
    %v732 = vpop.f32.mrb[0].mxu0
    %733 = vdwg.mxu0
    %v735 = vsel %vm152, %v21, 0
    %v738 = vsel %vm152, %v22, 0
    %v741 = vsel %vm152, %v23, 0
    %v744 = vsel %vm152, %v24, 0
    %v747 = vsel %vm152, %v25, 0
    %v750 = vsel %vm152, %v26, 0
    %v753 = vsel %vm152, %v27, 0
    %v756 = vsel %vm152, %v28, 0
    %v759 = vsel %vm152, %v29, 0
    %v762 = vsel %vm152, %v30, 0
    %v765 = vsel %vm152, %v31, 0
    %v768 = vsel %vm152, %v32, 0
    %v771 = vsel %vm152, %v33, 0
    %v774 = vsel %vm152, %v34, 0
    %v777 = vsel %vm152, %v35, 0
    %v780 = vsel %vm152, %v36, 0
    %v783 = vsel %vm152, %v37, 0
    %v786 = vsel %vm152, %v38, 0
    %v789 = vsel %vm152, %v39, 0
    %v792 = vsel %vm152, %v40, 0
    %v795 = vsel %vm152, %v41, 0
    %v798 = vsel %vm152, %v42, 0
    %v801 = vsel %vm152, %v43, 0
    %v804 = vsel %vm152, %v44, 0
    %v807 = vsel %vm152, %v45, 0
    %v810 = vsel %vm152, %v46, 0
    %v813 = vsel %vm152, %v47, 0
    %v816 = vsel %vm152, %v48, 0
    %v819 = vsel %vm152, %v49, 0
    %v822 = vsel %vm152, %v50, 0
    %v825 = vsel %vm152, %v51, 0
    %v828 = vsel %vm152, %v52, 0
    %v831 = vsel %vm152, %v53, 0
    %v834 = vsel %vm152, %v54, 0
    %v837 = vsel %vm152, %v55, 0
    %v840 = vsel %vm152, %v56, 0
    %v843 = vsel %vm152, %v57, 0
    %v846 = vsel %vm152, %v58, 0
    %v849 = vsel %vm152, %v59, 0
    %v852 = vsel %vm152, %v60, 0
    %v855 = vsel %vm152, %v61, 0
    %v858 = vsel %vm152, %v62, 0
    %v861 = vsel %vm152, %v63, 0
    %v864 = vsel %vm152, %v64, 0
    %v867 = vsel %vm152, %v65, 0
    %v870 = vsel %vm152, %v66, 0
    %v873 = vsel %vm152, %v67, 0
    %v876 = vsel %vm152, %v68, 0
    %v879 = vsel %vm152, %v69, 0
    %v882 = vsel %vm152, %v70, 0
    %v885 = vsel %vm152, %v71, 0
    %v888 = vsel %vm152, %v72, 0
    %v891 = vsel %vm152, %v73, 0
    %v894 = vsel %vm152, %v74, 0
    %v897 = vsel %vm152, %v75, 0
    %v900 = vsel %vm152, %v76, 0
    %v903 = vsel %vm152, %v77, 0
    %v906 = vsel %vm152, %v78, 0
    %v909 = vsel %vm152, %v79, 0
    %v912 = vsel %vm152, %v80, 0
    %v915 = vsel %vm152, %v81, 0
    %v918 = vsel %vm152, %v82, 0
    %v921 = vsel %vm152, %v83, 0
    %v924 = vsel %vm152, %v84, 0
    %v927 = vsel %vm345, %v85, 0
    %929 = vmatprep.subr.mxu0 0.0
    %930 = vmatpush1.msra.mxu0 %v927
    %931 = vmatprep.subr.mxu0 0.0
    %932 = vmatpush1.msra.mxu0 0.0
    %933 = vmatprep.subr.mxu0 0.0
    %934 = vmatpush1.msra.mxu0 0.0
    %935 = vmatprep.subr.mxu0 0.0
    %936 = vmatpush1.msra.mxu0 0.0
    %937 = vmatprep.subr.mxu0 0.0
    %938 = vmatpush1.msra.mxu0 0.0
    %939 = vmatprep.subr.mxu0 0.0
    %940 = vmatpush1.msra.mxu0 0.0
    %941 = vmatprep.subr.mxu0 0.0
    %942 = vmatpush1.msra.mxu0 0.0
    %943 = vmatprep.subr.mxu0 0.0
    %944 = vmatpush1.msra.mxu0 0.0
    %945 = vmatprep.subr.mxu0 0.0
    %946 = vmatpush1.msra.mxu0 0.0
    %947 = vmatprep.subr.mxu0 0.0
    %948 = vmatpush1.msra.mxu0 0.0
    %949 = vmatprep.subr.mxu0 0.0
    %950 = vmatpush1.msra.mxu0 0.0
    %951 = vmatprep.subr.mxu0 0.0
    %952 = vmatpush1.msra.mxu0 0.0
    %953 = vmatprep.subr.mxu0 0.0
    %954 = vmatpush1.msra.mxu0 0.0
    %955 = vmatprep.subr.mxu0 0.0
    %956 = vmatpush1.msra.mxu0 0.0
    %957 = vmatprep.subr.mxu0 0.0
    %958 = vmatpush1.msra.mxu0 0.0
    %959 = vmatprep.subr.mxu0 0.0
    %960 = vmatpush1.msra.mxu0 0.0
    %961 = vmatprep.subr.mxu0 0.0
    %962 = vmatpush1.msra.mxu0 0.0
    %963 = vmatprep.subr.mxu0 0.0
    %964 = vmatpush1.msra.mxu0 0.0
    %965 = vmatprep.subr.mxu0 0.0
    %966 = vmatpush1.msra.mxu0 0.0
    %967 = vmatprep.subr.mxu0 0.0
    %968 = vmatpush1.msra.mxu0 0.0
    %969 = vmatprep.subr.mxu0 0.0
    %970 = vmatpush1.msra.mxu0 0.0
    %971 = vmatprep.subr.mxu0 0.0
    %972 = vmatpush1.msra.mxu0 0.0
    %973 = vmatprep.subr.mxu0 0.0
    %974 = vmatpush1.msra.mxu0 0.0
    %975 = vmatprep.subr.mxu0 0.0
    %976 = vmatpush1.msra.mxu0 0.0
    %977 = vmatprep.subr.mxu0 0.0
    %978 = vmatpush1.msra.mxu0 0.0
    %979 = vmatprep.subr.mxu0 0.0
    %980 = vmatpush1.msra.mxu0 0.0
    %981 = vmatprep.subr.mxu0 0.0
    %982 = vmatpush1.msra.mxu0 0.0
    %983 = vmatprep.subr.mxu0 0.0
    %984 = vmatpush1.msra.mxu0 0.0
    %985 = vmatprep.subr.mxu0 0.0
    %986 = vmatpush1.msra.mxu0 0.0
    %987 = vmatprep.subr.mxu0 0.0
    %988 = vmatpush1.msra.mxu0 0.0
    %989 = vmatprep.subr.mxu0 0.0
    %990 = vmatpush1.msra.mxu0 0.0
    %991 = vmatprep.subr.mxu0 0.0
    %992 = vmatpush1.msra.mxu0 0.0
    %993 = vmatprep.mubr.f32.mxu0 0.0
    %994 = vmatmul.mubr.f32.gmra.mrb[0].mxu0 %v735
    %v995 = vpop.f32.mrb[0].mxu0
    %v996 = vadd.f32 %v416, %v995
    %v997 = vpop.f32.mrb[0].mxu0
    %998 = vmatprep.mubr.f32.mxu0 0.0
    %999 = vmatmul.mubr.f32.gmra.mrb[0].mxu0 %v738
    %v1000 = vpop.f32.mrb[0].mxu0
    %v1001 = vadd.f32 %v421, %v1000
    %v1002 = vpop.f32.mrb[0].mxu0
    %1003 = vmatprep.mubr.f32.mxu0 0.0
    %1004 = vmatmul.mubr.f32.gmra.mrb[0].mxu0 %v741
    %v1005 = vpop.f32.mrb[0].mxu0
    %v1006 = vadd.f32 %v426, %v1005
    %v1007 = vpop.f32.mrb[0].mxu0
    %1008 = vmatprep.mubr.f32.mxu0 0.0
    %1009 = vmatmul.mubr.f32.gmra.mrb[0].mxu0 %v744
    %v1010 = vpop.f32.mrb[0].mxu0
    %v1011 = vadd.f32 %v431, %v1010
    %v1012 = vpop.f32.mrb[0].mxu0
    %1013 = vmatprep.mubr.f32.mxu0 0.0
    %1014 = vmatmul.mubr.f32.gmra.mrb[0].mxu0 %v747
    %v1015 = vpop.f32.mrb[0].mxu0
    %v1016 = vadd.f32 %v436, %v1015
    %v1017 = vpop.f32.mrb[0].mxu0
    %1018 = vmatprep.mubr.f32.mxu0 0.0
    %1019 = vmatmul.mubr.f32.gmra.mrb[0].mxu0 %v750
    %v1020 = vpop.f32.mrb[0].mxu0
    %v1021 = vadd.f32 %v441, %v1020
    %v1022 = vpop.f32.mrb[0].mxu0
    %1023 = vmatprep.mubr.f32.mxu0 0.0
    %1024 = vmatmul.mubr.f32.gmra.mrb[0].mxu0 %v753
    %v1025 = vpop.f32.mrb[0].mxu0
    %v1026 = vadd.f32 %v446, %v1025
    %v1027 = vpop.f32.mrb[0].mxu0
    %1028 = vmatprep.mubr.f32.mxu0 0.0
    %1029 = vmatmul.mubr.f32.gmra.mrb[0].mxu0 %v756
    %v1030 = vpop.f32.mrb[0].mxu0
    %v1031 = vadd.f32 %v451, %v1030
    %v1032 = vpop.f32.mrb[0].mxu0
    %1033 = vmatprep.mubr.f32.mxu0 0.0
    %1034 = vmatmul.mubr.f32.gmra.mrb[0].mxu0 %v759
    %v1035 = vpop.f32.mrb[0].mxu0
    %v1036 = vadd.f32 %v456, %v1035
    %v1037 = vpop.f32.mrb[0].mxu0
    %1038 = vmatprep.mubr.f32.mxu0 0.0
    %1039 = vmatmul.mubr.f32.gmra.mrb[0].mxu0 %v762
    %v1040 = vpop.f32.mrb[0].mxu0
    %v1041 = vadd.f32 %v461, %v1040
    %v1042 = vpop.f32.mrb[0].mxu0
    %1043 = vmatprep.mubr.f32.mxu0 0.0
    %1044 = vmatmul.mubr.f32.gmra.mrb[0].mxu0 %v765
    %v1045 = vpop.f32.mrb[0].mxu0
    %v1046 = vadd.f32 %v466, %v1045
    %v1047 = vpop.f32.mrb[0].mxu0
    %1048 = vmatprep.mubr.f32.mxu0 0.0
    %1049 = vmatmul.mubr.f32.gmra.mrb[0].mxu0 %v768
    %v1050 = vpop.f32.mrb[0].mxu0
    %v1051 = vadd.f32 %v471, %v1050
    %v1052 = vpop.f32.mrb[0].mxu0
    %1053 = vmatprep.mubr.f32.mxu0 0.0
    %1054 = vmatmul.mubr.f32.gmra.mrb[0].mxu0 %v771
    %v1055 = vpop.f32.mrb[0].mxu0
    %v1056 = vadd.f32 %v476, %v1055
    %v1057 = vpop.f32.mrb[0].mxu0
    %1058 = vmatprep.mubr.f32.mxu0 0.0
    %1059 = vmatmul.mubr.f32.gmra.mrb[0].mxu0 %v774
    %v1060 = vpop.f32.mrb[0].mxu0
    %v1061 = vadd.f32 %v481, %v1060
    %v1062 = vpop.f32.mrb[0].mxu0
    %1063 = vmatprep.mubr.f32.mxu0 0.0
    %1064 = vmatmul.mubr.f32.gmra.mrb[0].mxu0 %v777
    %v1065 = vpop.f32.mrb[0].mxu0
    %v1066 = vadd.f32 %v486, %v1065
    %v1067 = vpop.f32.mrb[0].mxu0
    %1068 = vmatprep.mubr.f32.mxu0 0.0
    %1069 = vmatmul.mubr.f32.gmra.mrb[0].mxu0 %v780
    %v1070 = vpop.f32.mrb[0].mxu0
    %v1071 = vadd.f32 %v491, %v1070
    %v1072 = vpop.f32.mrb[0].mxu0
    %1073 = vmatprep.mubr.f32.mxu0 0.0
    %1074 = vmatmul.mubr.f32.gmra.mrb[0].mxu0 %v783
    %v1075 = vpop.f32.mrb[0].mxu0
    %v1076 = vadd.f32 %v496, %v1075
    %v1077 = vpop.f32.mrb[0].mxu0
    %1078 = vmatprep.mubr.f32.mxu0 0.0
    %1079 = vmatmul.mubr.f32.gmra.mrb[0].mxu0 %v786
    %v1080 = vpop.f32.mrb[0].mxu0
    %v1081 = vadd.f32 %v501, %v1080
    %v1082 = vpop.f32.mrb[0].mxu0
    %1083 = vmatprep.mubr.f32.mxu0 0.0
    %1084 = vmatmul.mubr.f32.gmra.mrb[0].mxu0 %v789
    %v1085 = vpop.f32.mrb[0].mxu0
    %v1086 = vadd.f32 %v506, %v1085
    %v1087 = vpop.f32.mrb[0].mxu0
    %1088 = vmatprep.mubr.f32.mxu0 0.0
    %1089 = vmatmul.mubr.f32.gmra.mrb[0].mxu0 %v792
    %v1090 = vpop.f32.mrb[0].mxu0
    %v1091 = vadd.f32 %v511, %v1090
    %v1092 = vpop.f32.mrb[0].mxu0
    %1093 = vmatprep.mubr.f32.mxu0 0.0
    %1094 = vmatmul.mubr.f32.gmra.mrb[0].mxu0 %v795
    %v1095 = vpop.f32.mrb[0].mxu0
    %v1096 = vadd.f32 %v516, %v1095
    %v1097 = vpop.f32.mrb[0].mxu0
    %1098 = vmatprep.mubr.f32.mxu0 0.0
    %1099 = vmatmul.mubr.f32.gmra.mrb[0].mxu0 %v798
    %v1100 = vpop.f32.mrb[0].mxu0
    %v1101 = vadd.f32 %v521, %v1100
    %v1102 = vpop.f32.mrb[0].mxu0
    %1103 = vmatprep.mubr.f32.mxu0 0.0
    %1104 = vmatmul.mubr.f32.gmra.mrb[0].mxu0 %v801
    %v1105 = vpop.f32.mrb[0].mxu0
    %v1106 = vadd.f32 %v526, %v1105
    %v1107 = vpop.f32.mrb[0].mxu0
    %1108 = vmatprep.mubr.f32.mxu0 0.0
    %1109 = vmatmul.mubr.f32.gmra.mrb[0].mxu0 %v804
    %v1110 = vpop.f32.mrb[0].mxu0
    %v1111 = vadd.f32 %v531, %v1110
    %v1112 = vpop.f32.mrb[0].mxu0
    %1113 = vmatprep.mubr.f32.mxu0 0.0
    %1114 = vmatmul.mubr.f32.gmra.mrb[0].mxu0 %v807
    %v1115 = vpop.f32.mrb[0].mxu0
    %v1116 = vadd.f32 %v536, %v1115
    %v1117 = vpop.f32.mrb[0].mxu0
    %1118 = vmatprep.mubr.f32.mxu0 0.0
    %1119 = vmatmul.mubr.f32.gmra.mrb[0].mxu0 %v810
    %v1120 = vpop.f32.mrb[0].mxu0
    %v1121 = vadd.f32 %v541, %v1120
    %v1122 = vpop.f32.mrb[0].mxu0
    %1123 = vmatprep.mubr.f32.mxu0 0.0
    %1124 = vmatmul.mubr.f32.gmra.mrb[0].mxu0 %v813
    %v1125 = vpop.f32.mrb[0].mxu0
    %v1126 = vadd.f32 %v546, %v1125
    %v1127 = vpop.f32.mrb[0].mxu0
    %1128 = vmatprep.mubr.f32.mxu0 0.0
    %1129 = vmatmul.mubr.f32.gmra.mrb[0].mxu0 %v816
    %v1130 = vpop.f32.mrb[0].mxu0
    %v1131 = vadd.f32 %v551, %v1130
    %v1132 = vpop.f32.mrb[0].mxu0
    %1133 = vmatprep.mubr.f32.mxu0 0.0
    %1134 = vmatmul.mubr.f32.gmra.mrb[0].mxu0 %v819
    %v1135 = vpop.f32.mrb[0].mxu0
    %v1136 = vadd.f32 %v556, %v1135
    %v1137 = vpop.f32.mrb[0].mxu0
    %1138 = vmatprep.mubr.f32.mxu0 0.0
    %1139 = vmatmul.mubr.f32.gmra.mrb[0].mxu0 %v822
    %v1140 = vpop.f32.mrb[0].mxu0
    %v1141 = vadd.f32 %v561, %v1140
    %v1142 = vpop.f32.mrb[0].mxu0
    %1143 = vmatprep.mubr.f32.mxu0 0.0
    %1144 = vmatmul.mubr.f32.gmra.mrb[0].mxu0 %v825
    %v1145 = vpop.f32.mrb[0].mxu0
    %v1146 = vadd.f32 %v566, %v1145
    %v1147 = vpop.f32.mrb[0].mxu0
    %1148 = vmatprep.mubr.f32.mxu0 0.0
    %1149 = vmatmul.mubr.f32.gmra.mrb[0].mxu0 %v828
    %v1150 = vpop.f32.mrb[0].mxu0
    %v1151 = vadd.f32 %v571, %v1150
    %v1152 = vpop.f32.mrb[0].mxu0
    %1153 = vmatprep.mubr.f32.mxu0 0.0
    %1154 = vmatmul.mubr.f32.gmra.mrb[0].mxu0 %v831
    %v1155 = vpop.f32.mrb[0].mxu0
    %v1156 = vadd.f32 %v576, %v1155
    %v1157 = vpop.f32.mrb[0].mxu0
    %1158 = vmatprep.mubr.f32.mxu0 0.0
    %1159 = vmatmul.mubr.f32.gmra.mrb[0].mxu0 %v834
    %v1160 = vpop.f32.mrb[0].mxu0
    %v1161 = vadd.f32 %v581, %v1160
    %v1162 = vpop.f32.mrb[0].mxu0
    %1163 = vmatprep.mubr.f32.mxu0 0.0
    %1164 = vmatmul.mubr.f32.gmra.mrb[0].mxu0 %v837
    %v1165 = vpop.f32.mrb[0].mxu0
    %v1166 = vadd.f32 %v586, %v1165
    %v1167 = vpop.f32.mrb[0].mxu0
    %1168 = vmatprep.mubr.f32.mxu0 0.0
    %1169 = vmatmul.mubr.f32.gmra.mrb[0].mxu0 %v840
    %v1170 = vpop.f32.mrb[0].mxu0
    %v1171 = vadd.f32 %v591, %v1170
    %v1172 = vpop.f32.mrb[0].mxu0
    %1173 = vmatprep.mubr.f32.mxu0 0.0
    %1174 = vmatmul.mubr.f32.gmra.mrb[0].mxu0 %v843
    %v1175 = vpop.f32.mrb[0].mxu0
    %v1176 = vadd.f32 %v596, %v1175
    %v1177 = vpop.f32.mrb[0].mxu0
    %1178 = vmatprep.mubr.f32.mxu0 0.0
    %1179 = vmatmul.mubr.f32.gmra.mrb[0].mxu0 %v846
    %v1180 = vpop.f32.mrb[0].mxu0
    %v1181 = vadd.f32 %v601, %v1180
    %v1182 = vpop.f32.mrb[0].mxu0
    %1183 = vmatprep.mubr.f32.mxu0 0.0
    %1184 = vmatmul.mubr.f32.gmra.mrb[0].mxu0 %v849
    %v1185 = vpop.f32.mrb[0].mxu0
    %v1186 = vadd.f32 %v606, %v1185
    %v1187 = vpop.f32.mrb[0].mxu0
    %1188 = vmatprep.mubr.f32.mxu0 0.0
    %1189 = vmatmul.mubr.f32.gmra.mrb[0].mxu0 %v852
    %v1190 = vpop.f32.mrb[0].mxu0
    %v1191 = vadd.f32 %v611, %v1190
    %v1192 = vpop.f32.mrb[0].mxu0
    %1193 = vmatprep.mubr.f32.mxu0 0.0
    %1194 = vmatmul.mubr.f32.gmra.mrb[0].mxu0 %v855
    %v1195 = vpop.f32.mrb[0].mxu0
    %v1196 = vadd.f32 %v616, %v1195
    %v1197 = vpop.f32.mrb[0].mxu0
    %1198 = vmatprep.mubr.f32.mxu0 0.0
    %1199 = vmatmul.mubr.f32.gmra.mrb[0].mxu0 %v858
    %v1200 = vpop.f32.mrb[0].mxu0
    %v1201 = vadd.f32 %v621, %v1200
    %v1202 = vpop.f32.mrb[0].mxu0
    %1203 = vmatprep.mubr.f32.mxu0 0.0
    %1204 = vmatmul.mubr.f32.gmra.mrb[0].mxu0 %v861
    %v1205 = vpop.f32.mrb[0].mxu0
    %v1206 = vadd.f32 %v626, %v1205
    %v1207 = vpop.f32.mrb[0].mxu0
    %1208 = vmatprep.mubr.f32.mxu0 0.0
    %1209 = vmatmul.mubr.f32.gmra.mrb[0].mxu0 %v864
    %v1210 = vpop.f32.mrb[0].mxu0
    %v1211 = vadd.f32 %v631, %v1210
    %v1212 = vpop.f32.mrb[0].mxu0
    %1213 = vmatprep.mubr.f32.mxu0 0.0
    %1214 = vmatmul.mubr.f32.gmra.mrb[0].mxu0 %v867
    %v1215 = vpop.f32.mrb[0].mxu0
    %v1216 = vadd.f32 %v636, %v1215
    %v1217 = vpop.f32.mrb[0].mxu0
    %1218 = vmatprep.mubr.f32.mxu0 0.0
    %1219 = vmatmul.mubr.f32.gmra.mrb[0].mxu0 %v870
    %v1220 = vpop.f32.mrb[0].mxu0
    %v1221 = vadd.f32 %v641, %v1220
    %v1222 = vpop.f32.mrb[0].mxu0
    %1223 = vmatprep.mubr.f32.mxu0 0.0
    %1224 = vmatmul.mubr.f32.gmra.mrb[0].mxu0 %v873
    %v1225 = vpop.f32.mrb[0].mxu0
    %v1226 = vadd.f32 %v646, %v1225
    %v1227 = vpop.f32.mrb[0].mxu0
    %1228 = vmatprep.mubr.f32.mxu0 0.0
    %1229 = vmatmul.mubr.f32.gmra.mrb[0].mxu0 %v876
    %v1230 = vpop.f32.mrb[0].mxu0
    %v1231 = vadd.f32 %v651, %v1230
    %v1232 = vpop.f32.mrb[0].mxu0
    %1233 = vmatprep.mubr.f32.mxu0 0.0
    %1234 = vmatmul.mubr.f32.gmra.mrb[0].mxu0 %v879
    %v1235 = vpop.f32.mrb[0].mxu0
    %v1236 = vadd.f32 %v656, %v1235
    %v1237 = vpop.f32.mrb[0].mxu0
    %1238 = vmatprep.mubr.f32.mxu0 0.0
    %1239 = vmatmul.mubr.f32.gmra.mrb[0].mxu0 %v882
    %v1240 = vpop.f32.mrb[0].mxu0
    %v1241 = vadd.f32 %v661, %v1240
    %v1242 = vpop.f32.mrb[0].mxu0
    %1243 = vmatprep.mubr.f32.mxu0 0.0
    %1244 = vmatmul.mubr.f32.gmra.mrb[0].mxu0 %v885
    %v1245 = vpop.f32.mrb[0].mxu0
    %v1246 = vadd.f32 %v666, %v1245
    %v1247 = vpop.f32.mrb[0].mxu0
    %1248 = vmatprep.mubr.f32.mxu0 0.0
    %1249 = vmatmul.mubr.f32.gmra.mrb[0].mxu0 %v888
    %v1250 = vpop.f32.mrb[0].mxu0
    %v1251 = vadd.f32 %v671, %v1250
    %v1252 = vpop.f32.mrb[0].mxu0
    %1253 = vmatprep.mubr.f32.mxu0 0.0
    %1254 = vmatmul.mubr.f32.gmra.mrb[0].mxu0 %v891
    %v1255 = vpop.f32.mrb[0].mxu0
    %v1256 = vadd.f32 %v676, %v1255
    %v1257 = vpop.f32.mrb[0].mxu0
    %1258 = vmatprep.mubr.f32.mxu0 0.0
    %1259 = vmatmul.mubr.f32.gmra.mrb[0].mxu0 %v894
    %v1260 = vpop.f32.mrb[0].mxu0
    %v1261 = vadd.f32 %v681, %v1260
    %v1262 = vpop.f32.mrb[0].mxu0
    %1263 = vmatprep.mubr.f32.mxu0 0.0
    %1264 = vmatmul.mubr.f32.gmra.mrb[0].mxu0 %v897
    %v1265 = vpop.f32.mrb[0].mxu0
    %v1266 = vadd.f32 %v686, %v1265
    %v1267 = vpop.f32.mrb[0].mxu0
    %1268 = vmatprep.mubr.f32.mxu0 0.0
    %1269 = vmatmul.mubr.f32.gmra.mrb[0].mxu0 %v900
    %v1270 = vpop.f32.mrb[0].mxu0
    %v1271 = vadd.f32 %v691, %v1270
    %v1272 = vpop.f32.mrb[0].mxu0
    %1273 = vmatprep.mubr.f32.mxu0 0.0
    %1274 = vmatmul.mubr.f32.gmra.mrb[0].mxu0 %v903
    %v1275 = vpop.f32.mrb[0].mxu0
    %v1276 = vadd.f32 %v696, %v1275
    %v1277 = vpop.f32.mrb[0].mxu0
    %1278 = vmatprep.mubr.f32.mxu0 0.0
    %1279 = vmatmul.mubr.f32.gmra.mrb[0].mxu0 %v906
    %v1280 = vpop.f32.mrb[0].mxu0
    %v1281 = vadd.f32 %v701, %v1280
    %v1282 = vpop.f32.mrb[0].mxu0
    %1283 = vmatprep.mubr.f32.mxu0 0.0
    %1284 = vmatmul.mubr.f32.gmra.mrb[0].mxu0 %v909
    %v1285 = vpop.f32.mrb[0].mxu0
    %v1286 = vadd.f32 %v706, %v1285
    %v1287 = vpop.f32.mrb[0].mxu0
    %1288 = vmatprep.mubr.f32.mxu0 0.0
    %1289 = vmatmul.mubr.f32.gmra.mrb[0].mxu0 %v912
    %v1290 = vpop.f32.mrb[0].mxu0
    %v1291 = vadd.f32 %v711, %v1290
    %v1292 = vpop.f32.mrb[0].mxu0
    %1293 = vmatprep.mubr.f32.mxu0 0.0
    %1294 = vmatmul.mubr.f32.gmra.mrb[0].mxu0 %v915
    %v1295 = vpop.f32.mrb[0].mxu0
    %v1296 = vadd.f32 %v716, %v1295
    %v1297 = vpop.f32.mrb[0].mxu0
    %1298 = vmatprep.mubr.f32.mxu0 0.0
    %1299 = vmatmul.mubr.f32.gmra.mrb[0].mxu0 %v918
    %v1300 = vpop.f32.mrb[0].mxu0
    %v1301 = vadd.f32 %v721, %v1300
    %v1302 = vpop.f32.mrb[0].mxu0
    %1303 = vmatprep.mubr.f32.mxu0 0.0
    %1304 = vmatmul.mubr.f32.gmra.mrb[0].mxu0 %v921
    %v1305 = vpop.f32.mrb[0].mxu0
    %v1306 = vadd.f32 %v726, %v1305
    %v1307 = vpop.f32.mrb[0].mxu0
    %1308 = vmatprep.mubr.f32.mxu0 0.0
    %1309 = vmatmul.mubr.f32.gmra.mrb[0].mxu0 %v924
    %v1310 = vpop.f32.mrb[0].mxu0
    %v1311 = vadd.f32 %v731, %v1310
    %v1312 = vpop.f32.mrb[0].mxu0
    %1313 = vdwg.mxu0
    %v1314 = vld [vmem:[%s0 + $0x2] sm:$0xff]
    %v1315 = vld [vmem:[%s0 + $0xa] sm:$0xff]
    %v1316 = vld [vmem:[%s0 + $0x1a] sm:$0xff]
    %v1317 = vld [vmem:[%s0 + $0x22] sm:$0xff]
    %v1318 = vld [vmem:[%s0 + $0x32] sm:$0xff]
    %v1319 = vld [vmem:[%s0 + $0x3a] sm:$0xff]
    %v1320 = vld [vmem:[%s0 + $0x4a] sm:$0xff]
    %v1321 = vld [vmem:[%s0 + $0x52] sm:$0xff]
    %v1322 = vld [vmem:[%s0 + $0x62] sm:$0xff]
    %v1323 = vld [vmem:[%s0 + $0x6a] sm:$0xff]
    %v1324 = vld [vmem:[%s0 + $0x7a] sm:$0xff]
    %v1325 = vld [vmem:[%s0 + $0x82] sm:$0xff]
    %v1326 = vld [vmem:[%s0 + $0x92] sm:$0xff]
    %v1327 = vld [vmem:[%s0 + $0x9a] sm:$0xff]
    %v1328 = vld [vmem:[%s0 + $0xaa] sm:$0xff]
    %v1329 = vld [vmem:[%s0 + $0xb2] sm:$0xff]
    %v1330 = vld [vmem:[%s0 + $0xc2] sm:$0xff]
    %v1331 = vld [vmem:[%s0 + $0xca] sm:$0xff]
    %v1332 = vld [vmem:[%s0 + $0xda] sm:$0xff]
    %v1333 = vld [vmem:[%s0 + $0xe2] sm:$0xff]
    %v1334 = vld [vmem:[%s0 + $0xf2] sm:$0xff]
    %v1335 = vld [vmem:[%s0 + $0xfa] sm:$0xff]
    %v1336 = vld [vmem:[%s0 + $0x10a] sm:$0xff]
    %v1337 = vld [vmem:[%s0 + $0x112] sm:$0xff]
    %v1338 = vld [vmem:[%s0 + $0x122] sm:$0xff]
    %v1339 = vld [vmem:[%s0 + $0x12a] sm:$0xff]
    %v1340 = vld [vmem:[%s0 + $0x13a] sm:$0xff]
    %v1341 = vld [vmem:[%s0 + $0x142] sm:$0xff]
    %v1342 = vld [vmem:[%s0 + $0x152] sm:$0xff]
    %v1343 = vld [vmem:[%s0 + $0x15a] sm:$0xff]
    %v1344 = vld [vmem:[%s0 + $0x16a] sm:$0xff]
    %v1345 = vld [vmem:[%s0 + $0x172] sm:$0xff]
    %v1346 = vld [vmem:[%s0 + $0x1b2] sm:$0xff]
    %v1347 = vld [vmem:[%s0 + $0x1ba] sm:$0xff]
    %v1348 = vld [vmem:[%s0 + $0x1ca] sm:$0xff]
    %v1349 = vld [vmem:[%s0 + $0x1d2] sm:$0xff]
    %v1350 = vld [vmem:[%s0 + $0x1e2] sm:$0xff]
    %v1351 = vld [vmem:[%s0 + $0x1ea] sm:$0xff]
    %v1352 = vld [vmem:[%s0 + $0x1fa] sm:$0xff]
    %v1353 = vld [vmem:[%s0 + $0x202] sm:$0xff]
    %v1354 = vld [vmem:[%s0 + $0x212] sm:$0xff]
    %v1355 = vld [vmem:[%s0 + $0x21a] sm:$0xff]
    %v1356 = vld [vmem:[%s0 + $0x22a] sm:$0xff]
    %v1357 = vld [vmem:[%s0 + $0x232] sm:$0xff]
    %v1358 = vld [vmem:[%s0 + $0x242] sm:$0xff]
    %v1359 = vld [vmem:[%s0 + $0x24a] sm:$0xff]
    %v1360 = vld [vmem:[%s0 + $0x25a] sm:$0xff]
    %v1361 = vld [vmem:[%s0 + $0x262] sm:$0xff]
    %v1362 = vld [vmem:[%s0 + $0x272] sm:$0xff]
    %v1363 = vld [vmem:[%s0 + $0x27a] sm:$0xff]
    %v1364 = vld [vmem:[%s0 + $0x28a] sm:$0xff]
    %v1365 = vld [vmem:[%s0 + $0x292] sm:$0xff]
    %v1366 = vld [vmem:[%s0 + $0x2a2] sm:$0xff]
    %v1367 = vld [vmem:[%s0 + $0x2aa] sm:$0xff]
    %v1368 = vld [vmem:[%s0 + $0x2ba] sm:$0xff]
    %v1369 = vld [vmem:[%s0 + $0x2c2] sm:$0xff]
    %v1370 = vld [vmem:[%s0 + $0x2d2] sm:$0xff]
    %v1371 = vld [vmem:[%s0 + $0x2da] sm:$0xff]
    %v1372 = vld [vmem:[%s0 + $0x2ea] sm:$0xff]
    %v1373 = vld [vmem:[%s0 + $0x2f2] sm:$0xff]
    %v1374 = vld [vmem:[%s0 + $0x302] sm:$0xff]
    %v1375 = vld [vmem:[%s0 + $0x30a] sm:$0xff]
    %v1376 = vld [vmem:[%s0 + $0x31a] sm:$0xff]
    %v1377 = vld [vmem:[%s0 + $0x322] sm:$0xff]
    %s1378 = scalar_lea.vmem %s1, 8
    %v1379 = vld [vmem:[%s1378] sm:$0xf]
    %v1381 = vsel %vm152, %v1314, 0
    %v1384 = vsel %vm152, %v1315, 0
    %v1387 = vsel %vm152, %v1316, 0
    %v1390 = vsel %vm152, %v1317, 0
    %v1393 = vsel %vm152, %v1318, 0
    %v1396 = vsel %vm152, %v1319, 0
    %v1399 = vsel %vm152, %v1320, 0
    %v1402 = vsel %vm152, %v1321, 0
    %v1405 = vsel %vm152, %v1322, 0
    %v1408 = vsel %vm152, %v1323, 0
    %v1411 = vsel %vm152, %v1324, 0
    %v1414 = vsel %vm152, %v1325, 0
    %v1417 = vsel %vm152, %v1326, 0
    %v1420 = vsel %vm152, %v1327, 0
    %v1423 = vsel %vm152, %v1328, 0
    %v1426 = vsel %vm152, %v1329, 0
    %v1429 = vsel %vm152, %v1330, 0
    %v1432 = vsel %vm152, %v1331, 0
    %v1435 = vsel %vm152, %v1332, 0
    %v1438 = vsel %vm152, %v1333, 0
    %v1441 = vsel %vm152, %v1334, 0
    %v1444 = vsel %vm152, %v1335, 0
    %v1447 = vsel %vm152, %v1336, 0
    %v1450 = vsel %vm152, %v1337, 0
    %v1453 = vsel %vm152, %v1338, 0
    %v1456 = vsel %vm152, %v1339, 0
    %v1459 = vsel %vm152, %v1340, 0
    %v1462 = vsel %vm152, %v1341, 0
    %v1465 = vsel %vm152, %v1342, 0
    %v1468 = vsel %vm152, %v1343, 0
    %v1471 = vsel %vm152, %v1344, 0
    %v1474 = vsel %vm152, %v1345, 0
    %v1477 = vsel %vm152, %v1346, 0
    %v1480 = vsel %vm152, %v1347, 0
    %v1483 = vsel %vm152, %v1348, 0
    %v1486 = vsel %vm152, %v1349, 0
    %v1489 = vsel %vm152, %v1350, 0
    %v1492 = vsel %vm152, %v1351, 0
    %v1495 = vsel %vm152, %v1352, 0
    %v1498 = vsel %vm152, %v1353, 0
    %v1501 = vsel %vm152, %v1354, 0
    %v1504 = vsel %vm152, %v1355, 0
    %v1507 = vsel %vm152, %v1356, 0
    %v1510 = vsel %vm152, %v1357, 0
    %v1513 = vsel %vm152, %v1358, 0
    %v1516 = vsel %vm152, %v1359, 0
    %v1519 = vsel %vm152, %v1360, 0
    %v1522 = vsel %vm152, %v1361, 0
    %v1525 = vsel %vm152, %v1362, 0
    %v1528 = vsel %vm152, %v1363, 0
    %v1531 = vsel %vm152, %v1364, 0
    %v1534 = vsel %vm152, %v1365, 0
    %v1537 = vsel %vm152, %v1366, 0
    %v1540 = vsel %vm152, %v1367, 0
    %v1543 = vsel %vm152, %v1368, 0
    %v1546 = vsel %vm152, %v1369, 0
    %v1549 = vsel %vm152, %v1370, 0
    %v1552 = vsel %vm152, %v1371, 0
    %v1555 = vsel %vm152, %v1372, 0
    %v1558 = vsel %vm152, %v1373, 0
    %v1561 = vsel %vm152, %v1374, 0
    %v1564 = vsel %vm152, %v1375, 0
    %v1567 = vsel %vm152, %v1376, 0
    %v1570 = vsel %vm152, %v1377, 0
    %v1573 = vsel %vm345, %v1379, 0
    %1575 = vmatprep.subr.mxu0 0.0
    %1576 = vmatpush1.msra.mxu0 %v1573
    %1577 = vmatprep.subr.mxu0 0.0
    %1578 = vmatpush1.msra.mxu0 0.0
    %1579 = vmatprep.subr.mxu0 0.0
    %1580 = vmatpush1.msra.mxu0 0.0
    %1581 = vmatprep.subr.mxu0 0.0
    %1582 = vmatpush1.msra.mxu0 0.0
    %1583 = vmatprep.subr.mxu0 0.0
    %1584 = vmatpush1.msra.mxu0 0.0
    %1585 = vmatprep.subr.mxu0 0.0
    %1586 = vmatpush1.msra.mxu0 0.0
    %1587 = vmatprep.subr.mxu0 0.0
    %1588 = vmatpush1.msra.mxu0 0.0
    %1589 = vmatprep.subr.mxu0 0.0
    %1590 = vmatpush1.msra.mxu0 0.0
    %1591 = vmatprep.subr.mxu0 0.0
    %1592 = vmatpush1.msra.mxu0 0.0
    %1593 = vmatprep.subr.mxu0 0.0
    %1594 = vmatpush1.msra.mxu0 0.0
    %1595 = vmatprep.subr.mxu0 0.0
    %1596 = vmatpush1.msra.mxu0 0.0
    %1597 = vmatprep.subr.mxu0 0.0
    %1598 = vmatpush1.msra.mxu0 0.0
    %1599 = vmatprep.subr.mxu0 0.0
    %1600 = vmatpush1.msra.mxu0 0.0
    %1601 = vmatprep.subr.mxu0 0.0
    %1602 = vmatpush1.msra.mxu0 0.0
    %1603 = vmatprep.subr.mxu0 0.0
    %1604 = vmatpush1.msra.mxu0 0.0
    %1605 = vmatprep.subr.mxu0 0.0
    %1606 = vmatpush1.msra.mxu0 0.0
    %1607 = vmatprep.subr.mxu0 0.0
    %1608 = vmatpush1.msra.mxu0 0.0
    %1609 = vmatprep.subr.mxu0 0.0
    %1610 = vmatpush1.msra.mxu0 0.0
    %1611 = vmatprep.subr.mxu0 0.0
    %1612 = vmatpush1.msra.mxu0 0.0
    %1613 = vmatprep.subr.mxu0 0.0
    %1614 = vmatpush1.msra.mxu0 0.0
    %1615 = vmatprep.subr.mxu0 0.0
    %1616 = vmatpush1.msra.mxu0 0.0
    %1617 = vmatprep.subr.mxu0 0.0
    %1618 = vmatpush1.msra.mxu0 0.0
    %1619 = vmatprep.subr.mxu0 0.0
    %1620 = vmatpush1.msra.mxu0 0.0
    %1621 = vmatprep.subr.mxu0 0.0
    %1622 = vmatpush1.msra.mxu0 0.0
    %1623 = vmatprep.subr.mxu0 0.0
    %1624 = vmatpush1.msra.mxu0 0.0
    %1625 = vmatprep.subr.mxu0 0.0
    %1626 = vmatpush1.msra.mxu0 0.0
    %1627 = vmatprep.subr.mxu0 0.0
    %1628 = vmatpush1.msra.mxu0 0.0
    %1629 = vmatprep.subr.mxu0 0.0
    %1630 = vmatpush1.msra.mxu0 0.0
    %1631 = vmatprep.subr.mxu0 0.0
    %1632 = vmatpush1.msra.mxu0 0.0
    %1633 = vmatprep.subr.mxu0 0.0
    %1634 = vmatpush1.msra.mxu0 0.0
    %1635 = vmatprep.subr.mxu0 0.0
    %1636 = vmatpush1.msra.mxu0 0.0
    %1637 = vmatprep.subr.mxu0 0.0
    %1638 = vmatpush1.msra.mxu0 0.0
    %1639 = vmatprep.mubr.f32.mxu0 0.0
    %1640 = vmatmul.mubr.f32.gmra.mrb[0].mxu0 %v1381
    %v1641 = vpop.f32.mrb[0].mxu0
    %v1642 = vadd.f32 0.0, %v1641
    %v1643 = vpop.f32.mrb[0].mxu0
    %1644 = vmatprep.mubr.f32.mxu0 0.0
    %1645 = vmatmul.mubr.f32.gmra.mrb[0].mxu0 %v1384
    %v1646 = vpop.f32.mrb[0].mxu0
    %v1647 = vadd.f32 0.0, %v1646
    %v1648 = vpop.f32.mrb[0].mxu0
    %1649 = vmatprep.mubr.f32.mxu0 0.0
    %1650 = vmatmul.mubr.f32.gmra.mrb[0].mxu0 %v1387
    %v1651 = vpop.f32.mrb[0].mxu0
    %v1652 = vadd.f32 0.0, %v1651
    %v1653 = vpop.f32.mrb[0].mxu0
    %1654 = vmatprep.mubr.f32.mxu0 0.0
    %1655 = vmatmul.mubr.f32.gmra.mrb[0].mxu0 %v1390
    %v1656 = vpop.f32.mrb[0].mxu0
    %v1657 = vadd.f32 0.0, %v1656
    %v1658 = vpop.f32.mrb[0].mxu0
    %1659 = vmatprep.mubr.f32.mxu0 0.0
    %1660 = vmatmul.mubr.f32.gmra.mrb[0].mxu0 %v1393
    %v1661 = vpop.f32.mrb[0].mxu0
    %v1662 = vadd.f32 0.0, %v1661
    %v1663 = vpop.f32.mrb[0].mxu0
    %1664 = vmatprep.mubr.f32.mxu0 0.0
    %1665 = vmatmul.mubr.f32.gmra.mrb[0].mxu0 %v1396
    %v1666 = vpop.f32.mrb[0].mxu0
    %v1667 = vadd.f32 0.0, %v1666
    %v1668 = vpop.f32.mrb[0].mxu0
    %1669 = vmatprep.mubr.f32.mxu0 0.0
    %1670 = vmatmul.mubr.f32.gmra.mrb[0].mxu0 %v1399
    %v1671 = vpop.f32.mrb[0].mxu0
    %v1672 = vadd.f32 0.0, %v1671
    %v1673 = vpop.f32.mrb[0].mxu0
    %1674 = vmatprep.mubr.f32.mxu0 0.0
    %1675 = vmatmul.mubr.f32.gmra.mrb[0].mxu0 %v1402
    %v1676 = vpop.f32.mrb[0].mxu0
    %v1677 = vadd.f32 0.0, %v1676
    %v1678 = vpop.f32.mrb[0].mxu0
    %1679 = vmatprep.mubr.f32.mxu0 0.0
    %1680 = vmatmul.mubr.f32.gmra.mrb[0].mxu0 %v1405
    %v1681 = vpop.f32.mrb[0].mxu0
    %v1682 = vadd.f32 0.0, %v1681
    %v1683 = vpop.f32.mrb[0].mxu0
    %1684 = vmatprep.mubr.f32.mxu0 0.0
    %1685 = vmatmul.mubr.f32.gmra.mrb[0].mxu0 %v1408
    %v1686 = vpop.f32.mrb[0].mxu0
    %v1687 = vadd.f32 0.0, %v1686
    %v1688 = vpop.f32.mrb[0].mxu0
    %1689 = vmatprep.mubr.f32.mxu0 0.0
    %1690 = vmatmul.mubr.f32.gmra.mrb[0].mxu0 %v1411
    %v1691 = vpop.f32.mrb[0].mxu0
    %v1692 = vadd.f32 0.0, %v1691
    %v1693 = vpop.f32.mrb[0].mxu0
    %1694 = vmatprep.mubr.f32.mxu0 0.0
    %1695 = vmatmul.mubr.f32.gmra.mrb[0].mxu0 %v1414
    %v1696 = vpop.f32.mrb[0].mxu0
    %v1697 = vadd.f32 0.0, %v1696
    %v1698 = vpop.f32.mrb[0].mxu0
    %1699 = vmatprep.mubr.f32.mxu0 0.0
    %1700 = vmatmul.mubr.f32.gmra.mrb[0].mxu0 %v1417
    %v1701 = vpop.f32.mrb[0].mxu0
    %v1702 = vadd.f32 0.0, %v1701
    %v1703 = vpop.f32.mrb[0].mxu0
    %1704 = vmatprep.mubr.f32.mxu0 0.0
    %1705 = vmatmul.mubr.f32.gmra.mrb[0].mxu0 %v1420
    %v1706 = vpop.f32.mrb[0].mxu0
    %v1707 = vadd.f32 0.0, %v1706
    %v1708 = vpop.f32.mrb[0].mxu0
    %1709 = vmatprep.mubr.f32.mxu0 0.0
    %1710 = vmatmul.mubr.f32.gmra.mrb[0].mxu0 %v1423
    %v1711 = vpop.f32.mrb[0].mxu0
    %v1712 = vadd.f32 0.0, %v1711
    %v1713 = vpop.f32.mrb[0].mxu0
    %1714 = vmatprep.mubr.f32.mxu0 0.0
    %1715 = vmatmul.mubr.f32.gmra.mrb[0].mxu0 %v1426
    %v1716 = vpop.f32.mrb[0].mxu0
    %v1717 = vadd.f32 0.0, %v1716
    %v1718 = vpop.f32.mrb[0].mxu0
    %1719 = vmatprep.mubr.f32.mxu0 0.0
    %1720 = vmatmul.mubr.f32.gmra.mrb[0].mxu0 %v1429
    %v1721 = vpop.f32.mrb[0].mxu0
    %v1722 = vadd.f32 0.0, %v1721
    %v1723 = vpop.f32.mrb[0].mxu0
    %1724 = vmatprep.mubr.f32.mxu0 0.0
    %1725 = vmatmul.mubr.f32.gmra.mrb[0].mxu0 %v1432
    %v1726 = vpop.f32.mrb[0].mxu0
    %v1727 = vadd.f32 0.0, %v1726
    %v1728 = vpop.f32.mrb[0].mxu0
    %1729 = vmatprep.mubr.f32.mxu0 0.0
    %1730 = vmatmul.mubr.f32.gmra.mrb[0].mxu0 %v1435
    %v1731 = vpop.f32.mrb[0].mxu0
    %v1732 = vadd.f32 0.0, %v1731
    %v1733 = vpop.f32.mrb[0].mxu0
    %1734 = vmatprep.mubr.f32.mxu0 0.0
    %1735 = vmatmul.mubr.f32.gmra.mrb[0].mxu0 %v1438
    %v1736 = vpop.f32.mrb[0].mxu0
    %v1737 = vadd.f32 0.0, %v1736
    %v1738 = vpop.f32.mrb[0].mxu0
    %1739 = vmatprep.mubr.f32.mxu0 0.0
    %1740 = vmatmul.mubr.f32.gmra.mrb[0].mxu0 %v1441
    %v1741 = vpop.f32.mrb[0].mxu0
    %v1742 = vadd.f32 0.0, %v1741
    %v1743 = vpop.f32.mrb[0].mxu0
    %1744 = vmatprep.mubr.f32.mxu0 0.0
    %1745 = vmatmul.mubr.f32.gmra.mrb[0].mxu0 %v1444
    %v1746 = vpop.f32.mrb[0].mxu0
    %v1747 = vadd.f32 0.0, %v1746
    %v1748 = vpop.f32.mrb[0].mxu0
    %1749 = vmatprep.mubr.f32.mxu0 0.0
    %1750 = vmatmul.mubr.f32.gmra.mrb[0].mxu0 %v1447
    %v1751 = vpop.f32.mrb[0].mxu0
    %v1752 = vadd.f32 0.0, %v1751
    %v1753 = vpop.f32.mrb[0].mxu0
    %1754 = vmatprep.mubr.f32.mxu0 0.0
    %1755 = vmatmul.mubr.f32.gmra.mrb[0].mxu0 %v1450
    %v1756 = vpop.f32.mrb[0].mxu0
    %v1757 = vadd.f32 0.0, %v1756
    %v1758 = vpop.f32.mrb[0].mxu0
    %1759 = vmatprep.mubr.f32.mxu0 0.0
    %1760 = vmatmul.mubr.f32.gmra.mrb[0].mxu0 %v1453
    %v1761 = vpop.f32.mrb[0].mxu0
    %v1762 = vadd.f32 0.0, %v1761
    %v1763 = vpop.f32.mrb[0].mxu0
    %1764 = vmatprep.mubr.f32.mxu0 0.0
    %1765 = vmatmul.mubr.f32.gmra.mrb[0].mxu0 %v1456
    %v1766 = vpop.f32.mrb[0].mxu0
    %v1767 = vadd.f32 0.0, %v1766
    %v1768 = vpop.f32.mrb[0].mxu0
    %1769 = vmatprep.mubr.f32.mxu0 0.0
    %1770 = vmatmul.mubr.f32.gmra.mrb[0].mxu0 %v1459
    %v1771 = vpop.f32.mrb[0].mxu0
    %v1772 = vadd.f32 0.0, %v1771
    %v1773 = vpop.f32.mrb[0].mxu0
    %1774 = vmatprep.mubr.f32.mxu0 0.0
    %1775 = vmatmul.mubr.f32.gmra.mrb[0].mxu0 %v1462
    %v1776 = vpop.f32.mrb[0].mxu0
    %v1777 = vadd.f32 0.0, %v1776
    %v1778 = vpop.f32.mrb[0].mxu0
    %1779 = vmatprep.mubr.f32.mxu0 0.0
    %1780 = vmatmul.mubr.f32.gmra.mrb[0].mxu0 %v1465
    %v1781 = vpop.f32.mrb[0].mxu0
    %v1782 = vadd.f32 0.0, %v1781
    %v1783 = vpop.f32.mrb[0].mxu0
    %1784 = vmatprep.mubr.f32.mxu0 0.0
    %1785 = vmatmul.mubr.f32.gmra.mrb[0].mxu0 %v1468
    %v1786 = vpop.f32.mrb[0].mxu0
    %v1787 = vadd.f32 0.0, %v1786
    %v1788 = vpop.f32.mrb[0].mxu0
    %1789 = vmatprep.mubr.f32.mxu0 0.0
    %1790 = vmatmul.mubr.f32.gmra.mrb[0].mxu0 %v1471
    %v1791 = vpop.f32.mrb[0].mxu0
    %v1792 = vadd.f32 0.0, %v1791
    %v1793 = vpop.f32.mrb[0].mxu0
    %1794 = vmatprep.mubr.f32.mxu0 0.0
    %1795 = vmatmul.mubr.f32.gmra.mrb[0].mxu0 %v1474
    %v1796 = vpop.f32.mrb[0].mxu0
    %v1797 = vadd.f32 0.0, %v1796
    %v1798 = vpop.f32.mrb[0].mxu0
    %1799 = vmatprep.mubr.f32.mxu0 0.0
    %1800 = vmatmul.mubr.f32.gmra.mrb[0].mxu0 %v1477
    %v1801 = vpop.f32.mrb[0].mxu0
    %v1802 = vadd.f32 0.0, %v1801
    %v1803 = vpop.f32.mrb[0].mxu0
    %1804 = vmatprep.mubr.f32.mxu0 0.0
    %1805 = vmatmul.mubr.f32.gmra.mrb[0].mxu0 %v1480
    %v1806 = vpop.f32.mrb[0].mxu0
    %v1807 = vadd.f32 0.0, %v1806
    %v1808 = vpop.f32.mrb[0].mxu0
    %1809 = vmatprep.mubr.f32.mxu0 0.0
    %1810 = vmatmul.mubr.f32.gmra.mrb[0].mxu0 %v1483
    %v1811 = vpop.f32.mrb[0].mxu0
    %v1812 = vadd.f32 0.0, %v1811
    %v1813 = vpop.f32.mrb[0].mxu0
    %1814 = vmatprep.mubr.f32.mxu0 0.0
    %1815 = vmatmul.mubr.f32.gmra.mrb[0].mxu0 %v1486
    %v1816 = vpop.f32.mrb[0].mxu0
    %v1817 = vadd.f32 0.0, %v1816
    %v1818 = vpop.f32.mrb[0].mxu0
    %1819 = vmatprep.mubr.f32.mxu0 0.0
    %1820 = vmatmul.mubr.f32.gmra.mrb[0].mxu0 %v1489
    %v1821 = vpop.f32.mrb[0].mxu0
    %v1822 = vadd.f32 0.0, %v1821
    %v1823 = vpop.f32.mrb[0].mxu0
    %1824 = vmatprep.mubr.f32.mxu0 0.0
    %1825 = vmatmul.mubr.f32.gmra.mrb[0].mxu0 %v1492
    %v1826 = vpop.f32.mrb[0].mxu0
    %v1827 = vadd.f32 0.0, %v1826
    %v1828 = vpop.f32.mrb[0].mxu0
    %1829 = vmatprep.mubr.f32.mxu0 0.0
    %1830 = vmatmul.mubr.f32.gmra.mrb[0].mxu0 %v1495
    %v1831 = vpop.f32.mrb[0].mxu0
    %v1832 = vadd.f32 0.0, %v1831
    %v1833 = vpop.f32.mrb[0].mxu0
    %1834 = vmatprep.mubr.f32.mxu0 0.0
    %1835 = vmatmul.mubr.f32.gmra.mrb[0].mxu0 %v1498
    %v1836 = vpop.f32.mrb[0].mxu0
    %v1837 = vadd.f32 0.0, %v1836
    %v1838 = vpop.f32.mrb[0].mxu0
    %1839 = vmatprep.mubr.f32.mxu0 0.0
    %1840 = vmatmul.mubr.f32.gmra.mrb[0].mxu0 %v1501
    %v1841 = vpop.f32.mrb[0].mxu0
    %v1842 = vadd.f32 0.0, %v1841
    %v1843 = vpop.f32.mrb[0].mxu0
    %1844 = vmatprep.mubr.f32.mxu0 0.0
    %1845 = vmatmul.mubr.f32.gmra.mrb[0].mxu0 %v1504
    %v1846 = vpop.f32.mrb[0].mxu0
    %v1847 = vadd.f32 0.0, %v1846
    %v1848 = vpop.f32.mrb[0].mxu0
    %1849 = vmatprep.mubr.f32.mxu0 0.0
    %1850 = vmatmul.mubr.f32.gmra.mrb[0].mxu0 %v1507
    %v1851 = vpop.f32.mrb[0].mxu0
    %v1852 = vadd.f32 0.0, %v1851
    %v1853 = vpop.f32.mrb[0].mxu0
    %1854 = vmatprep.mubr.f32.mxu0 0.0
    %1855 = vmatmul.mubr.f32.gmra.mrb[0].mxu0 %v1510
    %v1856 = vpop.f32.mrb[0].mxu0
    %v1857 = vadd.f32 0.0, %v1856
    %v1858 = vpop.f32.mrb[0].mxu0
    %1859 = vmatprep.mubr.f32.mxu0 0.0
    %1860 = vmatmul.mubr.f32.gmra.mrb[0].mxu0 %v1513
    %v1861 = vpop.f32.mrb[0].mxu0
    %v1862 = vadd.f32 0.0, %v1861
    %v1863 = vpop.f32.mrb[0].mxu0
    %1864 = vmatprep.mubr.f32.mxu0 0.0
    %1865 = vmatmul.mubr.f32.gmra.mrb[0].mxu0 %v1516
    %v1866 = vpop.f32.mrb[0].mxu0
    %v1867 = vadd.f32 0.0, %v1866
    %v1868 = vpop.f32.mrb[0].mxu0
    %1869 = vmatprep.mubr.f32.mxu0 0.0
    %1870 = vmatmul.mubr.f32.gmra.mrb[0].mxu0 %v1519
    %v1871 = vpop.f32.mrb[0].mxu0
    %v1872 = vadd.f32 0.0, %v1871
    %v1873 = vpop.f32.mrb[0].mxu0
    %1874 = vmatprep.mubr.f32.mxu0 0.0
    %1875 = vmatmul.mubr.f32.gmra.mrb[0].mxu0 %v1522
    %v1876 = vpop.f32.mrb[0].mxu0
    %v1877 = vadd.f32 0.0, %v1876
    %v1878 = vpop.f32.mrb[0].mxu0
    %1879 = vmatprep.mubr.f32.mxu0 0.0
    %1880 = vmatmul.mubr.f32.gmra.mrb[0].mxu0 %v1525
    %v1881 = vpop.f32.mrb[0].mxu0
    %v1882 = vadd.f32 0.0, %v1881
    %v1883 = vpop.f32.mrb[0].mxu0
    %1884 = vmatprep.mubr.f32.mxu0 0.0
    %1885 = vmatmul.mubr.f32.gmra.mrb[0].mxu0 %v1528
    %v1886 = vpop.f32.mrb[0].mxu0
    %v1887 = vadd.f32 0.0, %v1886
    %v1888 = vpop.f32.mrb[0].mxu0
    %1889 = vmatprep.mubr.f32.mxu0 0.0
    %1890 = vmatmul.mubr.f32.gmra.mrb[0].mxu0 %v1531
    %v1891 = vpop.f32.mrb[0].mxu0
    %v1892 = vadd.f32 0.0, %v1891
    %v1893 = vpop.f32.mrb[0].mxu0
    %1894 = vmatprep.mubr.f32.mxu0 0.0
    %1895 = vmatmul.mubr.f32.gmra.mrb[0].mxu0 %v1534
    %v1896 = vpop.f32.mrb[0].mxu0
    %v1897 = vadd.f32 0.0, %v1896
    %v1898 = vpop.f32.mrb[0].mxu0
    %1899 = vmatprep.mubr.f32.mxu0 0.0
    %1900 = vmatmul.mubr.f32.gmra.mrb[0].mxu0 %v1537
    %v1901 = vpop.f32.mrb[0].mxu0
    %v1902 = vadd.f32 0.0, %v1901
    %v1903 = vpop.f32.mrb[0].mxu0
    %1904 = vmatprep.mubr.f32.mxu0 0.0
    %1905 = vmatmul.mubr.f32.gmra.mrb[0].mxu0 %v1540
    %v1906 = vpop.f32.mrb[0].mxu0
    %v1907 = vadd.f32 0.0, %v1906
    %v1908 = vpop.f32.mrb[0].mxu0
    %1909 = vmatprep.mubr.f32.mxu0 0.0
    %1910 = vmatmul.mubr.f32.gmra.mrb[0].mxu0 %v1543
    %v1911 = vpop.f32.mrb[0].mxu0
    %v1912 = vadd.f32 0.0, %v1911
    %v1913 = vpop.f32.mrb[0].mxu0
    %1914 = vmatprep.mubr.f32.mxu0 0.0
    %1915 = vmatmul.mubr.f32.gmra.mrb[0].mxu0 %v1546
    %v1916 = vpop.f32.mrb[0].mxu0
    %v1917 = vadd.f32 0.0, %v1916
    %v1918 = vpop.f32.mrb[0].mxu0
    %1919 = vmatprep.mubr.f32.mxu0 0.0
    %1920 = vmatmul.mubr.f32.gmra.mrb[0].mxu0 %v1549
    %v1921 = vpop.f32.mrb[0].mxu0
    %v1922 = vadd.f32 0.0, %v1921
    %v1923 = vpop.f32.mrb[0].mxu0
    %1924 = vmatprep.mubr.f32.mxu0 0.0
    %1925 = vmatmul.mubr.f32.gmra.mrb[0].mxu0 %v1552
    %v1926 = vpop.f32.mrb[0].mxu0
    %v1927 = vadd.f32 0.0, %v1926
    %v1928 = vpop.f32.mrb[0].mxu0
    %1929 = vmatprep.mubr.f32.mxu0 0.0
    %1930 = vmatmul.mubr.f32.gmra.mrb[0].mxu0 %v1555
    %v1931 = vpop.f32.mrb[0].mxu0
    %v1932 = vadd.f32 0.0, %v1931
    %v1933 = vpop.f32.mrb[0].mxu0
    %1934 = vmatprep.mubr.f32.mxu0 0.0
    %1935 = vmatmul.mubr.f32.gmra.mrb[0].mxu0 %v1558
    %v1936 = vpop.f32.mrb[0].mxu0
    %v1937 = vadd.f32 0.0, %v1936
    %v1938 = vpop.f32.mrb[0].mxu0
    %1939 = vmatprep.mubr.f32.mxu0 0.0
    %1940 = vmatmul.mubr.f32.gmra.mrb[0].mxu0 %v1561
    %v1941 = vpop.f32.mrb[0].mxu0
    %v1942 = vadd.f32 0.0, %v1941
    %v1943 = vpop.f32.mrb[0].mxu0
    %1944 = vmatprep.mubr.f32.mxu0 0.0
    %1945 = vmatmul.mubr.f32.gmra.mrb[0].mxu0 %v1564
    %v1946 = vpop.f32.mrb[0].mxu0
    %v1947 = vadd.f32 0.0, %v1946
    %v1948 = vpop.f32.mrb[0].mxu0
    %1949 = vmatprep.mubr.f32.mxu0 0.0
    %1950 = vmatmul.mubr.f32.gmra.mrb[0].mxu0 %v1567
    %v1951 = vpop.f32.mrb[0].mxu0
    %v1952 = vadd.f32 0.0, %v1951
    %v1953 = vpop.f32.mrb[0].mxu0
    %1954 = vmatprep.mubr.f32.mxu0 0.0
    %1955 = vmatmul.mubr.f32.gmra.mrb[0].mxu0 %v1570
    %v1956 = vpop.f32.mrb[0].mxu0
    %v1957 = vadd.f32 0.0, %v1956
    %v1958 = vpop.f32.mrb[0].mxu0
    %1959 = vdwg.mxu0
    %v1960 = vadd.f32 %v996, %v1642
    %v1961 = vadd.f32 %v1001, %v1647
    %v1962 = vadd.f32 %v1006, %v1652
    %v1963 = vadd.f32 %v1011, %v1657
    %v1964 = vadd.f32 %v1016, %v1662
    %v1965 = vadd.f32 %v1021, %v1667
    %v1966 = vadd.f32 %v1026, %v1672
    %v1967 = vadd.f32 %v1031, %v1677
    %v1968 = vadd.f32 %v1036, %v1682
    %v1969 = vadd.f32 %v1041, %v1687
    %v1970 = vadd.f32 %v1046, %v1692
    %v1971 = vadd.f32 %v1051, %v1697
    %v1972 = vadd.f32 %v1056, %v1702
    %v1973 = vadd.f32 %v1061, %v1707
    %v1974 = vadd.f32 %v1066, %v1712
    %v1975 = vadd.f32 %v1071, %v1717
    %v1976 = vadd.f32 %v1076, %v1722
    %v1977 = vadd.f32 %v1081, %v1727
    %v1978 = vadd.f32 %v1086, %v1732
    %v1979 = vadd.f32 %v1091, %v1737
    %v1980 = vadd.f32 %v1096, %v1742
    %v1981 = vadd.f32 %v1101, %v1747
    %v1982 = vadd.f32 %v1106, %v1752
    %v1983 = vadd.f32 %v1111, %v1757
    %v1984 = vadd.f32 %v1116, %v1762
    %v1985 = vadd.f32 %v1121, %v1767
    %v1986 = vadd.f32 %v1126, %v1772
    %v1987 = vadd.f32 %v1131, %v1777
    %v1988 = vadd.f32 %v1136, %v1782
    %v1989 = vadd.f32 %v1141, %v1787
    %v1990 = vadd.f32 %v1146, %v1792
    %v1991 = vadd.f32 %v1151, %v1797
    %v1992 = vadd.f32 %v1156, %v1802
    %v1993 = vadd.f32 %v1161, %v1807
    %v1994 = vadd.f32 %v1166, %v1812
    %v1995 = vadd.f32 %v1171, %v1817
    %v1996 = vadd.f32 %v1176, %v1822
    %v1997 = vadd.f32 %v1181, %v1827
    %v1998 = vadd.f32 %v1186, %v1832
    %v1999 = vadd.f32 %v1191, %v1837
    %v2000 = vadd.f32 %v1196, %v1842
    %v2001 = vadd.f32 %v1201, %v1847
    %v2002 = vadd.f32 %v1206, %v1852
    %v2003 = vadd.f32 %v1211, %v1857
    %v2004 = vadd.f32 %v1216, %v1862
    %v2005 = vadd.f32 %v1221, %v1867
    %v2006 = vadd.f32 %v1226, %v1872
    %v2007 = vadd.f32 %v1231, %v1877
    %v2008 = vadd.f32 %v1236, %v1882
    %v2009 = vadd.f32 %v1241, %v1887
    %v2010 = vadd.f32 %v1246, %v1892
    %v2011 = vadd.f32 %v1251, %v1897
    %v2012 = vadd.f32 %v1256, %v1902
    %v2013 = vadd.f32 %v1261, %v1907
    %v2014 = vadd.f32 %v1266, %v1912
    %v2015 = vadd.f32 %v1271, %v1917
    %v2016 = vadd.f32 %v1276, %v1922
    %v2017 = vadd.f32 %v1281, %v1927
    %v2018 = vadd.f32 %v1286, %v1932
    %v2019 = vadd.f32 %v1291, %v1937
    %v2020 = vadd.f32 %v1296, %v1942
    %v2021 = vadd.f32 %v1301, %v1947
    %v2022 = vadd.f32 %v1306, %v1952
    %v2023 = vadd.f32 %v1311, %v1957
    %s2024 = scalar_lea.vmem %s0, 24
    %v2025 = vld [vmem:[%s2024] sm:$0xff]
    %v2026 = vld [vmem:[%s2024 + $0x8] sm:$0xff]
    %v2027 = vld [vmem:[%s2024 + $0x18] sm:$0xff]
    %v2028 = vld [vmem:[%s2024 + $0x20] sm:$0xff]
    %v2029 = vld [vmem:[%s2024 + $0x30] sm:$0xff]
    %v2030 = vld [vmem:[%s2024 + $0x38] sm:$0xff]
    %v2031 = vld [vmem:[%s2024 + $0x48] sm:$0xff]
    %v2032 = vld [vmem:[%s2024 + $0x50] sm:$0xff]
    %v2033 = vld [vmem:[%s2024 + $0x60] sm:$0xff]
    %v2034 = vld [vmem:[%s2024 + $0x68] sm:$0xff]
    %v2035 = vld [vmem:[%s2024 + $0x78] sm:$0xff]
    %v2036 = vld [vmem:[%s2024 + $0x80] sm:$0xff]
    %v2037 = vld [vmem:[%s2024 + $0x90] sm:$0xff]
    %v2038 = vld [vmem:[%s2024 + $0x98] sm:$0xff]
    %v2039 = vld [vmem:[%s2024 + $0xa8] sm:$0xff]
    %v2040 = vld [vmem:[%s2024 + $0xb0] sm:$0xff]
    %v2041 = vld [vmem:[%s2024 + $0xc0] sm:$0xff]
    %v2042 = vld [vmem:[%s2024 + $0xc8] sm:$0xff]
    %v2043 = vld [vmem:[%s2024 + $0xd8] sm:$0xff]
    %v2044 = vld [vmem:[%s2024 + $0xe0] sm:$0xff]
    %v2045 = vld [vmem:[%s2024 + $0xf0] sm:$0xff]
    %v2046 = vld [vmem:[%s2024 + $0xf8] sm:$0xff]
    %v2047 = vld [vmem:[%s2024 + $0x108] sm:$0xff]
    %v2048 = vld [vmem:[%s2024 + $0x110] sm:$0xff]
    %v2049 = vld [vmem:[%s2024 + $0x120] sm:$0xff]
    %v2050 = vld [vmem:[%s2024 + $0x128] sm:$0xff]
    %v2051 = vld [vmem:[%s2024 + $0x138] sm:$0xff]
    %v2052 = vld [vmem:[%s2024 + $0x140] sm:$0xff]
    %v2053 = vld [vmem:[%s2024 + $0x150] sm:$0xff]
    %v2054 = vld [vmem:[%s2024 + $0x158] sm:$0xff]
    %v2055 = vld [vmem:[%s2024 + $0x168] sm:$0xff]
    %v2056 = vld [vmem:[%s2024 + $0x170] sm:$0xff]
    %v2057 = vld [vmem:[%s2024 + $0x1b0] sm:$0xff]
    %v2058 = vld [vmem:[%s2024 + $0x1b8] sm:$0xff]
    %v2059 = vld [vmem:[%s2024 + $0x1c8] sm:$0xff]
    %v2060 = vld [vmem:[%s2024 + $0x1d0] sm:$0xff]
    %v2061 = vld [vmem:[%s2024 + $0x1e0] sm:$0xff]
    %v2062 = vld [vmem:[%s2024 + $0x1e8] sm:$0xff]
    %v2063 = vld [vmem:[%s2024 + $0x1f8] sm:$0xff]
    %v2064 = vld [vmem:[%s2024 + $0x200] sm:$0xff]
    %v2065 = vld [vmem:[%s2024 + $0x210] sm:$0xff]
    %v2066 = vld [vmem:[%s2024 + $0x218] sm:$0xff]
    %v2067 = vld [vmem:[%s2024 + $0x228] sm:$0xff]
    %v2068 = vld [vmem:[%s2024 + $0x230] sm:$0xff]
    %v2069 = vld [vmem:[%s2024 + $0x240] sm:$0xff]
    %v2070 = vld [vmem:[%s2024 + $0x248] sm:$0xff]
    %v2071 = vld [vmem:[%s2024 + $0x258] sm:$0xff]
    %v2072 = vld [vmem:[%s2024 + $0x260] sm:$0xff]
    %v2073 = vld [vmem:[%s2024 + $0x270] sm:$0xff]
    %v2074 = vld [vmem:[%s2024 + $0x278] sm:$0xff]
    %v2075 = vld [vmem:[%s2024 + $0x288] sm:$0xff]
    %v2076 = vld [vmem:[%s2024 + $0x290] sm:$0xff]
    %v2077 = vld [vmem:[%s2024 + $0x2a0] sm:$0xff]
    %v2078 = vld [vmem:[%s2024 + $0x2a8] sm:$0xff]
    %v2079 = vld [vmem:[%s2024 + $0x2b8] sm:$0xff]
    %v2080 = vld [vmem:[%s2024 + $0x2c0] sm:$0xff]
    %v2081 = vld [vmem:[%s2024 + $0x2d0] sm:$0xff]
    %v2082 = vld [vmem:[%s2024 + $0x2d8] sm:$0xff]
    %v2083 = vld [vmem:[%s2024 + $0x2e8] sm:$0xff]
    %v2084 = vld [vmem:[%s2024 + $0x2f0] sm:$0xff]
    %v2085 = vld [vmem:[%s2024 + $0x300] sm:$0xff]
    %v2086 = vld [vmem:[%s2024 + $0x308] sm:$0xff]
    %v2087 = vld [vmem:[%s2024 + $0x318] sm:$0xff]
    %v2088 = vld [vmem:[%s2024 + $0x320] sm:$0xff]
    %s2089 = scalar_lea.vmem %s1, 12
    %v2090 = vld [vmem:[%s2089] sm:$0xf]
    %v2092 = vsel %vm152, %v2025, 0
    %v2095 = vsel %vm152, %v2026, 0
    %v2098 = vsel %vm152, %v2027, 0
    %v2101 = vsel %vm152, %v2028, 0
    %v2104 = vsel %vm152, %v2029, 0
    %v2107 = vsel %vm152, %v2030, 0
    %v2110 = vsel %vm152, %v2031, 0
    %v2113 = vsel %vm152, %v2032, 0
    %v2116 = vsel %vm152, %v2033, 0
    %v2119 = vsel %vm152, %v2034, 0
    %v2122 = vsel %vm152, %v2035, 0
    %v2125 = vsel %vm152, %v2036, 0
    %v2128 = vsel %vm152, %v2037, 0
    %v2131 = vsel %vm152, %v2038, 0
    %v2134 = vsel %vm152, %v2039, 0
    %v2137 = vsel %vm152, %v2040, 0
    %v2140 = vsel %vm152, %v2041, 0
    %v2143 = vsel %vm152, %v2042, 0
    %v2146 = vsel %vm152, %v2043, 0
    %v2149 = vsel %vm152, %v2044, 0
    %v2152 = vsel %vm152, %v2045, 0
    %v2155 = vsel %vm152, %v2046, 0
    %v2158 = vsel %vm152, %v2047, 0
    %v2161 = vsel %vm152, %v2048, 0
    %v2164 = vsel %vm152, %v2049, 0
    %v2167 = vsel %vm152, %v2050, 0
    %v2170 = vsel %vm152, %v2051, 0
    %v2173 = vsel %vm152, %v2052, 0
    %v2176 = vsel %vm152, %v2053, 0
    %v2179 = vsel %vm152, %v2054, 0
    %v2182 = vsel %vm152, %v2055, 0
    %v2185 = vsel %vm152, %v2056, 0
    %v2188 = vsel %vm152, %v2057, 0
    %v2191 = vsel %vm152, %v2058, 0
    %v2194 = vsel %vm152, %v2059, 0
    %v2197 = vsel %vm152, %v2060, 0
    %v2200 = vsel %vm152, %v2061, 0
    %v2203 = vsel %vm152, %v2062, 0
    %v2206 = vsel %vm152, %v2063, 0
    %v2209 = vsel %vm152, %v2064, 0
    %v2212 = vsel %vm152, %v2065, 0
    %v2215 = vsel %vm152, %v2066, 0
    %v2218 = vsel %vm152, %v2067, 0
    %v2221 = vsel %vm152, %v2068, 0
    %v2224 = vsel %vm152, %v2069, 0
    %v2227 = vsel %vm152, %v2070, 0
    %v2230 = vsel %vm152, %v2071, 0
    %v2233 = vsel %vm152, %v2072, 0
    %v2236 = vsel %vm152, %v2073, 0
    %v2239 = vsel %vm152, %v2074, 0
    %v2242 = vsel %vm152, %v2075, 0
    %v2245 = vsel %vm152, %v2076, 0
    %v2248 = vsel %vm152, %v2077, 0
    %v2251 = vsel %vm152, %v2078, 0
    %v2254 = vsel %vm152, %v2079, 0
    %v2257 = vsel %vm152, %v2080, 0
    %v2260 = vsel %vm152, %v2081, 0
    %v2263 = vsel %vm152, %v2082, 0
    %v2266 = vsel %vm152, %v2083, 0
    %v2269 = vsel %vm152, %v2084, 0
    %v2272 = vsel %vm152, %v2085, 0
    %v2275 = vsel %vm152, %v2086, 0
    %v2278 = vsel %vm152, %v2087, 0
    %v2281 = vsel %vm152, %v2088, 0
    %v2284 = vsel %vm345, %v2090, 0
    %2286 = vmatprep.subr.mxu0 0.0
    %2287 = vmatpush1.msra.mxu0 %v2284
    %2288 = vmatprep.subr.mxu0 0.0
    %2289 = vmatpush1.msra.mxu0 0.0
    %2290 = vmatprep.subr.mxu0 0.0
    %2291 = vmatpush1.msra.mxu0 0.0
    %2292 = vmatprep.subr.mxu0 0.0
    %2293 = vmatpush1.msra.mxu0 0.0
    %2294 = vmatprep.subr.mxu0 0.0
    %2295 = vmatpush1.msra.mxu0 0.0
    %2296 = vmatprep.subr.mxu0 0.0
    %2297 = vmatpush1.msra.mxu0 0.0
    %2298 = vmatprep.subr.mxu0 0.0
    %2299 = vmatpush1.msra.mxu0 0.0
    %2300 = vmatprep.subr.mxu0 0.0
    %2301 = vmatpush1.msra.mxu0 0.0
    %2302 = vmatprep.subr.mxu0 0.0
    %2303 = vmatpush1.msra.mxu0 0.0
    %2304 = vmatprep.subr.mxu0 0.0
    %2305 = vmatpush1.msra.mxu0 0.0
    %2306 = vmatprep.subr.mxu0 0.0
    %2307 = vmatpush1.msra.mxu0 0.0
    %2308 = vmatprep.subr.mxu0 0.0
    %2309 = vmatpush1.msra.mxu0 0.0
    %2310 = vmatprep.subr.mxu0 0.0
    %2311 = vmatpush1.msra.mxu0 0.0
    %2312 = vmatprep.subr.mxu0 0.0
    %2313 = vmatpush1.msra.mxu0 0.0
    %2314 = vmatprep.subr.mxu0 0.0
    %2315 = vmatpush1.msra.mxu0 0.0
    %2316 = vmatprep.subr.mxu0 0.0
    %2317 = vmatpush1.msra.mxu0 0.0
    %2318 = vmatprep.subr.mxu0 0.0
    %2319 = vmatpush1.msra.mxu0 0.0
    %2320 = vmatprep.subr.mxu0 0.0
    %2321 = vmatpush1.msra.mxu0 0.0
    %2322 = vmatprep.subr.mxu0 0.0
    %2323 = vmatpush1.msra.mxu0 0.0
    %2324 = vmatprep.subr.mxu0 0.0
    %2325 = vmatpush1.msra.mxu0 0.0
    %2326 = vmatprep.subr.mxu0 0.0
    %2327 = vmatpush1.msra.mxu0 0.0
    %2328 = vmatprep.subr.mxu0 0.0
    %2329 = vmatpush1.msra.mxu0 0.0
    %2330 = vmatprep.subr.mxu0 0.0
    %2331 = vmatpush1.msra.mxu0 0.0
    %2332 = vmatprep.subr.mxu0 0.0
    %2333 = vmatpush1.msra.mxu0 0.0
    %2334 = vmatprep.subr.mxu0 0.0
    %2335 = vmatpush1.msra.mxu0 0.0
    %2336 = vmatprep.subr.mxu0 0.0
    %2337 = vmatpush1.msra.mxu0 0.0
    %2338 = vmatprep.subr.mxu0 0.0
    %2339 = vmatpush1.msra.mxu0 0.0
    %2340 = vmatprep.subr.mxu0 0.0
    %2341 = vmatpush1.msra.mxu0 0.0
    %2342 = vmatprep.subr.mxu0 0.0
    %2343 = vmatpush1.msra.mxu0 0.0
    %2344 = vmatprep.subr.mxu0 0.0
    %2345 = vmatpush1.msra.mxu0 0.0
    %2346 = vmatprep.subr.mxu0 0.0
    %2347 = vmatpush1.msra.mxu0 0.0
    %2348 = vmatprep.subr.mxu0 0.0
    %2349 = vmatpush1.msra.mxu0 0.0
    %2350 = vmatprep.mubr.f32.mxu0 0.0
    %2351 = vmatmul.mubr.f32.gmra.mrb[0].mxu0 %v2092
    %v2352 = vpop.f32.mrb[0].mxu0
    %v2353 = vadd.f32 0.0, %v2352
    %v2354 = vpop.f32.mrb[0].mxu0
    %2355 = vmatprep.mubr.f32.mxu0 0.0
    %2356 = vmatmul.mubr.f32.gmra.mrb[0].mxu0 %v2095
    %v2357 = vpop.f32.mrb[0].mxu0
    %v2358 = vadd.f32 0.0, %v2357
    %v2359 = vpop.f32.mrb[0].mxu0
    %2360 = vmatprep.mubr.f32.mxu0 0.0
    %2361 = vmatmul.mubr.f32.gmra.mrb[0].mxu0 %v2098
    %v2362 = vpop.f32.mrb[0].mxu0
    %v2363 = vadd.f32 0.0, %v2362
    %v2364 = vpop.f32.mrb[0].mxu0
    %2365 = vmatprep.mubr.f32.mxu0 0.0
    %2366 = vmatmul.mubr.f32.gmra.mrb[0].mxu0 %v2101
    %v2367 = vpop.f32.mrb[0].mxu0
    %v2368 = vadd.f32 0.0, %v2367
    %v2369 = vpop.f32.mrb[0].mxu0
    %2370 = vmatprep.mubr.f32.mxu0 0.0
    %2371 = vmatmul.mubr.f32.gmra.mrb[0].mxu0 %v2104
    %v2372 = vpop.f32.mrb[0].mxu0
    %v2373 = vadd.f32 0.0, %v2372
    %v2374 = vpop.f32.mrb[0].mxu0
    %2375 = vmatprep.mubr.f32.mxu0 0.0
    %2376 = vmatmul.mubr.f32.gmra.mrb[0].mxu0 %v2107
    %v2377 = vpop.f32.mrb[0].mxu0
    %v2378 = vadd.f32 0.0, %v2377
    %v2379 = vpop.f32.mrb[0].mxu0
    %2380 = vmatprep.mubr.f32.mxu0 0.0
    %2381 = vmatmul.mubr.f32.gmra.mrb[0].mxu0 %v2110
    %v2382 = vpop.f32.mrb[0].mxu0
    %v2383 = vadd.f32 0.0, %v2382
    %v2384 = vpop.f32.mrb[0].mxu0
    %2385 = vmatprep.mubr.f32.mxu0 0.0
    %2386 = vmatmul.mubr.f32.gmra.mrb[0].mxu0 %v2113
    %v2387 = vpop.f32.mrb[0].mxu0
    %v2388 = vadd.f32 0.0, %v2387
    %v2389 = vpop.f32.mrb[0].mxu0
    %2390 = vmatprep.mubr.f32.mxu0 0.0
    %2391 = vmatmul.mubr.f32.gmra.mrb[0].mxu0 %v2116
    %v2392 = vpop.f32.mrb[0].mxu0
    %v2393 = vadd.f32 0.0, %v2392
    %v2394 = vpop.f32.mrb[0].mxu0
    %2395 = vmatprep.mubr.f32.mxu0 0.0
    %2396 = vmatmul.mubr.f32.gmra.mrb[0].mxu0 %v2119
    %v2397 = vpop.f32.mrb[0].mxu0
    %v2398 = vadd.f32 0.0, %v2397
    %v2399 = vpop.f32.mrb[0].mxu0
    %2400 = vmatprep.mubr.f32.mxu0 0.0
    %2401 = vmatmul.mubr.f32.gmra.mrb[0].mxu0 %v2122
    %v2402 = vpop.f32.mrb[0].mxu0
    %v2403 = vadd.f32 0.0, %v2402
    %v2404 = vpop.f32.mrb[0].mxu0
    %2405 = vmatprep.mubr.f32.mxu0 0.0
    %2406 = vmatmul.mubr.f32.gmra.mrb[0].mxu0 %v2125
    %v2407 = vpop.f32.mrb[0].mxu0
    %v2408 = vadd.f32 0.0, %v2407
    %v2409 = vpop.f32.mrb[0].mxu0
    %2410 = vmatprep.mubr.f32.mxu0 0.0
    %2411 = vmatmul.mubr.f32.gmra.mrb[0].mxu0 %v2128
    %v2412 = vpop.f32.mrb[0].mxu0
    %v2413 = vadd.f32 0.0, %v2412
    %v2414 = vpop.f32.mrb[0].mxu0
    %2415 = vmatprep.mubr.f32.mxu0 0.0
    %2416 = vmatmul.mubr.f32.gmra.mrb[0].mxu0 %v2131
    %v2417 = vpop.f32.mrb[0].mxu0
    %v2418 = vadd.f32 0.0, %v2417
    %v2419 = vpop.f32.mrb[0].mxu0
    %2420 = vmatprep.mubr.f32.mxu0 0.0
    %2421 = vmatmul.mubr.f32.gmra.mrb[0].mxu0 %v2134
    %v2422 = vpop.f32.mrb[0].mxu0
    %v2423 = vadd.f32 0.0, %v2422
    %v2424 = vpop.f32.mrb[0].mxu0
    %2425 = vmatprep.mubr.f32.mxu0 0.0
    %2426 = vmatmul.mubr.f32.gmra.mrb[0].mxu0 %v2137
    %v2427 = vpop.f32.mrb[0].mxu0
    %v2428 = vadd.f32 0.0, %v2427
    %v2429 = vpop.f32.mrb[0].mxu0
    %2430 = vmatprep.mubr.f32.mxu0 0.0
    %2431 = vmatmul.mubr.f32.gmra.mrb[0].mxu0 %v2140
    %v2432 = vpop.f32.mrb[0].mxu0
    %v2433 = vadd.f32 0.0, %v2432
    %v2434 = vpop.f32.mrb[0].mxu0
    %2435 = vmatprep.mubr.f32.mxu0 0.0
    %2436 = vmatmul.mubr.f32.gmra.mrb[0].mxu0 %v2143
    %v2437 = vpop.f32.mrb[0].mxu0
    %v2438 = vadd.f32 0.0, %v2437
    %v2439 = vpop.f32.mrb[0].mxu0
    %2440 = vmatprep.mubr.f32.mxu0 0.0
    %2441 = vmatmul.mubr.f32.gmra.mrb[0].mxu0 %v2146
    %v2442 = vpop.f32.mrb[0].mxu0
    %v2443 = vadd.f32 0.0, %v2442
    %v2444 = vpop.f32.mrb[0].mxu0
    %2445 = vmatprep.mubr.f32.mxu0 0.0
    %2446 = vmatmul.mubr.f32.gmra.mrb[0].mxu0 %v2149
    %v2447 = vpop.f32.mrb[0].mxu0
    %v2448 = vadd.f32 0.0, %v2447
    %v2449 = vpop.f32.mrb[0].mxu0
    %2450 = vmatprep.mubr.f32.mxu0 0.0
    %2451 = vmatmul.mubr.f32.gmra.mrb[0].mxu0 %v2152
    %v2452 = vpop.f32.mrb[0].mxu0
    %v2453 = vadd.f32 0.0, %v2452
    %v2454 = vpop.f32.mrb[0].mxu0
    %2455 = vmatprep.mubr.f32.mxu0 0.0
    %2456 = vmatmul.mubr.f32.gmra.mrb[0].mxu0 %v2155
    %v2457 = vpop.f32.mrb[0].mxu0
    %v2458 = vadd.f32 0.0, %v2457
    %v2459 = vpop.f32.mrb[0].mxu0
    %2460 = vmatprep.mubr.f32.mxu0 0.0
    %2461 = vmatmul.mubr.f32.gmra.mrb[0].mxu0 %v2158
    %v2462 = vpop.f32.mrb[0].mxu0
    %v2463 = vadd.f32 0.0, %v2462
    %v2464 = vpop.f32.mrb[0].mxu0
    %2465 = vmatprep.mubr.f32.mxu0 0.0
    %2466 = vmatmul.mubr.f32.gmra.mrb[0].mxu0 %v2161
    %v2467 = vpop.f32.mrb[0].mxu0
    %v2468 = vadd.f32 0.0, %v2467
    %v2469 = vpop.f32.mrb[0].mxu0
    %2470 = vmatprep.mubr.f32.mxu0 0.0
    %2471 = vmatmul.mubr.f32.gmra.mrb[0].mxu0 %v2164
    %v2472 = vpop.f32.mrb[0].mxu0
    %v2473 = vadd.f32 0.0, %v2472
    %v2474 = vpop.f32.mrb[0].mxu0
    %2475 = vmatprep.mubr.f32.mxu0 0.0
    %2476 = vmatmul.mubr.f32.gmra.mrb[0].mxu0 %v2167
    %v2477 = vpop.f32.mrb[0].mxu0
    %v2478 = vadd.f32 0.0, %v2477
    %v2479 = vpop.f32.mrb[0].mxu0
    %2480 = vmatprep.mubr.f32.mxu0 0.0
    %2481 = vmatmul.mubr.f32.gmra.mrb[0].mxu0 %v2170
    %v2482 = vpop.f32.mrb[0].mxu0
    %v2483 = vadd.f32 0.0, %v2482
    %v2484 = vpop.f32.mrb[0].mxu0
    %2485 = vmatprep.mubr.f32.mxu0 0.0
    %2486 = vmatmul.mubr.f32.gmra.mrb[0].mxu0 %v2173
    %v2487 = vpop.f32.mrb[0].mxu0
    %v2488 = vadd.f32 0.0, %v2487
    %v2489 = vpop.f32.mrb[0].mxu0
    %2490 = vmatprep.mubr.f32.mxu0 0.0
    %2491 = vmatmul.mubr.f32.gmra.mrb[0].mxu0 %v2176
    %v2492 = vpop.f32.mrb[0].mxu0
    %v2493 = vadd.f32 0.0, %v2492
    %v2494 = vpop.f32.mrb[0].mxu0
    %2495 = vmatprep.mubr.f32.mxu0 0.0
    %2496 = vmatmul.mubr.f32.gmra.mrb[0].mxu0 %v2179
    %v2497 = vpop.f32.mrb[0].mxu0
    %v2498 = vadd.f32 0.0, %v2497
    %v2499 = vpop.f32.mrb[0].mxu0
    %2500 = vmatprep.mubr.f32.mxu0 0.0
    %2501 = vmatmul.mubr.f32.gmra.mrb[0].mxu0 %v2182
    %v2502 = vpop.f32.mrb[0].mxu0
    %v2503 = vadd.f32 0.0, %v2502
    %v2504 = vpop.f32.mrb[0].mxu0
    %2505 = vmatprep.mubr.f32.mxu0 0.0
    %2506 = vmatmul.mubr.f32.gmra.mrb[0].mxu0 %v2185
    %v2507 = vpop.f32.mrb[0].mxu0
    %v2508 = vadd.f32 0.0, %v2507
    %v2509 = vpop.f32.mrb[0].mxu0
    %2510 = vmatprep.mubr.f32.mxu0 0.0
    %2511 = vmatmul.mubr.f32.gmra.mrb[0].mxu0 %v2188
    %v2512 = vpop.f32.mrb[0].mxu0
    %v2513 = vadd.f32 0.0, %v2512
    %v2514 = vpop.f32.mrb[0].mxu0
    %2515 = vmatprep.mubr.f32.mxu0 0.0
    %2516 = vmatmul.mubr.f32.gmra.mrb[0].mxu0 %v2191
    %v2517 = vpop.f32.mrb[0].mxu0
    %v2518 = vadd.f32 0.0, %v2517
    %v2519 = vpop.f32.mrb[0].mxu0
    %2520 = vmatprep.mubr.f32.mxu0 0.0
    %2521 = vmatmul.mubr.f32.gmra.mrb[0].mxu0 %v2194
    %v2522 = vpop.f32.mrb[0].mxu0
    %v2523 = vadd.f32 0.0, %v2522
    %v2524 = vpop.f32.mrb[0].mxu0
    %2525 = vmatprep.mubr.f32.mxu0 0.0
    %2526 = vmatmul.mubr.f32.gmra.mrb[0].mxu0 %v2197
    %v2527 = vpop.f32.mrb[0].mxu0
    %v2528 = vadd.f32 0.0, %v2527
    %v2529 = vpop.f32.mrb[0].mxu0
    %2530 = vmatprep.mubr.f32.mxu0 0.0
    %2531 = vmatmul.mubr.f32.gmra.mrb[0].mxu0 %v2200
    %v2532 = vpop.f32.mrb[0].mxu0
    %v2533 = vadd.f32 0.0, %v2532
    %v2534 = vpop.f32.mrb[0].mxu0
    %2535 = vmatprep.mubr.f32.mxu0 0.0
    %2536 = vmatmul.mubr.f32.gmra.mrb[0].mxu0 %v2203
    %v2537 = vpop.f32.mrb[0].mxu0
    %v2538 = vadd.f32 0.0, %v2537
    %v2539 = vpop.f32.mrb[0].mxu0
    %2540 = vmatprep.mubr.f32.mxu0 0.0
    %2541 = vmatmul.mubr.f32.gmra.mrb[0].mxu0 %v2206
    %v2542 = vpop.f32.mrb[0].mxu0
    %v2543 = vadd.f32 0.0, %v2542
    %v2544 = vpop.f32.mrb[0].mxu0
    %2545 = vmatprep.mubr.f32.mxu0 0.0
    %2546 = vmatmul.mubr.f32.gmra.mrb[0].mxu0 %v2209
    %v2547 = vpop.f32.mrb[0].mxu0
    %v2548 = vadd.f32 0.0, %v2547
    %v2549 = vpop.f32.mrb[0].mxu0
    %2550 = vmatprep.mubr.f32.mxu0 0.0
    %2551 = vmatmul.mubr.f32.gmra.mrb[0].mxu0 %v2212
    %v2552 = vpop.f32.mrb[0].mxu0
    %v2553 = vadd.f32 0.0, %v2552
    %v2554 = vpop.f32.mrb[0].mxu0
    %2555 = vmatprep.mubr.f32.mxu0 0.0
    %2556 = vmatmul.mubr.f32.gmra.mrb[0].mxu0 %v2215
    %v2557 = vpop.f32.mrb[0].mxu0
    %v2558 = vadd.f32 0.0, %v2557
    %v2559 = vpop.f32.mrb[0].mxu0
    %2560 = vmatprep.mubr.f32.mxu0 0.0
    %2561 = vmatmul.mubr.f32.gmra.mrb[0].mxu0 %v2218
    %v2562 = vpop.f32.mrb[0].mxu0
    %v2563 = vadd.f32 0.0, %v2562
    %v2564 = vpop.f32.mrb[0].mxu0
    %2565 = vmatprep.mubr.f32.mxu0 0.0
    %2566 = vmatmul.mubr.f32.gmra.mrb[0].mxu0 %v2221
    %v2567 = vpop.f32.mrb[0].mxu0
    %v2568 = vadd.f32 0.0, %v2567
    %v2569 = vpop.f32.mrb[0].mxu0
    %2570 = vmatprep.mubr.f32.mxu0 0.0
    %2571 = vmatmul.mubr.f32.gmra.mrb[0].mxu0 %v2224
    %v2572 = vpop.f32.mrb[0].mxu0
    %v2573 = vadd.f32 0.0, %v2572
    %v2574 = vpop.f32.mrb[0].mxu0
    %2575 = vmatprep.mubr.f32.mxu0 0.0
    %2576 = vmatmul.mubr.f32.gmra.mrb[0].mxu0 %v2227
    %v2577 = vpop.f32.mrb[0].mxu0
    %v2578 = vadd.f32 0.0, %v2577
    %v2579 = vpop.f32.mrb[0].mxu0
    %2580 = vmatprep.mubr.f32.mxu0 0.0
    %2581 = vmatmul.mubr.f32.gmra.mrb[0].mxu0 %v2230
    %v2582 = vpop.f32.mrb[0].mxu0
    %v2583 = vadd.f32 0.0, %v2582
    %v2584 = vpop.f32.mrb[0].mxu0
    %2585 = vmatprep.mubr.f32.mxu0 0.0
    %2586 = vmatmul.mubr.f32.gmra.mrb[0].mxu0 %v2233
    %v2587 = vpop.f32.mrb[0].mxu0
    %v2588 = vadd.f32 0.0, %v2587
    %v2589 = vpop.f32.mrb[0].mxu0
    %2590 = vmatprep.mubr.f32.mxu0 0.0
    %2591 = vmatmul.mubr.f32.gmra.mrb[0].mxu0 %v2236
    %v2592 = vpop.f32.mrb[0].mxu0
    %v2593 = vadd.f32 0.0, %v2592
    %v2594 = vpop.f32.mrb[0].mxu0
    %2595 = vmatprep.mubr.f32.mxu0 0.0
    %2596 = vmatmul.mubr.f32.gmra.mrb[0].mxu0 %v2239
    %v2597 = vpop.f32.mrb[0].mxu0
    %v2598 = vadd.f32 0.0, %v2597
    %v2599 = vpop.f32.mrb[0].mxu0
    %2600 = vmatprep.mubr.f32.mxu0 0.0
    %2601 = vmatmul.mubr.f32.gmra.mrb[0].mxu0 %v2242
    %v2602 = vpop.f32.mrb[0].mxu0
    %v2603 = vadd.f32 0.0, %v2602
    %v2604 = vpop.f32.mrb[0].mxu0
    %2605 = vmatprep.mubr.f32.mxu0 0.0
    %2606 = vmatmul.mubr.f32.gmra.mrb[0].mxu0 %v2245
    %v2607 = vpop.f32.mrb[0].mxu0
    %v2608 = vadd.f32 0.0, %v2607
    %v2609 = vpop.f32.mrb[0].mxu0
    %2610 = vmatprep.mubr.f32.mxu0 0.0
    %2611 = vmatmul.mubr.f32.gmra.mrb[0].mxu0 %v2248
    %v2612 = vpop.f32.mrb[0].mxu0
    %v2613 = vadd.f32 0.0, %v2612
    %v2614 = vpop.f32.mrb[0].mxu0
    %2615 = vmatprep.mubr.f32.mxu0 0.0
    %2616 = vmatmul.mubr.f32.gmra.mrb[0].mxu0 %v2251
    %v2617 = vpop.f32.mrb[0].mxu0
    %v2618 = vadd.f32 0.0, %v2617
    %v2619 = vpop.f32.mrb[0].mxu0
    %2620 = vmatprep.mubr.f32.mxu0 0.0
    %2621 = vmatmul.mubr.f32.gmra.mrb[0].mxu0 %v2254
    %v2622 = vpop.f32.mrb[0].mxu0
    %v2623 = vadd.f32 0.0, %v2622
    %v2624 = vpop.f32.mrb[0].mxu0
    %2625 = vmatprep.mubr.f32.mxu0 0.0
    %2626 = vmatmul.mubr.f32.gmra.mrb[0].mxu0 %v2257
    %v2627 = vpop.f32.mrb[0].mxu0
    %v2628 = vadd.f32 0.0, %v2627
    %v2629 = vpop.f32.mrb[0].mxu0
    %2630 = vmatprep.mubr.f32.mxu0 0.0
    %2631 = vmatmul.mubr.f32.gmra.mrb[0].mxu0 %v2260
    %v2632 = vpop.f32.mrb[0].mxu0
    %v2633 = vadd.f32 0.0, %v2632
    %v2634 = vpop.f32.mrb[0].mxu0
    %2635 = vmatprep.mubr.f32.mxu0 0.0
    %2636 = vmatmul.mubr.f32.gmra.mrb[0].mxu0 %v2263
    %v2637 = vpop.f32.mrb[0].mxu0
    %v2638 = vadd.f32 0.0, %v2637
    %v2639 = vpop.f32.mrb[0].mxu0
    %2640 = vmatprep.mubr.f32.mxu0 0.0
    %2641 = vmatmul.mubr.f32.gmra.mrb[0].mxu0 %v2266
    %v2642 = vpop.f32.mrb[0].mxu0
    %v2643 = vadd.f32 0.0, %v2642
    %v2644 = vpop.f32.mrb[0].mxu0
    %2645 = vmatprep.mubr.f32.mxu0 0.0
    %2646 = vmatmul.mubr.f32.gmra.mrb[0].mxu0 %v2269
    %v2647 = vpop.f32.mrb[0].mxu0
    %v2648 = vadd.f32 0.0, %v2647
    %v2649 = vpop.f32.mrb[0].mxu0
    %2650 = vmatprep.mubr.f32.mxu0 0.0
    %2651 = vmatmul.mubr.f32.gmra.mrb[0].mxu0 %v2272
    %v2652 = vpop.f32.mrb[0].mxu0
    %v2653 = vadd.f32 0.0, %v2652
    %v2654 = vpop.f32.mrb[0].mxu0
    %2655 = vmatprep.mubr.f32.mxu0 0.0
    %2656 = vmatmul.mubr.f32.gmra.mrb[0].mxu0 %v2275
    %v2657 = vpop.f32.mrb[0].mxu0
    %v2658 = vadd.f32 0.0, %v2657
    %v2659 = vpop.f32.mrb[0].mxu0
    %2660 = vmatprep.mubr.f32.mxu0 0.0
    %2661 = vmatmul.mubr.f32.gmra.mrb[0].mxu0 %v2278
    %v2662 = vpop.f32.mrb[0].mxu0
    %v2663 = vadd.f32 0.0, %v2662
    %v2664 = vpop.f32.mrb[0].mxu0
    %2665 = vmatprep.mubr.f32.mxu0 0.0
    %2666 = vmatmul.mubr.f32.gmra.mrb[0].mxu0 %v2281
    %v2667 = vpop.f32.mrb[0].mxu0
    %v2668 = vadd.f32 0.0, %v2667
    %v2669 = vpop.f32.mrb[0].mxu0
    %2670 = vdwg.mxu0
    %v2671 = vadd.f32 %v1960, %v2353
    %v2672 = vadd.f32 %v1961, %v2358
    %v2673 = vadd.f32 %v1962, %v2363
    %v2674 = vadd.f32 %v1963, %v2368
    %v2675 = vadd.f32 %v1964, %v2373
    %v2676 = vadd.f32 %v1965, %v2378
    %v2677 = vadd.f32 %v1966, %v2383
    %v2678 = vadd.f32 %v1967, %v2388
    %v2679 = vadd.f32 %v1968, %v2393
    %v2680 = vadd.f32 %v1969, %v2398
    %v2681 = vadd.f32 %v1970, %v2403
    %v2682 = vadd.f32 %v1971, %v2408
    %v2683 = vadd.f32 %v1972, %v2413
    %v2684 = vadd.f32 %v1973, %v2418
    %v2685 = vadd.f32 %v1974, %v2423
    %v2686 = vadd.f32 %v1975, %v2428
    %v2687 = vadd.f32 %v1976, %v2433
    %v2688 = vadd.f32 %v1977, %v2438
    %v2689 = vadd.f32 %v1978, %v2443
    %v2690 = vadd.f32 %v1979, %v2448
    %v2691 = vadd.f32 %v1980, %v2453
    %v2692 = vadd.f32 %v1981, %v2458
    %v2693 = vadd.f32 %v1982, %v2463
    %v2694 = vadd.f32 %v1983, %v2468
    %v2695 = vadd.f32 %v1984, %v2473
    %v2696 = vadd.f32 %v1985, %v2478
    %v2697 = vadd.f32 %v1986, %v2483
    %v2698 = vadd.f32 %v1987, %v2488
    %v2699 = vadd.f32 %v1988, %v2493
    %v2700 = vadd.f32 %v1989, %v2498
    %v2701 = vadd.f32 %v1990, %v2503
    %v2702 = vadd.f32 %v1991, %v2508
    %v2703 = vadd.f32 %v1992, %v2513
    %v2704 = vadd.f32 %v1993, %v2518
    %v2705 = vadd.f32 %v1994, %v2523
    %v2706 = vadd.f32 %v1995, %v2528
    %v2707 = vadd.f32 %v1996, %v2533
    %v2708 = vadd.f32 %v1997, %v2538
    %v2709 = vadd.f32 %v1998, %v2543
    %v2710 = vadd.f32 %v1999, %v2548
    %v2711 = vadd.f32 %v2000, %v2553
    %v2712 = vadd.f32 %v2001, %v2558
    %v2713 = vadd.f32 %v2002, %v2563
    %v2714 = vadd.f32 %v2003, %v2568
    %v2715 = vadd.f32 %v2004, %v2573
    %v2716 = vadd.f32 %v2005, %v2578
    %v2717 = vadd.f32 %v2006, %v2583
    %v2718 = vadd.f32 %v2007, %v2588
    %v2719 = vadd.f32 %v2008, %v2593
    %v2720 = vadd.f32 %v2009, %v2598
    %v2721 = vadd.f32 %v2010, %v2603
    %v2722 = vadd.f32 %v2011, %v2608
    %v2723 = vadd.f32 %v2012, %v2613
    %v2724 = vadd.f32 %v2013, %v2618
    %v2725 = vadd.f32 %v2014, %v2623
    %v2726 = vadd.f32 %v2015, %v2628
    %v2727 = vadd.f32 %v2016, %v2633
    %v2728 = vadd.f32 %v2017, %v2638
    %v2729 = vadd.f32 %v2018, %v2643
    %v2730 = vadd.f32 %v2019, %v2648
    %v2731 = vadd.f32 %v2020, %v2653
    %v2732 = vadd.f32 %v2021, %v2658
    %v2733 = vadd.f32 %v2022, %v2663
    %v2734 = vadd.f32 %v2023, %v2668
    %v2735 = vld [vmem:[%s2024 + $0x1] sm:$0xff]
    %v2736 = vld [vmem:[%s2024 + $0x9] sm:$0xff]
    %v2737 = vld [vmem:[%s2024 + $0x19] sm:$0xff]
    %v2738 = vld [vmem:[%s2024 + $0x21] sm:$0xff]
    %v2739 = vld [vmem:[%s2024 + $0x31] sm:$0xff]
    %v2740 = vld [vmem:[%s2024 + $0x39] sm:$0xff]
    %v2741 = vld [vmem:[%s2024 + $0x49] sm:$0xff]
    %v2742 = vld [vmem:[%s2024 + $0x51] sm:$0xff]
    %v2743 = vld [vmem:[%s2024 + $0x61] sm:$0xff]
    %v2744 = vld [vmem:[%s2024 + $0x69] sm:$0xff]
    %v2745 = vld [vmem:[%s2024 + $0x79] sm:$0xff]
    %v2746 = vld [vmem:[%s2024 + $0x81] sm:$0xff]
    %v2747 = vld [vmem:[%s2024 + $0x91] sm:$0xff]
    %v2748 = vld [vmem:[%s2024 + $0x99] sm:$0xff]
    %v2749 = vld [vmem:[%s2024 + $0xa9] sm:$0xff]
    %v2750 = vld [vmem:[%s2024 + $0xb1] sm:$0xff]
    %v2751 = vld [vmem:[%s2024 + $0xc1] sm:$0xff]
    %v2752 = vld [vmem:[%s2024 + $0xc9] sm:$0xff]
    %v2753 = vld [vmem:[%s2024 + $0xd9] sm:$0xff]
    %v2754 = vld [vmem:[%s2024 + $0xe1] sm:$0xff]
    %v2755 = vld [vmem:[%s2024 + $0xf1] sm:$0xff]
    %v2756 = vld [vmem:[%s2024 + $0xf9] sm:$0xff]
    %v2757 = vld [vmem:[%s2024 + $0x109] sm:$0xff]
    %v2758 = vld [vmem:[%s2024 + $0x111] sm:$0xff]
    %v2759 = vld [vmem:[%s2024 + $0x121] sm:$0xff]
    %v2760 = vld [vmem:[%s2024 + $0x129] sm:$0xff]
    %v2761 = vld [vmem:[%s2024 + $0x139] sm:$0xff]
    %v2762 = vld [vmem:[%s2024 + $0x141] sm:$0xff]
    %v2763 = vld [vmem:[%s2024 + $0x151] sm:$0xff]
    %v2764 = vld [vmem:[%s2024 + $0x159] sm:$0xff]
    %v2765 = vld [vmem:[%s2024 + $0x169] sm:$0xff]
    %v2766 = vld [vmem:[%s2024 + $0x171] sm:$0xff]
    %v2767 = vld [vmem:[%s2024 + $0x1b1] sm:$0xff]
    %v2768 = vld [vmem:[%s2024 + $0x1b9] sm:$0xff]
    %v2769 = vld [vmem:[%s2024 + $0x1c9] sm:$0xff]
    %v2770 = vld [vmem:[%s2024 + $0x1d1] sm:$0xff]
    %v2771 = vld [vmem:[%s2024 + $0x1e1] sm:$0xff]
    %v2772 = vld [vmem:[%s2024 + $0x1e9] sm:$0xff]
    %v2773 = vld [vmem:[%s2024 + $0x1f9] sm:$0xff]
    %v2774 = vld [vmem:[%s2024 + $0x201] sm:$0xff]
    %v2775 = vld [vmem:[%s2024 + $0x211] sm:$0xff]
    %v2776 = vld [vmem:[%s2024 + $0x219] sm:$0xff]
    %v2777 = vld [vmem:[%s2024 + $0x229] sm:$0xff]
    %v2778 = vld [vmem:[%s2024 + $0x231] sm:$0xff]
    %v2779 = vld [vmem:[%s2024 + $0x241] sm:$0xff]
    %v2780 = vld [vmem:[%s2024 + $0x249] sm:$0xff]
    %v2781 = vld [vmem:[%s2024 + $0x259] sm:$0xff]
    %v2782 = vld [vmem:[%s2024 + $0x261] sm:$0xff]
    %v2783 = vld [vmem:[%s2024 + $0x271] sm:$0xff]
    %v2784 = vld [vmem:[%s2024 + $0x279] sm:$0xff]
    %v2785 = vld [vmem:[%s2024 + $0x289] sm:$0xff]
    %v2786 = vld [vmem:[%s2024 + $0x291] sm:$0xff]
    %v2787 = vld [vmem:[%s2024 + $0x2a1] sm:$0xff]
    %v2788 = vld [vmem:[%s2024 + $0x2a9] sm:$0xff]
    %v2789 = vld [vmem:[%s2024 + $0x2b9] sm:$0xff]
    %v2790 = vld [vmem:[%s2024 + $0x2c1] sm:$0xff]
    %v2791 = vld [vmem:[%s2024 + $0x2d1] sm:$0xff]
    %v2792 = vld [vmem:[%s2024 + $0x2d9] sm:$0xff]
    %v2793 = vld [vmem:[%s2024 + $0x2e9] sm:$0xff]
    %v2794 = vld [vmem:[%s2024 + $0x2f1] sm:$0xff]
    %v2795 = vld [vmem:[%s2024 + $0x301] sm:$0xff]
    %v2796 = vld [vmem:[%s2024 + $0x309] sm:$0xff]
    %v2797 = vld [vmem:[%s2024 + $0x319] sm:$0xff]
    %v2798 = vld [vmem:[%s2024 + $0x321] sm:$0xff]
    %s2799 = scalar_lea.vmem %s1, 16
    %v2800 = vld [vmem:[%s2799] sm:$0xf]
    %v2802 = vsel %vm152, %v2735, 0
    %v2805 = vsel %vm152, %v2736, 0
    %v2808 = vsel %vm152, %v2737, 0
    %v2811 = vsel %vm152, %v2738, 0
    %v2814 = vsel %vm152, %v2739, 0
    %v2817 = vsel %vm152, %v2740, 0
    %v2820 = vsel %vm152, %v2741, 0
    %v2823 = vsel %vm152, %v2742, 0
    %v2826 = vsel %vm152, %v2743, 0
    %v2829 = vsel %vm152, %v2744, 0
    %v2832 = vsel %vm152, %v2745, 0
    %v2835 = vsel %vm152, %v2746, 0
    %v2838 = vsel %vm152, %v2747, 0
    %v2841 = vsel %vm152, %v2748, 0
    %v2844 = vsel %vm152, %v2749, 0
    %v2847 = vsel %vm152, %v2750, 0
    %v2850 = vsel %vm152, %v2751, 0
    %v2853 = vsel %vm152, %v2752, 0
    %v2856 = vsel %vm152, %v2753, 0
    %v2859 = vsel %vm152, %v2754, 0
    %v2862 = vsel %vm152, %v2755, 0
    %v2865 = vsel %vm152, %v2756, 0
    %v2868 = vsel %vm152, %v2757, 0
    %v2871 = vsel %vm152, %v2758, 0
    %v2874 = vsel %vm152, %v2759, 0
    %v2877 = vsel %vm152, %v2760, 0
    %v2880 = vsel %vm152, %v2761, 0
    %v2883 = vsel %vm152, %v2762, 0
    %v2886 = vsel %vm152, %v2763, 0
    %v2889 = vsel %vm152, %v2764, 0
    %v2892 = vsel %vm152, %v2765, 0
    %v2895 = vsel %vm152, %v2766, 0
    %v2898 = vsel %vm152, %v2767, 0
    %v2901 = vsel %vm152, %v2768, 0
    %v2904 = vsel %vm152, %v2769, 0
    %v2907 = vsel %vm152, %v2770, 0
    %v2910 = vsel %vm152, %v2771, 0
    %v2913 = vsel %vm152, %v2772, 0
    %v2916 = vsel %vm152, %v2773, 0
    %v2919 = vsel %vm152, %v2774, 0
    %v2922 = vsel %vm152, %v2775, 0
    %v2925 = vsel %vm152, %v2776, 0
    %v2928 = vsel %vm152, %v2777, 0
    %v2931 = vsel %vm152, %v2778, 0
    %v2934 = vsel %vm152, %v2779, 0
    %v2937 = vsel %vm152, %v2780, 0
    %v2940 = vsel %vm152, %v2781, 0
    %v2943 = vsel %vm152, %v2782, 0
    %v2946 = vsel %vm152, %v2783, 0
    %v2949 = vsel %vm152, %v2784, 0
    %v2952 = vsel %vm152, %v2785, 0
    %v2955 = vsel %vm152, %v2786, 0
    %v2958 = vsel %vm152, %v2787, 0
    %v2961 = vsel %vm152, %v2788, 0
    %v2964 = vsel %vm152, %v2789, 0
    %v2967 = vsel %vm152, %v2790, 0
    %v2970 = vsel %vm152, %v2791, 0
    %v2973 = vsel %vm152, %v2792, 0
    %v2976 = vsel %vm152, %v2793, 0
    %v2979 = vsel %vm152, %v2794, 0
    %v2982 = vsel %vm152, %v2795, 0
    %v2985 = vsel %vm152, %v2796, 0
    %v2988 = vsel %vm152, %v2797, 0
    %v2991 = vsel %vm152, %v2798, 0
    %v2994 = vsel %vm345, %v2800, 0
    %2996 = vmatprep.subr.mxu0 0.0
    %2997 = vmatpush1.msra.mxu0 %v2994
    %2998 = vmatprep.subr.mxu0 0.0
    %2999 = vmatpush1.msra.mxu0 0.0
    %3000 = vmatprep.subr.mxu0 0.0
    %3001 = vmatpush1.msra.mxu0 0.0
    %3002 = vmatprep.subr.mxu0 0.0
    %3003 = vmatpush1.msra.mxu0 0.0
    %3004 = vmatprep.subr.mxu0 0.0
    %3005 = vmatpush1.msra.mxu0 0.0
    %3006 = vmatprep.subr.mxu0 0.0
    %3007 = vmatpush1.msra.mxu0 0.0
    %3008 = vmatprep.subr.mxu0 0.0
    %3009 = vmatpush1.msra.mxu0 0.0
    %3010 = vmatprep.subr.mxu0 0.0
    %3011 = vmatpush1.msra.mxu0 0.0
    %3012 = vmatprep.subr.mxu0 0.0
    %3013 = vmatpush1.msra.mxu0 0.0
    %3014 = vmatprep.subr.mxu0 0.0
    %3015 = vmatpush1.msra.mxu0 0.0
    %3016 = vmatprep.subr.mxu0 0.0
    %3017 = vmatpush1.msra.mxu0 0.0
    %3018 = vmatprep.subr.mxu0 0.0
    %3019 = vmatpush1.msra.mxu0 0.0
    %3020 = vmatprep.subr.mxu0 0.0
    %3021 = vmatpush1.msra.mxu0 0.0
    %3022 = vmatprep.subr.mxu0 0.0
    %3023 = vmatpush1.msra.mxu0 0.0
    %3024 = vmatprep.subr.mxu0 0.0
    %3025 = vmatpush1.msra.mxu0 0.0
    %3026 = vmatprep.subr.mxu0 0.0
    %3027 = vmatpush1.msra.mxu0 0.0
    %3028 = vmatprep.subr.mxu0 0.0
    %3029 = vmatpush1.msra.mxu0 0.0
    %3030 = vmatprep.subr.mxu0 0.0
    %3031 = vmatpush1.msra.mxu0 0.0
    %3032 = vmatprep.subr.mxu0 0.0
    %3033 = vmatpush1.msra.mxu0 0.0
    %3034 = vmatprep.subr.mxu0 0.0
    %3035 = vmatpush1.msra.mxu0 0.0
    %3036 = vmatprep.subr.mxu0 0.0
    %3037 = vmatpush1.msra.mxu0 0.0
    %3038 = vmatprep.subr.mxu0 0.0
    %3039 = vmatpush1.msra.mxu0 0.0
    %3040 = vmatprep.subr.mxu0 0.0
    %3041 = vmatpush1.msra.mxu0 0.0
    %3042 = vmatprep.subr.mxu0 0.0
    %3043 = vmatpush1.msra.mxu0 0.0
    %3044 = vmatprep.subr.mxu0 0.0
    %3045 = vmatpush1.msra.mxu0 0.0
    %3046 = vmatprep.subr.mxu0 0.0
    %3047 = vmatpush1.msra.mxu0 0.0
    %3048 = vmatprep.subr.mxu0 0.0
    %3049 = vmatpush1.msra.mxu0 0.0
    %3050 = vmatprep.subr.mxu0 0.0
    %3051 = vmatpush1.msra.mxu0 0.0
    %3052 = vmatprep.subr.mxu0 0.0
    %3053 = vmatpush1.msra.mxu0 0.0
    %3054 = vmatprep.subr.mxu0 0.0
    %3055 = vmatpush1.msra.mxu0 0.0
    %3056 = vmatprep.subr.mxu0 0.0
    %3057 = vmatpush1.msra.mxu0 0.0
    %3058 = vmatprep.subr.mxu0 0.0
    %3059 = vmatpush1.msra.mxu0 0.0
    %3060 = vmatprep.mubr.f32.mxu0 0.0
    %3061 = vmatmul.mubr.f32.gmra.mrb[0].mxu0 %v2802
    %v3062 = vpop.f32.mrb[0].mxu0
    %v3063 = vadd.f32 0.0, %v3062
    %v3064 = vpop.f32.mrb[0].mxu0
    %3065 = vmatprep.mubr.f32.mxu0 0.0
    %3066 = vmatmul.mubr.f32.gmra.mrb[0].mxu0 %v2805
    %v3067 = vpop.f32.mrb[0].mxu0
    %v3068 = vadd.f32 0.0, %v3067
    %v3069 = vpop.f32.mrb[0].mxu0
    %3070 = vmatprep.mubr.f32.mxu0 0.0
    %3071 = vmatmul.mubr.f32.gmra.mrb[0].mxu0 %v2808
    %v3072 = vpop.f32.mrb[0].mxu0
    %v3073 = vadd.f32 0.0, %v3072
    %v3074 = vpop.f32.mrb[0].mxu0
    %3075 = vmatprep.mubr.f32.mxu0 0.0
    %3076 = vmatmul.mubr.f32.gmra.mrb[0].mxu0 %v2811
    %v3077 = vpop.f32.mrb[0].mxu0
    %v3078 = vadd.f32 0.0, %v3077
    %v3079 = vpop.f32.mrb[0].mxu0
    %3080 = vmatprep.mubr.f32.mxu0 0.0
    %3081 = vmatmul.mubr.f32.gmra.mrb[0].mxu0 %v2814
    %v3082 = vpop.f32.mrb[0].mxu0
    %v3083 = vadd.f32 0.0, %v3082
    %v3084 = vpop.f32.mrb[0].mxu0
    %3085 = vmatprep.mubr.f32.mxu0 0.0
    %3086 = vmatmul.mubr.f32.gmra.mrb[0].mxu0 %v2817
    %v3087 = vpop.f32.mrb[0].mxu0
    %v3088 = vadd.f32 0.0, %v3087
    %v3089 = vpop.f32.mrb[0].mxu0
    %3090 = vmatprep.mubr.f32.mxu0 0.0
    %3091 = vmatmul.mubr.f32.gmra.mrb[0].mxu0 %v2820
    %v3092 = vpop.f32.mrb[0].mxu0
    %v3093 = vadd.f32 0.0, %v3092
    %v3094 = vpop.f32.mrb[0].mxu0
    %3095 = vmatprep.mubr.f32.mxu0 0.0
    %3096 = vmatmul.mubr.f32.gmra.mrb[0].mxu0 %v2823
    %v3097 = vpop.f32.mrb[0].mxu0
    %v3098 = vadd.f32 0.0, %v3097
    %v3099 = vpop.f32.mrb[0].mxu0
    %3100 = vmatprep.mubr.f32.mxu0 0.0
    %3101 = vmatmul.mubr.f32.gmra.mrb[0].mxu0 %v2826
    %v3102 = vpop.f32.mrb[0].mxu0
    %v3103 = vadd.f32 0.0, %v3102
    %v3104 = vpop.f32.mrb[0].mxu0
    %3105 = vmatprep.mubr.f32.mxu0 0.0
    %3106 = vmatmul.mubr.f32.gmra.mrb[0].mxu0 %v2829
    %v3107 = vpop.f32.mrb[0].mxu0
    %v3108 = vadd.f32 0.0, %v3107
    %v3109 = vpop.f32.mrb[0].mxu0
    %3110 = vmatprep.mubr.f32.mxu0 0.0
    %3111 = vmatmul.mubr.f32.gmra.mrb[0].mxu0 %v2832
    %v3112 = vpop.f32.mrb[0].mxu0
    %v3113 = vadd.f32 0.0, %v3112
    %v3114 = vpop.f32.mrb[0].mxu0
    %3115 = vmatprep.mubr.f32.mxu0 0.0
    %3116 = vmatmul.mubr.f32.gmra.mrb[0].mxu0 %v2835
    %v3117 = vpop.f32.mrb[0].mxu0
    %v3118 = vadd.f32 0.0, %v3117
    %v3119 = vpop.f32.mrb[0].mxu0
    %3120 = vmatprep.mubr.f32.mxu0 0.0
    %3121 = vmatmul.mubr.f32.gmra.mrb[0].mxu0 %v2838
    %v3122 = vpop.f32.mrb[0].mxu0
    %v3123 = vadd.f32 0.0, %v3122
    %v3124 = vpop.f32.mrb[0].mxu0
    %3125 = vmatprep.mubr.f32.mxu0 0.0
    %3126 = vmatmul.mubr.f32.gmra.mrb[0].mxu0 %v2841
    %v3127 = vpop.f32.mrb[0].mxu0
    %v3128 = vadd.f32 0.0, %v3127
    %v3129 = vpop.f32.mrb[0].mxu0
    %3130 = vmatprep.mubr.f32.mxu0 0.0
    %3131 = vmatmul.mubr.f32.gmra.mrb[0].mxu0 %v2844
    %v3132 = vpop.f32.mrb[0].mxu0
    %v3133 = vadd.f32 0.0, %v3132
    %v3134 = vpop.f32.mrb[0].mxu0
    %3135 = vmatprep.mubr.f32.mxu0 0.0
    %3136 = vmatmul.mubr.f32.gmra.mrb[0].mxu0 %v2847
    %v3137 = vpop.f32.mrb[0].mxu0
    %v3138 = vadd.f32 0.0, %v3137
    %v3139 = vpop.f32.mrb[0].mxu0
    %3140 = vmatprep.mubr.f32.mxu0 0.0
    %3141 = vmatmul.mubr.f32.gmra.mrb[0].mxu0 %v2850
    %v3142 = vpop.f32.mrb[0].mxu0
    %v3143 = vadd.f32 0.0, %v3142
    %v3144 = vpop.f32.mrb[0].mxu0
    %3145 = vmatprep.mubr.f32.mxu0 0.0
    %3146 = vmatmul.mubr.f32.gmra.mrb[0].mxu0 %v2853
    %v3147 = vpop.f32.mrb[0].mxu0
    %v3148 = vadd.f32 0.0, %v3147
    %v3149 = vpop.f32.mrb[0].mxu0
    %3150 = vmatprep.mubr.f32.mxu0 0.0
    %3151 = vmatmul.mubr.f32.gmra.mrb[0].mxu0 %v2856
    %v3152 = vpop.f32.mrb[0].mxu0
    %v3153 = vadd.f32 0.0, %v3152
    %v3154 = vpop.f32.mrb[0].mxu0
    %3155 = vmatprep.mubr.f32.mxu0 0.0
    %3156 = vmatmul.mubr.f32.gmra.mrb[0].mxu0 %v2859
    %v3157 = vpop.f32.mrb[0].mxu0
    %v3158 = vadd.f32 0.0, %v3157
    %v3159 = vpop.f32.mrb[0].mxu0
    %3160 = vmatprep.mubr.f32.mxu0 0.0
    %3161 = vmatmul.mubr.f32.gmra.mrb[0].mxu0 %v2862
    %v3162 = vpop.f32.mrb[0].mxu0
    %v3163 = vadd.f32 0.0, %v3162
    %v3164 = vpop.f32.mrb[0].mxu0
    %3165 = vmatprep.mubr.f32.mxu0 0.0
    %3166 = vmatmul.mubr.f32.gmra.mrb[0].mxu0 %v2865
    %v3167 = vpop.f32.mrb[0].mxu0
    %v3168 = vadd.f32 0.0, %v3167
    %v3169 = vpop.f32.mrb[0].mxu0
    %3170 = vmatprep.mubr.f32.mxu0 0.0
    %3171 = vmatmul.mubr.f32.gmra.mrb[0].mxu0 %v2868
    %v3172 = vpop.f32.mrb[0].mxu0
    %v3173 = vadd.f32 0.0, %v3172
    %v3174 = vpop.f32.mrb[0].mxu0
    %3175 = vmatprep.mubr.f32.mxu0 0.0
    %3176 = vmatmul.mubr.f32.gmra.mrb[0].mxu0 %v2871
    %v3177 = vpop.f32.mrb[0].mxu0
    %v3178 = vadd.f32 0.0, %v3177
    %v3179 = vpop.f32.mrb[0].mxu0
    %3180 = vmatprep.mubr.f32.mxu0 0.0
    %3181 = vmatmul.mubr.f32.gmra.mrb[0].mxu0 %v2874
    %v3182 = vpop.f32.mrb[0].mxu0
    %v3183 = vadd.f32 0.0, %v3182
    %v3184 = vpop.f32.mrb[0].mxu0
    %3185 = vmatprep.mubr.f32.mxu0 0.0
    %3186 = vmatmul.mubr.f32.gmra.mrb[0].mxu0 %v2877
    %v3187 = vpop.f32.mrb[0].mxu0
    %v3188 = vadd.f32 0.0, %v3187
    %v3189 = vpop.f32.mrb[0].mxu0
    %3190 = vmatprep.mubr.f32.mxu0 0.0
    %3191 = vmatmul.mubr.f32.gmra.mrb[0].mxu0 %v2880
    %v3192 = vpop.f32.mrb[0].mxu0
    %v3193 = vadd.f32 0.0, %v3192
    %v3194 = vpop.f32.mrb[0].mxu0
    %3195 = vmatprep.mubr.f32.mxu0 0.0
    %3196 = vmatmul.mubr.f32.gmra.mrb[0].mxu0 %v2883
    %v3197 = vpop.f32.mrb[0].mxu0
    %v3198 = vadd.f32 0.0, %v3197
    %v3199 = vpop.f32.mrb[0].mxu0
    %3200 = vmatprep.mubr.f32.mxu0 0.0
    %3201 = vmatmul.mubr.f32.gmra.mrb[0].mxu0 %v2886
    %v3202 = vpop.f32.mrb[0].mxu0
    %v3203 = vadd.f32 0.0, %v3202
    %v3204 = vpop.f32.mrb[0].mxu0
    %3205 = vmatprep.mubr.f32.mxu0 0.0
    %3206 = vmatmul.mubr.f32.gmra.mrb[0].mxu0 %v2889
    %v3207 = vpop.f32.mrb[0].mxu0
    %v3208 = vadd.f32 0.0, %v3207
    %v3209 = vpop.f32.mrb[0].mxu0
    %3210 = vmatprep.mubr.f32.mxu0 0.0
    %3211 = vmatmul.mubr.f32.gmra.mrb[0].mxu0 %v2892
    %v3212 = vpop.f32.mrb[0].mxu0
    %v3213 = vadd.f32 0.0, %v3212
    %v3214 = vpop.f32.mrb[0].mxu0
    %3215 = vmatprep.mubr.f32.mxu0 0.0
    %3216 = vmatmul.mubr.f32.gmra.mrb[0].mxu0 %v2895
    %v3217 = vpop.f32.mrb[0].mxu0
    %v3218 = vadd.f32 0.0, %v3217
    %v3219 = vpop.f32.mrb[0].mxu0
    %3220 = vmatprep.mubr.f32.mxu0 0.0
    %3221 = vmatmul.mubr.f32.gmra.mrb[0].mxu0 %v2898
    %v3222 = vpop.f32.mrb[0].mxu0
    %v3223 = vadd.f32 0.0, %v3222
    %v3224 = vpop.f32.mrb[0].mxu0
    %3225 = vmatprep.mubr.f32.mxu0 0.0
    %3226 = vmatmul.mubr.f32.gmra.mrb[0].mxu0 %v2901
    %v3227 = vpop.f32.mrb[0].mxu0
    %v3228 = vadd.f32 0.0, %v3227
    %v3229 = vpop.f32.mrb[0].mxu0
    %3230 = vmatprep.mubr.f32.mxu0 0.0
    %3231 = vmatmul.mubr.f32.gmra.mrb[0].mxu0 %v2904
    %v3232 = vpop.f32.mrb[0].mxu0
    %v3233 = vadd.f32 0.0, %v3232
    %v3234 = vpop.f32.mrb[0].mxu0
    %3235 = vmatprep.mubr.f32.mxu0 0.0
    %3236 = vmatmul.mubr.f32.gmra.mrb[0].mxu0 %v2907
    %v3237 = vpop.f32.mrb[0].mxu0
    %v3238 = vadd.f32 0.0, %v3237
    %v3239 = vpop.f32.mrb[0].mxu0
    %3240 = vmatprep.mubr.f32.mxu0 0.0
    %3241 = vmatmul.mubr.f32.gmra.mrb[0].mxu0 %v2910
    %v3242 = vpop.f32.mrb[0].mxu0
    %v3243 = vadd.f32 0.0, %v3242
    %v3244 = vpop.f32.mrb[0].mxu0
    %3245 = vmatprep.mubr.f32.mxu0 0.0
    %3246 = vmatmul.mubr.f32.gmra.mrb[0].mxu0 %v2913
    %v3247 = vpop.f32.mrb[0].mxu0
    %v3248 = vadd.f32 0.0, %v3247
    %v3249 = vpop.f32.mrb[0].mxu0
    %3250 = vmatprep.mubr.f32.mxu0 0.0
    %3251 = vmatmul.mubr.f32.gmra.mrb[0].mxu0 %v2916
    %v3252 = vpop.f32.mrb[0].mxu0
    %v3253 = vadd.f32 0.0, %v3252
    %v3254 = vpop.f32.mrb[0].mxu0
    %3255 = vmatprep.mubr.f32.mxu0 0.0
    %3256 = vmatmul.mubr.f32.gmra.mrb[0].mxu0 %v2919
    %v3257 = vpop.f32.mrb[0].mxu0
    %v3258 = vadd.f32 0.0, %v3257
    %v3259 = vpop.f32.mrb[0].mxu0
    %3260 = vmatprep.mubr.f32.mxu0 0.0
    %3261 = vmatmul.mubr.f32.gmra.mrb[0].mxu0 %v2922
    %v3262 = vpop.f32.mrb[0].mxu0
    %v3263 = vadd.f32 0.0, %v3262
    %v3264 = vpop.f32.mrb[0].mxu0
    %3265 = vmatprep.mubr.f32.mxu0 0.0
    %3266 = vmatmul.mubr.f32.gmra.mrb[0].mxu0 %v2925
    %v3267 = vpop.f32.mrb[0].mxu0
    %v3268 = vadd.f32 0.0, %v3267
    %v3269 = vpop.f32.mrb[0].mxu0
    %3270 = vmatprep.mubr.f32.mxu0 0.0
    %3271 = vmatmul.mubr.f32.gmra.mrb[0].mxu0 %v2928
    %v3272 = vpop.f32.mrb[0].mxu0
    %v3273 = vadd.f32 0.0, %v3272
    %v3274 = vpop.f32.mrb[0].mxu0
    %3275 = vmatprep.mubr.f32.mxu0 0.0
    %3276 = vmatmul.mubr.f32.gmra.mrb[0].mxu0 %v2931
    %v3277 = vpop.f32.mrb[0].mxu0
    %v3278 = vadd.f32 0.0, %v3277
    %v3279 = vpop.f32.mrb[0].mxu0
    %3280 = vmatprep.mubr.f32.mxu0 0.0
    %3281 = vmatmul.mubr.f32.gmra.mrb[0].mxu0 %v2934
    %v3282 = vpop.f32.mrb[0].mxu0
    %v3283 = vadd.f32 0.0, %v3282
    %v3284 = vpop.f32.mrb[0].mxu0
    %3285 = vmatprep.mubr.f32.mxu0 0.0
    %3286 = vmatmul.mubr.f32.gmra.mrb[0].mxu0 %v2937
    %v3287 = vpop.f32.mrb[0].mxu0
    %v3288 = vadd.f32 0.0, %v3287
    %v3289 = vpop.f32.mrb[0].mxu0
    %3290 = vmatprep.mubr.f32.mxu0 0.0
    %3291 = vmatmul.mubr.f32.gmra.mrb[0].mxu0 %v2940
    %v3292 = vpop.f32.mrb[0].mxu0
    %v3293 = vadd.f32 0.0, %v3292
    %v3294 = vpop.f32.mrb[0].mxu0
    %3295 = vmatprep.mubr.f32.mxu0 0.0
    %3296 = vmatmul.mubr.f32.gmra.mrb[0].mxu0 %v2943
    %v3297 = vpop.f32.mrb[0].mxu0
    %v3298 = vadd.f32 0.0, %v3297
    %v3299 = vpop.f32.mrb[0].mxu0
    %3300 = vmatprep.mubr.f32.mxu0 0.0
    %3301 = vmatmul.mubr.f32.gmra.mrb[0].mxu0 %v2946
    %v3302 = vpop.f32.mrb[0].mxu0
    %v3303 = vadd.f32 0.0, %v3302
    %v3304 = vpop.f32.mrb[0].mxu0
    %3305 = vmatprep.mubr.f32.mxu0 0.0
    %3306 = vmatmul.mubr.f32.gmra.mrb[0].mxu0 %v2949
    %v3307 = vpop.f32.mrb[0].mxu0
    %v3308 = vadd.f32 0.0, %v3307
    %v3309 = vpop.f32.mrb[0].mxu0
    %3310 = vmatprep.mubr.f32.mxu0 0.0
    %3311 = vmatmul.mubr.f32.gmra.mrb[0].mxu0 %v2952
    %v3312 = vpop.f32.mrb[0].mxu0
    %v3313 = vadd.f32 0.0, %v3312
    %v3314 = vpop.f32.mrb[0].mxu0
    %3315 = vmatprep.mubr.f32.mxu0 0.0
    %3316 = vmatmul.mubr.f32.gmra.mrb[0].mxu0 %v2955
    %v3317 = vpop.f32.mrb[0].mxu0
    %v3318 = vadd.f32 0.0, %v3317
    %v3319 = vpop.f32.mrb[0].mxu0
    %3320 = vmatprep.mubr.f32.mxu0 0.0
    %3321 = vmatmul.mubr.f32.gmra.mrb[0].mxu0 %v2958
    %v3322 = vpop.f32.mrb[0].mxu0
    %v3323 = vadd.f32 0.0, %v3322
    %v3324 = vpop.f32.mrb[0].mxu0
    %3325 = vmatprep.mubr.f32.mxu0 0.0
    %3326 = vmatmul.mubr.f32.gmra.mrb[0].mxu0 %v2961
    %v3327 = vpop.f32.mrb[0].mxu0
    %v3328 = vadd.f32 0.0, %v3327
    %v3329 = vpop.f32.mrb[0].mxu0
    %3330 = vmatprep.mubr.f32.mxu0 0.0
    %3331 = vmatmul.mubr.f32.gmra.mrb[0].mxu0 %v2964
    %v3332 = vpop.f32.mrb[0].mxu0
    %v3333 = vadd.f32 0.0, %v3332
    %v3334 = vpop.f32.mrb[0].mxu0
    %3335 = vmatprep.mubr.f32.mxu0 0.0
    %3336 = vmatmul.mubr.f32.gmra.mrb[0].mxu0 %v2967
    %v3337 = vpop.f32.mrb[0].mxu0
    %v3338 = vadd.f32 0.0, %v3337
    %v3339 = vpop.f32.mrb[0].mxu0
    %3340 = vmatprep.mubr.f32.mxu0 0.0
    %3341 = vmatmul.mubr.f32.gmra.mrb[0].mxu0 %v2970
    %v3342 = vpop.f32.mrb[0].mxu0
    %v3343 = vadd.f32 0.0, %v3342
    %v3344 = vpop.f32.mrb[0].mxu0
    %3345 = vmatprep.mubr.f32.mxu0 0.0
    %3346 = vmatmul.mubr.f32.gmra.mrb[0].mxu0 %v2973
    %v3347 = vpop.f32.mrb[0].mxu0
    %v3348 = vadd.f32 0.0, %v3347
    %v3349 = vpop.f32.mrb[0].mxu0
    %3350 = vmatprep.mubr.f32.mxu0 0.0
    %3351 = vmatmul.mubr.f32.gmra.mrb[0].mxu0 %v2976
    %v3352 = vpop.f32.mrb[0].mxu0
    %v3353 = vadd.f32 0.0, %v3352
    %v3354 = vpop.f32.mrb[0].mxu0
    %3355 = vmatprep.mubr.f32.mxu0 0.0
    %3356 = vmatmul.mubr.f32.gmra.mrb[0].mxu0 %v2979
    %v3357 = vpop.f32.mrb[0].mxu0
    %v3358 = vadd.f32 0.0, %v3357
    %v3359 = vpop.f32.mrb[0].mxu0
    %3360 = vmatprep.mubr.f32.mxu0 0.0
    %3361 = vmatmul.mubr.f32.gmra.mrb[0].mxu0 %v2982
    %v3362 = vpop.f32.mrb[0].mxu0
    %v3363 = vadd.f32 0.0, %v3362
    %v3364 = vpop.f32.mrb[0].mxu0
    %3365 = vmatprep.mubr.f32.mxu0 0.0
    %3366 = vmatmul.mubr.f32.gmra.mrb[0].mxu0 %v2985
    %v3367 = vpop.f32.mrb[0].mxu0
    %v3368 = vadd.f32 0.0, %v3367
    %v3369 = vpop.f32.mrb[0].mxu0
    %3370 = vmatprep.mubr.f32.mxu0 0.0
    %3371 = vmatmul.mubr.f32.gmra.mrb[0].mxu0 %v2988
    %v3372 = vpop.f32.mrb[0].mxu0
    %v3373 = vadd.f32 0.0, %v3372
    %v3374 = vpop.f32.mrb[0].mxu0
    %3375 = vmatprep.mubr.f32.mxu0 0.0
    %3376 = vmatmul.mubr.f32.gmra.mrb[0].mxu0 %v2991
    %v3377 = vpop.f32.mrb[0].mxu0
    %v3378 = vadd.f32 0.0, %v3377
    %v3379 = vpop.f32.mrb[0].mxu0
    %3380 = vdwg.mxu0
    %v3381 = vadd.f32 %v2671, %v3063
    %v3382 = vadd.f32 %v2672, %v3068
    %v3383 = vadd.f32 %v2673, %v3073
    %v3384 = vadd.f32 %v2674, %v3078
    %v3385 = vadd.f32 %v2675, %v3083
    %v3386 = vadd.f32 %v2676, %v3088
    %v3387 = vadd.f32 %v2677, %v3093
    %v3388 = vadd.f32 %v2678, %v3098
    %v3389 = vadd.f32 %v2679, %v3103
    %v3390 = vadd.f32 %v2680, %v3108
    %v3391 = vadd.f32 %v2681, %v3113
    %v3392 = vadd.f32 %v2682, %v3118
    %v3393 = vadd.f32 %v2683, %v3123
    %v3394 = vadd.f32 %v2684, %v3128
    %v3395 = vadd.f32 %v2685, %v3133
    %v3396 = vadd.f32 %v2686, %v3138
    %v3397 = vadd.f32 %v2687, %v3143
    %v3398 = vadd.f32 %v2688, %v3148
    %v3399 = vadd.f32 %v2689, %v3153
    %v3400 = vadd.f32 %v2690, %v3158
    %v3401 = vadd.f32 %v2691, %v3163
    %v3402 = vadd.f32 %v2692, %v3168
    %v3403 = vadd.f32 %v2693, %v3173
    %v3404 = vadd.f32 %v2694, %v3178
    %v3405 = vadd.f32 %v2695, %v3183
    %v3406 = vadd.f32 %v2696, %v3188
    %v3407 = vadd.f32 %v2697, %v3193
    %v3408 = vadd.f32 %v2698, %v3198
    %v3409 = vadd.f32 %v2699, %v3203
    %v3410 = vadd.f32 %v2700, %v3208
    %v3411 = vadd.f32 %v2701, %v3213
    %v3412 = vadd.f32 %v2702, %v3218
    %v3413 = vadd.f32 %v2703, %v3223
    %v3414 = vadd.f32 %v2704, %v3228
    %v3415 = vadd.f32 %v2705, %v3233
    %v3416 = vadd.f32 %v2706, %v3238
    %v3417 = vadd.f32 %v2707, %v3243
    %v3418 = vadd.f32 %v2708, %v3248
    %v3419 = vadd.f32 %v2709, %v3253
    %v3420 = vadd.f32 %v2710, %v3258
    %v3421 = vadd.f32 %v2711, %v3263
    %v3422 = vadd.f32 %v2712, %v3268
    %v3423 = vadd.f32 %v2713, %v3273
    %v3424 = vadd.f32 %v2714, %v3278
    %v3425 = vadd.f32 %v2715, %v3283
    %v3426 = vadd.f32 %v2716, %v3288
    %v3427 = vadd.f32 %v2717, %v3293
    %v3428 = vadd.f32 %v2718, %v3298
    %v3429 = vadd.f32 %v2719, %v3303
    %v3430 = vadd.f32 %v2720, %v3308
    %v3431 = vadd.f32 %v2721, %v3313
    %v3432 = vadd.f32 %v2722, %v3318
    %v3433 = vadd.f32 %v2723, %v3323
    %v3434 = vadd.f32 %v2724, %v3328
    %v3435 = vadd.f32 %v2725, %v3333
    %v3436 = vadd.f32 %v2726, %v3338
    %v3437 = vadd.f32 %v2727, %v3343
    %v3438 = vadd.f32 %v2728, %v3348
    %v3439 = vadd.f32 %v2729, %v3353
    %v3440 = vadd.f32 %v2730, %v3358
    %v3441 = vadd.f32 %v2731, %v3363
    %v3442 = vadd.f32 %v2732, %v3368
    %v3443 = vadd.f32 %v2733, %v3373
    %v3444 = vadd.f32 %v2734, %v3378
    %v3445 = vld [vmem:[%s2024 + $0x2] sm:$0xff]
    %v3446 = vld [vmem:[%s2024 + $0xa] sm:$0xff]
    %v3447 = vld [vmem:[%s2024 + $0x1a] sm:$0xff]
    %v3448 = vld [vmem:[%s2024 + $0x22] sm:$0xff]
    %v3449 = vld [vmem:[%s2024 + $0x32] sm:$0xff]
    %v3450 = vld [vmem:[%s2024 + $0x3a] sm:$0xff]
    %v3451 = vld [vmem:[%s2024 + $0x4a] sm:$0xff]
    %v3452 = vld [vmem:[%s2024 + $0x52] sm:$0xff]
    %v3453 = vld [vmem:[%s2024 + $0x62] sm:$0xff]
    %v3454 = vld [vmem:[%s2024 + $0x6a] sm:$0xff]
    %v3455 = vld [vmem:[%s2024 + $0x7a] sm:$0xff]
    %v3456 = vld [vmem:[%s2024 + $0x82] sm:$0xff]
    %v3457 = vld [vmem:[%s2024 + $0x92] sm:$0xff]
    %v3458 = vld [vmem:[%s2024 + $0x9a] sm:$0xff]
    %v3459 = vld [vmem:[%s2024 + $0xaa] sm:$0xff]
    %v3460 = vld [vmem:[%s2024 + $0xb2] sm:$0xff]
    %v3461 = vld [vmem:[%s2024 + $0xc2] sm:$0xff]
    %v3462 = vld [vmem:[%s2024 + $0xca] sm:$0xff]
    %v3463 = vld [vmem:[%s2024 + $0xda] sm:$0xff]
    %v3464 = vld [vmem:[%s2024 + $0xe2] sm:$0xff]
    %v3465 = vld [vmem:[%s2024 + $0xf2] sm:$0xff]
    %v3466 = vld [vmem:[%s2024 + $0xfa] sm:$0xff]
    %v3467 = vld [vmem:[%s2024 + $0x10a] sm:$0xff]
    %v3468 = vld [vmem:[%s2024 + $0x112] sm:$0xff]
    %v3469 = vld [vmem:[%s2024 + $0x122] sm:$0xff]
    %v3470 = vld [vmem:[%s2024 + $0x12a] sm:$0xff]
    %v3471 = vld [vmem:[%s2024 + $0x13a] sm:$0xff]
    %v3472 = vld [vmem:[%s2024 + $0x142] sm:$0xff]
    %v3473 = vld [vmem:[%s2024 + $0x152] sm:$0xff]
    %v3474 = vld [vmem:[%s2024 + $0x15a] sm:$0xff]
    %v3475 = vld [vmem:[%s2024 + $0x16a] sm:$0xff]
    %v3476 = vld [vmem:[%s2024 + $0x172] sm:$0xff]
    %v3477 = vld [vmem:[%s2024 + $0x1b2] sm:$0xff]
    %v3478 = vld [vmem:[%s2024 + $0x1ba] sm:$0xff]
    %v3479 = vld [vmem:[%s2024 + $0x1ca] sm:$0xff]
    %v3480 = vld [vmem:[%s2024 + $0x1d2] sm:$0xff]
    %v3481 = vld [vmem:[%s2024 + $0x1e2] sm:$0xff]
    %v3482 = vld [vmem:[%s2024 + $0x1ea] sm:$0xff]
    %v3483 = vld [vmem:[%s2024 + $0x1fa] sm:$0xff]
    %v3484 = vld [vmem:[%s2024 + $0x202] sm:$0xff]
    %v3485 = vld [vmem:[%s2024 + $0x212] sm:$0xff]
    %v3486 = vld [vmem:[%s2024 + $0x21a] sm:$0xff]
    %v3487 = vld [vmem:[%s2024 + $0x22a] sm:$0xff]
    %v3488 = vld [vmem:[%s2024 + $0x232] sm:$0xff]
    %v3489 = vld [vmem:[%s2024 + $0x242] sm:$0xff]
    %v3490 = vld [vmem:[%s2024 + $0x24a] sm:$0xff]
    %v3491 = vld [vmem:[%s2024 + $0x25a] sm:$0xff]
    %v3492 = vld [vmem:[%s2024 + $0x262] sm:$0xff]
    %v3493 = vld [vmem:[%s2024 + $0x272] sm:$0xff]
    %v3494 = vld [vmem:[%s2024 + $0x27a] sm:$0xff]
    %v3495 = vld [vmem:[%s2024 + $0x28a] sm:$0xff]
    %v3496 = vld [vmem:[%s2024 + $0x292] sm:$0xff]
    %v3497 = vld [vmem:[%s2024 + $0x2a2] sm:$0xff]
    %v3498 = vld [vmem:[%s2024 + $0x2aa] sm:$0xff]
    %v3499 = vld [vmem:[%s2024 + $0x2ba] sm:$0xff]
    %v3500 = vld [vmem:[%s2024 + $0x2c2] sm:$0xff]
    %v3501 = vld [vmem:[%s2024 + $0x2d2] sm:$0xff]
    %v3502 = vld [vmem:[%s2024 + $0x2da] sm:$0xff]
    %v3503 = vld [vmem:[%s2024 + $0x2ea] sm:$0xff]
    %v3504 = vld [vmem:[%s2024 + $0x2f2] sm:$0xff]
    %v3505 = vld [vmem:[%s2024 + $0x302] sm:$0xff]
    %v3506 = vld [vmem:[%s2024 + $0x30a] sm:$0xff]
    %v3507 = vld [vmem:[%s2024 + $0x31a] sm:$0xff]
    %v3508 = vld [vmem:[%s2024 + $0x322] sm:$0xff]
    %s3509 = scalar_lea.vmem %s1, 20
    %v3510 = vld [vmem:[%s3509] sm:$0xf]
    %v3512 = vsel %vm152, %v3445, 0
    %v3515 = vsel %vm152, %v3446, 0
    %v3518 = vsel %vm152, %v3447, 0
    %v3521 = vsel %vm152, %v3448, 0
    %v3524 = vsel %vm152, %v3449, 0
    %v3527 = vsel %vm152, %v3450, 0
    %v3530 = vsel %vm152, %v3451, 0
    %v3533 = vsel %vm152, %v3452, 0
    %v3536 = vsel %vm152, %v3453, 0
    %v3539 = vsel %vm152, %v3454, 0
    %v3542 = vsel %vm152, %v3455, 0
    %v3545 = vsel %vm152, %v3456, 0
    %v3548 = vsel %vm152, %v3457, 0
    %v3551 = vsel %vm152, %v3458, 0
    %v3554 = vsel %vm152, %v3459, 0
    %v3557 = vsel %vm152, %v3460, 0
    %v3560 = vsel %vm152, %v3461, 0
    %v3563 = vsel %vm152, %v3462, 0
    %v3566 = vsel %vm152, %v3463, 0
    %v3569 = vsel %vm152, %v3464, 0
    %v3572 = vsel %vm152, %v3465, 0
    %v3575 = vsel %vm152, %v3466, 0
    %v3578 = vsel %vm152, %v3467, 0
    %v3581 = vsel %vm152, %v3468, 0
    %v3584 = vsel %vm152, %v3469, 0
    %v3587 = vsel %vm152, %v3470, 0
    %v3590 = vsel %vm152, %v3471, 0
    %v3593 = vsel %vm152, %v3472, 0
    %v3596 = vsel %vm152, %v3473, 0
    %v3599 = vsel %vm152, %v3474, 0
    %v3602 = vsel %vm152, %v3475, 0
    %v3605 = vsel %vm152, %v3476, 0
    %v3608 = vsel %vm152, %v3477, 0
    %v3611 = vsel %vm152, %v3478, 0
    %v3614 = vsel %vm152, %v3479, 0
    %v3617 = vsel %vm152, %v3480, 0
    %v3620 = vsel %vm152, %v3481, 0
    %v3623 = vsel %vm152, %v3482, 0
    %v3626 = vsel %vm152, %v3483, 0
    %v3629 = vsel %vm152, %v3484, 0
    %v3632 = vsel %vm152, %v3485, 0
    %v3635 = vsel %vm152, %v3486, 0
    %v3638 = vsel %vm152, %v3487, 0
    %v3641 = vsel %vm152, %v3488, 0
    %v3644 = vsel %vm152, %v3489, 0
    %v3647 = vsel %vm152, %v3490, 0
    %v3650 = vsel %vm152, %v3491, 0
    %v3653 = vsel %vm152, %v3492, 0
    %v3656 = vsel %vm152, %v3493, 0
    %v3659 = vsel %vm152, %v3494, 0
    %v3662 = vsel %vm152, %v3495, 0
    %v3665 = vsel %vm152, %v3496, 0
    %v3668 = vsel %vm152, %v3497, 0
    %v3671 = vsel %vm152, %v3498, 0
    %v3674 = vsel %vm152, %v3499, 0
    %v3677 = vsel %vm152, %v3500, 0
    %v3680 = vsel %vm152, %v3501, 0
    %v3683 = vsel %vm152, %v3502, 0
    %v3686 = vsel %vm152, %v3503, 0
    %v3689 = vsel %vm152, %v3504, 0
    %v3692 = vsel %vm152, %v3505, 0
    %v3695 = vsel %vm152, %v3506, 0
    %v3698 = vsel %vm152, %v3507, 0
    %v3701 = vsel %vm152, %v3508, 0
    %v3704 = vsel %vm345, %v3510, 0
    %3706 = vmatprep.subr.mxu0 0.0
    %3707 = vmatpush1.msra.mxu0 %v3704
    %3708 = vmatprep.subr.mxu0 0.0
    %3709 = vmatpush1.msra.mxu0 0.0
    %3710 = vmatprep.subr.mxu0 0.0
    %3711 = vmatpush1.msra.mxu0 0.0
    %3712 = vmatprep.subr.mxu0 0.0
    %3713 = vmatpush1.msra.mxu0 0.0
    %3714 = vmatprep.subr.mxu0 0.0
    %3715 = vmatpush1.msra.mxu0 0.0
    %3716 = vmatprep.subr.mxu0 0.0
    %3717 = vmatpush1.msra.mxu0 0.0
    %3718 = vmatprep.subr.mxu0 0.0
    %3719 = vmatpush1.msra.mxu0 0.0
    %3720 = vmatprep.subr.mxu0 0.0
    %3721 = vmatpush1.msra.mxu0 0.0
    %3722 = vmatprep.subr.mxu0 0.0
    %3723 = vmatpush1.msra.mxu0 0.0
    %3724 = vmatprep.subr.mxu0 0.0
    %3725 = vmatpush1.msra.mxu0 0.0
    %3726 = vmatprep.subr.mxu0 0.0
    %3727 = vmatpush1.msra.mxu0 0.0
    %3728 = vmatprep.subr.mxu0 0.0
    %3729 = vmatpush1.msra.mxu0 0.0
    %3730 = vmatprep.subr.mxu0 0.0
    %3731 = vmatpush1.msra.mxu0 0.0
    %3732 = vmatprep.subr.mxu0 0.0
    %3733 = vmatpush1.msra.mxu0 0.0
    %3734 = vmatprep.subr.mxu0 0.0
    %3735 = vmatpush1.msra.mxu0 0.0
    %3736 = vmatprep.subr.mxu0 0.0
    %3737 = vmatpush1.msra.mxu0 0.0
    %3738 = vmatprep.subr.mxu0 0.0
    %3739 = vmatpush1.msra.mxu0 0.0
    %3740 = vmatprep.subr.mxu0 0.0
    %3741 = vmatpush1.msra.mxu0 0.0
    %3742 = vmatprep.subr.mxu0 0.0
    %3743 = vmatpush1.msra.mxu0 0.0
    %3744 = vmatprep.subr.mxu0 0.0
    %3745 = vmatpush1.msra.mxu0 0.0
    %3746 = vmatprep.subr.mxu0 0.0
    %3747 = vmatpush1.msra.mxu0 0.0
    %3748 = vmatprep.subr.mxu0 0.0
    %3749 = vmatpush1.msra.mxu0 0.0
    %3750 = vmatprep.subr.mxu0 0.0
    %3751 = vmatpush1.msra.mxu0 0.0
    %3752 = vmatprep.subr.mxu0 0.0
    %3753 = vmatpush1.msra.mxu0 0.0
    %3754 = vmatprep.subr.mxu0 0.0
    %3755 = vmatpush1.msra.mxu0 0.0
    %3756 = vmatprep.subr.mxu0 0.0
    %3757 = vmatpush1.msra.mxu0 0.0
    %3758 = vmatprep.subr.mxu0 0.0
    %3759 = vmatpush1.msra.mxu0 0.0
    %3760 = vmatprep.subr.mxu0 0.0
    %3761 = vmatpush1.msra.mxu0 0.0
    %3762 = vmatprep.subr.mxu0 0.0
    %3763 = vmatpush1.msra.mxu0 0.0
    %3764 = vmatprep.subr.mxu0 0.0
    %3765 = vmatpush1.msra.mxu0 0.0
    %3766 = vmatprep.subr.mxu0 0.0
    %3767 = vmatpush1.msra.mxu0 0.0
    %3768 = vmatprep.subr.mxu0 0.0
    %3769 = vmatpush1.msra.mxu0 0.0
    %3770 = vmatprep.mubr.f32.mxu0 0.0
    %3771 = vmatmul.mubr.f32.gmra.mrb[0].mxu0 %v3512
    %v3772 = vpop.f32.mrb[0].mxu0
    %v3773 = vadd.f32 0.0, %v3772
    %v3774 = vpop.f32.mrb[0].mxu0
    %3775 = vmatprep.mubr.f32.mxu0 0.0
    %3776 = vmatmul.mubr.f32.gmra.mrb[0].mxu0 %v3515
    %v3777 = vpop.f32.mrb[0].mxu0
    %v3778 = vadd.f32 0.0, %v3777
    %v3779 = vpop.f32.mrb[0].mxu0
    %3780 = vmatprep.mubr.f32.mxu0 0.0
    %3781 = vmatmul.mubr.f32.gmra.mrb[0].mxu0 %v3518
    %v3782 = vpop.f32.mrb[0].mxu0
    %v3783 = vadd.f32 0.0, %v3782
    %v3784 = vpop.f32.mrb[0].mxu0
    %3785 = vmatprep.mubr.f32.mxu0 0.0
    %3786 = vmatmul.mubr.f32.gmra.mrb[0].mxu0 %v3521
    %v3787 = vpop.f32.mrb[0].mxu0
    %v3788 = vadd.f32 0.0, %v3787
    %v3789 = vpop.f32.mrb[0].mxu0
    %3790 = vmatprep.mubr.f32.mxu0 0.0
    %3791 = vmatmul.mubr.f32.gmra.mrb[0].mxu0 %v3524
    %v3792 = vpop.f32.mrb[0].mxu0
    %v3793 = vadd.f32 0.0, %v3792
    %v3794 = vpop.f32.mrb[0].mxu0
    %3795 = vmatprep.mubr.f32.mxu0 0.0
    %3796 = vmatmul.mubr.f32.gmra.mrb[0].mxu0 %v3527
    %v3797 = vpop.f32.mrb[0].mxu0
    %v3798 = vadd.f32 0.0, %v3797
    %v3799 = vpop.f32.mrb[0].mxu0
    %3800 = vmatprep.mubr.f32.mxu0 0.0
    %3801 = vmatmul.mubr.f32.gmra.mrb[0].mxu0 %v3530
    %v3802 = vpop.f32.mrb[0].mxu0
    %v3803 = vadd.f32 0.0, %v3802
    %v3804 = vpop.f32.mrb[0].mxu0
    %3805 = vmatprep.mubr.f32.mxu0 0.0
    %3806 = vmatmul.mubr.f32.gmra.mrb[0].mxu0 %v3533
    %v3807 = vpop.f32.mrb[0].mxu0
    %v3808 = vadd.f32 0.0, %v3807
    %v3809 = vpop.f32.mrb[0].mxu0
    %3810 = vmatprep.mubr.f32.mxu0 0.0
    %3811 = vmatmul.mubr.f32.gmra.mrb[0].mxu0 %v3536
    %v3812 = vpop.f32.mrb[0].mxu0
    %v3813 = vadd.f32 0.0, %v3812
    %v3814 = vpop.f32.mrb[0].mxu0
    %3815 = vmatprep.mubr.f32.mxu0 0.0
    %3816 = vmatmul.mubr.f32.gmra.mrb[0].mxu0 %v3539
    %v3817 = vpop.f32.mrb[0].mxu0
    %v3818 = vadd.f32 0.0, %v3817
    %v3819 = vpop.f32.mrb[0].mxu0
    %3820 = vmatprep.mubr.f32.mxu0 0.0
    %3821 = vmatmul.mubr.f32.gmra.mrb[0].mxu0 %v3542
    %v3822 = vpop.f32.mrb[0].mxu0
    %v3823 = vadd.f32 0.0, %v3822
    %v3824 = vpop.f32.mrb[0].mxu0
    %3825 = vmatprep.mubr.f32.mxu0 0.0
    %3826 = vmatmul.mubr.f32.gmra.mrb[0].mxu0 %v3545
    %v3827 = vpop.f32.mrb[0].mxu0
    %v3828 = vadd.f32 0.0, %v3827
    %v3829 = vpop.f32.mrb[0].mxu0
    %3830 = vmatprep.mubr.f32.mxu0 0.0
    %3831 = vmatmul.mubr.f32.gmra.mrb[0].mxu0 %v3548
    %v3832 = vpop.f32.mrb[0].mxu0
    %v3833 = vadd.f32 0.0, %v3832
    %v3834 = vpop.f32.mrb[0].mxu0
    %3835 = vmatprep.mubr.f32.mxu0 0.0
    %3836 = vmatmul.mubr.f32.gmra.mrb[0].mxu0 %v3551
    %v3837 = vpop.f32.mrb[0].mxu0
    %v3838 = vadd.f32 0.0, %v3837
    %v3839 = vpop.f32.mrb[0].mxu0
    %3840 = vmatprep.mubr.f32.mxu0 0.0
    %3841 = vmatmul.mubr.f32.gmra.mrb[0].mxu0 %v3554
    %v3842 = vpop.f32.mrb[0].mxu0
    %v3843 = vadd.f32 0.0, %v3842
    %v3844 = vpop.f32.mrb[0].mxu0
    %3845 = vmatprep.mubr.f32.mxu0 0.0
    %3846 = vmatmul.mubr.f32.gmra.mrb[0].mxu0 %v3557
    %v3847 = vpop.f32.mrb[0].mxu0
    %v3848 = vadd.f32 0.0, %v3847
    %v3849 = vpop.f32.mrb[0].mxu0
    %3850 = vmatprep.mubr.f32.mxu0 0.0
    %3851 = vmatmul.mubr.f32.gmra.mrb[0].mxu0 %v3560
    %v3852 = vpop.f32.mrb[0].mxu0
    %v3853 = vadd.f32 0.0, %v3852
    %v3854 = vpop.f32.mrb[0].mxu0
    %3855 = vmatprep.mubr.f32.mxu0 0.0
    %3856 = vmatmul.mubr.f32.gmra.mrb[0].mxu0 %v3563
    %v3857 = vpop.f32.mrb[0].mxu0
    %v3858 = vadd.f32 0.0, %v3857
    %v3859 = vpop.f32.mrb[0].mxu0
    %3860 = vmatprep.mubr.f32.mxu0 0.0
    %3861 = vmatmul.mubr.f32.gmra.mrb[0].mxu0 %v3566
    %v3862 = vpop.f32.mrb[0].mxu0
    %v3863 = vadd.f32 0.0, %v3862
    %v3864 = vpop.f32.mrb[0].mxu0
    %3865 = vmatprep.mubr.f32.mxu0 0.0
    %3866 = vmatmul.mubr.f32.gmra.mrb[0].mxu0 %v3569
    %v3867 = vpop.f32.mrb[0].mxu0
    %v3868 = vadd.f32 0.0, %v3867
    %v3869 = vpop.f32.mrb[0].mxu0
    %3870 = vmatprep.mubr.f32.mxu0 0.0
    %3871 = vmatmul.mubr.f32.gmra.mrb[0].mxu0 %v3572
    %v3872 = vpop.f32.mrb[0].mxu0
    %v3873 = vadd.f32 0.0, %v3872
    %v3874 = vpop.f32.mrb[0].mxu0
    %3875 = vmatprep.mubr.f32.mxu0 0.0
    %3876 = vmatmul.mubr.f32.gmra.mrb[0].mxu0 %v3575
    %v3877 = vpop.f32.mrb[0].mxu0
    %v3878 = vadd.f32 0.0, %v3877
    %v3879 = vpop.f32.mrb[0].mxu0
    %3880 = vmatprep.mubr.f32.mxu0 0.0
    %3881 = vmatmul.mubr.f32.gmra.mrb[0].mxu0 %v3578
    %v3882 = vpop.f32.mrb[0].mxu0
    %v3883 = vadd.f32 0.0, %v3882
    %v3884 = vpop.f32.mrb[0].mxu0
    %3885 = vmatprep.mubr.f32.mxu0 0.0
    %3886 = vmatmul.mubr.f32.gmra.mrb[0].mxu0 %v3581
    %v3887 = vpop.f32.mrb[0].mxu0
    %v3888 = vadd.f32 0.0, %v3887
    %v3889 = vpop.f32.mrb[0].mxu0
    %3890 = vmatprep.mubr.f32.mxu0 0.0
    %3891 = vmatmul.mubr.f32.gmra.mrb[0].mxu0 %v3584
    %v3892 = vpop.f32.mrb[0].mxu0
    %v3893 = vadd.f32 0.0, %v3892
    %v3894 = vpop.f32.mrb[0].mxu0
    %3895 = vmatprep.mubr.f32.mxu0 0.0
    %3896 = vmatmul.mubr.f32.gmra.mrb[0].mxu0 %v3587
    %v3897 = vpop.f32.mrb[0].mxu0
    %v3898 = vadd.f32 0.0, %v3897
    %v3899 = vpop.f32.mrb[0].mxu0
    %3900 = vmatprep.mubr.f32.mxu0 0.0
    %3901 = vmatmul.mubr.f32.gmra.mrb[0].mxu0 %v3590
    %v3902 = vpop.f32.mrb[0].mxu0
    %v3903 = vadd.f32 0.0, %v3902
    %v3904 = vpop.f32.mrb[0].mxu0
    %3905 = vmatprep.mubr.f32.mxu0 0.0
    %3906 = vmatmul.mubr.f32.gmra.mrb[0].mxu0 %v3593
    %v3907 = vpop.f32.mrb[0].mxu0
    %v3908 = vadd.f32 0.0, %v3907
    %v3909 = vpop.f32.mrb[0].mxu0
    %3910 = vmatprep.mubr.f32.mxu0 0.0
    %3911 = vmatmul.mubr.f32.gmra.mrb[0].mxu0 %v3596
    %v3912 = vpop.f32.mrb[0].mxu0
    %v3913 = vadd.f32 0.0, %v3912
    %v3914 = vpop.f32.mrb[0].mxu0
    %3915 = vmatprep.mubr.f32.mxu0 0.0
    %3916 = vmatmul.mubr.f32.gmra.mrb[0].mxu0 %v3599
    %v3917 = vpop.f32.mrb[0].mxu0
    %v3918 = vadd.f32 0.0, %v3917
    %v3919 = vpop.f32.mrb[0].mxu0
    %3920 = vmatprep.mubr.f32.mxu0 0.0
    %3921 = vmatmul.mubr.f32.gmra.mrb[0].mxu0 %v3602
    %v3922 = vpop.f32.mrb[0].mxu0
    %v3923 = vadd.f32 0.0, %v3922
    %v3924 = vpop.f32.mrb[0].mxu0
    %3925 = vmatprep.mubr.f32.mxu0 0.0
    %3926 = vmatmul.mubr.f32.gmra.mrb[0].mxu0 %v3605
    %v3927 = vpop.f32.mrb[0].mxu0
    %v3928 = vadd.f32 0.0, %v3927
    %v3929 = vpop.f32.mrb[0].mxu0
    %3930 = vmatprep.mubr.f32.mxu0 0.0
    %3931 = vmatmul.mubr.f32.gmra.mrb[0].mxu0 %v3608
    %v3932 = vpop.f32.mrb[0].mxu0
    %v3933 = vadd.f32 0.0, %v3932
    %v3934 = vpop.f32.mrb[0].mxu0
    %3935 = vmatprep.mubr.f32.mxu0 0.0
    %3936 = vmatmul.mubr.f32.gmra.mrb[0].mxu0 %v3611
    %v3937 = vpop.f32.mrb[0].mxu0
    %v3938 = vadd.f32 0.0, %v3937
    %v3939 = vpop.f32.mrb[0].mxu0
    %3940 = vmatprep.mubr.f32.mxu0 0.0
    %3941 = vmatmul.mubr.f32.gmra.mrb[0].mxu0 %v3614
    %v3942 = vpop.f32.mrb[0].mxu0
    %v3943 = vadd.f32 0.0, %v3942
    %v3944 = vpop.f32.mrb[0].mxu0
    %3945 = vmatprep.mubr.f32.mxu0 0.0
    %3946 = vmatmul.mubr.f32.gmra.mrb[0].mxu0 %v3617
    %v3947 = vpop.f32.mrb[0].mxu0
    %v3948 = vadd.f32 0.0, %v3947
    %v3949 = vpop.f32.mrb[0].mxu0
    %3950 = vmatprep.mubr.f32.mxu0 0.0
    %3951 = vmatmul.mubr.f32.gmra.mrb[0].mxu0 %v3620
    %v3952 = vpop.f32.mrb[0].mxu0
    %v3953 = vadd.f32 0.0, %v3952
    %v3954 = vpop.f32.mrb[0].mxu0
    %3955 = vmatprep.mubr.f32.mxu0 0.0
    %3956 = vmatmul.mubr.f32.gmra.mrb[0].mxu0 %v3623
    %v3957 = vpop.f32.mrb[0].mxu0
    %v3958 = vadd.f32 0.0, %v3957
    %v3959 = vpop.f32.mrb[0].mxu0
    %3960 = vmatprep.mubr.f32.mxu0 0.0
    %3961 = vmatmul.mubr.f32.gmra.mrb[0].mxu0 %v3626
    %v3962 = vpop.f32.mrb[0].mxu0
    %v3963 = vadd.f32 0.0, %v3962
    %v3964 = vpop.f32.mrb[0].mxu0
    %3965 = vmatprep.mubr.f32.mxu0 0.0
    %3966 = vmatmul.mubr.f32.gmra.mrb[0].mxu0 %v3629
    %v3967 = vpop.f32.mrb[0].mxu0
    %v3968 = vadd.f32 0.0, %v3967
    %v3969 = vpop.f32.mrb[0].mxu0
    %3970 = vmatprep.mubr.f32.mxu0 0.0
    %3971 = vmatmul.mubr.f32.gmra.mrb[0].mxu0 %v3632
    %v3972 = vpop.f32.mrb[0].mxu0
    %v3973 = vadd.f32 0.0, %v3972
    %v3974 = vpop.f32.mrb[0].mxu0
    %3975 = vmatprep.mubr.f32.mxu0 0.0
    %3976 = vmatmul.mubr.f32.gmra.mrb[0].mxu0 %v3635
    %v3977 = vpop.f32.mrb[0].mxu0
    %v3978 = vadd.f32 0.0, %v3977
    %v3979 = vpop.f32.mrb[0].mxu0
    %3980 = vmatprep.mubr.f32.mxu0 0.0
    %3981 = vmatmul.mubr.f32.gmra.mrb[0].mxu0 %v3638
    %v3982 = vpop.f32.mrb[0].mxu0
    %v3983 = vadd.f32 0.0, %v3982
    %v3984 = vpop.f32.mrb[0].mxu0
    %3985 = vmatprep.mubr.f32.mxu0 0.0
    %3986 = vmatmul.mubr.f32.gmra.mrb[0].mxu0 %v3641
    %v3987 = vpop.f32.mrb[0].mxu0
    %v3988 = vadd.f32 0.0, %v3987
    %v3989 = vpop.f32.mrb[0].mxu0
    %3990 = vmatprep.mubr.f32.mxu0 0.0
    %3991 = vmatmul.mubr.f32.gmra.mrb[0].mxu0 %v3644
    %v3992 = vpop.f32.mrb[0].mxu0
    %v3993 = vadd.f32 0.0, %v3992
    %v3994 = vpop.f32.mrb[0].mxu0
    %3995 = vmatprep.mubr.f32.mxu0 0.0
    %3996 = vmatmul.mubr.f32.gmra.mrb[0].mxu0 %v3647
    %v3997 = vpop.f32.mrb[0].mxu0
    %v3998 = vadd.f32 0.0, %v3997
    %v3999 = vpop.f32.mrb[0].mxu0
    %4000 = vmatprep.mubr.f32.mxu0 0.0
    %4001 = vmatmul.mubr.f32.gmra.mrb[0].mxu0 %v3650
    %v4002 = vpop.f32.mrb[0].mxu0
    %v4003 = vadd.f32 0.0, %v4002
    %v4004 = vpop.f32.mrb[0].mxu0
    %4005 = vmatprep.mubr.f32.mxu0 0.0
    %4006 = vmatmul.mubr.f32.gmra.mrb[0].mxu0 %v3653
    %v4007 = vpop.f32.mrb[0].mxu0
    %v4008 = vadd.f32 0.0, %v4007
    %v4009 = vpop.f32.mrb[0].mxu0
    %4010 = vmatprep.mubr.f32.mxu0 0.0
    %4011 = vmatmul.mubr.f32.gmra.mrb[0].mxu0 %v3656
    %v4012 = vpop.f32.mrb[0].mxu0
    %v4013 = vadd.f32 0.0, %v4012
    %v4014 = vpop.f32.mrb[0].mxu0
    %4015 = vmatprep.mubr.f32.mxu0 0.0
    %4016 = vmatmul.mubr.f32.gmra.mrb[0].mxu0 %v3659
    %v4017 = vpop.f32.mrb[0].mxu0
    %v4018 = vadd.f32 0.0, %v4017
    %v4019 = vpop.f32.mrb[0].mxu0
    %4020 = vmatprep.mubr.f32.mxu0 0.0
    %4021 = vmatmul.mubr.f32.gmra.mrb[0].mxu0 %v3662
    %v4022 = vpop.f32.mrb[0].mxu0
    %v4023 = vadd.f32 0.0, %v4022
    %v4024 = vpop.f32.mrb[0].mxu0
    %4025 = vmatprep.mubr.f32.mxu0 0.0
    %4026 = vmatmul.mubr.f32.gmra.mrb[0].mxu0 %v3665
    %v4027 = vpop.f32.mrb[0].mxu0
    %v4028 = vadd.f32 0.0, %v4027
    %v4029 = vpop.f32.mrb[0].mxu0
    %4030 = vmatprep.mubr.f32.mxu0 0.0
    %4031 = vmatmul.mubr.f32.gmra.mrb[0].mxu0 %v3668
    %v4032 = vpop.f32.mrb[0].mxu0
    %v4033 = vadd.f32 0.0, %v4032
    %v4034 = vpop.f32.mrb[0].mxu0
    %4035 = vmatprep.mubr.f32.mxu0 0.0
    %4036 = vmatmul.mubr.f32.gmra.mrb[0].mxu0 %v3671
    %v4037 = vpop.f32.mrb[0].mxu0
    %v4038 = vadd.f32 0.0, %v4037
    %v4039 = vpop.f32.mrb[0].mxu0
    %4040 = vmatprep.mubr.f32.mxu0 0.0
    %4041 = vmatmul.mubr.f32.gmra.mrb[0].mxu0 %v3674
    %v4042 = vpop.f32.mrb[0].mxu0
    %v4043 = vadd.f32 0.0, %v4042
    %v4044 = vpop.f32.mrb[0].mxu0
    %4045 = vmatprep.mubr.f32.mxu0 0.0
    %4046 = vmatmul.mubr.f32.gmra.mrb[0].mxu0 %v3677
    %v4047 = vpop.f32.mrb[0].mxu0
    %v4048 = vadd.f32 0.0, %v4047
    %v4049 = vpop.f32.mrb[0].mxu0
    %4050 = vmatprep.mubr.f32.mxu0 0.0
    %4051 = vmatmul.mubr.f32.gmra.mrb[0].mxu0 %v3680
    %v4052 = vpop.f32.mrb[0].mxu0
    %v4053 = vadd.f32 0.0, %v4052
    %v4054 = vpop.f32.mrb[0].mxu0
    %4055 = vmatprep.mubr.f32.mxu0 0.0
    %4056 = vmatmul.mubr.f32.gmra.mrb[0].mxu0 %v3683
    %v4057 = vpop.f32.mrb[0].mxu0
    %v4058 = vadd.f32 0.0, %v4057
    %v4059 = vpop.f32.mrb[0].mxu0
    %4060 = vmatprep.mubr.f32.mxu0 0.0
    %4061 = vmatmul.mubr.f32.gmra.mrb[0].mxu0 %v3686
    %v4062 = vpop.f32.mrb[0].mxu0
    %v4063 = vadd.f32 0.0, %v4062
    %v4064 = vpop.f32.mrb[0].mxu0
    %4065 = vmatprep.mubr.f32.mxu0 0.0
    %4066 = vmatmul.mubr.f32.gmra.mrb[0].mxu0 %v3689
    %v4067 = vpop.f32.mrb[0].mxu0
    %v4068 = vadd.f32 0.0, %v4067
    %v4069 = vpop.f32.mrb[0].mxu0
    %4070 = vmatprep.mubr.f32.mxu0 0.0
    %4071 = vmatmul.mubr.f32.gmra.mrb[0].mxu0 %v3692
    %v4072 = vpop.f32.mrb[0].mxu0
    %v4073 = vadd.f32 0.0, %v4072
    %v4074 = vpop.f32.mrb[0].mxu0
    %4075 = vmatprep.mubr.f32.mxu0 0.0
    %4076 = vmatmul.mubr.f32.gmra.mrb[0].mxu0 %v3695
    %v4077 = vpop.f32.mrb[0].mxu0
    %v4078 = vadd.f32 0.0, %v4077
    %v4079 = vpop.f32.mrb[0].mxu0
    %4080 = vmatprep.mubr.f32.mxu0 0.0
    %4081 = vmatmul.mubr.f32.gmra.mrb[0].mxu0 %v3698
    %v4082 = vpop.f32.mrb[0].mxu0
    %v4083 = vadd.f32 0.0, %v4082
    %v4084 = vpop.f32.mrb[0].mxu0
    %4085 = vmatprep.mubr.f32.mxu0 0.0
    %4086 = vmatmul.mubr.f32.gmra.mrb[0].mxu0 %v3701
    %v4087 = vpop.f32.mrb[0].mxu0
    %v4088 = vadd.f32 0.0, %v4087
    %v4089 = vpop.f32.mrb[0].mxu0
    %4090 = vdwg.mxu0
    %v4091 = vadd.f32 %v3381, %v3773
    %v4092 = vadd.f32 %v3382, %v3778
    %v4093 = vadd.f32 %v3383, %v3783
    %v4094 = vadd.f32 %v3384, %v3788
    %v4095 = vadd.f32 %v3385, %v3793
    %v4096 = vadd.f32 %v3386, %v3798
    %v4097 = vadd.f32 %v3387, %v3803
    %v4098 = vadd.f32 %v3388, %v3808
    %v4099 = vadd.f32 %v3389, %v3813
    %v4100 = vadd.f32 %v3390, %v3818
    %v4101 = vadd.f32 %v3391, %v3823
    %v4102 = vadd.f32 %v3392, %v3828
    %v4103 = vadd.f32 %v3393, %v3833
    %v4104 = vadd.f32 %v3394, %v3838
    %v4105 = vadd.f32 %v3395, %v3843
    %v4106 = vadd.f32 %v3396, %v3848
    %v4107 = vadd.f32 %v3397, %v3853
    %v4108 = vadd.f32 %v3398, %v3858
    %v4109 = vadd.f32 %v3399, %v3863
    %v4110 = vadd.f32 %v3400, %v3868
    %v4111 = vadd.f32 %v3401, %v3873
    %v4112 = vadd.f32 %v3402, %v3878
    %v4113 = vadd.f32 %v3403, %v3883
    %v4114 = vadd.f32 %v3404, %v3888
    %v4115 = vadd.f32 %v3405, %v3893
    %v4116 = vadd.f32 %v3406, %v3898
    %v4117 = vadd.f32 %v3407, %v3903
    %v4118 = vadd.f32 %v3408, %v3908
    %v4119 = vadd.f32 %v3409, %v3913
    %v4120 = vadd.f32 %v3410, %v3918
    %v4121 = vadd.f32 %v3411, %v3923
    %v4122 = vadd.f32 %v3412, %v3928
    %v4123 = vadd.f32 %v3413, %v3933
    %v4124 = vadd.f32 %v3414, %v3938
    %v4125 = vadd.f32 %v3415, %v3943
    %v4126 = vadd.f32 %v3416, %v3948
    %v4127 = vadd.f32 %v3417, %v3953
    %v4128 = vadd.f32 %v3418, %v3958
    %v4129 = vadd.f32 %v3419, %v3963
    %v4130 = vadd.f32 %v3420, %v3968
    %v4131 = vadd.f32 %v3421, %v3973
    %v4132 = vadd.f32 %v3422, %v3978
    %v4133 = vadd.f32 %v3423, %v3983
    %v4134 = vadd.f32 %v3424, %v3988
    %v4135 = vadd.f32 %v3425, %v3993
    %v4136 = vadd.f32 %v3426, %v3998
    %v4137 = vadd.f32 %v3427, %v4003
    %v4138 = vadd.f32 %v3428, %v4008
    %v4139 = vadd.f32 %v3429, %v4013
    %v4140 = vadd.f32 %v3430, %v4018
    %v4141 = vadd.f32 %v3431, %v4023
    %v4142 = vadd.f32 %v3432, %v4028
    %v4143 = vadd.f32 %v3433, %v4033
    %v4144 = vadd.f32 %v3434, %v4038
    %v4145 = vadd.f32 %v3435, %v4043
    %v4146 = vadd.f32 %v3436, %v4048
    %v4147 = vadd.f32 %v3437, %v4053
    %v4148 = vadd.f32 %v3438, %v4058
    %v4149 = vadd.f32 %v3439, %v4063
    %v4150 = vadd.f32 %v3440, %v4068
    %v4151 = vadd.f32 %v3441, %v4073
    %v4152 = vadd.f32 %v3442, %v4078
    %v4153 = vadd.f32 %v3443, %v4083
    %v4154 = vadd.f32 %v3444, %v4088
    %s4155 = scalar_lea.vmem %s0, 48
    %v4156 = vld [vmem:[%s4155] sm:$0xff]
    %v4157 = vld [vmem:[%s4155 + $0x8] sm:$0xff]
    %v4158 = vld [vmem:[%s4155 + $0x18] sm:$0xff]
    %v4159 = vld [vmem:[%s4155 + $0x20] sm:$0xff]
    %v4160 = vld [vmem:[%s4155 + $0x30] sm:$0xff]
    %v4161 = vld [vmem:[%s4155 + $0x38] sm:$0xff]
    %v4162 = vld [vmem:[%s4155 + $0x48] sm:$0xff]
    %v4163 = vld [vmem:[%s4155 + $0x50] sm:$0xff]
    %v4164 = vld [vmem:[%s4155 + $0x60] sm:$0xff]
    %v4165 = vld [vmem:[%s4155 + $0x68] sm:$0xff]
    %v4166 = vld [vmem:[%s4155 + $0x78] sm:$0xff]
    %v4167 = vld [vmem:[%s4155 + $0x80] sm:$0xff]
    %v4168 = vld [vmem:[%s4155 + $0x90] sm:$0xff]
    %v4169 = vld [vmem:[%s4155 + $0x98] sm:$0xff]
    %v4170 = vld [vmem:[%s4155 + $0xa8] sm:$0xff]
    %v4171 = vld [vmem:[%s4155 + $0xb0] sm:$0xff]
    %v4172 = vld [vmem:[%s4155 + $0xc0] sm:$0xff]
    %v4173 = vld [vmem:[%s4155 + $0xc8] sm:$0xff]
    %v4174 = vld [vmem:[%s4155 + $0xd8] sm:$0xff]
    %v4175 = vld [vmem:[%s4155 + $0xe0] sm:$0xff]
    %v4176 = vld [vmem:[%s4155 + $0xf0] sm:$0xff]
    %v4177 = vld [vmem:[%s4155 + $0xf8] sm:$0xff]
    %v4178 = vld [vmem:[%s4155 + $0x108] sm:$0xff]
    %v4179 = vld [vmem:[%s4155 + $0x110] sm:$0xff]
    %v4180 = vld [vmem:[%s4155 + $0x120] sm:$0xff]
    %v4181 = vld [vmem:[%s4155 + $0x128] sm:$0xff]
    %v4182 = vld [vmem:[%s4155 + $0x138] sm:$0xff]
    %v4183 = vld [vmem:[%s4155 + $0x140] sm:$0xff]
    %v4184 = vld [vmem:[%s4155 + $0x150] sm:$0xff]
    %v4185 = vld [vmem:[%s4155 + $0x158] sm:$0xff]
    %v4186 = vld [vmem:[%s4155 + $0x168] sm:$0xff]
    %v4187 = vld [vmem:[%s4155 + $0x170] sm:$0xff]
    %v4188 = vld [vmem:[%s4155 + $0x1b0] sm:$0xff]
    %v4189 = vld [vmem:[%s4155 + $0x1b8] sm:$0xff]
    %v4190 = vld [vmem:[%s4155 + $0x1c8] sm:$0xff]
    %v4191 = vld [vmem:[%s4155 + $0x1d0] sm:$0xff]
    %v4192 = vld [vmem:[%s4155 + $0x1e0] sm:$0xff]
    %v4193 = vld [vmem:[%s4155 + $0x1e8] sm:$0xff]
    %v4194 = vld [vmem:[%s4155 + $0x1f8] sm:$0xff]
    %v4195 = vld [vmem:[%s4155 + $0x200] sm:$0xff]
    %v4196 = vld [vmem:[%s4155 + $0x210] sm:$0xff]
    %v4197 = vld [vmem:[%s4155 + $0x218] sm:$0xff]
    %v4198 = vld [vmem:[%s4155 + $0x228] sm:$0xff]
    %v4199 = vld [vmem:[%s4155 + $0x230] sm:$0xff]
    %v4200 = vld [vmem:[%s4155 + $0x240] sm:$0xff]
    %v4201 = vld [vmem:[%s4155 + $0x248] sm:$0xff]
    %v4202 = vld [vmem:[%s4155 + $0x258] sm:$0xff]
    %v4203 = vld [vmem:[%s4155 + $0x260] sm:$0xff]
    %v4204 = vld [vmem:[%s4155 + $0x270] sm:$0xff]
    %v4205 = vld [vmem:[%s4155 + $0x278] sm:$0xff]
    %v4206 = vld [vmem:[%s4155 + $0x288] sm:$0xff]
    %v4207 = vld [vmem:[%s4155 + $0x290] sm:$0xff]
    %v4208 = vld [vmem:[%s4155 + $0x2a0] sm:$0xff]
    %v4209 = vld [vmem:[%s4155 + $0x2a8] sm:$0xff]
    %v4210 = vld [vmem:[%s4155 + $0x2b8] sm:$0xff]
    %v4211 = vld [vmem:[%s4155 + $0x2c0] sm:$0xff]
    %v4212 = vld [vmem:[%s4155 + $0x2d0] sm:$0xff]
    %v4213 = vld [vmem:[%s4155 + $0x2d8] sm:$0xff]
    %v4214 = vld [vmem:[%s4155 + $0x2e8] sm:$0xff]
    %v4215 = vld [vmem:[%s4155 + $0x2f0] sm:$0xff]
    %v4216 = vld [vmem:[%s4155 + $0x300] sm:$0xff]
    %v4217 = vld [vmem:[%s4155 + $0x308] sm:$0xff]
    %v4218 = vld [vmem:[%s4155 + $0x318] sm:$0xff]
    %v4219 = vld [vmem:[%s4155 + $0x320] sm:$0xff]
    %s4220 = scalar_lea.vmem %s1, 24
    %v4221 = vld [vmem:[%s4220] sm:$0xf]
    %v4223 = vsel %vm152, %v4156, 0
    %v4226 = vsel %vm152, %v4157, 0
    %v4229 = vsel %vm152, %v4158, 0
    %v4232 = vsel %vm152, %v4159, 0
    %v4235 = vsel %vm152, %v4160, 0
    %v4238 = vsel %vm152, %v4161, 0
    %v4241 = vsel %vm152, %v4162, 0
    %v4244 = vsel %vm152, %v4163, 0
    %v4247 = vsel %vm152, %v4164, 0
    %v4250 = vsel %vm152, %v4165, 0
    %v4253 = vsel %vm152, %v4166, 0
    %v4256 = vsel %vm152, %v4167, 0
    %v4259 = vsel %vm152, %v4168, 0
    %v4262 = vsel %vm152, %v4169, 0
    %v4265 = vsel %vm152, %v4170, 0
    %v4268 = vsel %vm152, %v4171, 0
    %v4271 = vsel %vm152, %v4172, 0
    %v4274 = vsel %vm152, %v4173, 0
    %v4277 = vsel %vm152, %v4174, 0
    %v4280 = vsel %vm152, %v4175, 0
    %v4283 = vsel %vm152, %v4176, 0
    %v4286 = vsel %vm152, %v4177, 0
    %v4289 = vsel %vm152, %v4178, 0
    %v4292 = vsel %vm152, %v4179, 0
    %v4295 = vsel %vm152, %v4180, 0
    %v4298 = vsel %vm152, %v4181, 0
    %v4301 = vsel %vm152, %v4182, 0
    %v4304 = vsel %vm152, %v4183, 0
    %v4307 = vsel %vm152, %v4184, 0
    %v4310 = vsel %vm152, %v4185, 0
    %v4313 = vsel %vm152, %v4186, 0
    %v4316 = vsel %vm152, %v4187, 0
    %v4319 = vsel %vm152, %v4188, 0
    %v4322 = vsel %vm152, %v4189, 0
    %v4325 = vsel %vm152, %v4190, 0
    %v4328 = vsel %vm152, %v4191, 0
    %v4331 = vsel %vm152, %v4192, 0
    %v4334 = vsel %vm152, %v4193, 0
    %v4337 = vsel %vm152, %v4194, 0
    %v4340 = vsel %vm152, %v4195, 0
    %v4343 = vsel %vm152, %v4196, 0
    %v4346 = vsel %vm152, %v4197, 0
    %v4349 = vsel %vm152, %v4198, 0
    %v4352 = vsel %vm152, %v4199, 0
    %v4355 = vsel %vm152, %v4200, 0
    %v4358 = vsel %vm152, %v4201, 0
    %v4361 = vsel %vm152, %v4202, 0
    %v4364 = vsel %vm152, %v4203, 0
    %v4367 = vsel %vm152, %v4204, 0
    %v4370 = vsel %vm152, %v4205, 0
    %v4373 = vsel %vm152, %v4206, 0
    %v4376 = vsel %vm152, %v4207, 0
    %v4379 = vsel %vm152, %v4208, 0
    %v4382 = vsel %vm152, %v4209, 0
    %v4385 = vsel %vm152, %v4210, 0
    %v4388 = vsel %vm152, %v4211, 0
    %v4391 = vsel %vm152, %v4212, 0
    %v4394 = vsel %vm152, %v4213, 0
    %v4397 = vsel %vm152, %v4214, 0
    %v4400 = vsel %vm152, %v4215, 0
    %v4403 = vsel %vm152, %v4216, 0
    %v4406 = vsel %vm152, %v4217, 0
    %v4409 = vsel %vm152, %v4218, 0
    %v4412 = vsel %vm152, %v4219, 0
    %v4415 = vsel %vm345, %v4221, 0
    %4417 = vmatprep.subr.mxu0 0.0
    %4418 = vmatpush1.msra.mxu0 %v4415
    %4419 = vmatprep.subr.mxu0 0.0
    %4420 = vmatpush1.msra.mxu0 0.0
    %4421 = vmatprep.subr.mxu0 0.0
    %4422 = vmatpush1.msra.mxu0 0.0
    %4423 = vmatprep.subr.mxu0 0.0
    %4424 = vmatpush1.msra.mxu0 0.0
    %4425 = vmatprep.subr.mxu0 0.0
    %4426 = vmatpush1.msra.mxu0 0.0
    %4427 = vmatprep.subr.mxu0 0.0
    %4428 = vmatpush1.msra.mxu0 0.0
    %4429 = vmatprep.subr.mxu0 0.0
    %4430 = vmatpush1.msra.mxu0 0.0
    %4431 = vmatprep.subr.mxu0 0.0
    %4432 = vmatpush1.msra.mxu0 0.0
    %4433 = vmatprep.subr.mxu0 0.0
    %4434 = vmatpush1.msra.mxu0 0.0
    %4435 = vmatprep.subr.mxu0 0.0
    %4436 = vmatpush1.msra.mxu0 0.0
    %4437 = vmatprep.subr.mxu0 0.0
    %4438 = vmatpush1.msra.mxu0 0.0
    %4439 = vmatprep.subr.mxu0 0.0
    %4440 = vmatpush1.msra.mxu0 0.0
    %4441 = vmatprep.subr.mxu0 0.0
    %4442 = vmatpush1.msra.mxu0 0.0
    %4443 = vmatprep.subr.mxu0 0.0
    %4444 = vmatpush1.msra.mxu0 0.0
    %4445 = vmatprep.subr.mxu0 0.0
    %4446 = vmatpush1.msra.mxu0 0.0
    %4447 = vmatprep.subr.mxu0 0.0
    %4448 = vmatpush1.msra.mxu0 0.0
    %4449 = vmatprep.subr.mxu0 0.0
    %4450 = vmatpush1.msra.mxu0 0.0
    %4451 = vmatprep.subr.mxu0 0.0
    %4452 = vmatpush1.msra.mxu0 0.0
    %4453 = vmatprep.subr.mxu0 0.0
    %4454 = vmatpush1.msra.mxu0 0.0
    %4455 = vmatprep.subr.mxu0 0.0
    %4456 = vmatpush1.msra.mxu0 0.0
    %4457 = vmatprep.subr.mxu0 0.0
    %4458 = vmatpush1.msra.mxu0 0.0
    %4459 = vmatprep.subr.mxu0 0.0
    %4460 = vmatpush1.msra.mxu0 0.0
    %4461 = vmatprep.subr.mxu0 0.0
    %4462 = vmatpush1.msra.mxu0 0.0
    %4463 = vmatprep.subr.mxu0 0.0
    %4464 = vmatpush1.msra.mxu0 0.0
    %4465 = vmatprep.subr.mxu0 0.0
    %4466 = vmatpush1.msra.mxu0 0.0
    %4467 = vmatprep.subr.mxu0 0.0
    %4468 = vmatpush1.msra.mxu0 0.0
    %4469 = vmatprep.subr.mxu0 0.0
    %4470 = vmatpush1.msra.mxu0 0.0
    %4471 = vmatprep.subr.mxu0 0.0
    %4472 = vmatpush1.msra.mxu0 0.0
    %4473 = vmatprep.subr.mxu0 0.0
    %4474 = vmatpush1.msra.mxu0 0.0
    %4475 = vmatprep.subr.mxu0 0.0
    %4476 = vmatpush1.msra.mxu0 0.0
    %4477 = vmatprep.subr.mxu0 0.0
    %4478 = vmatpush1.msra.mxu0 0.0
    %4479 = vmatprep.subr.mxu0 0.0
    %4480 = vmatpush1.msra.mxu0 0.0
    %4481 = vmatprep.mubr.f32.mxu0 0.0
    %4482 = vmatmul.mubr.f32.gmra.mrb[0].mxu0 %v4223
    %v4483 = vpop.f32.mrb[0].mxu0
    %v4484 = vadd.f32 0.0, %v4483
    %v4485 = vpop.f32.mrb[0].mxu0
    %4486 = vmatprep.mubr.f32.mxu0 0.0
    %4487 = vmatmul.mubr.f32.gmra.mrb[0].mxu0 %v4226
    %v4488 = vpop.f32.mrb[0].mxu0
    %v4489 = vadd.f32 0.0, %v4488
    %v4490 = vpop.f32.mrb[0].mxu0
    %4491 = vmatprep.mubr.f32.mxu0 0.0
    %4492 = vmatmul.mubr.f32.gmra.mrb[0].mxu0 %v4229
    %v4493 = vpop.f32.mrb[0].mxu0
    %v4494 = vadd.f32 0.0, %v4493
    %v4495 = vpop.f32.mrb[0].mxu0
    %4496 = vmatprep.mubr.f32.mxu0 0.0
    %4497 = vmatmul.mubr.f32.gmra.mrb[0].mxu0 %v4232
    %v4498 = vpop.f32.mrb[0].mxu0
    %v4499 = vadd.f32 0.0, %v4498
    %v4500 = vpop.f32.mrb[0].mxu0
    %4501 = vmatprep.mubr.f32.mxu0 0.0
    %4502 = vmatmul.mubr.f32.gmra.mrb[0].mxu0 %v4235
    %v4503 = vpop.f32.mrb[0].mxu0
    %v4504 = vadd.f32 0.0, %v4503
    %v4505 = vpop.f32.mrb[0].mxu0
    %4506 = vmatprep.mubr.f32.mxu0 0.0
    %4507 = vmatmul.mubr.f32.gmra.mrb[0].mxu0 %v4238
    %v4508 = vpop.f32.mrb[0].mxu0
    %v4509 = vadd.f32 0.0, %v4508
    %v4510 = vpop.f32.mrb[0].mxu0
    %4511 = vmatprep.mubr.f32.mxu0 0.0
    %4512 = vmatmul.mubr.f32.gmra.mrb[0].mxu0 %v4241
    %v4513 = vpop.f32.mrb[0].mxu0
    %v4514 = vadd.f32 0.0, %v4513
    %v4515 = vpop.f32.mrb[0].mxu0
    %4516 = vmatprep.mubr.f32.mxu0 0.0
    %4517 = vmatmul.mubr.f32.gmra.mrb[0].mxu0 %v4244
    %v4518 = vpop.f32.mrb[0].mxu0
    %v4519 = vadd.f32 0.0, %v4518
    %v4520 = vpop.f32.mrb[0].mxu0
    %4521 = vmatprep.mubr.f32.mxu0 0.0
    %4522 = vmatmul.mubr.f32.gmra.mrb[0].mxu0 %v4247
    %v4523 = vpop.f32.mrb[0].mxu0
    %v4524 = vadd.f32 0.0, %v4523
    %v4525 = vpop.f32.mrb[0].mxu0
    %4526 = vmatprep.mubr.f32.mxu0 0.0
    %4527 = vmatmul.mubr.f32.gmra.mrb[0].mxu0 %v4250
    %v4528 = vpop.f32.mrb[0].mxu0
    %v4529 = vadd.f32 0.0, %v4528
    %v4530 = vpop.f32.mrb[0].mxu0
    %4531 = vmatprep.mubr.f32.mxu0 0.0
    %4532 = vmatmul.mubr.f32.gmra.mrb[0].mxu0 %v4253
    %v4533 = vpop.f32.mrb[0].mxu0
    %v4534 = vadd.f32 0.0, %v4533
    %v4535 = vpop.f32.mrb[0].mxu0
    %4536 = vmatprep.mubr.f32.mxu0 0.0
    %4537 = vmatmul.mubr.f32.gmra.mrb[0].mxu0 %v4256
    %v4538 = vpop.f32.mrb[0].mxu0
    %v4539 = vadd.f32 0.0, %v4538
    %v4540 = vpop.f32.mrb[0].mxu0
    %4541 = vmatprep.mubr.f32.mxu0 0.0
    %4542 = vmatmul.mubr.f32.gmra.mrb[0].mxu0 %v4259
    %v4543 = vpop.f32.mrb[0].mxu0
    %v4544 = vadd.f32 0.0, %v4543
    %v4545 = vpop.f32.mrb[0].mxu0
    %4546 = vmatprep.mubr.f32.mxu0 0.0
    %4547 = vmatmul.mubr.f32.gmra.mrb[0].mxu0 %v4262
    %v4548 = vpop.f32.mrb[0].mxu0
    %v4549 = vadd.f32 0.0, %v4548
    %v4550 = vpop.f32.mrb[0].mxu0
    %4551 = vmatprep.mubr.f32.mxu0 0.0
    %4552 = vmatmul.mubr.f32.gmra.mrb[0].mxu0 %v4265
    %v4553 = vpop.f32.mrb[0].mxu0
    %v4554 = vadd.f32 0.0, %v4553
    %v4555 = vpop.f32.mrb[0].mxu0
    %4556 = vmatprep.mubr.f32.mxu0 0.0
    %4557 = vmatmul.mubr.f32.gmra.mrb[0].mxu0 %v4268
    %v4558 = vpop.f32.mrb[0].mxu0
    %v4559 = vadd.f32 0.0, %v4558
    %v4560 = vpop.f32.mrb[0].mxu0
    %4561 = vmatprep.mubr.f32.mxu0 0.0
    %4562 = vmatmul.mubr.f32.gmra.mrb[0].mxu0 %v4271
    %v4563 = vpop.f32.mrb[0].mxu0
    %v4564 = vadd.f32 0.0, %v4563
    %v4565 = vpop.f32.mrb[0].mxu0
    %4566 = vmatprep.mubr.f32.mxu0 0.0
    %4567 = vmatmul.mubr.f32.gmra.mrb[0].mxu0 %v4274
    %v4568 = vpop.f32.mrb[0].mxu0
    %v4569 = vadd.f32 0.0, %v4568
    %v4570 = vpop.f32.mrb[0].mxu0
    %4571 = vmatprep.mubr.f32.mxu0 0.0
    %4572 = vmatmul.mubr.f32.gmra.mrb[0].mxu0 %v4277
    %v4573 = vpop.f32.mrb[0].mxu0
    %v4574 = vadd.f32 0.0, %v4573
    %v4575 = vpop.f32.mrb[0].mxu0
    %4576 = vmatprep.mubr.f32.mxu0 0.0
    %4577 = vmatmul.mubr.f32.gmra.mrb[0].mxu0 %v4280
    %v4578 = vpop.f32.mrb[0].mxu0
    %v4579 = vadd.f32 0.0, %v4578
    %v4580 = vpop.f32.mrb[0].mxu0
    %4581 = vmatprep.mubr.f32.mxu0 0.0
    %4582 = vmatmul.mubr.f32.gmra.mrb[0].mxu0 %v4283
    %v4583 = vpop.f32.mrb[0].mxu0
    %v4584 = vadd.f32 0.0, %v4583
    %v4585 = vpop.f32.mrb[0].mxu0
    %4586 = vmatprep.mubr.f32.mxu0 0.0
    %4587 = vmatmul.mubr.f32.gmra.mrb[0].mxu0 %v4286
    %v4588 = vpop.f32.mrb[0].mxu0
    %v4589 = vadd.f32 0.0, %v4588
    %v4590 = vpop.f32.mrb[0].mxu0
    %4591 = vmatprep.mubr.f32.mxu0 0.0
    %4592 = vmatmul.mubr.f32.gmra.mrb[0].mxu0 %v4289
    %v4593 = vpop.f32.mrb[0].mxu0
    %v4594 = vadd.f32 0.0, %v4593
    %v4595 = vpop.f32.mrb[0].mxu0
    %4596 = vmatprep.mubr.f32.mxu0 0.0
    %4597 = vmatmul.mubr.f32.gmra.mrb[0].mxu0 %v4292
    %v4598 = vpop.f32.mrb[0].mxu0
    %v4599 = vadd.f32 0.0, %v4598
    %v4600 = vpop.f32.mrb[0].mxu0
    %4601 = vmatprep.mubr.f32.mxu0 0.0
    %4602 = vmatmul.mubr.f32.gmra.mrb[0].mxu0 %v4295
    %v4603 = vpop.f32.mrb[0].mxu0
    %v4604 = vadd.f32 0.0, %v4603
    %v4605 = vpop.f32.mrb[0].mxu0
    %4606 = vmatprep.mubr.f32.mxu0 0.0
    %4607 = vmatmul.mubr.f32.gmra.mrb[0].mxu0 %v4298
    %v4608 = vpop.f32.mrb[0].mxu0
    %v4609 = vadd.f32 0.0, %v4608
    %v4610 = vpop.f32.mrb[0].mxu0
    %4611 = vmatprep.mubr.f32.mxu0 0.0
    %4612 = vmatmul.mubr.f32.gmra.mrb[0].mxu0 %v4301
    %v4613 = vpop.f32.mrb[0].mxu0
    %v4614 = vadd.f32 0.0, %v4613
    %v4615 = vpop.f32.mrb[0].mxu0
    %4616 = vmatprep.mubr.f32.mxu0 0.0
    %4617 = vmatmul.mubr.f32.gmra.mrb[0].mxu0 %v4304
    %v4618 = vpop.f32.mrb[0].mxu0
    %v4619 = vadd.f32 0.0, %v4618
    %v4620 = vpop.f32.mrb[0].mxu0
    %4621 = vmatprep.mubr.f32.mxu0 0.0
    %4622 = vmatmul.mubr.f32.gmra.mrb[0].mxu0 %v4307
    %v4623 = vpop.f32.mrb[0].mxu0
    %v4624 = vadd.f32 0.0, %v4623
    %v4625 = vpop.f32.mrb[0].mxu0
    %4626 = vmatprep.mubr.f32.mxu0 0.0
    %4627 = vmatmul.mubr.f32.gmra.mrb[0].mxu0 %v4310
    %v4628 = vpop.f32.mrb[0].mxu0
    %v4629 = vadd.f32 0.0, %v4628
    %v4630 = vpop.f32.mrb[0].mxu0
    %4631 = vmatprep.mubr.f32.mxu0 0.0
    %4632 = vmatmul.mubr.f32.gmra.mrb[0].mxu0 %v4313
    %v4633 = vpop.f32.mrb[0].mxu0
    %v4634 = vadd.f32 0.0, %v4633
    %v4635 = vpop.f32.mrb[0].mxu0
    %4636 = vmatprep.mubr.f32.mxu0 0.0
    %4637 = vmatmul.mubr.f32.gmra.mrb[0].mxu0 %v4316
    %v4638 = vpop.f32.mrb[0].mxu0
    %v4639 = vadd.f32 0.0, %v4638
    %v4640 = vpop.f32.mrb[0].mxu0
    %4641 = vmatprep.mubr.f32.mxu0 0.0
    %4642 = vmatmul.mubr.f32.gmra.mrb[0].mxu0 %v4319
    %v4643 = vpop.f32.mrb[0].mxu0
    %v4644 = vadd.f32 0.0, %v4643
    %v4645 = vpop.f32.mrb[0].mxu0
    %4646 = vmatprep.mubr.f32.mxu0 0.0
    %4647 = vmatmul.mubr.f32.gmra.mrb[0].mxu0 %v4322
    %v4648 = vpop.f32.mrb[0].mxu0
    %v4649 = vadd.f32 0.0, %v4648
    %v4650 = vpop.f32.mrb[0].mxu0
    %4651 = vmatprep.mubr.f32.mxu0 0.0
    %4652 = vmatmul.mubr.f32.gmra.mrb[0].mxu0 %v4325
    %v4653 = vpop.f32.mrb[0].mxu0
    %v4654 = vadd.f32 0.0, %v4653
    %v4655 = vpop.f32.mrb[0].mxu0
    %4656 = vmatprep.mubr.f32.mxu0 0.0
    %4657 = vmatmul.mubr.f32.gmra.mrb[0].mxu0 %v4328
    %v4658 = vpop.f32.mrb[0].mxu0
    %v4659 = vadd.f32 0.0, %v4658
    %v4660 = vpop.f32.mrb[0].mxu0
    %4661 = vmatprep.mubr.f32.mxu0 0.0
    %4662 = vmatmul.mubr.f32.gmra.mrb[0].mxu0 %v4331
    %v4663 = vpop.f32.mrb[0].mxu0
    %v4664 = vadd.f32 0.0, %v4663
    %v4665 = vpop.f32.mrb[0].mxu0
    %4666 = vmatprep.mubr.f32.mxu0 0.0
    %4667 = vmatmul.mubr.f32.gmra.mrb[0].mxu0 %v4334
    %v4668 = vpop.f32.mrb[0].mxu0
    %v4669 = vadd.f32 0.0, %v4668
    %v4670 = vpop.f32.mrb[0].mxu0
    %4671 = vmatprep.mubr.f32.mxu0 0.0
    %4672 = vmatmul.mubr.f32.gmra.mrb[0].mxu0 %v4337
    %v4673 = vpop.f32.mrb[0].mxu0
    %v4674 = vadd.f32 0.0, %v4673
    %v4675 = vpop.f32.mrb[0].mxu0
    %4676 = vmatprep.mubr.f32.mxu0 0.0
    %4677 = vmatmul.mubr.f32.gmra.mrb[0].mxu0 %v4340
    %v4678 = vpop.f32.mrb[0].mxu0
    %v4679 = vadd.f32 0.0, %v4678
    %v4680 = vpop.f32.mrb[0].mxu0
    %4681 = vmatprep.mubr.f32.mxu0 0.0
    %4682 = vmatmul.mubr.f32.gmra.mrb[0].mxu0 %v4343
    %v4683 = vpop.f32.mrb[0].mxu0
    %v4684 = vadd.f32 0.0, %v4683
    %v4685 = vpop.f32.mrb[0].mxu0
    %4686 = vmatprep.mubr.f32.mxu0 0.0
    %4687 = vmatmul.mubr.f32.gmra.mrb[0].mxu0 %v4346
    %v4688 = vpop.f32.mrb[0].mxu0
    %v4689 = vadd.f32 0.0, %v4688
    %v4690 = vpop.f32.mrb[0].mxu0
    %4691 = vmatprep.mubr.f32.mxu0 0.0
    %4692 = vmatmul.mubr.f32.gmra.mrb[0].mxu0 %v4349
    %v4693 = vpop.f32.mrb[0].mxu0
    %v4694 = vadd.f32 0.0, %v4693
    %v4695 = vpop.f32.mrb[0].mxu0
    %4696 = vmatprep.mubr.f32.mxu0 0.0
    %4697 = vmatmul.mubr.f32.gmra.mrb[0].mxu0 %v4352
    %v4698 = vpop.f32.mrb[0].mxu0
    %v4699 = vadd.f32 0.0, %v4698
    %v4700 = vpop.f32.mrb[0].mxu0
    %4701 = vmatprep.mubr.f32.mxu0 0.0
    %4702 = vmatmul.mubr.f32.gmra.mrb[0].mxu0 %v4355
    %v4703 = vpop.f32.mrb[0].mxu0
    %v4704 = vadd.f32 0.0, %v4703
    %v4705 = vpop.f32.mrb[0].mxu0
    %4706 = vmatprep.mubr.f32.mxu0 0.0
    %4707 = vmatmul.mubr.f32.gmra.mrb[0].mxu0 %v4358
    %v4708 = vpop.f32.mrb[0].mxu0
    %v4709 = vadd.f32 0.0, %v4708
    %v4710 = vpop.f32.mrb[0].mxu0
    %4711 = vmatprep.mubr.f32.mxu0 0.0
    %4712 = vmatmul.mubr.f32.gmra.mrb[0].mxu0 %v4361
    %v4713 = vpop.f32.mrb[0].mxu0
    %v4714 = vadd.f32 0.0, %v4713
    %v4715 = vpop.f32.mrb[0].mxu0
    %4716 = vmatprep.mubr.f32.mxu0 0.0
    %4717 = vmatmul.mubr.f32.gmra.mrb[0].mxu0 %v4364
    %v4718 = vpop.f32.mrb[0].mxu0
    %v4719 = vadd.f32 0.0, %v4718
    %v4720 = vpop.f32.mrb[0].mxu0
    %4721 = vmatprep.mubr.f32.mxu0 0.0
    %4722 = vmatmul.mubr.f32.gmra.mrb[0].mxu0 %v4367
    %v4723 = vpop.f32.mrb[0].mxu0
    %v4724 = vadd.f32 0.0, %v4723
    %v4725 = vpop.f32.mrb[0].mxu0
    %4726 = vmatprep.mubr.f32.mxu0 0.0
    %4727 = vmatmul.mubr.f32.gmra.mrb[0].mxu0 %v4370
    %v4728 = vpop.f32.mrb[0].mxu0
    %v4729 = vadd.f32 0.0, %v4728
    %v4730 = vpop.f32.mrb[0].mxu0
    %4731 = vmatprep.mubr.f32.mxu0 0.0
    %4732 = vmatmul.mubr.f32.gmra.mrb[0].mxu0 %v4373
    %v4733 = vpop.f32.mrb[0].mxu0
    %v4734 = vadd.f32 0.0, %v4733
    %v4735 = vpop.f32.mrb[0].mxu0
    %4736 = vmatprep.mubr.f32.mxu0 0.0
    %4737 = vmatmul.mubr.f32.gmra.mrb[0].mxu0 %v4376
    %v4738 = vpop.f32.mrb[0].mxu0
    %v4739 = vadd.f32 0.0, %v4738
    %v4740 = vpop.f32.mrb[0].mxu0
    %4741 = vmatprep.mubr.f32.mxu0 0.0
    %4742 = vmatmul.mubr.f32.gmra.mrb[0].mxu0 %v4379
    %v4743 = vpop.f32.mrb[0].mxu0
    %v4744 = vadd.f32 0.0, %v4743
    %v4745 = vpop.f32.mrb[0].mxu0
    %4746 = vmatprep.mubr.f32.mxu0 0.0
    %4747 = vmatmul.mubr.f32.gmra.mrb[0].mxu0 %v4382
    %v4748 = vpop.f32.mrb[0].mxu0
    %v4749 = vadd.f32 0.0, %v4748
    %v4750 = vpop.f32.mrb[0].mxu0
    %4751 = vmatprep.mubr.f32.mxu0 0.0
    %4752 = vmatmul.mubr.f32.gmra.mrb[0].mxu0 %v4385
    %v4753 = vpop.f32.mrb[0].mxu0
    %v4754 = vadd.f32 0.0, %v4753
    %v4755 = vpop.f32.mrb[0].mxu0
    %4756 = vmatprep.mubr.f32.mxu0 0.0
    %4757 = vmatmul.mubr.f32.gmra.mrb[0].mxu0 %v4388
    %v4758 = vpop.f32.mrb[0].mxu0
    %v4759 = vadd.f32 0.0, %v4758
    %v4760 = vpop.f32.mrb[0].mxu0
    %4761 = vmatprep.mubr.f32.mxu0 0.0
    %4762 = vmatmul.mubr.f32.gmra.mrb[0].mxu0 %v4391
    %v4763 = vpop.f32.mrb[0].mxu0
    %v4764 = vadd.f32 0.0, %v4763
    %v4765 = vpop.f32.mrb[0].mxu0
    %4766 = vmatprep.mubr.f32.mxu0 0.0
    %4767 = vmatmul.mubr.f32.gmra.mrb[0].mxu0 %v4394
    %v4768 = vpop.f32.mrb[0].mxu0
    %v4769 = vadd.f32 0.0, %v4768
    %v4770 = vpop.f32.mrb[0].mxu0
    %4771 = vmatprep.mubr.f32.mxu0 0.0
    %4772 = vmatmul.mubr.f32.gmra.mrb[0].mxu0 %v4397
    %v4773 = vpop.f32.mrb[0].mxu0
    %v4774 = vadd.f32 0.0, %v4773
    %v4775 = vpop.f32.mrb[0].mxu0
    %4776 = vmatprep.mubr.f32.mxu0 0.0
    %4777 = vmatmul.mubr.f32.gmra.mrb[0].mxu0 %v4400
    %v4778 = vpop.f32.mrb[0].mxu0
    %v4779 = vadd.f32 0.0, %v4778
    %v4780 = vpop.f32.mrb[0].mxu0
    %4781 = vmatprep.mubr.f32.mxu0 0.0
    %4782 = vmatmul.mubr.f32.gmra.mrb[0].mxu0 %v4403
    %v4783 = vpop.f32.mrb[0].mxu0
    %v4784 = vadd.f32 0.0, %v4783
    %v4785 = vpop.f32.mrb[0].mxu0
    %4786 = vmatprep.mubr.f32.mxu0 0.0
    %4787 = vmatmul.mubr.f32.gmra.mrb[0].mxu0 %v4406
    %v4788 = vpop.f32.mrb[0].mxu0
    %v4789 = vadd.f32 0.0, %v4788
    %v4790 = vpop.f32.mrb[0].mxu0
    %4791 = vmatprep.mubr.f32.mxu0 0.0
    %4792 = vmatmul.mubr.f32.gmra.mrb[0].mxu0 %v4409
    %v4793 = vpop.f32.mrb[0].mxu0
    %v4794 = vadd.f32 0.0, %v4793
    %v4795 = vpop.f32.mrb[0].mxu0
    %4796 = vmatprep.mubr.f32.mxu0 0.0
    %4797 = vmatmul.mubr.f32.gmra.mrb[0].mxu0 %v4412
    %v4798 = vpop.f32.mrb[0].mxu0
    %v4799 = vadd.f32 0.0, %v4798
    %v4800 = vpop.f32.mrb[0].mxu0
    %4801 = vdwg.mxu0
    %v4802 = vadd.f32 %v4091, %v4484
    %v4803 = vadd.f32 %v4092, %v4489
    %v4804 = vadd.f32 %v4093, %v4494
    %v4805 = vadd.f32 %v4094, %v4499
    %v4806 = vadd.f32 %v4095, %v4504
    %v4807 = vadd.f32 %v4096, %v4509
    %v4808 = vadd.f32 %v4097, %v4514
    %v4809 = vadd.f32 %v4098, %v4519
    %v4810 = vadd.f32 %v4099, %v4524
    %v4811 = vadd.f32 %v4100, %v4529
    %v4812 = vadd.f32 %v4101, %v4534
    %v4813 = vadd.f32 %v4102, %v4539
    %v4814 = vadd.f32 %v4103, %v4544
    %v4815 = vadd.f32 %v4104, %v4549
    %v4816 = vadd.f32 %v4105, %v4554
    %v4817 = vadd.f32 %v4106, %v4559
    %v4818 = vadd.f32 %v4107, %v4564
    %v4819 = vadd.f32 %v4108, %v4569
    %v4820 = vadd.f32 %v4109, %v4574
    %v4821 = vadd.f32 %v4110, %v4579
    %v4822 = vadd.f32 %v4111, %v4584
    %v4823 = vadd.f32 %v4112, %v4589
    %v4824 = vadd.f32 %v4113, %v4594
    %v4825 = vadd.f32 %v4114, %v4599
    %v4826 = vadd.f32 %v4115, %v4604
    %v4827 = vadd.f32 %v4116, %v4609
    %v4828 = vadd.f32 %v4117, %v4614
    %v4829 = vadd.f32 %v4118, %v4619
    %v4830 = vadd.f32 %v4119, %v4624
    %v4831 = vadd.f32 %v4120, %v4629
    %v4832 = vadd.f32 %v4121, %v4634
    %v4833 = vadd.f32 %v4122, %v4639
    %v4834 = vadd.f32 %v4123, %v4644
    %v4835 = vadd.f32 %v4124, %v4649
    %v4836 = vadd.f32 %v4125, %v4654
    %v4837 = vadd.f32 %v4126, %v4659
    %v4838 = vadd.f32 %v4127, %v4664
    %v4839 = vadd.f32 %v4128, %v4669
    %v4840 = vadd.f32 %v4129, %v4674
    %v4841 = vadd.f32 %v4130, %v4679
    %v4842 = vadd.f32 %v4131, %v4684
    %v4843 = vadd.f32 %v4132, %v4689
    %v4844 = vadd.f32 %v4133, %v4694
    %v4845 = vadd.f32 %v4134, %v4699
    %v4846 = vadd.f32 %v4135, %v4704
    %v4847 = vadd.f32 %v4136, %v4709
    %v4848 = vadd.f32 %v4137, %v4714
    %v4849 = vadd.f32 %v4138, %v4719
    %v4850 = vadd.f32 %v4139, %v4724
    %v4851 = vadd.f32 %v4140, %v4729
    %v4852 = vadd.f32 %v4141, %v4734
    %v4853 = vadd.f32 %v4142, %v4739
    %v4854 = vadd.f32 %v4143, %v4744
    %v4855 = vadd.f32 %v4144, %v4749
    %v4856 = vadd.f32 %v4145, %v4754
    %v4857 = vadd.f32 %v4146, %v4759
    %v4858 = vadd.f32 %v4147, %v4764
    %v4859 = vadd.f32 %v4148, %v4769
    %v4860 = vadd.f32 %v4149, %v4774
    %v4861 = vadd.f32 %v4150, %v4779
    %v4862 = vadd.f32 %v4151, %v4784
    %v4863 = vadd.f32 %v4152, %v4789
    %v4864 = vadd.f32 %v4153, %v4794
    %v4865 = vadd.f32 %v4154, %v4799
    %v4866 = vld [vmem:[%s4155 + $0x1] sm:$0xff]
    %v4867 = vld [vmem:[%s4155 + $0x9] sm:$0xff]
    %v4868 = vld [vmem:[%s4155 + $0x19] sm:$0xff]
    %v4869 = vld [vmem:[%s4155 + $0x21] sm:$0xff]
    %v4870 = vld [vmem:[%s4155 + $0x31] sm:$0xff]
    %v4871 = vld [vmem:[%s4155 + $0x39] sm:$0xff]
    %v4872 = vld [vmem:[%s4155 + $0x49] sm:$0xff]
    %v4873 = vld [vmem:[%s4155 + $0x51] sm:$0xff]
    %v4874 = vld [vmem:[%s4155 + $0x61] sm:$0xff]
    %v4875 = vld [vmem:[%s4155 + $0x69] sm:$0xff]
    %v4876 = vld [vmem:[%s4155 + $0x79] sm:$0xff]
    %v4877 = vld [vmem:[%s4155 + $0x81] sm:$0xff]
    %v4878 = vld [vmem:[%s4155 + $0x91] sm:$0xff]
    %v4879 = vld [vmem:[%s4155 + $0x99] sm:$0xff]
    %v4880 = vld [vmem:[%s4155 + $0xa9] sm:$0xff]
    %v4881 = vld [vmem:[%s4155 + $0xb1] sm:$0xff]
    %v4882 = vld [vmem:[%s4155 + $0xc1] sm:$0xff]
    %v4883 = vld [vmem:[%s4155 + $0xc9] sm:$0xff]
    %v4884 = vld [vmem:[%s4155 + $0xd9] sm:$0xff]
    %v4885 = vld [vmem:[%s4155 + $0xe1] sm:$0xff]
    %v4886 = vld [vmem:[%s4155 + $0xf1] sm:$0xff]
    %v4887 = vld [vmem:[%s4155 + $0xf9] sm:$0xff]
    %v4888 = vld [vmem:[%s4155 + $0x109] sm:$0xff]
    %v4889 = vld [vmem:[%s4155 + $0x111] sm:$0xff]
    %v4890 = vld [vmem:[%s4155 + $0x121] sm:$0xff]
    %v4891 = vld [vmem:[%s4155 + $0x129] sm:$0xff]
    %v4892 = vld [vmem:[%s4155 + $0x139] sm:$0xff]
    %v4893 = vld [vmem:[%s4155 + $0x141] sm:$0xff]
    %v4894 = vld [vmem:[%s4155 + $0x151] sm:$0xff]
    %v4895 = vld [vmem:[%s4155 + $0x159] sm:$0xff]
    %v4896 = vld [vmem:[%s4155 + $0x169] sm:$0xff]
    %v4897 = vld [vmem:[%s4155 + $0x171] sm:$0xff]
    %v4898 = vld [vmem:[%s4155 + $0x1b1] sm:$0xff]
    %v4899 = vld [vmem:[%s4155 + $0x1b9] sm:$0xff]
    %v4900 = vld [vmem:[%s4155 + $0x1c9] sm:$0xff]
    %v4901 = vld [vmem:[%s4155 + $0x1d1] sm:$0xff]
    %v4902 = vld [vmem:[%s4155 + $0x1e1] sm:$0xff]
    %v4903 = vld [vmem:[%s4155 + $0x1e9] sm:$0xff]
    %v4904 = vld [vmem:[%s4155 + $0x1f9] sm:$0xff]
    %v4905 = vld [vmem:[%s4155 + $0x201] sm:$0xff]
    %v4906 = vld [vmem:[%s4155 + $0x211] sm:$0xff]
    %v4907 = vld [vmem:[%s4155 + $0x219] sm:$0xff]
    %v4908 = vld [vmem:[%s4155 + $0x229] sm:$0xff]
    %v4909 = vld [vmem:[%s4155 + $0x231] sm:$0xff]
    %v4910 = vld [vmem:[%s4155 + $0x241] sm:$0xff]
    %v4911 = vld [vmem:[%s4155 + $0x249] sm:$0xff]
    %v4912 = vld [vmem:[%s4155 + $0x259] sm:$0xff]
    %v4913 = vld [vmem:[%s4155 + $0x261] sm:$0xff]
    %v4914 = vld [vmem:[%s4155 + $0x271] sm:$0xff]
    %v4915 = vld [vmem:[%s4155 + $0x279] sm:$0xff]
    %v4916 = vld [vmem:[%s4155 + $0x289] sm:$0xff]
    %v4917 = vld [vmem:[%s4155 + $0x291] sm:$0xff]
    %v4918 = vld [vmem:[%s4155 + $0x2a1] sm:$0xff]
    %v4919 = vld [vmem:[%s4155 + $0x2a9] sm:$0xff]
    %v4920 = vld [vmem:[%s4155 + $0x2b9] sm:$0xff]
    %v4921 = vld [vmem:[%s4155 + $0x2c1] sm:$0xff]
    %v4922 = vld [vmem:[%s4155 + $0x2d1] sm:$0xff]
    %v4923 = vld [vmem:[%s4155 + $0x2d9] sm:$0xff]
    %v4924 = vld [vmem:[%s4155 + $0x2e9] sm:$0xff]
    %v4925 = vld [vmem:[%s4155 + $0x2f1] sm:$0xff]
    %v4926 = vld [vmem:[%s4155 + $0x301] sm:$0xff]
    %v4927 = vld [vmem:[%s4155 + $0x309] sm:$0xff]
    %v4928 = vld [vmem:[%s4155 + $0x319] sm:$0xff]
    %v4929 = vld [vmem:[%s4155 + $0x321] sm:$0xff]
    %s4930 = scalar_lea.vmem %s1, 28
    %v4931 = vld [vmem:[%s4930] sm:$0xf]
    %v4933 = vsel %vm152, %v4866, 0
    %v4936 = vsel %vm152, %v4867, 0
    %v4939 = vsel %vm152, %v4868, 0
    %v4942 = vsel %vm152, %v4869, 0
    %v4945 = vsel %vm152, %v4870, 0
    %v4948 = vsel %vm152, %v4871, 0
    %v4951 = vsel %vm152, %v4872, 0
    %v4954 = vsel %vm152, %v4873, 0
    %v4957 = vsel %vm152, %v4874, 0
    %v4960 = vsel %vm152, %v4875, 0
    %v4963 = vsel %vm152, %v4876, 0
    %v4966 = vsel %vm152, %v4877, 0
    %v4969 = vsel %vm152, %v4878, 0
    %v4972 = vsel %vm152, %v4879, 0
    %v4975 = vsel %vm152, %v4880, 0
    %v4978 = vsel %vm152, %v4881, 0
    %v4981 = vsel %vm152, %v4882, 0
    %v4984 = vsel %vm152, %v4883, 0
    %v4987 = vsel %vm152, %v4884, 0
    %v4990 = vsel %vm152, %v4885, 0
    %v4993 = vsel %vm152, %v4886, 0
    %v4996 = vsel %vm152, %v4887, 0
    %v4999 = vsel %vm152, %v4888, 0
    %v5002 = vsel %vm152, %v4889, 0
    %v5005 = vsel %vm152, %v4890, 0
    %v5008 = vsel %vm152, %v4891, 0
    %v5011 = vsel %vm152, %v4892, 0
    %v5014 = vsel %vm152, %v4893, 0
    %v5017 = vsel %vm152, %v4894, 0
    %v5020 = vsel %vm152, %v4895, 0
    %v5023 = vsel %vm152, %v4896, 0
    %v5026 = vsel %vm152, %v4897, 0
    %v5029 = vsel %vm152, %v4898, 0
    %v5032 = vsel %vm152, %v4899, 0
    %v5035 = vsel %vm152, %v4900, 0
    %v5038 = vsel %vm152, %v4901, 0
    %v5041 = vsel %vm152, %v4902, 0
    %v5044 = vsel %vm152, %v4903, 0
    %v5047 = vsel %vm152, %v4904, 0
    %v5050 = vsel %vm152, %v4905, 0
    %v5053 = vsel %vm152, %v4906, 0
    %v5056 = vsel %vm152, %v4907, 0
    %v5059 = vsel %vm152, %v4908, 0
    %v5062 = vsel %vm152, %v4909, 0
    %v5065 = vsel %vm152, %v4910, 0
    %v5068 = vsel %vm152, %v4911, 0
    %v5071 = vsel %vm152, %v4912, 0
    %v5074 = vsel %vm152, %v4913, 0
    %v5077 = vsel %vm152, %v4914, 0
    %v5080 = vsel %vm152, %v4915, 0
    %v5083 = vsel %vm152, %v4916, 0
    %v5086 = vsel %vm152, %v4917, 0
    %v5089 = vsel %vm152, %v4918, 0
    %v5092 = vsel %vm152, %v4919, 0
    %v5095 = vsel %vm152, %v4920, 0
    %v5098 = vsel %vm152, %v4921, 0
    %v5101 = vsel %vm152, %v4922, 0
    %v5104 = vsel %vm152, %v4923, 0
    %v5107 = vsel %vm152, %v4924, 0
    %v5110 = vsel %vm152, %v4925, 0
    %v5113 = vsel %vm152, %v4926, 0
    %v5116 = vsel %vm152, %v4927, 0
    %v5119 = vsel %vm152, %v4928, 0
    %v5122 = vsel %vm152, %v4929, 0
    %v5125 = vsel %vm345, %v4931, 0
    %5127 = vmatprep.subr.mxu0 0.0
    %5128 = vmatpush1.msra.mxu0 %v5125
    %5129 = vmatprep.subr.mxu0 0.0
    %5130 = vmatpush1.msra.mxu0 0.0
    %5131 = vmatprep.subr.mxu0 0.0
    %5132 = vmatpush1.msra.mxu0 0.0
    %5133 = vmatprep.subr.mxu0 0.0
    %5134 = vmatpush1.msra.mxu0 0.0
    %5135 = vmatprep.subr.mxu0 0.0
    %5136 = vmatpush1.msra.mxu0 0.0
    %5137 = vmatprep.subr.mxu0 0.0
    %5138 = vmatpush1.msra.mxu0 0.0
    %5139 = vmatprep.subr.mxu0 0.0
    %5140 = vmatpush1.msra.mxu0 0.0
    %5141 = vmatprep.subr.mxu0 0.0
    %5142 = vmatpush1.msra.mxu0 0.0
    %5143 = vmatprep.subr.mxu0 0.0
    %5144 = vmatpush1.msra.mxu0 0.0
    %5145 = vmatprep.subr.mxu0 0.0
    %5146 = vmatpush1.msra.mxu0 0.0
    %5147 = vmatprep.subr.mxu0 0.0
    %5148 = vmatpush1.msra.mxu0 0.0
    %5149 = vmatprep.subr.mxu0 0.0
    %5150 = vmatpush1.msra.mxu0 0.0
    %5151 = vmatprep.subr.mxu0 0.0
    %5152 = vmatpush1.msra.mxu0 0.0
    %5153 = vmatprep.subr.mxu0 0.0
    %5154 = vmatpush1.msra.mxu0 0.0
    %5155 = vmatprep.subr.mxu0 0.0
    %5156 = vmatpush1.msra.mxu0 0.0
    %5157 = vmatprep.subr.mxu0 0.0
    %5158 = vmatpush1.msra.mxu0 0.0
    %5159 = vmatprep.subr.mxu0 0.0
    %5160 = vmatpush1.msra.mxu0 0.0
    %5161 = vmatprep.subr.mxu0 0.0
    %5162 = vmatpush1.msra.mxu0 0.0
    %5163 = vmatprep.subr.mxu0 0.0
    %5164 = vmatpush1.msra.mxu0 0.0
    %5165 = vmatprep.subr.mxu0 0.0
    %5166 = vmatpush1.msra.mxu0 0.0
    %5167 = vmatprep.subr.mxu0 0.0
    %5168 = vmatpush1.msra.mxu0 0.0
    %5169 = vmatprep.subr.mxu0 0.0
    %5170 = vmatpush1.msra.mxu0 0.0
    %5171 = vmatprep.subr.mxu0 0.0
    %5172 = vmatpush1.msra.mxu0 0.0
    %5173 = vmatprep.subr.mxu0 0.0
    %5174 = vmatpush1.msra.mxu0 0.0
    %5175 = vmatprep.subr.mxu0 0.0
    %5176 = vmatpush1.msra.mxu0 0.0
    %5177 = vmatprep.subr.mxu0 0.0
    %5178 = vmatpush1.msra.mxu0 0.0
    %5179 = vmatprep.subr.mxu0 0.0
    %5180 = vmatpush1.msra.mxu0 0.0
    %5181 = vmatprep.subr.mxu0 0.0
    %5182 = vmatpush1.msra.mxu0 0.0
    %5183 = vmatprep.subr.mxu0 0.0
    %5184 = vmatpush1.msra.mxu0 0.0
    %5185 = vmatprep.subr.mxu0 0.0
    %5186 = vmatpush1.msra.mxu0 0.0
    %5187 = vmatprep.subr.mxu0 0.0
    %5188 = vmatpush1.msra.mxu0 0.0
    %5189 = vmatprep.subr.mxu0 0.0
    %5190 = vmatpush1.msra.mxu0 0.0
    %5191 = vmatprep.mubr.f32.mxu0 0.0
    %5192 = vmatmul.mubr.f32.gmra.mrb[0].mxu0 %v4933
    %v5193 = vpop.f32.mrb[0].mxu0
    %v5194 = vadd.f32 0.0, %v5193
    %v5195 = vpop.f32.mrb[0].mxu0
    %5196 = vmatprep.mubr.f32.mxu0 0.0
    %5197 = vmatmul.mubr.f32.gmra.mrb[0].mxu0 %v4936
    %v5198 = vpop.f32.mrb[0].mxu0
    %v5199 = vadd.f32 0.0, %v5198
    %v5200 = vpop.f32.mrb[0].mxu0
    %5201 = vmatprep.mubr.f32.mxu0 0.0
    %5202 = vmatmul.mubr.f32.gmra.mrb[0].mxu0 %v4939
    %v5203 = vpop.f32.mrb[0].mxu0
    %v5204 = vadd.f32 0.0, %v5203
    %v5205 = vpop.f32.mrb[0].mxu0
    %5206 = vmatprep.mubr.f32.mxu0 0.0
    %5207 = vmatmul.mubr.f32.gmra.mrb[0].mxu0 %v4942
    %v5208 = vpop.f32.mrb[0].mxu0
    %v5209 = vadd.f32 0.0, %v5208
    %v5210 = vpop.f32.mrb[0].mxu0
    %5211 = vmatprep.mubr.f32.mxu0 0.0
    %5212 = vmatmul.mubr.f32.gmra.mrb[0].mxu0 %v4945
    %v5213 = vpop.f32.mrb[0].mxu0
    %v5214 = vadd.f32 0.0, %v5213
    %v5215 = vpop.f32.mrb[0].mxu0
    %5216 = vmatprep.mubr.f32.mxu0 0.0
    %5217 = vmatmul.mubr.f32.gmra.mrb[0].mxu0 %v4948
    %v5218 = vpop.f32.mrb[0].mxu0
    %v5219 = vadd.f32 0.0, %v5218
    %v5220 = vpop.f32.mrb[0].mxu0
    %5221 = vmatprep.mubr.f32.mxu0 0.0
    %5222 = vmatmul.mubr.f32.gmra.mrb[0].mxu0 %v4951
    %v5223 = vpop.f32.mrb[0].mxu0
    %v5224 = vadd.f32 0.0, %v5223
    %v5225 = vpop.f32.mrb[0].mxu0
    %5226 = vmatprep.mubr.f32.mxu0 0.0
    %5227 = vmatmul.mubr.f32.gmra.mrb[0].mxu0 %v4954
    %v5228 = vpop.f32.mrb[0].mxu0
    %v5229 = vadd.f32 0.0, %v5228
    %v5230 = vpop.f32.mrb[0].mxu0
    %5231 = vmatprep.mubr.f32.mxu0 0.0
    %5232 = vmatmul.mubr.f32.gmra.mrb[0].mxu0 %v4957
    %v5233 = vpop.f32.mrb[0].mxu0
    %v5234 = vadd.f32 0.0, %v5233
    %v5235 = vpop.f32.mrb[0].mxu0
    %5236 = vmatprep.mubr.f32.mxu0 0.0
    %5237 = vmatmul.mubr.f32.gmra.mrb[0].mxu0 %v4960
    %v5238 = vpop.f32.mrb[0].mxu0
    %v5239 = vadd.f32 0.0, %v5238
    %v5240 = vpop.f32.mrb[0].mxu0
    %5241 = vmatprep.mubr.f32.mxu0 0.0
    %5242 = vmatmul.mubr.f32.gmra.mrb[0].mxu0 %v4963
    %v5243 = vpop.f32.mrb[0].mxu0
    %v5244 = vadd.f32 0.0, %v5243
    %v5245 = vpop.f32.mrb[0].mxu0
    %5246 = vmatprep.mubr.f32.mxu0 0.0
    %5247 = vmatmul.mubr.f32.gmra.mrb[0].mxu0 %v4966
    %v5248 = vpop.f32.mrb[0].mxu0
    %v5249 = vadd.f32 0.0, %v5248
    %v5250 = vpop.f32.mrb[0].mxu0
    %5251 = vmatprep.mubr.f32.mxu0 0.0
    %5252 = vmatmul.mubr.f32.gmra.mrb[0].mxu0 %v4969
    %v5253 = vpop.f32.mrb[0].mxu0
    %v5254 = vadd.f32 0.0, %v5253
    %v5255 = vpop.f32.mrb[0].mxu0
    %5256 = vmatprep.mubr.f32.mxu0 0.0
    %5257 = vmatmul.mubr.f32.gmra.mrb[0].mxu0 %v4972
    %v5258 = vpop.f32.mrb[0].mxu0
    %v5259 = vadd.f32 0.0, %v5258
    %v5260 = vpop.f32.mrb[0].mxu0
    %5261 = vmatprep.mubr.f32.mxu0 0.0
    %5262 = vmatmul.mubr.f32.gmra.mrb[0].mxu0 %v4975
    %v5263 = vpop.f32.mrb[0].mxu0
    %v5264 = vadd.f32 0.0, %v5263
    %v5265 = vpop.f32.mrb[0].mxu0
    %5266 = vmatprep.mubr.f32.mxu0 0.0
    %5267 = vmatmul.mubr.f32.gmra.mrb[0].mxu0 %v4978
    %v5268 = vpop.f32.mrb[0].mxu0
    %v5269 = vadd.f32 0.0, %v5268
    %v5270 = vpop.f32.mrb[0].mxu0
    %5271 = vmatprep.mubr.f32.mxu0 0.0
    %5272 = vmatmul.mubr.f32.gmra.mrb[0].mxu0 %v4981
    %v5273 = vpop.f32.mrb[0].mxu0
    %v5274 = vadd.f32 0.0, %v5273
    %v5275 = vpop.f32.mrb[0].mxu0
    %5276 = vmatprep.mubr.f32.mxu0 0.0
    %5277 = vmatmul.mubr.f32.gmra.mrb[0].mxu0 %v4984
    %v5278 = vpop.f32.mrb[0].mxu0
    %v5279 = vadd.f32 0.0, %v5278
    %v5280 = vpop.f32.mrb[0].mxu0
    %5281 = vmatprep.mubr.f32.mxu0 0.0
    %5282 = vmatmul.mubr.f32.gmra.mrb[0].mxu0 %v4987
    %v5283 = vpop.f32.mrb[0].mxu0
    %v5284 = vadd.f32 0.0, %v5283
    %v5285 = vpop.f32.mrb[0].mxu0
    %5286 = vmatprep.mubr.f32.mxu0 0.0
    %5287 = vmatmul.mubr.f32.gmra.mrb[0].mxu0 %v4990
    %v5288 = vpop.f32.mrb[0].mxu0
    %v5289 = vadd.f32 0.0, %v5288
    %v5290 = vpop.f32.mrb[0].mxu0
    %5291 = vmatprep.mubr.f32.mxu0 0.0
    %5292 = vmatmul.mubr.f32.gmra.mrb[0].mxu0 %v4993
    %v5293 = vpop.f32.mrb[0].mxu0
    %v5294 = vadd.f32 0.0, %v5293
    %v5295 = vpop.f32.mrb[0].mxu0
    %5296 = vmatprep.mubr.f32.mxu0 0.0
    %5297 = vmatmul.mubr.f32.gmra.mrb[0].mxu0 %v4996
    %v5298 = vpop.f32.mrb[0].mxu0
    %v5299 = vadd.f32 0.0, %v5298
    %v5300 = vpop.f32.mrb[0].mxu0
    %5301 = vmatprep.mubr.f32.mxu0 0.0
    %5302 = vmatmul.mubr.f32.gmra.mrb[0].mxu0 %v4999
    %v5303 = vpop.f32.mrb[0].mxu0
    %v5304 = vadd.f32 0.0, %v5303
    %v5305 = vpop.f32.mrb[0].mxu0
    %5306 = vmatprep.mubr.f32.mxu0 0.0
    %5307 = vmatmul.mubr.f32.gmra.mrb[0].mxu0 %v5002
    %v5308 = vpop.f32.mrb[0].mxu0
    %v5309 = vadd.f32 0.0, %v5308
    %v5310 = vpop.f32.mrb[0].mxu0
    %5311 = vmatprep.mubr.f32.mxu0 0.0
    %5312 = vmatmul.mubr.f32.gmra.mrb[0].mxu0 %v5005
    %v5313 = vpop.f32.mrb[0].mxu0
    %v5314 = vadd.f32 0.0, %v5313
    %v5315 = vpop.f32.mrb[0].mxu0
    %5316 = vmatprep.mubr.f32.mxu0 0.0
    %5317 = vmatmul.mubr.f32.gmra.mrb[0].mxu0 %v5008
    %v5318 = vpop.f32.mrb[0].mxu0
    %v5319 = vadd.f32 0.0, %v5318
    %v5320 = vpop.f32.mrb[0].mxu0
    %5321 = vmatprep.mubr.f32.mxu0 0.0
    %5322 = vmatmul.mubr.f32.gmra.mrb[0].mxu0 %v5011
    %v5323 = vpop.f32.mrb[0].mxu0
    %v5324 = vadd.f32 0.0, %v5323
    %v5325 = vpop.f32.mrb[0].mxu0
    %5326 = vmatprep.mubr.f32.mxu0 0.0
    %5327 = vmatmul.mubr.f32.gmra.mrb[0].mxu0 %v5014
    %v5328 = vpop.f32.mrb[0].mxu0
    %v5329 = vadd.f32 0.0, %v5328
    %v5330 = vpop.f32.mrb[0].mxu0
    %5331 = vmatprep.mubr.f32.mxu0 0.0
    %5332 = vmatmul.mubr.f32.gmra.mrb[0].mxu0 %v5017
    %v5333 = vpop.f32.mrb[0].mxu0
    %v5334 = vadd.f32 0.0, %v5333
    %v5335 = vpop.f32.mrb[0].mxu0
    %5336 = vmatprep.mubr.f32.mxu0 0.0
    %5337 = vmatmul.mubr.f32.gmra.mrb[0].mxu0 %v5020
    %v5338 = vpop.f32.mrb[0].mxu0
    %v5339 = vadd.f32 0.0, %v5338
    %v5340 = vpop.f32.mrb[0].mxu0
    %5341 = vmatprep.mubr.f32.mxu0 0.0
    %5342 = vmatmul.mubr.f32.gmra.mrb[0].mxu0 %v5023
    %v5343 = vpop.f32.mrb[0].mxu0
    %v5344 = vadd.f32 0.0, %v5343
    %v5345 = vpop.f32.mrb[0].mxu0
    %5346 = vmatprep.mubr.f32.mxu0 0.0
    %5347 = vmatmul.mubr.f32.gmra.mrb[0].mxu0 %v5026
    %v5348 = vpop.f32.mrb[0].mxu0
    %v5349 = vadd.f32 0.0, %v5348
    %v5350 = vpop.f32.mrb[0].mxu0
    %5351 = vmatprep.mubr.f32.mxu0 0.0
    %5352 = vmatmul.mubr.f32.gmra.mrb[0].mxu0 %v5029
    %v5353 = vpop.f32.mrb[0].mxu0
    %v5354 = vadd.f32 0.0, %v5353
    %v5355 = vpop.f32.mrb[0].mxu0
    %5356 = vmatprep.mubr.f32.mxu0 0.0
    %5357 = vmatmul.mubr.f32.gmra.mrb[0].mxu0 %v5032
    %v5358 = vpop.f32.mrb[0].mxu0
    %v5359 = vadd.f32 0.0, %v5358
    %v5360 = vpop.f32.mrb[0].mxu0
    %5361 = vmatprep.mubr.f32.mxu0 0.0
    %5362 = vmatmul.mubr.f32.gmra.mrb[0].mxu0 %v5035
    %v5363 = vpop.f32.mrb[0].mxu0
    %v5364 = vadd.f32 0.0, %v5363
    %v5365 = vpop.f32.mrb[0].mxu0
    %5366 = vmatprep.mubr.f32.mxu0 0.0
    %5367 = vmatmul.mubr.f32.gmra.mrb[0].mxu0 %v5038
    %v5368 = vpop.f32.mrb[0].mxu0
    %v5369 = vadd.f32 0.0, %v5368
    %v5370 = vpop.f32.mrb[0].mxu0
    %5371 = vmatprep.mubr.f32.mxu0 0.0
    %5372 = vmatmul.mubr.f32.gmra.mrb[0].mxu0 %v5041
    %v5373 = vpop.f32.mrb[0].mxu0
    %v5374 = vadd.f32 0.0, %v5373
    %v5375 = vpop.f32.mrb[0].mxu0
    %5376 = vmatprep.mubr.f32.mxu0 0.0
    %5377 = vmatmul.mubr.f32.gmra.mrb[0].mxu0 %v5044
    %v5378 = vpop.f32.mrb[0].mxu0
    %v5379 = vadd.f32 0.0, %v5378
    %v5380 = vpop.f32.mrb[0].mxu0
    %5381 = vmatprep.mubr.f32.mxu0 0.0
    %5382 = vmatmul.mubr.f32.gmra.mrb[0].mxu0 %v5047
    %v5383 = vpop.f32.mrb[0].mxu0
    %v5384 = vadd.f32 0.0, %v5383
    %v5385 = vpop.f32.mrb[0].mxu0
    %5386 = vmatprep.mubr.f32.mxu0 0.0
    %5387 = vmatmul.mubr.f32.gmra.mrb[0].mxu0 %v5050
    %v5388 = vpop.f32.mrb[0].mxu0
    %v5389 = vadd.f32 0.0, %v5388
    %v5390 = vpop.f32.mrb[0].mxu0
    %5391 = vmatprep.mubr.f32.mxu0 0.0
    %5392 = vmatmul.mubr.f32.gmra.mrb[0].mxu0 %v5053
    %v5393 = vpop.f32.mrb[0].mxu0
    %v5394 = vadd.f32 0.0, %v5393
    %v5395 = vpop.f32.mrb[0].mxu0
    %5396 = vmatprep.mubr.f32.mxu0 0.0
    %5397 = vmatmul.mubr.f32.gmra.mrb[0].mxu0 %v5056
    %v5398 = vpop.f32.mrb[0].mxu0
    %v5399 = vadd.f32 0.0, %v5398
    %v5400 = vpop.f32.mrb[0].mxu0
    %5401 = vmatprep.mubr.f32.mxu0 0.0
    %5402 = vmatmul.mubr.f32.gmra.mrb[0].mxu0 %v5059
    %v5403 = vpop.f32.mrb[0].mxu0
    %v5404 = vadd.f32 0.0, %v5403
    %v5405 = vpop.f32.mrb[0].mxu0
    %5406 = vmatprep.mubr.f32.mxu0 0.0
    %5407 = vmatmul.mubr.f32.gmra.mrb[0].mxu0 %v5062
    %v5408 = vpop.f32.mrb[0].mxu0
    %v5409 = vadd.f32 0.0, %v5408
    %v5410 = vpop.f32.mrb[0].mxu0
    %5411 = vmatprep.mubr.f32.mxu0 0.0
    %5412 = vmatmul.mubr.f32.gmra.mrb[0].mxu0 %v5065
    %v5413 = vpop.f32.mrb[0].mxu0
    %v5414 = vadd.f32 0.0, %v5413
    %v5415 = vpop.f32.mrb[0].mxu0
    %5416 = vmatprep.mubr.f32.mxu0 0.0
    %5417 = vmatmul.mubr.f32.gmra.mrb[0].mxu0 %v5068
    %v5418 = vpop.f32.mrb[0].mxu0
    %v5419 = vadd.f32 0.0, %v5418
    %v5420 = vpop.f32.mrb[0].mxu0
    %5421 = vmatprep.mubr.f32.mxu0 0.0
    %5422 = vmatmul.mubr.f32.gmra.mrb[0].mxu0 %v5071
    %v5423 = vpop.f32.mrb[0].mxu0
    %v5424 = vadd.f32 0.0, %v5423
    %v5425 = vpop.f32.mrb[0].mxu0
    %5426 = vmatprep.mubr.f32.mxu0 0.0
    %5427 = vmatmul.mubr.f32.gmra.mrb[0].mxu0 %v5074
    %v5428 = vpop.f32.mrb[0].mxu0
    %v5429 = vadd.f32 0.0, %v5428
    %v5430 = vpop.f32.mrb[0].mxu0
    %5431 = vmatprep.mubr.f32.mxu0 0.0
    %5432 = vmatmul.mubr.f32.gmra.mrb[0].mxu0 %v5077
    %v5433 = vpop.f32.mrb[0].mxu0
    %v5434 = vadd.f32 0.0, %v5433
    %v5435 = vpop.f32.mrb[0].mxu0
    %5436 = vmatprep.mubr.f32.mxu0 0.0
    %5437 = vmatmul.mubr.f32.gmra.mrb[0].mxu0 %v5080
    %v5438 = vpop.f32.mrb[0].mxu0
    %v5439 = vadd.f32 0.0, %v5438
    %v5440 = vpop.f32.mrb[0].mxu0
    %5441 = vmatprep.mubr.f32.mxu0 0.0
    %5442 = vmatmul.mubr.f32.gmra.mrb[0].mxu0 %v5083
    %v5443 = vpop.f32.mrb[0].mxu0
    %v5444 = vadd.f32 0.0, %v5443
    %v5445 = vpop.f32.mrb[0].mxu0
    %5446 = vmatprep.mubr.f32.mxu0 0.0
    %5447 = vmatmul.mubr.f32.gmra.mrb[0].mxu0 %v5086
    %v5448 = vpop.f32.mrb[0].mxu0
    %v5449 = vadd.f32 0.0, %v5448
    %v5450 = vpop.f32.mrb[0].mxu0
    %5451 = vmatprep.mubr.f32.mxu0 0.0
    %5452 = vmatmul.mubr.f32.gmra.mrb[0].mxu0 %v5089
    %v5453 = vpop.f32.mrb[0].mxu0
    %v5454 = vadd.f32 0.0, %v5453
    %v5455 = vpop.f32.mrb[0].mxu0
    %5456 = vmatprep.mubr.f32.mxu0 0.0
    %5457 = vmatmul.mubr.f32.gmra.mrb[0].mxu0 %v5092
    %v5458 = vpop.f32.mrb[0].mxu0
    %v5459 = vadd.f32 0.0, %v5458
    %v5460 = vpop.f32.mrb[0].mxu0
    %5461 = vmatprep.mubr.f32.mxu0 0.0
    %5462 = vmatmul.mubr.f32.gmra.mrb[0].mxu0 %v5095
    %v5463 = vpop.f32.mrb[0].mxu0
    %v5464 = vadd.f32 0.0, %v5463
    %v5465 = vpop.f32.mrb[0].mxu0
    %5466 = vmatprep.mubr.f32.mxu0 0.0
    %5467 = vmatmul.mubr.f32.gmra.mrb[0].mxu0 %v5098
    %v5468 = vpop.f32.mrb[0].mxu0
    %v5469 = vadd.f32 0.0, %v5468
    %v5470 = vpop.f32.mrb[0].mxu0
    %5471 = vmatprep.mubr.f32.mxu0 0.0
    %5472 = vmatmul.mubr.f32.gmra.mrb[0].mxu0 %v5101
    %v5473 = vpop.f32.mrb[0].mxu0
    %v5474 = vadd.f32 0.0, %v5473
    %v5475 = vpop.f32.mrb[0].mxu0
    %5476 = vmatprep.mubr.f32.mxu0 0.0
    %5477 = vmatmul.mubr.f32.gmra.mrb[0].mxu0 %v5104
    %v5478 = vpop.f32.mrb[0].mxu0
    %v5479 = vadd.f32 0.0, %v5478
    %v5480 = vpop.f32.mrb[0].mxu0
    %5481 = vmatprep.mubr.f32.mxu0 0.0
    %5482 = vmatmul.mubr.f32.gmra.mrb[0].mxu0 %v5107
    %v5483 = vpop.f32.mrb[0].mxu0
    %v5484 = vadd.f32 0.0, %v5483
    %v5485 = vpop.f32.mrb[0].mxu0
    %5486 = vmatprep.mubr.f32.mxu0 0.0
    %5487 = vmatmul.mubr.f32.gmra.mrb[0].mxu0 %v5110
    %v5488 = vpop.f32.mrb[0].mxu0
    %v5489 = vadd.f32 0.0, %v5488
    %v5490 = vpop.f32.mrb[0].mxu0
    %5491 = vmatprep.mubr.f32.mxu0 0.0
    %5492 = vmatmul.mubr.f32.gmra.mrb[0].mxu0 %v5113
    %v5493 = vpop.f32.mrb[0].mxu0
    %v5494 = vadd.f32 0.0, %v5493
    %v5495 = vpop.f32.mrb[0].mxu0
    %5496 = vmatprep.mubr.f32.mxu0 0.0
    %5497 = vmatmul.mubr.f32.gmra.mrb[0].mxu0 %v5116
    %v5498 = vpop.f32.mrb[0].mxu0
    %v5499 = vadd.f32 0.0, %v5498
    %v5500 = vpop.f32.mrb[0].mxu0
    %5501 = vmatprep.mubr.f32.mxu0 0.0
    %5502 = vmatmul.mubr.f32.gmra.mrb[0].mxu0 %v5119
    %v5503 = vpop.f32.mrb[0].mxu0
    %v5504 = vadd.f32 0.0, %v5503
    %v5505 = vpop.f32.mrb[0].mxu0
    %5506 = vmatprep.mubr.f32.mxu0 0.0
    %5507 = vmatmul.mubr.f32.gmra.mrb[0].mxu0 %v5122
    %v5508 = vpop.f32.mrb[0].mxu0
    %v5509 = vadd.f32 0.0, %v5508
    %v5510 = vpop.f32.mrb[0].mxu0
    %5511 = vdwg.mxu0
    %v5512 = vadd.f32 %v4802, %v5194
    %v5513 = vadd.f32 %v4803, %v5199
    %v5514 = vadd.f32 %v4804, %v5204
    %v5515 = vadd.f32 %v4805, %v5209
    %v5516 = vadd.f32 %v4806, %v5214
    %v5517 = vadd.f32 %v4807, %v5219
    %v5518 = vadd.f32 %v4808, %v5224
    %v5519 = vadd.f32 %v4809, %v5229
    %v5520 = vadd.f32 %v4810, %v5234
    %v5521 = vadd.f32 %v4811, %v5239
    %v5522 = vadd.f32 %v4812, %v5244
    %v5523 = vadd.f32 %v4813, %v5249
    %v5524 = vadd.f32 %v4814, %v5254
    %v5525 = vadd.f32 %v4815, %v5259
    %v5526 = vadd.f32 %v4816, %v5264
    %v5527 = vadd.f32 %v4817, %v5269
    %v5528 = vadd.f32 %v4818, %v5274
    %v5529 = vadd.f32 %v4819, %v5279
    %v5530 = vadd.f32 %v4820, %v5284
    %v5531 = vadd.f32 %v4821, %v5289
    %v5532 = vadd.f32 %v4822, %v5294
    %v5533 = vadd.f32 %v4823, %v5299
    %v5534 = vadd.f32 %v4824, %v5304
    %v5535 = vadd.f32 %v4825, %v5309
    %v5536 = vadd.f32 %v4826, %v5314
    %v5537 = vadd.f32 %v4827, %v5319
    %v5538 = vadd.f32 %v4828, %v5324
    %v5539 = vadd.f32 %v4829, %v5329
    %v5540 = vadd.f32 %v4830, %v5334
    %v5541 = vadd.f32 %v4831, %v5339
    %v5542 = vadd.f32 %v4832, %v5344
    %v5543 = vadd.f32 %v4833, %v5349
    %v5544 = vadd.f32 %v4834, %v5354
    %v5545 = vadd.f32 %v4835, %v5359
    %v5546 = vadd.f32 %v4836, %v5364
    %v5547 = vadd.f32 %v4837, %v5369
    %v5548 = vadd.f32 %v4838, %v5374
    %v5549 = vadd.f32 %v4839, %v5379
    %v5550 = vadd.f32 %v4840, %v5384
    %v5551 = vadd.f32 %v4841, %v5389
    %v5552 = vadd.f32 %v4842, %v5394
    %v5553 = vadd.f32 %v4843, %v5399
    %v5554 = vadd.f32 %v4844, %v5404
    %v5555 = vadd.f32 %v4845, %v5409
    %v5556 = vadd.f32 %v4846, %v5414
    %v5557 = vadd.f32 %v4847, %v5419
    %v5558 = vadd.f32 %v4848, %v5424
    %v5559 = vadd.f32 %v4849, %v5429
    %v5560 = vadd.f32 %v4850, %v5434
    %v5561 = vadd.f32 %v4851, %v5439
    %v5562 = vadd.f32 %v4852, %v5444
    %v5563 = vadd.f32 %v4853, %v5449
    %v5564 = vadd.f32 %v4854, %v5454
    %v5565 = vadd.f32 %v4855, %v5459
    %v5566 = vadd.f32 %v4856, %v5464
    %v5567 = vadd.f32 %v4857, %v5469
    %v5568 = vadd.f32 %v4858, %v5474
    %v5569 = vadd.f32 %v4859, %v5479
    %v5570 = vadd.f32 %v4860, %v5484
    %v5571 = vadd.f32 %v4861, %v5489
    %v5572 = vadd.f32 %v4862, %v5494
    %v5573 = vadd.f32 %v4863, %v5499
    %v5574 = vadd.f32 %v4864, %v5504
    %v5575 = vadd.f32 %v4865, %v5509
    %v5576 = vld [vmem:[%s4155 + $0x2] sm:$0xff]
    %v5577 = vld [vmem:[%s4155 + $0xa] sm:$0xff]
    %v5578 = vld [vmem:[%s4155 + $0x1a] sm:$0xff]
    %v5579 = vld [vmem:[%s4155 + $0x22] sm:$0xff]
    %v5580 = vld [vmem:[%s4155 + $0x32] sm:$0xff]
    %v5581 = vld [vmem:[%s4155 + $0x3a] sm:$0xff]
    %v5582 = vld [vmem:[%s4155 + $0x4a] sm:$0xff]
    %v5583 = vld [vmem:[%s4155 + $0x52] sm:$0xff]
    %v5584 = vld [vmem:[%s4155 + $0x62] sm:$0xff]
    %v5585 = vld [vmem:[%s4155 + $0x6a] sm:$0xff]
    %v5586 = vld [vmem:[%s4155 + $0x7a] sm:$0xff]
    %v5587 = vld [vmem:[%s4155 + $0x82] sm:$0xff]
    %v5588 = vld [vmem:[%s4155 + $0x92] sm:$0xff]
    %v5589 = vld [vmem:[%s4155 + $0x9a] sm:$0xff]
    %v5590 = vld [vmem:[%s4155 + $0xaa] sm:$0xff]
    %v5591 = vld [vmem:[%s4155 + $0xb2] sm:$0xff]
    %v5592 = vld [vmem:[%s4155 + $0xc2] sm:$0xff]
    %v5593 = vld [vmem:[%s4155 + $0xca] sm:$0xff]
    %v5594 = vld [vmem:[%s4155 + $0xda] sm:$0xff]
    %v5595 = vld [vmem:[%s4155 + $0xe2] sm:$0xff]
    %v5596 = vld [vmem:[%s4155 + $0xf2] sm:$0xff]
    %v5597 = vld [vmem:[%s4155 + $0xfa] sm:$0xff]
    %v5598 = vld [vmem:[%s4155 + $0x10a] sm:$0xff]
    %v5599 = vld [vmem:[%s4155 + $0x112] sm:$0xff]
    %v5600 = vld [vmem:[%s4155 + $0x122] sm:$0xff]
    %v5601 = vld [vmem:[%s4155 + $0x12a] sm:$0xff]
    %v5602 = vld [vmem:[%s4155 + $0x13a] sm:$0xff]
    %v5603 = vld [vmem:[%s4155 + $0x142] sm:$0xff]
    %v5604 = vld [vmem:[%s4155 + $0x152] sm:$0xff]
    %v5605 = vld [vmem:[%s4155 + $0x15a] sm:$0xff]
    %v5606 = vld [vmem:[%s4155 + $0x16a] sm:$0xff]
    %v5607 = vld [vmem:[%s4155 + $0x172] sm:$0xff]
    %v5608 = vld [vmem:[%s4155 + $0x1b2] sm:$0xff]
    %v5609 = vld [vmem:[%s4155 + $0x1ba] sm:$0xff]
    %v5610 = vld [vmem:[%s4155 + $0x1ca] sm:$0xff]
    %v5611 = vld [vmem:[%s4155 + $0x1d2] sm:$0xff]
    %v5612 = vld [vmem:[%s4155 + $0x1e2] sm:$0xff]
    %v5613 = vld [vmem:[%s4155 + $0x1ea] sm:$0xff]
    %v5614 = vld [vmem:[%s4155 + $0x1fa] sm:$0xff]
    %v5615 = vld [vmem:[%s4155 + $0x202] sm:$0xff]
    %v5616 = vld [vmem:[%s4155 + $0x212] sm:$0xff]
    %v5617 = vld [vmem:[%s4155 + $0x21a] sm:$0xff]
    %v5618 = vld [vmem:[%s4155 + $0x22a] sm:$0xff]
    %v5619 = vld [vmem:[%s4155 + $0x232] sm:$0xff]
    %v5620 = vld [vmem:[%s4155 + $0x242] sm:$0xff]
    %v5621 = vld [vmem:[%s4155 + $0x24a] sm:$0xff]
    %v5622 = vld [vmem:[%s4155 + $0x25a] sm:$0xff]
    %v5623 = vld [vmem:[%s4155 + $0x262] sm:$0xff]
    %v5624 = vld [vmem:[%s4155 + $0x272] sm:$0xff]
    %v5625 = vld [vmem:[%s4155 + $0x27a] sm:$0xff]
    %v5626 = vld [vmem:[%s4155 + $0x28a] sm:$0xff]
    %v5627 = vld [vmem:[%s4155 + $0x292] sm:$0xff]
    %v5628 = vld [vmem:[%s4155 + $0x2a2] sm:$0xff]
    %v5629 = vld [vmem:[%s4155 + $0x2aa] sm:$0xff]
    %v5630 = vld [vmem:[%s4155 + $0x2ba] sm:$0xff]
    %v5631 = vld [vmem:[%s4155 + $0x2c2] sm:$0xff]
    %v5632 = vld [vmem:[%s4155 + $0x2d2] sm:$0xff]
    %v5633 = vld [vmem:[%s4155 + $0x2da] sm:$0xff]
    %v5634 = vld [vmem:[%s4155 + $0x2ea] sm:$0xff]
    %v5635 = vld [vmem:[%s4155 + $0x2f2] sm:$0xff]
    %v5636 = vld [vmem:[%s4155 + $0x302] sm:$0xff]
    %v5637 = vld [vmem:[%s4155 + $0x30a] sm:$0xff]
    %v5638 = vld [vmem:[%s4155 + $0x31a] sm:$0xff]
    %v5639 = vld [vmem:[%s4155 + $0x322] sm:$0xff]
    %s5640 = scalar_lea.vmem %s1, 32
    %v5641 = vld [vmem:[%s5640] sm:$0xf]
    %v5643 = vsel %vm152, %v5576, 0
    %v5646 = vsel %vm152, %v5577, 0
    %v5649 = vsel %vm152, %v5578, 0
    %v5652 = vsel %vm152, %v5579, 0
    %v5655 = vsel %vm152, %v5580, 0
    %v5658 = vsel %vm152, %v5581, 0
    %v5661 = vsel %vm152, %v5582, 0
    %v5664 = vsel %vm152, %v5583, 0
    %v5667 = vsel %vm152, %v5584, 0
    %v5670 = vsel %vm152, %v5585, 0
    %v5673 = vsel %vm152, %v5586, 0
    %v5676 = vsel %vm152, %v5587, 0
    %v5679 = vsel %vm152, %v5588, 0
    %v5682 = vsel %vm152, %v5589, 0
    %v5685 = vsel %vm152, %v5590, 0
    %v5688 = vsel %vm152, %v5591, 0
    %v5691 = vsel %vm152, %v5592, 0
    %v5694 = vsel %vm152, %v5593, 0
    %v5697 = vsel %vm152, %v5594, 0
    %v5700 = vsel %vm152, %v5595, 0
    %v5703 = vsel %vm152, %v5596, 0
    %v5706 = vsel %vm152, %v5597, 0
    %v5709 = vsel %vm152, %v5598, 0
    %v5712 = vsel %vm152, %v5599, 0
    %v5715 = vsel %vm152, %v5600, 0
    %v5718 = vsel %vm152, %v5601, 0
    %v5721 = vsel %vm152, %v5602, 0
    %v5724 = vsel %vm152, %v5603, 0
    %v5727 = vsel %vm152, %v5604, 0
    %v5730 = vsel %vm152, %v5605, 0
    %v5733 = vsel %vm152, %v5606, 0
    %v5736 = vsel %vm152, %v5607, 0
    %v5739 = vsel %vm152, %v5608, 0
    %v5742 = vsel %vm152, %v5609, 0
    %v5745 = vsel %vm152, %v5610, 0
    %v5748 = vsel %vm152, %v5611, 0
    %v5751 = vsel %vm152, %v5612, 0
    %v5754 = vsel %vm152, %v5613, 0
    %v5757 = vsel %vm152, %v5614, 0
    %v5760 = vsel %vm152, %v5615, 0
    %v5763 = vsel %vm152, %v5616, 0
    %v5766 = vsel %vm152, %v5617, 0
    %v5769 = vsel %vm152, %v5618, 0
    %v5772 = vsel %vm152, %v5619, 0
    %v5775 = vsel %vm152, %v5620, 0
    %v5778 = vsel %vm152, %v5621, 0
    %v5781 = vsel %vm152, %v5622, 0
    %v5784 = vsel %vm152, %v5623, 0
    %v5787 = vsel %vm152, %v5624, 0
    %v5790 = vsel %vm152, %v5625, 0
    %v5793 = vsel %vm152, %v5626, 0
    %v5796 = vsel %vm152, %v5627, 0
    %v5799 = vsel %vm152, %v5628, 0
    %v5802 = vsel %vm152, %v5629, 0
    %v5805 = vsel %vm152, %v5630, 0
    %v5808 = vsel %vm152, %v5631, 0
    %v5811 = vsel %vm152, %v5632, 0
    %v5814 = vsel %vm152, %v5633, 0
    %v5817 = vsel %vm152, %v5634, 0
    %v5820 = vsel %vm152, %v5635, 0
    %v5823 = vsel %vm152, %v5636, 0
    %v5826 = vsel %vm152, %v5637, 0
    %v5829 = vsel %vm152, %v5638, 0
    %v5832 = vsel %vm152, %v5639, 0
    %v5835 = vsel %vm345, %v5641, 0
    %5837 = vmatprep.subr.mxu0 0.0
    %5838 = vmatpush1.msra.mxu0 %v5835
    %5839 = vmatprep.subr.mxu0 0.0
    %5840 = vmatpush1.msra.mxu0 0.0
    %5841 = vmatprep.subr.mxu0 0.0
    %5842 = vmatpush1.msra.mxu0 0.0
    %5843 = vmatprep.subr.mxu0 0.0
    %5844 = vmatpush1.msra.mxu0 0.0
    %5845 = vmatprep.subr.mxu0 0.0
    %5846 = vmatpush1.msra.mxu0 0.0
    %5847 = vmatprep.subr.mxu0 0.0
    %5848 = vmatpush1.msra.mxu0 0.0
    %5849 = vmatprep.subr.mxu0 0.0
    %5850 = vmatpush1.msra.mxu0 0.0
    %5851 = vmatprep.subr.mxu0 0.0
    %5852 = vmatpush1.msra.mxu0 0.0
    %5853 = vmatprep.subr.mxu0 0.0
    %5854 = vmatpush1.msra.mxu0 0.0
    %5855 = vmatprep.subr.mxu0 0.0
    %5856 = vmatpush1.msra.mxu0 0.0
    %5857 = vmatprep.subr.mxu0 0.0
    %5858 = vmatpush1.msra.mxu0 0.0
    %5859 = vmatprep.subr.mxu0 0.0
    %5860 = vmatpush1.msra.mxu0 0.0
    %5861 = vmatprep.subr.mxu0 0.0
    %5862 = vmatpush1.msra.mxu0 0.0
    %5863 = vmatprep.subr.mxu0 0.0
    %5864 = vmatpush1.msra.mxu0 0.0
    %5865 = vmatprep.subr.mxu0 0.0
    %5866 = vmatpush1.msra.mxu0 0.0
    %5867 = vmatprep.subr.mxu0 0.0
    %5868 = vmatpush1.msra.mxu0 0.0
    %5869 = vmatprep.subr.mxu0 0.0
    %5870 = vmatpush1.msra.mxu0 0.0
    %5871 = vmatprep.subr.mxu0 0.0
    %5872 = vmatpush1.msra.mxu0 0.0
    %5873 = vmatprep.subr.mxu0 0.0
    %5874 = vmatpush1.msra.mxu0 0.0
    %5875 = vmatprep.subr.mxu0 0.0
    %5876 = vmatpush1.msra.mxu0 0.0
    %5877 = vmatprep.subr.mxu0 0.0
    %5878 = vmatpush1.msra.mxu0 0.0
    %5879 = vmatprep.subr.mxu0 0.0
    %5880 = vmatpush1.msra.mxu0 0.0
    %5881 = vmatprep.subr.mxu0 0.0
    %5882 = vmatpush1.msra.mxu0 0.0
    %5883 = vmatprep.subr.mxu0 0.0
    %5884 = vmatpush1.msra.mxu0 0.0
    %5885 = vmatprep.subr.mxu0 0.0
    %5886 = vmatpush1.msra.mxu0 0.0
    %5887 = vmatprep.subr.mxu0 0.0
    %5888 = vmatpush1.msra.mxu0 0.0
    %5889 = vmatprep.subr.mxu0 0.0
    %5890 = vmatpush1.msra.mxu0 0.0
    %5891 = vmatprep.subr.mxu0 0.0
    %5892 = vmatpush1.msra.mxu0 0.0
    %5893 = vmatprep.subr.mxu0 0.0
    %5894 = vmatpush1.msra.mxu0 0.0
    %5895 = vmatprep.subr.mxu0 0.0
    %5896 = vmatpush1.msra.mxu0 0.0
    %5897 = vmatprep.subr.mxu0 0.0
    %5898 = vmatpush1.msra.mxu0 0.0
    %5899 = vmatprep.subr.mxu0 0.0
    %5900 = vmatpush1.msra.mxu0 0.0
    %5901 = vmatprep.mubr.f32.mxu0 0.0
    %5902 = vmatmul.mubr.f32.gmra.mrb[0].mxu0 %v5643
    %v5903 = vpop.f32.mrb[0].mxu0
    %v5904 = vadd.f32 0.0, %v5903
    %v5905 = vpop.f32.mrb[0].mxu0
    %5906 = vmatprep.mubr.f32.mxu0 0.0
    %5907 = vmatmul.mubr.f32.gmra.mrb[0].mxu0 %v5646
    %v5908 = vpop.f32.mrb[0].mxu0
    %v5909 = vadd.f32 0.0, %v5908
    %v5910 = vpop.f32.mrb[0].mxu0
    %5911 = vmatprep.mubr.f32.mxu0 0.0
    %5912 = vmatmul.mubr.f32.gmra.mrb[0].mxu0 %v5649
    %v5913 = vpop.f32.mrb[0].mxu0
    %v5914 = vadd.f32 0.0, %v5913
    %v5915 = vpop.f32.mrb[0].mxu0
    %5916 = vmatprep.mubr.f32.mxu0 0.0
    %5917 = vmatmul.mubr.f32.gmra.mrb[0].mxu0 %v5652
    %v5918 = vpop.f32.mrb[0].mxu0
    %v5919 = vadd.f32 0.0, %v5918
    %v5920 = vpop.f32.mrb[0].mxu0
    %5921 = vmatprep.mubr.f32.mxu0 0.0
    %5922 = vmatmul.mubr.f32.gmra.mrb[0].mxu0 %v5655
    %v5923 = vpop.f32.mrb[0].mxu0
    %v5924 = vadd.f32 0.0, %v5923
    %v5925 = vpop.f32.mrb[0].mxu0
    %5926 = vmatprep.mubr.f32.mxu0 0.0
    %5927 = vmatmul.mubr.f32.gmra.mrb[0].mxu0 %v5658
    %v5928 = vpop.f32.mrb[0].mxu0
    %v5929 = vadd.f32 0.0, %v5928
    %v5930 = vpop.f32.mrb[0].mxu0
    %5931 = vmatprep.mubr.f32.mxu0 0.0
    %5932 = vmatmul.mubr.f32.gmra.mrb[0].mxu0 %v5661
    %v5933 = vpop.f32.mrb[0].mxu0
    %v5934 = vadd.f32 0.0, %v5933
    %v5935 = vpop.f32.mrb[0].mxu0
    %5936 = vmatprep.mubr.f32.mxu0 0.0
    %5937 = vmatmul.mubr.f32.gmra.mrb[0].mxu0 %v5664
    %v5938 = vpop.f32.mrb[0].mxu0
    %v5939 = vadd.f32 0.0, %v5938
    %v5940 = vpop.f32.mrb[0].mxu0
    %5941 = vmatprep.mubr.f32.mxu0 0.0
    %5942 = vmatmul.mubr.f32.gmra.mrb[0].mxu0 %v5667
    %v5943 = vpop.f32.mrb[0].mxu0
    %v5944 = vadd.f32 0.0, %v5943
    %v5945 = vpop.f32.mrb[0].mxu0
    %5946 = vmatprep.mubr.f32.mxu0 0.0
    %5947 = vmatmul.mubr.f32.gmra.mrb[0].mxu0 %v5670
    %v5948 = vpop.f32.mrb[0].mxu0
    %v5949 = vadd.f32 0.0, %v5948
    %v5950 = vpop.f32.mrb[0].mxu0
    %5951 = vmatprep.mubr.f32.mxu0 0.0
    %5952 = vmatmul.mubr.f32.gmra.mrb[0].mxu0 %v5673
    %v5953 = vpop.f32.mrb[0].mxu0
    %v5954 = vadd.f32 0.0, %v5953
    %v5955 = vpop.f32.mrb[0].mxu0
    %5956 = vmatprep.mubr.f32.mxu0 0.0
    %5957 = vmatmul.mubr.f32.gmra.mrb[0].mxu0 %v5676
    %v5958 = vpop.f32.mrb[0].mxu0
    %v5959 = vadd.f32 0.0, %v5958
    %v5960 = vpop.f32.mrb[0].mxu0
    %5961 = vmatprep.mubr.f32.mxu0 0.0
    %5962 = vmatmul.mubr.f32.gmra.mrb[0].mxu0 %v5679
    %v5963 = vpop.f32.mrb[0].mxu0
    %v5964 = vadd.f32 0.0, %v5963
    %v5965 = vpop.f32.mrb[0].mxu0
    %5966 = vmatprep.mubr.f32.mxu0 0.0
    %5967 = vmatmul.mubr.f32.gmra.mrb[0].mxu0 %v5682
    %v5968 = vpop.f32.mrb[0].mxu0
    %v5969 = vadd.f32 0.0, %v5968
    %v5970 = vpop.f32.mrb[0].mxu0
    %5971 = vmatprep.mubr.f32.mxu0 0.0
    %5972 = vmatmul.mubr.f32.gmra.mrb[0].mxu0 %v5685
    %v5973 = vpop.f32.mrb[0].mxu0
    %v5974 = vadd.f32 0.0, %v5973
    %v5975 = vpop.f32.mrb[0].mxu0
    %5976 = vmatprep.mubr.f32.mxu0 0.0
    %5977 = vmatmul.mubr.f32.gmra.mrb[0].mxu0 %v5688
    %v5978 = vpop.f32.mrb[0].mxu0
    %v5979 = vadd.f32 0.0, %v5978
    %v5980 = vpop.f32.mrb[0].mxu0
    %5981 = vmatprep.mubr.f32.mxu0 0.0
    %5982 = vmatmul.mubr.f32.gmra.mrb[0].mxu0 %v5691
    %v5983 = vpop.f32.mrb[0].mxu0
    %v5984 = vadd.f32 0.0, %v5983
    %v5985 = vpop.f32.mrb[0].mxu0
    %5986 = vmatprep.mubr.f32.mxu0 0.0
    %5987 = vmatmul.mubr.f32.gmra.mrb[0].mxu0 %v5694
    %v5988 = vpop.f32.mrb[0].mxu0
    %v5989 = vadd.f32 0.0, %v5988
    %v5990 = vpop.f32.mrb[0].mxu0
    %5991 = vmatprep.mubr.f32.mxu0 0.0
    %5992 = vmatmul.mubr.f32.gmra.mrb[0].mxu0 %v5697
    %v5993 = vpop.f32.mrb[0].mxu0
    %v5994 = vadd.f32 0.0, %v5993
    %v5995 = vpop.f32.mrb[0].mxu0
    %5996 = vmatprep.mubr.f32.mxu0 0.0
    %5997 = vmatmul.mubr.f32.gmra.mrb[0].mxu0 %v5700
    %v5998 = vpop.f32.mrb[0].mxu0
    %v5999 = vadd.f32 0.0, %v5998
    %v6000 = vpop.f32.mrb[0].mxu0
    %6001 = vmatprep.mubr.f32.mxu0 0.0
    %6002 = vmatmul.mubr.f32.gmra.mrb[0].mxu0 %v5703
    %v6003 = vpop.f32.mrb[0].mxu0
    %v6004 = vadd.f32 0.0, %v6003
    %v6005 = vpop.f32.mrb[0].mxu0
    %6006 = vmatprep.mubr.f32.mxu0 0.0
    %6007 = vmatmul.mubr.f32.gmra.mrb[0].mxu0 %v5706
    %v6008 = vpop.f32.mrb[0].mxu0
    %v6009 = vadd.f32 0.0, %v6008
    %v6010 = vpop.f32.mrb[0].mxu0
    %6011 = vmatprep.mubr.f32.mxu0 0.0
    %6012 = vmatmul.mubr.f32.gmra.mrb[0].mxu0 %v5709
    %v6013 = vpop.f32.mrb[0].mxu0
    %v6014 = vadd.f32 0.0, %v6013
    %v6015 = vpop.f32.mrb[0].mxu0
    %6016 = vmatprep.mubr.f32.mxu0 0.0
    %6017 = vmatmul.mubr.f32.gmra.mrb[0].mxu0 %v5712
    %v6018 = vpop.f32.mrb[0].mxu0
    %v6019 = vadd.f32 0.0, %v6018
    %v6020 = vpop.f32.mrb[0].mxu0
    %6021 = vmatprep.mubr.f32.mxu0 0.0
    %6022 = vmatmul.mubr.f32.gmra.mrb[0].mxu0 %v5715
    %v6023 = vpop.f32.mrb[0].mxu0
    %v6024 = vadd.f32 0.0, %v6023
    %v6025 = vpop.f32.mrb[0].mxu0
    %6026 = vmatprep.mubr.f32.mxu0 0.0
    %6027 = vmatmul.mubr.f32.gmra.mrb[0].mxu0 %v5718
    %v6028 = vpop.f32.mrb[0].mxu0
    %v6029 = vadd.f32 0.0, %v6028
    %v6030 = vpop.f32.mrb[0].mxu0
    %6031 = vmatprep.mubr.f32.mxu0 0.0
    %6032 = vmatmul.mubr.f32.gmra.mrb[0].mxu0 %v5721
    %v6033 = vpop.f32.mrb[0].mxu0
    %v6034 = vadd.f32 0.0, %v6033
    %v6035 = vpop.f32.mrb[0].mxu0
    %6036 = vmatprep.mubr.f32.mxu0 0.0
    %6037 = vmatmul.mubr.f32.gmra.mrb[0].mxu0 %v5724
    %v6038 = vpop.f32.mrb[0].mxu0
    %v6039 = vadd.f32 0.0, %v6038
    %v6040 = vpop.f32.mrb[0].mxu0
    %6041 = vmatprep.mubr.f32.mxu0 0.0
    %6042 = vmatmul.mubr.f32.gmra.mrb[0].mxu0 %v5727
    %v6043 = vpop.f32.mrb[0].mxu0
    %v6044 = vadd.f32 0.0, %v6043
    %v6045 = vpop.f32.mrb[0].mxu0
    %6046 = vmatprep.mubr.f32.mxu0 0.0
    %6047 = vmatmul.mubr.f32.gmra.mrb[0].mxu0 %v5730
    %v6048 = vpop.f32.mrb[0].mxu0
    %v6049 = vadd.f32 0.0, %v6048
    %v6050 = vpop.f32.mrb[0].mxu0
    %6051 = vmatprep.mubr.f32.mxu0 0.0
    %6052 = vmatmul.mubr.f32.gmra.mrb[0].mxu0 %v5733
    %v6053 = vpop.f32.mrb[0].mxu0
    %v6054 = vadd.f32 0.0, %v6053
    %v6055 = vpop.f32.mrb[0].mxu0
    %6056 = vmatprep.mubr.f32.mxu0 0.0
    %6057 = vmatmul.mubr.f32.gmra.mrb[0].mxu0 %v5736
    %v6058 = vpop.f32.mrb[0].mxu0
    %v6059 = vadd.f32 0.0, %v6058
    %v6060 = vpop.f32.mrb[0].mxu0
    %6061 = vmatprep.mubr.f32.mxu0 0.0
    %6062 = vmatmul.mubr.f32.gmra.mrb[0].mxu0 %v5739
    %v6063 = vpop.f32.mrb[0].mxu0
    %v6064 = vadd.f32 0.0, %v6063
    %v6065 = vpop.f32.mrb[0].mxu0
    %6066 = vmatprep.mubr.f32.mxu0 0.0
    %6067 = vmatmul.mubr.f32.gmra.mrb[0].mxu0 %v5742
    %v6068 = vpop.f32.mrb[0].mxu0
    %v6069 = vadd.f32 0.0, %v6068
    %v6070 = vpop.f32.mrb[0].mxu0
    %6071 = vmatprep.mubr.f32.mxu0 0.0
    %6072 = vmatmul.mubr.f32.gmra.mrb[0].mxu0 %v5745
    %v6073 = vpop.f32.mrb[0].mxu0
    %v6074 = vadd.f32 0.0, %v6073
    %v6075 = vpop.f32.mrb[0].mxu0
    %6076 = vmatprep.mubr.f32.mxu0 0.0
    %6077 = vmatmul.mubr.f32.gmra.mrb[0].mxu0 %v5748
    %v6078 = vpop.f32.mrb[0].mxu0
    %v6079 = vadd.f32 0.0, %v6078
    %v6080 = vpop.f32.mrb[0].mxu0
    %6081 = vmatprep.mubr.f32.mxu0 0.0
    %6082 = vmatmul.mubr.f32.gmra.mrb[0].mxu0 %v5751
    %v6083 = vpop.f32.mrb[0].mxu0
    %v6084 = vadd.f32 0.0, %v6083
    %v6085 = vpop.f32.mrb[0].mxu0
    %6086 = vmatprep.mubr.f32.mxu0 0.0
    %6087 = vmatmul.mubr.f32.gmra.mrb[0].mxu0 %v5754
    %v6088 = vpop.f32.mrb[0].mxu0
    %v6089 = vadd.f32 0.0, %v6088
    %v6090 = vpop.f32.mrb[0].mxu0
    %6091 = vmatprep.mubr.f32.mxu0 0.0
    %6092 = vmatmul.mubr.f32.gmra.mrb[0].mxu0 %v5757
    %v6093 = vpop.f32.mrb[0].mxu0
    %v6094 = vadd.f32 0.0, %v6093
    %v6095 = vpop.f32.mrb[0].mxu0
    %6096 = vmatprep.mubr.f32.mxu0 0.0
    %6097 = vmatmul.mubr.f32.gmra.mrb[0].mxu0 %v5760
    %v6098 = vpop.f32.mrb[0].mxu0
    %v6099 = vadd.f32 0.0, %v6098
    %v6100 = vpop.f32.mrb[0].mxu0
    %6101 = vmatprep.mubr.f32.mxu0 0.0
    %6102 = vmatmul.mubr.f32.gmra.mrb[0].mxu0 %v5763
    %v6103 = vpop.f32.mrb[0].mxu0
    %v6104 = vadd.f32 0.0, %v6103
    %v6105 = vpop.f32.mrb[0].mxu0
    %6106 = vmatprep.mubr.f32.mxu0 0.0
    %6107 = vmatmul.mubr.f32.gmra.mrb[0].mxu0 %v5766
    %v6108 = vpop.f32.mrb[0].mxu0
    %v6109 = vadd.f32 0.0, %v6108
    %v6110 = vpop.f32.mrb[0].mxu0
    %6111 = vmatprep.mubr.f32.mxu0 0.0
    %6112 = vmatmul.mubr.f32.gmra.mrb[0].mxu0 %v5769
    %v6113 = vpop.f32.mrb[0].mxu0
    %v6114 = vadd.f32 0.0, %v6113
    %v6115 = vpop.f32.mrb[0].mxu0
    %6116 = vmatprep.mubr.f32.mxu0 0.0
    %6117 = vmatmul.mubr.f32.gmra.mrb[0].mxu0 %v5772
    %v6118 = vpop.f32.mrb[0].mxu0
    %v6119 = vadd.f32 0.0, %v6118
    %v6120 = vpop.f32.mrb[0].mxu0
    %6121 = vmatprep.mubr.f32.mxu0 0.0
    %6122 = vmatmul.mubr.f32.gmra.mrb[0].mxu0 %v5775
    %v6123 = vpop.f32.mrb[0].mxu0
    %v6124 = vadd.f32 0.0, %v6123
    %v6125 = vpop.f32.mrb[0].mxu0
    %6126 = vmatprep.mubr.f32.mxu0 0.0
    %6127 = vmatmul.mubr.f32.gmra.mrb[0].mxu0 %v5778
    %v6128 = vpop.f32.mrb[0].mxu0
    %v6129 = vadd.f32 0.0, %v6128
    %v6130 = vpop.f32.mrb[0].mxu0
    %6131 = vmatprep.mubr.f32.mxu0 0.0
    %6132 = vmatmul.mubr.f32.gmra.mrb[0].mxu0 %v5781
    %v6133 = vpop.f32.mrb[0].mxu0
    %v6134 = vadd.f32 0.0, %v6133
    %v6135 = vpop.f32.mrb[0].mxu0
    %6136 = vmatprep.mubr.f32.mxu0 0.0
    %6137 = vmatmul.mubr.f32.gmra.mrb[0].mxu0 %v5784
    %v6138 = vpop.f32.mrb[0].mxu0
    %v6139 = vadd.f32 0.0, %v6138
    %v6140 = vpop.f32.mrb[0].mxu0
    %6141 = vmatprep.mubr.f32.mxu0 0.0
    %6142 = vmatmul.mubr.f32.gmra.mrb[0].mxu0 %v5787
    %v6143 = vpop.f32.mrb[0].mxu0
    %v6144 = vadd.f32 0.0, %v6143
    %v6145 = vpop.f32.mrb[0].mxu0
    %6146 = vmatprep.mubr.f32.mxu0 0.0
    %6147 = vmatmul.mubr.f32.gmra.mrb[0].mxu0 %v5790
    %v6148 = vpop.f32.mrb[0].mxu0
    %v6149 = vadd.f32 0.0, %v6148
    %v6150 = vpop.f32.mrb[0].mxu0
    %6151 = vmatprep.mubr.f32.mxu0 0.0
    %6152 = vmatmul.mubr.f32.gmra.mrb[0].mxu0 %v5793
    %v6153 = vpop.f32.mrb[0].mxu0
    %v6154 = vadd.f32 0.0, %v6153
    %v6155 = vpop.f32.mrb[0].mxu0
    %6156 = vmatprep.mubr.f32.mxu0 0.0
    %6157 = vmatmul.mubr.f32.gmra.mrb[0].mxu0 %v5796
    %v6158 = vpop.f32.mrb[0].mxu0
    %v6159 = vadd.f32 0.0, %v6158
    %v6160 = vpop.f32.mrb[0].mxu0
    %6161 = vmatprep.mubr.f32.mxu0 0.0
    %6162 = vmatmul.mubr.f32.gmra.mrb[0].mxu0 %v5799
    %v6163 = vpop.f32.mrb[0].mxu0
    %v6164 = vadd.f32 0.0, %v6163
    %v6165 = vpop.f32.mrb[0].mxu0
    %6166 = vmatprep.mubr.f32.mxu0 0.0
    %6167 = vmatmul.mubr.f32.gmra.mrb[0].mxu0 %v5802
    %v6168 = vpop.f32.mrb[0].mxu0
    %v6169 = vadd.f32 0.0, %v6168
    %v6170 = vpop.f32.mrb[0].mxu0
    %6171 = vmatprep.mubr.f32.mxu0 0.0
    %6172 = vmatmul.mubr.f32.gmra.mrb[0].mxu0 %v5805
    %v6173 = vpop.f32.mrb[0].mxu0
    %v6174 = vadd.f32 0.0, %v6173
    %v6175 = vpop.f32.mrb[0].mxu0
    %6176 = vmatprep.mubr.f32.mxu0 0.0
    %6177 = vmatmul.mubr.f32.gmra.mrb[0].mxu0 %v5808
    %v6178 = vpop.f32.mrb[0].mxu0
    %v6179 = vadd.f32 0.0, %v6178
    %v6180 = vpop.f32.mrb[0].mxu0
    %6181 = vmatprep.mubr.f32.mxu0 0.0
    %6182 = vmatmul.mubr.f32.gmra.mrb[0].mxu0 %v5811
    %v6183 = vpop.f32.mrb[0].mxu0
    %v6184 = vadd.f32 0.0, %v6183
    %v6185 = vpop.f32.mrb[0].mxu0
    %6186 = vmatprep.mubr.f32.mxu0 0.0
    %6187 = vmatmul.mubr.f32.gmra.mrb[0].mxu0 %v5814
    %v6188 = vpop.f32.mrb[0].mxu0
    %v6189 = vadd.f32 0.0, %v6188
    %v6190 = vpop.f32.mrb[0].mxu0
    %6191 = vmatprep.mubr.f32.mxu0 0.0
    %6192 = vmatmul.mubr.f32.gmra.mrb[0].mxu0 %v5817
    %v6193 = vpop.f32.mrb[0].mxu0
    %v6194 = vadd.f32 0.0, %v6193
    %v6195 = vpop.f32.mrb[0].mxu0
    %6196 = vmatprep.mubr.f32.mxu0 0.0
    %6197 = vmatmul.mubr.f32.gmra.mrb[0].mxu0 %v5820
    %v6198 = vpop.f32.mrb[0].mxu0
    %v6199 = vadd.f32 0.0, %v6198
    %v6200 = vpop.f32.mrb[0].mxu0
    %6201 = vmatprep.mubr.f32.mxu0 0.0
    %6202 = vmatmul.mubr.f32.gmra.mrb[0].mxu0 %v5823
    %v6203 = vpop.f32.mrb[0].mxu0
    %v6204 = vadd.f32 0.0, %v6203
    %v6205 = vpop.f32.mrb[0].mxu0
    %6206 = vmatprep.mubr.f32.mxu0 0.0
    %6207 = vmatmul.mubr.f32.gmra.mrb[0].mxu0 %v5826
    %v6208 = vpop.f32.mrb[0].mxu0
    %v6209 = vadd.f32 0.0, %v6208
    %v6210 = vpop.f32.mrb[0].mxu0
    %6211 = vmatprep.mubr.f32.mxu0 0.0
    %6212 = vmatmul.mubr.f32.gmra.mrb[0].mxu0 %v5829
    %v6213 = vpop.f32.mrb[0].mxu0
    %v6214 = vadd.f32 0.0, %v6213
    %v6215 = vpop.f32.mrb[0].mxu0
    %6216 = vmatprep.mubr.f32.mxu0 0.0
    %6217 = vmatmul.mubr.f32.gmra.mrb[0].mxu0 %v5832
    %v6218 = vpop.f32.mrb[0].mxu0
    %v6219 = vadd.f32 0.0, %v6218
    %v6220 = vpop.f32.mrb[0].mxu0
    %6221 = vdwg.mxu0
    %v6222 = vadd.f32 %v5512, %v5904
    %v6223 = vadd.f32 %v5513, %v5909
    %v6224 = vadd.f32 %v5514, %v5914
    %v6225 = vadd.f32 %v5515, %v5919
    %v6226 = vadd.f32 %v5516, %v5924
    %v6227 = vadd.f32 %v5517, %v5929
    %v6228 = vadd.f32 %v5518, %v5934
    %v6229 = vadd.f32 %v5519, %v5939
    %v6230 = vadd.f32 %v5520, %v5944
    %v6231 = vadd.f32 %v5521, %v5949
    %v6232 = vadd.f32 %v5522, %v5954
    %v6233 = vadd.f32 %v5523, %v5959
    %v6234 = vadd.f32 %v5524, %v5964
    %v6235 = vadd.f32 %v5525, %v5969
    %v6236 = vadd.f32 %v5526, %v5974
    %v6237 = vadd.f32 %v5527, %v5979
    %v6238 = vadd.f32 %v5528, %v5984
    %v6239 = vadd.f32 %v5529, %v5989
    %v6240 = vadd.f32 %v5530, %v5994
    %v6241 = vadd.f32 %v5531, %v5999
    %v6242 = vadd.f32 %v5532, %v6004
    %v6243 = vadd.f32 %v5533, %v6009
    %v6244 = vadd.f32 %v5534, %v6014
    %v6245 = vadd.f32 %v5535, %v6019
    %v6246 = vadd.f32 %v5536, %v6024
    %v6247 = vadd.f32 %v5537, %v6029
    %v6248 = vadd.f32 %v5538, %v6034
    %v6249 = vadd.f32 %v5539, %v6039
    %v6250 = vadd.f32 %v5540, %v6044
    %v6251 = vadd.f32 %v5541, %v6049
    %v6252 = vadd.f32 %v5542, %v6054
    %v6253 = vadd.f32 %v5543, %v6059
    %v6254 = vadd.f32 %v5544, %v6064
    %v6255 = vadd.f32 %v5545, %v6069
    %v6256 = vadd.f32 %v5546, %v6074
    %v6257 = vadd.f32 %v5547, %v6079
    %v6258 = vadd.f32 %v5548, %v6084
    %v6259 = vadd.f32 %v5549, %v6089
    %v6260 = vadd.f32 %v5550, %v6094
    %v6261 = vadd.f32 %v5551, %v6099
    %v6262 = vadd.f32 %v5552, %v6104
    %v6263 = vadd.f32 %v5553, %v6109
    %v6264 = vadd.f32 %v5554, %v6114
    %v6265 = vadd.f32 %v5555, %v6119
    %v6266 = vadd.f32 %v5556, %v6124
    %v6267 = vadd.f32 %v5557, %v6129
    %v6268 = vadd.f32 %v5558, %v6134
    %v6269 = vadd.f32 %v5559, %v6139
    %v6270 = vadd.f32 %v5560, %v6144
    %v6271 = vadd.f32 %v5561, %v6149
    %v6272 = vadd.f32 %v5562, %v6154
    %v6273 = vadd.f32 %v5563, %v6159
    %v6274 = vadd.f32 %v5564, %v6164
    %v6275 = vadd.f32 %v5565, %v6169
    %v6276 = vadd.f32 %v5566, %v6174
    %v6277 = vadd.f32 %v5567, %v6179
    %v6278 = vadd.f32 %v5568, %v6184
    %v6279 = vadd.f32 %v5569, %v6189
    %v6280 = vadd.f32 %v5570, %v6194
    %v6281 = vadd.f32 %v5571, %v6199
    %v6282 = vadd.f32 %v5572, %v6204
    %v6283 = vadd.f32 %v5573, %v6209
    %v6284 = vadd.f32 %v5574, %v6214
    %v6285 = vadd.f32 %v5575, %v6219
    %v6286 = vld [vmem:[%s2] sm:$0x1]
    %v6288 = vlaneseq
    %v6289 = vshrl.u32 %v6288, 7
    %v6290 = vsub.s32 0, %v6289
    %v6291 = vrot.slane %v6286, %v6290
    %v6293 = vadd.f32 %v6222, %v6291
    %v6294 = vadd.f32 %v6223, %v6291
    %v6295 = vadd.f32 %v6224, %v6291
    %v6296 = vadd.f32 %v6225, %v6291
    %v6297 = vadd.f32 %v6226, %v6291
    %v6298 = vadd.f32 %v6227, %v6291
    %v6299 = vadd.f32 %v6228, %v6291
    %v6300 = vadd.f32 %v6229, %v6291
    %v6301 = vadd.f32 %v6230, %v6291
    %v6302 = vadd.f32 %v6231, %v6291
    %v6303 = vadd.f32 %v6232, %v6291
    %v6304 = vadd.f32 %v6233, %v6291
    %v6305 = vadd.f32 %v6234, %v6291
    %v6306 = vadd.f32 %v6235, %v6291
    %v6307 = vadd.f32 %v6236, %v6291
    %v6308 = vadd.f32 %v6237, %v6291
    %v6309 = vadd.f32 %v6238, %v6291
    %v6310 = vadd.f32 %v6239, %v6291
    %v6311 = vadd.f32 %v6240, %v6291
    %v6312 = vadd.f32 %v6241, %v6291
    %v6313 = vadd.f32 %v6242, %v6291
    %v6314 = vadd.f32 %v6243, %v6291
    %v6315 = vadd.f32 %v6244, %v6291
    %v6316 = vadd.f32 %v6245, %v6291
    %v6317 = vadd.f32 %v6246, %v6291
    %v6318 = vadd.f32 %v6247, %v6291
    %v6319 = vadd.f32 %v6248, %v6291
    %v6320 = vadd.f32 %v6249, %v6291
    %v6321 = vadd.f32 %v6250, %v6291
    %v6322 = vadd.f32 %v6251, %v6291
    %v6323 = vadd.f32 %v6252, %v6291
    %v6324 = vadd.f32 %v6253, %v6291
    %v6325 = vadd.f32 %v6254, %v6291
    %v6326 = vadd.f32 %v6255, %v6291
    %v6327 = vadd.f32 %v6256, %v6291
    %v6328 = vadd.f32 %v6257, %v6291
    %v6329 = vadd.f32 %v6258, %v6291
    %v6330 = vadd.f32 %v6259, %v6291
    %v6331 = vadd.f32 %v6260, %v6291
    %v6332 = vadd.f32 %v6261, %v6291
    %v6333 = vadd.f32 %v6262, %v6291
    %v6334 = vadd.f32 %v6263, %v6291
    %v6335 = vadd.f32 %v6264, %v6291
    %v6336 = vadd.f32 %v6265, %v6291
    %v6337 = vadd.f32 %v6266, %v6291
    %v6338 = vadd.f32 %v6267, %v6291
    %v6339 = vadd.f32 %v6268, %v6291
    %v6340 = vadd.f32 %v6269, %v6291
    %v6341 = vadd.f32 %v6270, %v6291
    %v6342 = vadd.f32 %v6271, %v6291
    %v6343 = vadd.f32 %v6272, %v6291
    %v6344 = vadd.f32 %v6273, %v6291
    %v6345 = vadd.f32 %v6274, %v6291
    %v6346 = vadd.f32 %v6275, %v6291
    %v6347 = vadd.f32 %v6276, %v6291
    %v6348 = vadd.f32 %v6277, %v6291
    %v6349 = vadd.f32 %v6278, %v6291
    %v6350 = vadd.f32 %v6279, %v6291
    %v6351 = vadd.f32 %v6280, %v6291
    %v6352 = vadd.f32 %v6281, %v6291
    %v6353 = vadd.f32 %v6282, %v6291
    %v6354 = vadd.f32 %v6283, %v6291
    %v6355 = vadd.f32 %v6284, %v6291
    %v6356 = vadd.f32 %v6285, %v6291
    %v6357 = vmax.f32 %v6293, 0.0
    %v6358 = vmax.f32 %v6294, 0.0
    %v6359 = vmax.f32 %v6295, 0.0
    %v6360 = vmax.f32 %v6296, 0.0
    %v6361 = vmax.f32 %v6297, 0.0
    %v6362 = vmax.f32 %v6298, 0.0
    %v6363 = vmax.f32 %v6299, 0.0
    %v6364 = vmax.f32 %v6300, 0.0
    %v6365 = vmax.f32 %v6301, 0.0
    %v6366 = vmax.f32 %v6302, 0.0
    %v6367 = vmax.f32 %v6303, 0.0
    %v6368 = vmax.f32 %v6304, 0.0
    %v6369 = vmax.f32 %v6305, 0.0
    %v6370 = vmax.f32 %v6306, 0.0
    %v6371 = vmax.f32 %v6307, 0.0
    %v6372 = vmax.f32 %v6308, 0.0
    %v6373 = vmax.f32 %v6309, 0.0
    %v6374 = vmax.f32 %v6310, 0.0
    %v6375 = vmax.f32 %v6311, 0.0
    %v6376 = vmax.f32 %v6312, 0.0
    %v6377 = vmax.f32 %v6313, 0.0
    %v6378 = vmax.f32 %v6314, 0.0
    %v6379 = vmax.f32 %v6315, 0.0
    %v6380 = vmax.f32 %v6316, 0.0
    %v6381 = vmax.f32 %v6317, 0.0
    %v6382 = vmax.f32 %v6318, 0.0
    %v6383 = vmax.f32 %v6319, 0.0
    %v6384 = vmax.f32 %v6320, 0.0
    %v6385 = vmax.f32 %v6321, 0.0
    %v6386 = vmax.f32 %v6322, 0.0
    %v6387 = vmax.f32 %v6323, 0.0
    %v6388 = vmax.f32 %v6324, 0.0
    %v6389 = vmax.f32 %v6325, 0.0
    %v6390 = vmax.f32 %v6326, 0.0
    %v6391 = vmax.f32 %v6327, 0.0
    %v6392 = vmax.f32 %v6328, 0.0
    %v6393 = vmax.f32 %v6329, 0.0
    %v6394 = vmax.f32 %v6330, 0.0
    %v6395 = vmax.f32 %v6331, 0.0
    %v6396 = vmax.f32 %v6332, 0.0
    %v6397 = vmax.f32 %v6333, 0.0
    %v6398 = vmax.f32 %v6334, 0.0
    %v6399 = vmax.f32 %v6335, 0.0
    %v6400 = vmax.f32 %v6336, 0.0
    %v6401 = vmax.f32 %v6337, 0.0
    %v6402 = vmax.f32 %v6338, 0.0
    %v6403 = vmax.f32 %v6339, 0.0
    %v6404 = vmax.f32 %v6340, 0.0
    %v6405 = vmax.f32 %v6341, 0.0
    %v6406 = vmax.f32 %v6342, 0.0
    %v6407 = vmax.f32 %v6343, 0.0
    %v6408 = vmax.f32 %v6344, 0.0
    %v6409 = vmax.f32 %v6345, 0.0
    %v6410 = vmax.f32 %v6346, 0.0
    %v6411 = vmax.f32 %v6347, 0.0
    %v6412 = vmax.f32 %v6348, 0.0
    %v6413 = vmax.f32 %v6349, 0.0
    %v6414 = vmax.f32 %v6350, 0.0
    %v6415 = vmax.f32 %v6351, 0.0
    %v6416 = vmax.f32 %v6352, 0.0
    %v6417 = vmax.f32 %v6353, 0.0
    %v6418 = vmax.f32 %v6354, 0.0
    %v6419 = vmax.f32 %v6355, 0.0
    %v6420 = vmax.f32 %v6356, 0.0
    %6421 = vxpose.xlu0.b32.start [1/16] %v6357, 128
    %6422 = vxpose.xlu0.b32.cont [2/16] %v6358, 128
    %6423 = vxpose.xlu0.b32.cont [3/16] %v6359, 128
    %6424 = vxpose.xlu0.b32.cont [4/16] %v6360, 128
    %6425 = vxpose.xlu0.b32.cont [5/16] %v6361, 128
    %6426 = vxpose.xlu0.b32.cont [6/16] %v6362, 128
    %6427 = vxpose.xlu0.b32.cont [7/16] %v6363, 128
    %6428 = vxpose.xlu0.b32.cont [8/16] %v6364, 128
    %6429 = vxpose.xlu0.b32.cont [9/16] %v6365, 128
    %6430 = vxpose.xlu0.b32.cont [10/16] %v6366, 128
    %6431 = vxpose.xlu0.b32.cont [11/16] %v6367, 128
    %6432 = vxpose.xlu0.b32.cont [12/16] %v6368, 128
    %6433 = vxpose.xlu0.b32.cont [13/16] %v6369, 128
    %6434 = vxpose.xlu0.b32.cont [14/16] %v6370, 128
    %6435 = vxpose.xlu0.b32.cont [15/16] %v6371, 128
    %6436 = vxpose.xlu0.b32.end [16/16] %v6372, 128
    %v6437 = vpop.trf.xlu0
    %v6438 = vpop.trf.xlu0
    %v6439 = vpop.trf.xlu0
    %v6440 = vpop.trf.xlu0
    %v6441 = vpop.trf.xlu0
    %v6442 = vpop.trf.xlu0
    %v6443 = vpop.trf.xlu0
    %v6444 = vpop.trf.xlu0
    %v6445 = vpop.trf.xlu0
    %v6446 = vpop.trf.xlu0
    %v6447 = vpop.trf.xlu0
    %v6448 = vpop.trf.xlu0
    %v6449 = vpop.trf.xlu0
    %v6450 = vpop.trf.xlu0
    %v6451 = vpop.trf.xlu0
    %v6452 = vpop.trf.xlu0
    %6453 = vxpose.xlu0.b32.start [1/16] %v6373, 128
    %6454 = vxpose.xlu0.b32.cont [2/16] %v6374, 128
    %6455 = vxpose.xlu0.b32.cont [3/16] %v6375, 128
    %6456 = vxpose.xlu0.b32.cont [4/16] %v6376, 128
    %6457 = vxpose.xlu0.b32.cont [5/16] %v6377, 128
    %6458 = vxpose.xlu0.b32.cont [6/16] %v6378, 128
    %6459 = vxpose.xlu0.b32.cont [7/16] %v6379, 128
    %6460 = vxpose.xlu0.b32.cont [8/16] %v6380, 128
    %6461 = vxpose.xlu0.b32.cont [9/16] %v6381, 128
    %6462 = vxpose.xlu0.b32.cont [10/16] %v6382, 128
    %6463 = vxpose.xlu0.b32.cont [11/16] %v6383, 128
    %6464 = vxpose.xlu0.b32.cont [12/16] %v6384, 128
    %6465 = vxpose.xlu0.b32.cont [13/16] %v6385, 128
    %6466 = vxpose.xlu0.b32.cont [14/16] %v6386, 128
    %6467 = vxpose.xlu0.b32.cont [15/16] %v6387, 128
    %6468 = vxpose.xlu0.b32.end [16/16] %v6388, 128
    %v6469 = vpop.trf.xlu0
    %v6470 = vpop.trf.xlu0
    %v6471 = vpop.trf.xlu0
    %v6472 = vpop.trf.xlu0
    %v6473 = vpop.trf.xlu0
    %v6474 = vpop.trf.xlu0
    %v6475 = vpop.trf.xlu0
    %v6476 = vpop.trf.xlu0
    %v6477 = vpop.trf.xlu0
    %v6478 = vpop.trf.xlu0
    %v6479 = vpop.trf.xlu0
    %v6480 = vpop.trf.xlu0
    %v6481 = vpop.trf.xlu0
    %v6482 = vpop.trf.xlu0
    %v6483 = vpop.trf.xlu0
    %v6484 = vpop.trf.xlu0
    %6485 = vxpose.xlu0.b32.start [1/16] %v6389, 128
    %6486 = vxpose.xlu0.b32.cont [2/16] %v6390, 128
    %6487 = vxpose.xlu0.b32.cont [3/16] %v6391, 128
    %6488 = vxpose.xlu0.b32.cont [4/16] %v6392, 128
    %6489 = vxpose.xlu0.b32.cont [5/16] %v6393, 128
    %6490 = vxpose.xlu0.b32.cont [6/16] %v6394, 128
    %6491 = vxpose.xlu0.b32.cont [7/16] %v6395, 128
    %6492 = vxpose.xlu0.b32.cont [8/16] %v6396, 128
    %6493 = vxpose.xlu0.b32.cont [9/16] %v6397, 128
    %6494 = vxpose.xlu0.b32.cont [10/16] %v6398, 128
    %6495 = vxpose.xlu0.b32.cont [11/16] %v6399, 128
    %6496 = vxpose.xlu0.b32.cont [12/16] %v6400, 128
    %6497 = vxpose.xlu0.b32.cont [13/16] %v6401, 128
    %6498 = vxpose.xlu0.b32.cont [14/16] %v6402, 128
    %6499 = vxpose.xlu0.b32.cont [15/16] %v6403, 128
    %6500 = vxpose.xlu0.b32.end [16/16] %v6404, 128
    %v6501 = vpop.trf.xlu0
    %v6502 = vpop.trf.xlu0
    %v6503 = vpop.trf.xlu0
    %v6504 = vpop.trf.xlu0
    %v6505 = vpop.trf.xlu0
    %v6506 = vpop.trf.xlu0
    %v6507 = vpop.trf.xlu0
    %v6508 = vpop.trf.xlu0
    %v6509 = vpop.trf.xlu0
    %v6510 = vpop.trf.xlu0
    %v6511 = vpop.trf.xlu0
    %v6512 = vpop.trf.xlu0
    %v6513 = vpop.trf.xlu0
    %v6514 = vpop.trf.xlu0
    %v6515 = vpop.trf.xlu0
    %v6516 = vpop.trf.xlu0
    %6517 = vxpose.xlu0.b32.start [1/16] %v6405, 128
    %6518 = vxpose.xlu0.b32.cont [2/16] %v6406, 128
    %6519 = vxpose.xlu0.b32.cont [3/16] %v6407, 128
    %6520 = vxpose.xlu0.b32.cont [4/16] %v6408, 128
    %6521 = vxpose.xlu0.b32.cont [5/16] %v6409, 128
    %6522 = vxpose.xlu0.b32.cont [6/16] %v6410, 128
    %6523 = vxpose.xlu0.b32.cont [7/16] %v6411, 128
    %6524 = vxpose.xlu0.b32.cont [8/16] %v6412, 128
    %6525 = vxpose.xlu0.b32.cont [9/16] %v6413, 128
    %6526 = vxpose.xlu0.b32.cont [10/16] %v6414, 128
    %6527 = vxpose.xlu0.b32.cont [11/16] %v6415, 128
    %6528 = vxpose.xlu0.b32.cont [12/16] %v6416, 128
    %6529 = vxpose.xlu0.b32.cont [13/16] %v6417, 128
    %6530 = vxpose.xlu0.b32.cont [14/16] %v6418, 128
    %6531 = vxpose.xlu0.b32.cont [15/16] %v6419, 128
    %6532 = vxpose.xlu0.b32.end [16/16] %v6420, 128
    %v6533 = vpop.trf.xlu0
    %v6534 = vpop.trf.xlu0
    %v6535 = vpop.trf.xlu0
    %v6536 = vpop.trf.xlu0
    %v6537 = vpop.trf.xlu0
    %v6538 = vpop.trf.xlu0
    %v6539 = vpop.trf.xlu0
    %v6540 = vpop.trf.xlu0
    %v6541 = vpop.trf.xlu0
    %v6542 = vpop.trf.xlu0
    %v6543 = vpop.trf.xlu0
    %v6544 = vpop.trf.xlu0
    %v6545 = vpop.trf.xlu0
    %v6546 = vpop.trf.xlu0
    %v6547 = vpop.trf.xlu0
    %v6548 = vpop.trf.xlu0
    %v6549 = vld [vmem:[%s4] sm:$0x1]
    %v6551 = vlaneseq
    %v6552 = vshrl.u32 %v6551, 7
    %v6553 = vsub.s32 0, %v6552
    %v6554 = vrot.slane %v6549, %v6553
    %v6558 = vrot.slane %v6501, 7
    %v6559 = vrot.slane %v6533, 7
    %vm6562 = vcmask 1040384
    %v6563 = vsel %vm6562, %v6437, %v6558
    %v6564 = vsel %vm6562, %v6469, %v6559
    %v6565 = vld [vmem:[%s3] sm:$0xff]
    %v6566 = vld [vmem:[%s3 + $0x8] sm:$0xff]
    %v6567 = vld [vmem:[%s3 + $0x10] sm:$0xff]
    %v6568 = vld [vmem:[%s3 + $0x18] sm:$0xff]
    %v6569 = vld [vmem:[%s3 + $0x20] sm:$0xff]
    %v6570 = vld [vmem:[%s3 + $0x28] sm:$0xff]
    %v6571 = vld [vmem:[%s3 + $0x30] sm:$0xff]
    %v6572 = vld [vmem:[%s3 + $0x38] sm:$0xff]
    %v6573 = vld [vmem:[%s3 + $0x40] sm:$0xff]
    %v6574 = vld [vmem:[%s3 + $0x48] sm:$0xff]
    %v6575 = vld [vmem:[%s3 + $0x50] sm:$0xff]
    %v6576 = vld [vmem:[%s3 + $0x58] sm:$0xff]
    %v6577 = vld [vmem:[%s3 + $0x60] sm:$0xff]
    %v6578 = vld [vmem:[%s3 + $0x68] sm:$0xff]
    %v6579 = vld [vmem:[%s3 + $0x70] sm:$0xff]
    %v6580 = vld [vmem:[%s3 + $0x78] sm:$0xff]
    %v6581 = vld [vmem:[%s3 + $0x80] sm:$0xff]
    %v6582 = vld [vmem:[%s3 + $0x88] sm:$0xff]
    %v6583 = vld [vmem:[%s3 + $0x90] sm:$0xff]
    %v6584 = vld [vmem:[%s3 + $0x98] sm:$0xff]
    %v6585 = vld [vmem:[%s3 + $0xa0] sm:$0xff]
    %v6586 = vld [vmem:[%s3 + $0xa8] sm:$0xff]
    %v6587 = vld [vmem:[%s3 + $0xb0] sm:$0xff]
    %v6588 = vld [vmem:[%s3 + $0xb8] sm:$0xff]
    %v6589 = vld [vmem:[%s3 + $0xc0] sm:$0xff]
    %v6590 = vld [vmem:[%s3 + $0xc8] sm:$0xff]
    %v6591 = vld [vmem:[%s3 + $0xd0] sm:$0xff]
    %v6592 = vld [vmem:[%s3 + $0xd8] sm:$0xff]
    %v6593 = vld [vmem:[%s3 + $0xe0] sm:$0xff]
    %v6594 = vld [vmem:[%s3 + $0xe8] sm:$0xff]
    %v6595 = vld [vmem:[%s3 + $0xf0] sm:$0xff]
    %v6596 = vld [vmem:[%s3 + $0xf8] sm:$0xff]
    %6597 = vmatprep.subr.mxu0 0.0
    %6598 = vmatpush1.msra.mxu0 %v6565
    %6599 = vmatprep.subr.mxu0 0.0
    %6600 = vmatpush1.msra.mxu0 %v6566
    %6601 = vmatprep.subr.mxu0 0.0
    %6602 = vmatpush1.msra.mxu0 %v6567
    %6603 = vmatprep.subr.mxu0 0.0
    %6604 = vmatpush1.msra.mxu0 %v6568
    %6605 = vmatprep.subr.mxu0 0.0
    %6606 = vmatpush1.msra.mxu0 %v6569
    %6607 = vmatprep.subr.mxu0 0.0
    %6608 = vmatpush1.msra.mxu0 %v6570
    %6609 = vmatprep.subr.mxu0 0.0
    %6610 = vmatpush1.msra.mxu0 %v6571
    %6611 = vmatprep.subr.mxu0 0.0
    %6612 = vmatpush1.msra.mxu0 %v6572
    %6613 = vmatprep.subr.mxu0 0.0
    %6614 = vmatpush1.msra.mxu0 %v6573
    %6615 = vmatprep.subr.mxu0 0.0
    %6616 = vmatpush1.msra.mxu0 %v6574
    %6617 = vmatprep.subr.mxu0 0.0
    %6618 = vmatpush1.msra.mxu0 %v6575
    %6619 = vmatprep.subr.mxu0 0.0
    %6620 = vmatpush1.msra.mxu0 %v6576
    %6621 = vmatprep.subr.mxu0 0.0
    %6622 = vmatpush1.msra.mxu0 %v6577
    %6623 = vmatprep.subr.mxu0 0.0
    %6624 = vmatpush1.msra.mxu0 %v6578
    %6625 = vmatprep.subr.mxu0 0.0
    %6626 = vmatpush1.msra.mxu0 %v6579
    %6627 = vmatprep.subr.mxu0 0.0
    %6628 = vmatpush1.msra.mxu0 %v6580
    %6629 = vmatprep.subr.mxu0 0.0
    %6630 = vmatpush1.msra.mxu0 %v6581
    %6631 = vmatprep.subr.mxu0 0.0
    %6632 = vmatpush1.msra.mxu0 %v6582
    %6633 = vmatprep.subr.mxu0 0.0
    %6634 = vmatpush1.msra.mxu0 %v6583
    %6635 = vmatprep.subr.mxu0 0.0
    %6636 = vmatpush1.msra.mxu0 %v6584
    %6637 = vmatprep.subr.mxu0 0.0
    %6638 = vmatpush1.msra.mxu0 %v6585
    %6639 = vmatprep.subr.mxu0 0.0
    %6640 = vmatpush1.msra.mxu0 %v6586
    %6641 = vmatprep.subr.mxu0 0.0
    %6642 = vmatpush1.msra.mxu0 %v6587
    %6643 = vmatprep.subr.mxu0 0.0
    %6644 = vmatpush1.msra.mxu0 %v6588
    %6645 = vmatprep.subr.mxu0 0.0
    %6646 = vmatpush1.msra.mxu0 %v6589
    %6647 = vmatprep.subr.mxu0 0.0
    %6648 = vmatpush1.msra.mxu0 %v6590
    %6649 = vmatprep.subr.mxu0 0.0
    %6650 = vmatpush1.msra.mxu0 %v6591
    %6651 = vmatprep.subr.mxu0 0.0
    %6652 = vmatpush1.msra.mxu0 %v6592
    %6653 = vmatprep.subr.mxu0 0.0
    %6654 = vmatpush1.msra.mxu0 %v6593
    %6655 = vmatprep.subr.mxu0 0.0
    %6656 = vmatpush1.msra.mxu0 %v6594
    %6657 = vmatprep.subr.mxu0 0.0
    %6658 = vmatpush1.msra.mxu0 %v6595
    %6659 = vmatprep.subr.mxu0 0.0
    %6660 = vmatpush1.msra.mxu0 %v6596
    %6661 = vmatprep.mubr.f32.mxu0 %v6564
    %6662 = vmatmul.mubr.f32.gmra.mrb[0].mxu0 %v6563
    %v6663 = vpop.f32.mrb[0].mxu0
    %v6664 = vadd.f32 0.0, %v6663
    %v6665 = vpop.f32.mrb[0].mxu0
    %6666 = vdwg.mxu0
    %v6667 = vadd.f32 %v6554, %v6664
    %v6670 = vrot.slane %v6437, 1
    %v6671 = vrot.slane %v6469, 1
    %v6674 = vsel %vm6562, %v6670, %v6501
    %v6675 = vsel %vm6562, %v6671, %v6533
    %v6676 = vld [vmem:[%s3 + $0x100] sm:$0xff]
    %v6677 = vld [vmem:[%s3 + $0x108] sm:$0xff]
    %v6678 = vld [vmem:[%s3 + $0x110] sm:$0xff]
    %v6679 = vld [vmem:[%s3 + $0x118] sm:$0xff]
    %v6680 = vld [vmem:[%s3 + $0x120] sm:$0xff]
    %v6681 = vld [vmem:[%s3 + $0x128] sm:$0xff]
    %v6682 = vld [vmem:[%s3 + $0x130] sm:$0xff]
    %v6683 = vld [vmem:[%s3 + $0x138] sm:$0xff]
    %v6684 = vld [vmem:[%s3 + $0x140] sm:$0xff]
    %v6685 = vld [vmem:[%s3 + $0x148] sm:$0xff]
    %v6686 = vld [vmem:[%s3 + $0x150] sm:$0xff]
    %v6687 = vld [vmem:[%s3 + $0x158] sm:$0xff]
    %v6688 = vld [vmem:[%s3 + $0x160] sm:$0xff]
    %v6689 = vld [vmem:[%s3 + $0x168] sm:$0xff]
    %v6690 = vld [vmem:[%s3 + $0x170] sm:$0xff]
    %v6691 = vld [vmem:[%s3 + $0x178] sm:$0xff]
    %v6692 = vld [vmem:[%s3 + $0x180] sm:$0xff]
    %v6693 = vld [vmem:[%s3 + $0x188] sm:$0xff]
    %v6694 = vld [vmem:[%s3 + $0x190] sm:$0xff]
    %v6695 = vld [vmem:[%s3 + $0x198] sm:$0xff]
    %v6696 = vld [vmem:[%s3 + $0x1a0] sm:$0xff]
    %v6697 = vld [vmem:[%s3 + $0x1a8] sm:$0xff]
    %v6698 = vld [vmem:[%s3 + $0x1b0] sm:$0xff]
    %v6699 = vld [vmem:[%s3 + $0x1b8] sm:$0xff]
    %v6700 = vld [vmem:[%s3 + $0x1c0] sm:$0xff]
    %v6701 = vld [vmem:[%s3 + $0x1c8] sm:$0xff]
    %v6702 = vld [vmem:[%s3 + $0x1d0] sm:$0xff]
    %v6703 = vld [vmem:[%s3 + $0x1d8] sm:$0xff]
    %v6704 = vld [vmem:[%s3 + $0x1e0] sm:$0xff]
    %v6705 = vld [vmem:[%s3 + $0x1e8] sm:$0xff]
    %v6706 = vld [vmem:[%s3 + $0x1f0] sm:$0xff]
    %v6707 = vld [vmem:[%s3 + $0x1f8] sm:$0xff]
    %6708 = vmatprep.subr.mxu0 0.0
    %6709 = vmatpush1.msra.mxu0 %v6676
    %6710 = vmatprep.subr.mxu0 0.0
    %6711 = vmatpush1.msra.mxu0 %v6677
    %6712 = vmatprep.subr.mxu0 0.0
    %6713 = vmatpush1.msra.mxu0 %v6678
    %6714 = vmatprep.subr.mxu0 0.0
    %6715 = vmatpush1.msra.mxu0 %v6679
    %6716 = vmatprep.subr.mxu0 0.0
    %6717 = vmatpush1.msra.mxu0 %v6680
    %6718 = vmatprep.subr.mxu0 0.0
    %6719 = vmatpush1.msra.mxu0 %v6681
    %6720 = vmatprep.subr.mxu0 0.0
    %6721 = vmatpush1.msra.mxu0 %v6682
    %6722 = vmatprep.subr.mxu0 0.0
    %6723 = vmatpush1.msra.mxu0 %v6683
    %6724 = vmatprep.subr.mxu0 0.0
    %6725 = vmatpush1.msra.mxu0 %v6684
    %6726 = vmatprep.subr.mxu0 0.0
    %6727 = vmatpush1.msra.mxu0 %v6685
    %6728 = vmatprep.subr.mxu0 0.0
    %6729 = vmatpush1.msra.mxu0 %v6686
    %6730 = vmatprep.subr.mxu0 0.0
    %6731 = vmatpush1.msra.mxu0 %v6687
    %6732 = vmatprep.subr.mxu0 0.0
    %6733 = vmatpush1.msra.mxu0 %v6688
    %6734 = vmatprep.subr.mxu0 0.0
    %6735 = vmatpush1.msra.mxu0 %v6689
    %6736 = vmatprep.subr.mxu0 0.0
    %6737 = vmatpush1.msra.mxu0 %v6690
    %6738 = vmatprep.subr.mxu0 0.0
    %6739 = vmatpush1.msra.mxu0 %v6691
    %6740 = vmatprep.subr.mxu0 0.0
    %6741 = vmatpush1.msra.mxu0 %v6692
    %6742 = vmatprep.subr.mxu0 0.0
    %6743 = vmatpush1.msra.mxu0 %v6693
    %6744 = vmatprep.subr.mxu0 0.0
    %6745 = vmatpush1.msra.mxu0 %v6694
    %6746 = vmatprep.subr.mxu0 0.0
    %6747 = vmatpush1.msra.mxu0 %v6695
    %6748 = vmatprep.subr.mxu0 0.0
    %6749 = vmatpush1.msra.mxu0 %v6696
    %6750 = vmatprep.subr.mxu0 0.0
    %6751 = vmatpush1.msra.mxu0 %v6697
    %6752 = vmatprep.subr.mxu0 0.0
    %6753 = vmatpush1.msra.mxu0 %v6698
    %6754 = vmatprep.subr.mxu0 0.0
    %6755 = vmatpush1.msra.mxu0 %v6699
    %6756 = vmatprep.subr.mxu0 0.0
    %6757 = vmatpush1.msra.mxu0 %v6700
    %6758 = vmatprep.subr.mxu0 0.0
    %6759 = vmatpush1.msra.mxu0 %v6701
    %6760 = vmatprep.subr.mxu0 0.0
    %6761 = vmatpush1.msra.mxu0 %v6702
    %6762 = vmatprep.subr.mxu0 0.0
    %6763 = vmatpush1.msra.mxu0 %v6703
    %6764 = vmatprep.subr.mxu0 0.0
    %6765 = vmatpush1.msra.mxu0 %v6704
    %6766 = vmatprep.subr.mxu0 0.0
    %6767 = vmatpush1.msra.mxu0 %v6705
    %6768 = vmatprep.subr.mxu0 0.0
    %6769 = vmatpush1.msra.mxu0 %v6706
    %6770 = vmatprep.subr.mxu0 0.0
    %6771 = vmatpush1.msra.mxu0 %v6707
    %6772 = vmatprep.mubr.f32.mxu0 %v6675
    %6773 = vmatmul.mubr.f32.gmra.mrb[0].mxu0 %v6674
    %v6774 = vpop.f32.mrb[0].mxu0
    %v6775 = vadd.f32 0.0, %v6774
    %v6776 = vpop.f32.mrb[0].mxu0
    %6777 = vdwg.mxu0
    %v6778 = vadd.f32 %v6667, %v6775
    %v6779 = vrot.slane %v6437, 2
    %v6780 = vrot.slane %v6469, 2
    %v6783 = vrot.slane %v6501, 1
    %v6784 = vrot.slane %v6533, 1
    %v6787 = vsel %vm6562, %v6779, %v6783
    %v6788 = vsel %vm6562, %v6780, %v6784
    %v6789 = vld [vmem:[%s3 + $0x200] sm:$0xff]
    %v6790 = vld [vmem:[%s3 + $0x208] sm:$0xff]
    %v6791 = vld [vmem:[%s3 + $0x210] sm:$0xff]
    %v6792 = vld [vmem:[%s3 + $0x218] sm:$0xff]
    %v6793 = vld [vmem:[%s3 + $0x220] sm:$0xff]
    %v6794 = vld [vmem:[%s3 + $0x228] sm:$0xff]
    %v6795 = vld [vmem:[%s3 + $0x230] sm:$0xff]
    %v6796 = vld [vmem:[%s3 + $0x238] sm:$0xff]
    %v6797 = vld [vmem:[%s3 + $0x240] sm:$0xff]
    %v6798 = vld [vmem:[%s3 + $0x248] sm:$0xff]
    %v6799 = vld [vmem:[%s3 + $0x250] sm:$0xff]
    %v6800 = vld [vmem:[%s3 + $0x258] sm:$0xff]
    %v6801 = vld [vmem:[%s3 + $0x260] sm:$0xff]
    %v6802 = vld [vmem:[%s3 + $0x268] sm:$0xff]
    %v6803 = vld [vmem:[%s3 + $0x270] sm:$0xff]
    %v6804 = vld [vmem:[%s3 + $0x278] sm:$0xff]
    %v6805 = vld [vmem:[%s3 + $0x280] sm:$0xff]
    %v6806 = vld [vmem:[%s3 + $0x288] sm:$0xff]
    %v6807 = vld [vmem:[%s3 + $0x290] sm:$0xff]
    %v6808 = vld [vmem:[%s3 + $0x298] sm:$0xff]
    %v6809 = vld [vmem:[%s3 + $0x2a0] sm:$0xff]
    %v6810 = vld [vmem:[%s3 + $0x2a8] sm:$0xff]
    %v6811 = vld [vmem:[%s3 + $0x2b0] sm:$0xff]
    %v6812 = vld [vmem:[%s3 + $0x2b8] sm:$0xff]
    %v6813 = vld [vmem:[%s3 + $0x2c0] sm:$0xff]
    %v6814 = vld [vmem:[%s3 + $0x2c8] sm:$0xff]
    %v6815 = vld [vmem:[%s3 + $0x2d0] sm:$0xff]
    %v6816 = vld [vmem:[%s3 + $0x2d8] sm:$0xff]
    %v6817 = vld [vmem:[%s3 + $0x2e0] sm:$0xff]
    %v6818 = vld [vmem:[%s3 + $0x2e8] sm:$0xff]
    %v6819 = vld [vmem:[%s3 + $0x2f0] sm:$0xff]
    %v6820 = vld [vmem:[%s3 + $0x2f8] sm:$0xff]
    %6821 = vmatprep.subr.mxu0 0.0
    %6822 = vmatpush1.msra.mxu0 %v6789
    %6823 = vmatprep.subr.mxu0 0.0
    %6824 = vmatpush1.msra.mxu0 %v6790
    %6825 = vmatprep.subr.mxu0 0.0
    %6826 = vmatpush1.msra.mxu0 %v6791
    %6827 = vmatprep.subr.mxu0 0.0
    %6828 = vmatpush1.msra.mxu0 %v6792
    %6829 = vmatprep.subr.mxu0 0.0
    %6830 = vmatpush1.msra.mxu0 %v6793
    %6831 = vmatprep.subr.mxu0 0.0
    %6832 = vmatpush1.msra.mxu0 %v6794
    %6833 = vmatprep.subr.mxu0 0.0
    %6834 = vmatpush1.msra.mxu0 %v6795
    %6835 = vmatprep.subr.mxu0 0.0
    %6836 = vmatpush1.msra.mxu0 %v6796
    %6837 = vmatprep.subr.mxu0 0.0
    %6838 = vmatpush1.msra.mxu0 %v6797
    %6839 = vmatprep.subr.mxu0 0.0
    %6840 = vmatpush1.msra.mxu0 %v6798
    %6841 = vmatprep.subr.mxu0 0.0
    %6842 = vmatpush1.msra.mxu0 %v6799
    %6843 = vmatprep.subr.mxu0 0.0
    %6844 = vmatpush1.msra.mxu0 %v6800
    %6845 = vmatprep.subr.mxu0 0.0
    %6846 = vmatpush1.msra.mxu0 %v6801
    %6847 = vmatprep.subr.mxu0 0.0
    %6848 = vmatpush1.msra.mxu0 %v6802
    %6849 = vmatprep.subr.mxu0 0.0
    %6850 = vmatpush1.msra.mxu0 %v6803
    %6851 = vmatprep.subr.mxu0 0.0
    %6852 = vmatpush1.msra.mxu0 %v6804
    %6853 = vmatprep.subr.mxu0 0.0
    %6854 = vmatpush1.msra.mxu0 %v6805
    %6855 = vmatprep.subr.mxu0 0.0
    %6856 = vmatpush1.msra.mxu0 %v6806
    %6857 = vmatprep.subr.mxu0 0.0
    %6858 = vmatpush1.msra.mxu0 %v6807
    %6859 = vmatprep.subr.mxu0 0.0
    %6860 = vmatpush1.msra.mxu0 %v6808
    %6861 = vmatprep.subr.mxu0 0.0
    %6862 = vmatpush1.msra.mxu0 %v6809
    %6863 = vmatprep.subr.mxu0 0.0
    %6864 = vmatpush1.msra.mxu0 %v6810
    %6865 = vmatprep.subr.mxu0 0.0
    %6866 = vmatpush1.msra.mxu0 %v6811
    %6867 = vmatprep.subr.mxu0 0.0
    %6868 = vmatpush1.msra.mxu0 %v6812
    %6869 = vmatprep.subr.mxu0 0.0
    %6870 = vmatpush1.msra.mxu0 %v6813
    %6871 = vmatprep.subr.mxu0 0.0
    %6872 = vmatpush1.msra.mxu0 %v6814
    %6873 = vmatprep.subr.mxu0 0.0
    %6874 = vmatpush1.msra.mxu0 %v6815
    %6875 = vmatprep.subr.mxu0 0.0
    %6876 = vmatpush1.msra.mxu0 %v6816
    %6877 = vmatprep.subr.mxu0 0.0
    %6878 = vmatpush1.msra.mxu0 %v6817
    %6879 = vmatprep.subr.mxu0 0.0
    %6880 = vmatpush1.msra.mxu0 %v6818
    %6881 = vmatprep.subr.mxu0 0.0
    %6882 = vmatpush1.msra.mxu0 %v6819
    %6883 = vmatprep.subr.mxu0 0.0
    %6884 = vmatpush1.msra.mxu0 %v6820
    %6885 = vmatprep.mubr.f32.mxu0 %v6788
    %6886 = vmatmul.mubr.f32.gmra.mrb[0].mxu0 %v6787
    %v6887 = vpop.f32.mrb[0].mxu0
    %v6888 = vadd.f32 0.0, %v6887
    %v6889 = vpop.f32.mrb[0].mxu0
    %6890 = vdwg.mxu0
    %v6891 = vadd.f32 %v6778, %v6888
    %v6892 = vrot.slane %v6437, 3
    %v6893 = vrot.slane %v6469, 3
    %v6896 = vrot.slane %v6501, 2
    %v6897 = vrot.slane %v6533, 2
    %v6900 = vsel %vm6562, %v6892, %v6896
    %v6901 = vsel %vm6562, %v6893, %v6897
    %v6902 = vld [vmem:[%s3 + $0x300] sm:$0xff]
    %v6903 = vld [vmem:[%s3 + $0x308] sm:$0xff]
    %v6904 = vld [vmem:[%s3 + $0x310] sm:$0xff]
    %v6905 = vld [vmem:[%s3 + $0x318] sm:$0xff]
    %v6906 = vld [vmem:[%s3 + $0x320] sm:$0xff]
    %v6907 = vld [vmem:[%s3 + $0x328] sm:$0xff]
    %v6908 = vld [vmem:[%s3 + $0x330] sm:$0xff]
    %v6909 = vld [vmem:[%s3 + $0x338] sm:$0xff]
    %v6910 = vld [vmem:[%s3 + $0x340] sm:$0xff]
    %v6911 = vld [vmem:[%s3 + $0x348] sm:$0xff]
    %v6912 = vld [vmem:[%s3 + $0x350] sm:$0xff]
    %v6913 = vld [vmem:[%s3 + $0x358] sm:$0xff]
    %v6914 = vld [vmem:[%s3 + $0x360] sm:$0xff]
    %v6915 = vld [vmem:[%s3 + $0x368] sm:$0xff]
    %v6916 = vld [vmem:[%s3 + $0x370] sm:$0xff]
    %v6917 = vld [vmem:[%s3 + $0x378] sm:$0xff]
    %v6918 = vld [vmem:[%s3 + $0x380] sm:$0xff]
    %v6919 = vld [vmem:[%s3 + $0x388] sm:$0xff]
    %v6920 = vld [vmem:[%s3 + $0x390] sm:$0xff]
    %v6921 = vld [vmem:[%s3 + $0x398] sm:$0xff]
    %v6922 = vld [vmem:[%s3 + $0x3a0] sm:$0xff]
    %v6923 = vld [vmem:[%s3 + $0x3a8] sm:$0xff]
    %v6924 = vld [vmem:[%s3 + $0x3b0] sm:$0xff]
    %v6925 = vld [vmem:[%s3 + $0x3b8] sm:$0xff]
    %v6926 = vld [vmem:[%s3 + $0x3c0] sm:$0xff]
    %v6927 = vld [vmem:[%s3 + $0x3c8] sm:$0xff]
    %v6928 = vld [vmem:[%s3 + $0x3d0] sm:$0xff]
    %v6929 = vld [vmem:[%s3 + $0x3d8] sm:$0xff]
    %v6930 = vld [vmem:[%s3 + $0x3e0] sm:$0xff]
    %v6931 = vld [vmem:[%s3 + $0x3e8] sm:$0xff]
    %v6932 = vld [vmem:[%s3 + $0x3f0] sm:$0xff]
    %v6933 = vld [vmem:[%s3 + $0x3f8] sm:$0xff]
    %6934 = vmatprep.subr.mxu0 0.0
    %6935 = vmatpush1.msra.mxu0 %v6902
    %6936 = vmatprep.subr.mxu0 0.0
    %6937 = vmatpush1.msra.mxu0 %v6903
    %6938 = vmatprep.subr.mxu0 0.0
    %6939 = vmatpush1.msra.mxu0 %v6904
    %6940 = vmatprep.subr.mxu0 0.0
    %6941 = vmatpush1.msra.mxu0 %v6905
    %6942 = vmatprep.subr.mxu0 0.0
    %6943 = vmatpush1.msra.mxu0 %v6906
    %6944 = vmatprep.subr.mxu0 0.0
    %6945 = vmatpush1.msra.mxu0 %v6907
    %6946 = vmatprep.subr.mxu0 0.0
    %6947 = vmatpush1.msra.mxu0 %v6908
    %6948 = vmatprep.subr.mxu0 0.0
    %6949 = vmatpush1.msra.mxu0 %v6909
    %6950 = vmatprep.subr.mxu0 0.0
    %6951 = vmatpush1.msra.mxu0 %v6910
    %6952 = vmatprep.subr.mxu0 0.0
    %6953 = vmatpush1.msra.mxu0 %v6911
    %6954 = vmatprep.subr.mxu0 0.0
    %6955 = vmatpush1.msra.mxu0 %v6912
    %6956 = vmatprep.subr.mxu0 0.0
    %6957 = vmatpush1.msra.mxu0 %v6913
    %6958 = vmatprep.subr.mxu0 0.0
    %6959 = vmatpush1.msra.mxu0 %v6914
    %6960 = vmatprep.subr.mxu0 0.0
    %6961 = vmatpush1.msra.mxu0 %v6915
    %6962 = vmatprep.subr.mxu0 0.0
    %6963 = vmatpush1.msra.mxu0 %v6916
    %6964 = vmatprep.subr.mxu0 0.0
    %6965 = vmatpush1.msra.mxu0 %v6917
    %6966 = vmatprep.subr.mxu0 0.0
    %6967 = vmatpush1.msra.mxu0 %v6918
    %6968 = vmatprep.subr.mxu0 0.0
    %6969 = vmatpush1.msra.mxu0 %v6919
    %6970 = vmatprep.subr.mxu0 0.0
    %6971 = vmatpush1.msra.mxu0 %v6920
    %6972 = vmatprep.subr.mxu0 0.0
    %6973 = vmatpush1.msra.mxu0 %v6921
    %6974 = vmatprep.subr.mxu0 0.0
    %6975 = vmatpush1.msra.mxu0 %v6922
    %6976 = vmatprep.subr.mxu0 0.0
    %6977 = vmatpush1.msra.mxu0 %v6923
    %6978 = vmatprep.subr.mxu0 0.0
    %6979 = vmatpush1.msra.mxu0 %v6924
    %6980 = vmatprep.subr.mxu0 0.0
    %6981 = vmatpush1.msra.mxu0 %v6925
    %6982 = vmatprep.subr.mxu0 0.0
    %6983 = vmatpush1.msra.mxu0 %v6926
    %6984 = vmatprep.subr.mxu0 0.0
    %6985 = vmatpush1.msra.mxu0 %v6927
    %6986 = vmatprep.subr.mxu0 0.0
    %6987 = vmatpush1.msra.mxu0 %v6928
    %6988 = vmatprep.subr.mxu0 0.0
    %6989 = vmatpush1.msra.mxu0 %v6929
    %6990 = vmatprep.subr.mxu0 0.0
    %6991 = vmatpush1.msra.mxu0 %v6930
    %6992 = vmatprep.subr.mxu0 0.0
    %6993 = vmatpush1.msra.mxu0 %v6931
    %6994 = vmatprep.subr.mxu0 0.0
    %6995 = vmatpush1.msra.mxu0 %v6932
    %6996 = vmatprep.subr.mxu0 0.0
    %6997 = vmatpush1.msra.mxu0 %v6933
    %6998 = vmatprep.mubr.f32.mxu0 %v6901
    %6999 = vmatmul.mubr.f32.gmra.mrb[0].mxu0 %v6900
    %v7000 = vpop.f32.mrb[0].mxu0
    %v7001 = vadd.f32 0.0, %v7000
    %v7002 = vpop.f32.mrb[0].mxu0
    %7003 = vdwg.mxu0
    %v7004 = vadd.f32 %v6891, %v7001
    %v7005 = vrot.slane %v6437, 4
    %v7006 = vrot.slane %v6469, 4
    %v7009 = vrot.slane %v6501, 3
    %v7010 = vrot.slane %v6533, 3
    %v7013 = vsel %vm6562, %v7005, %v7009
    %v7014 = vsel %vm6562, %v7006, %v7010
    %v7015 = vld [vmem:[%s3 + $0x400] sm:$0xff]
    %v7016 = vld [vmem:[%s3 + $0x408] sm:$0xff]
    %v7017 = vld [vmem:[%s3 + $0x410] sm:$0xff]
    %v7018 = vld [vmem:[%s3 + $0x418] sm:$0xff]
    %v7019 = vld [vmem:[%s3 + $0x420] sm:$0xff]
    %v7020 = vld [vmem:[%s3 + $0x428] sm:$0xff]
    %v7021 = vld [vmem:[%s3 + $0x430] sm:$0xff]
    %v7022 = vld [vmem:[%s3 + $0x438] sm:$0xff]
    %v7023 = vld [vmem:[%s3 + $0x440] sm:$0xff]
    %v7024 = vld [vmem:[%s3 + $0x448] sm:$0xff]
    %v7025 = vld [vmem:[%s3 + $0x450] sm:$0xff]
    %v7026 = vld [vmem:[%s3 + $0x458] sm:$0xff]
    %v7027 = vld [vmem:[%s3 + $0x460] sm:$0xff]
    %v7028 = vld [vmem:[%s3 + $0x468] sm:$0xff]
    %v7029 = vld [vmem:[%s3 + $0x470] sm:$0xff]
    %v7030 = vld [vmem:[%s3 + $0x478] sm:$0xff]
    %v7031 = vld [vmem:[%s3 + $0x480] sm:$0xff]
    %v7032 = vld [vmem:[%s3 + $0x488] sm:$0xff]
    %v7033 = vld [vmem:[%s3 + $0x490] sm:$0xff]
    %v7034 = vld [vmem:[%s3 + $0x498] sm:$0xff]
    %v7035 = vld [vmem:[%s3 + $0x4a0] sm:$0xff]
    %v7036 = vld [vmem:[%s3 + $0x4a8] sm:$0xff]
    %v7037 = vld [vmem:[%s3 + $0x4b0] sm:$0xff]
    %v7038 = vld [vmem:[%s3 + $0x4b8] sm:$0xff]
    %v7039 = vld [vmem:[%s3 + $0x4c0] sm:$0xff]
    %v7040 = vld [vmem:[%s3 + $0x4c8] sm:$0xff]
    %v7041 = vld [vmem:[%s3 + $0x4d0] sm:$0xff]
    %v7042 = vld [vmem:[%s3 + $0x4d8] sm:$0xff]
    %v7043 = vld [vmem:[%s3 + $0x4e0] sm:$0xff]
    %v7044 = vld [vmem:[%s3 + $0x4e8] sm:$0xff]
    %v7045 = vld [vmem:[%s3 + $0x4f0] sm:$0xff]
    %v7046 = vld [vmem:[%s3 + $0x4f8] sm:$0xff]
    %7047 = vmatprep.subr.mxu0 0.0
    %7048 = vmatpush1.msra.mxu0 %v7015
    %7049 = vmatprep.subr.mxu0 0.0
    %7050 = vmatpush1.msra.mxu0 %v7016
    %7051 = vmatprep.subr.mxu0 0.0
    %7052 = vmatpush1.msra.mxu0 %v7017
    %7053 = vmatprep.subr.mxu0 0.0
    %7054 = vmatpush1.msra.mxu0 %v7018
    %7055 = vmatprep.subr.mxu0 0.0
    %7056 = vmatpush1.msra.mxu0 %v7019
    %7057 = vmatprep.subr.mxu0 0.0
    %7058 = vmatpush1.msra.mxu0 %v7020
    %7059 = vmatprep.subr.mxu0 0.0
    %7060 = vmatpush1.msra.mxu0 %v7021
    %7061 = vmatprep.subr.mxu0 0.0
    %7062 = vmatpush1.msra.mxu0 %v7022
    %7063 = vmatprep.subr.mxu0 0.0
    %7064 = vmatpush1.msra.mxu0 %v7023
    %7065 = vmatprep.subr.mxu0 0.0
    %7066 = vmatpush1.msra.mxu0 %v7024
    %7067 = vmatprep.subr.mxu0 0.0
    %7068 = vmatpush1.msra.mxu0 %v7025
    %7069 = vmatprep.subr.mxu0 0.0
    %7070 = vmatpush1.msra.mxu0 %v7026
    %7071 = vmatprep.subr.mxu0 0.0
    %7072 = vmatpush1.msra.mxu0 %v7027
    %7073 = vmatprep.subr.mxu0 0.0
    %7074 = vmatpush1.msra.mxu0 %v7028
    %7075 = vmatprep.subr.mxu0 0.0
    %7076 = vmatpush1.msra.mxu0 %v7029
    %7077 = vmatprep.subr.mxu0 0.0
    %7078 = vmatpush1.msra.mxu0 %v7030
    %7079 = vmatprep.subr.mxu0 0.0
    %7080 = vmatpush1.msra.mxu0 %v7031
    %7081 = vmatprep.subr.mxu0 0.0
    %7082 = vmatpush1.msra.mxu0 %v7032
    %7083 = vmatprep.subr.mxu0 0.0
    %7084 = vmatpush1.msra.mxu0 %v7033
    %7085 = vmatprep.subr.mxu0 0.0
    %7086 = vmatpush1.msra.mxu0 %v7034
    %7087 = vmatprep.subr.mxu0 0.0
    %7088 = vmatpush1.msra.mxu0 %v7035
    %7089 = vmatprep.subr.mxu0 0.0
    %7090 = vmatpush1.msra.mxu0 %v7036
    %7091 = vmatprep.subr.mxu0 0.0
    %7092 = vmatpush1.msra.mxu0 %v7037
    %7093 = vmatprep.subr.mxu0 0.0
    %7094 = vmatpush1.msra.mxu0 %v7038
    %7095 = vmatprep.subr.mxu0 0.0
    %7096 = vmatpush1.msra.mxu0 %v7039
    %7097 = vmatprep.subr.mxu0 0.0
    %7098 = vmatpush1.msra.mxu0 %v7040
    %7099 = vmatprep.subr.mxu0 0.0
    %7100 = vmatpush1.msra.mxu0 %v7041
    %7101 = vmatprep.subr.mxu0 0.0
    %7102 = vmatpush1.msra.mxu0 %v7042
    %7103 = vmatprep.subr.mxu0 0.0
    %7104 = vmatpush1.msra.mxu0 %v7043
    %7105 = vmatprep.subr.mxu0 0.0
    %7106 = vmatpush1.msra.mxu0 %v7044
    %7107 = vmatprep.subr.mxu0 0.0
    %7108 = vmatpush1.msra.mxu0 %v7045
    %7109 = vmatprep.subr.mxu0 0.0
    %7110 = vmatpush1.msra.mxu0 %v7046
    %7111 = vmatprep.mubr.f32.mxu0 %v7014
    %7112 = vmatmul.mubr.f32.gmra.mrb[0].mxu0 %v7013
    %v7113 = vpop.f32.mrb[0].mxu0
    %v7114 = vadd.f32 0.0, %v7113
    %v7115 = vpop.f32.mrb[0].mxu0
    %7116 = vdwg.mxu0
    %v7117 = vadd.f32 %v7004, %v7114
    %v7118 = vrot.slane %v6437, 5
    %v7119 = vrot.slane %v6469, 5
    %v7122 = vrot.slane %v6501, 4
    %v7123 = vrot.slane %v6533, 4
    %v7126 = vsel %vm6562, %v7118, %v7122
    %v7127 = vsel %vm6562, %v7119, %v7123
    %v7128 = vld [vmem:[%s3 + $0x500] sm:$0xff]
    %v7129 = vld [vmem:[%s3 + $0x508] sm:$0xff]
    %v7130 = vld [vmem:[%s3 + $0x510] sm:$0xff]
    %v7131 = vld [vmem:[%s3 + $0x518] sm:$0xff]
    %v7132 = vld [vmem:[%s3 + $0x520] sm:$0xff]
    %v7133 = vld [vmem:[%s3 + $0x528] sm:$0xff]
    %v7134 = vld [vmem:[%s3 + $0x530] sm:$0xff]
    %v7135 = vld [vmem:[%s3 + $0x538] sm:$0xff]
    %v7136 = vld [vmem:[%s3 + $0x540] sm:$0xff]
    %v7137 = vld [vmem:[%s3 + $0x548] sm:$0xff]
    %v7138 = vld [vmem:[%s3 + $0x550] sm:$0xff]
    %v7139 = vld [vmem:[%s3 + $0x558] sm:$0xff]
    %v7140 = vld [vmem:[%s3 + $0x560] sm:$0xff]
    %v7141 = vld [vmem:[%s3 + $0x568] sm:$0xff]
    %v7142 = vld [vmem:[%s3 + $0x570] sm:$0xff]
    %v7143 = vld [vmem:[%s3 + $0x578] sm:$0xff]
    %v7144 = vld [vmem:[%s3 + $0x580] sm:$0xff]
    %v7145 = vld [vmem:[%s3 + $0x588] sm:$0xff]
    %v7146 = vld [vmem:[%s3 + $0x590] sm:$0xff]
    %v7147 = vld [vmem:[%s3 + $0x598] sm:$0xff]
    %v7148 = vld [vmem:[%s3 + $0x5a0] sm:$0xff]
    %v7149 = vld [vmem:[%s3 + $0x5a8] sm:$0xff]
    %v7150 = vld [vmem:[%s3 + $0x5b0] sm:$0xff]
    %v7151 = vld [vmem:[%s3 + $0x5b8] sm:$0xff]
    %v7152 = vld [vmem:[%s3 + $0x5c0] sm:$0xff]
    %v7153 = vld [vmem:[%s3 + $0x5c8] sm:$0xff]
    %v7154 = vld [vmem:[%s3 + $0x5d0] sm:$0xff]
    %v7155 = vld [vmem:[%s3 + $0x5d8] sm:$0xff]
    %v7156 = vld [vmem:[%s3 + $0x5e0] sm:$0xff]
    %v7157 = vld [vmem:[%s3 + $0x5e8] sm:$0xff]
    %v7158 = vld [vmem:[%s3 + $0x5f0] sm:$0xff]
    %v7159 = vld [vmem:[%s3 + $0x5f8] sm:$0xff]
    %7160 = vmatprep.subr.mxu0 0.0
    %7161 = vmatpush1.msra.mxu0 %v7128
    %7162 = vmatprep.subr.mxu0 0.0
    %7163 = vmatpush1.msra.mxu0 %v7129
    %7164 = vmatprep.subr.mxu0 0.0
    %7165 = vmatpush1.msra.mxu0 %v7130
    %7166 = vmatprep.subr.mxu0 0.0
    %7167 = vmatpush1.msra.mxu0 %v7131
    %7168 = vmatprep.subr.mxu0 0.0
    %7169 = vmatpush1.msra.mxu0 %v7132
    %7170 = vmatprep.subr.mxu0 0.0
    %7171 = vmatpush1.msra.mxu0 %v7133
    %7172 = vmatprep.subr.mxu0 0.0
    %7173 = vmatpush1.msra.mxu0 %v7134
    %7174 = vmatprep.subr.mxu0 0.0
    %7175 = vmatpush1.msra.mxu0 %v7135
    %7176 = vmatprep.subr.mxu0 0.0
    %7177 = vmatpush1.msra.mxu0 %v7136
    %7178 = vmatprep.subr.mxu0 0.0
    %7179 = vmatpush1.msra.mxu0 %v7137
    %7180 = vmatprep.subr.mxu0 0.0
    %7181 = vmatpush1.msra.mxu0 %v7138
    %7182 = vmatprep.subr.mxu0 0.0
    %7183 = vmatpush1.msra.mxu0 %v7139
    %7184 = vmatprep.subr.mxu0 0.0
    %7185 = vmatpush1.msra.mxu0 %v7140
    %7186 = vmatprep.subr.mxu0 0.0
    %7187 = vmatpush1.msra.mxu0 %v7141
    %7188 = vmatprep.subr.mxu0 0.0
    %7189 = vmatpush1.msra.mxu0 %v7142
    %7190 = vmatprep.subr.mxu0 0.0
    %7191 = vmatpush1.msra.mxu0 %v7143
    %7192 = vmatprep.subr.mxu0 0.0
    %7193 = vmatpush1.msra.mxu0 %v7144
    %7194 = vmatprep.subr.mxu0 0.0
    %7195 = vmatpush1.msra.mxu0 %v7145
    %7196 = vmatprep.subr.mxu0 0.0
    %7197 = vmatpush1.msra.mxu0 %v7146
    %7198 = vmatprep.subr.mxu0 0.0
    %7199 = vmatpush1.msra.mxu0 %v7147
    %7200 = vmatprep.subr.mxu0 0.0
    %7201 = vmatpush1.msra.mxu0 %v7148
    %7202 = vmatprep.subr.mxu0 0.0
    %7203 = vmatpush1.msra.mxu0 %v7149
    %7204 = vmatprep.subr.mxu0 0.0
    %7205 = vmatpush1.msra.mxu0 %v7150
    %7206 = vmatprep.subr.mxu0 0.0
    %7207 = vmatpush1.msra.mxu0 %v7151
    %7208 = vmatprep.subr.mxu0 0.0
    %7209 = vmatpush1.msra.mxu0 %v7152
    %7210 = vmatprep.subr.mxu0 0.0
    %7211 = vmatpush1.msra.mxu0 %v7153
    %7212 = vmatprep.subr.mxu0 0.0
    %7213 = vmatpush1.msra.mxu0 %v7154
    %7214 = vmatprep.subr.mxu0 0.0
    %7215 = vmatpush1.msra.mxu0 %v7155
    %7216 = vmatprep.subr.mxu0 0.0
    %7217 = vmatpush1.msra.mxu0 %v7156
    %7218 = vmatprep.subr.mxu0 0.0
    %7219 = vmatpush1.msra.mxu0 %v7157
    %7220 = vmatprep.subr.mxu0 0.0
    %7221 = vmatpush1.msra.mxu0 %v7158
    %7222 = vmatprep.subr.mxu0 0.0
    %7223 = vmatpush1.msra.mxu0 %v7159
    %7224 = vmatprep.mubr.f32.mxu0 %v7127
    %7225 = vmatmul.mubr.f32.gmra.mrb[0].mxu0 %v7126
    %v7226 = vpop.f32.mrb[0].mxu0
    %v7227 = vadd.f32 0.0, %v7226
    %v7228 = vpop.f32.mrb[0].mxu0
    %7229 = vdwg.mxu0
    %v7230 = vadd.f32 %v7117, %v7227
    %v7231 = vrot.slane %v6437, 6
    %v7232 = vrot.slane %v6469, 6
    %v7235 = vrot.slane %v6501, 5
    %v7236 = vrot.slane %v6533, 5
    %v7239 = vsel %vm6562, %v7231, %v7235
    %v7240 = vsel %vm6562, %v7232, %v7236
    %v7241 = vld [vmem:[%s3 + $0x600] sm:$0xff]
    %v7242 = vld [vmem:[%s3 + $0x608] sm:$0xff]
    %v7243 = vld [vmem:[%s3 + $0x610] sm:$0xff]
    %v7244 = vld [vmem:[%s3 + $0x618] sm:$0xff]
    %v7245 = vld [vmem:[%s3 + $0x620] sm:$0xff]
    %v7246 = vld [vmem:[%s3 + $0x628] sm:$0xff]
    %v7247 = vld [vmem:[%s3 + $0x630] sm:$0xff]
    %v7248 = vld [vmem:[%s3 + $0x638] sm:$0xff]
    %v7249 = vld [vmem:[%s3 + $0x640] sm:$0xff]
    %v7250 = vld [vmem:[%s3 + $0x648] sm:$0xff]
    %v7251 = vld [vmem:[%s3 + $0x650] sm:$0xff]
    %v7252 = vld [vmem:[%s3 + $0x658] sm:$0xff]
    %v7253 = vld [vmem:[%s3 + $0x660] sm:$0xff]
    %v7254 = vld [vmem:[%s3 + $0x668] sm:$0xff]
    %v7255 = vld [vmem:[%s3 + $0x670] sm:$0xff]
    %v7256 = vld [vmem:[%s3 + $0x678] sm:$0xff]
    %v7257 = vld [vmem:[%s3 + $0x680] sm:$0xff]
    %v7258 = vld [vmem:[%s3 + $0x688] sm:$0xff]
    %v7259 = vld [vmem:[%s3 + $0x690] sm:$0xff]
    %v7260 = vld [vmem:[%s3 + $0x698] sm:$0xff]
    %v7261 = vld [vmem:[%s3 + $0x6a0] sm:$0xff]
    %v7262 = vld [vmem:[%s3 + $0x6a8] sm:$0xff]
    %v7263 = vld [vmem:[%s3 + $0x6b0] sm:$0xff]
    %v7264 = vld [vmem:[%s3 + $0x6b8] sm:$0xff]
    %v7265 = vld [vmem:[%s3 + $0x6c0] sm:$0xff]
    %v7266 = vld [vmem:[%s3 + $0x6c8] sm:$0xff]
    %v7267 = vld [vmem:[%s3 + $0x6d0] sm:$0xff]
    %v7268 = vld [vmem:[%s3 + $0x6d8] sm:$0xff]
    %v7269 = vld [vmem:[%s3 + $0x6e0] sm:$0xff]
    %v7270 = vld [vmem:[%s3 + $0x6e8] sm:$0xff]
    %v7271 = vld [vmem:[%s3 + $0x6f0] sm:$0xff]
    %v7272 = vld [vmem:[%s3 + $0x6f8] sm:$0xff]
    %7273 = vmatprep.subr.mxu0 0.0
    %7274 = vmatpush1.msra.mxu0 %v7241
    %7275 = vmatprep.subr.mxu0 0.0
    %7276 = vmatpush1.msra.mxu0 %v7242
    %7277 = vmatprep.subr.mxu0 0.0
    %7278 = vmatpush1.msra.mxu0 %v7243
    %7279 = vmatprep.subr.mxu0 0.0
    %7280 = vmatpush1.msra.mxu0 %v7244
    %7281 = vmatprep.subr.mxu0 0.0
    %7282 = vmatpush1.msra.mxu0 %v7245
    %7283 = vmatprep.subr.mxu0 0.0
    %7284 = vmatpush1.msra.mxu0 %v7246
    %7285 = vmatprep.subr.mxu0 0.0
    %7286 = vmatpush1.msra.mxu0 %v7247
    %7287 = vmatprep.subr.mxu0 0.0
    %7288 = vmatpush1.msra.mxu0 %v7248
    %7289 = vmatprep.subr.mxu0 0.0
    %7290 = vmatpush1.msra.mxu0 %v7249
    %7291 = vmatprep.subr.mxu0 0.0
    %7292 = vmatpush1.msra.mxu0 %v7250
    %7293 = vmatprep.subr.mxu0 0.0
    %7294 = vmatpush1.msra.mxu0 %v7251
    %7295 = vmatprep.subr.mxu0 0.0
    %7296 = vmatpush1.msra.mxu0 %v7252
    %7297 = vmatprep.subr.mxu0 0.0
    %7298 = vmatpush1.msra.mxu0 %v7253
    %7299 = vmatprep.subr.mxu0 0.0
    %7300 = vmatpush1.msra.mxu0 %v7254
    %7301 = vmatprep.subr.mxu0 0.0
    %7302 = vmatpush1.msra.mxu0 %v7255
    %7303 = vmatprep.subr.mxu0 0.0
    %7304 = vmatpush1.msra.mxu0 %v7256
    %7305 = vmatprep.subr.mxu0 0.0
    %7306 = vmatpush1.msra.mxu0 %v7257
    %7307 = vmatprep.subr.mxu0 0.0
    %7308 = vmatpush1.msra.mxu0 %v7258
    %7309 = vmatprep.subr.mxu0 0.0
    %7310 = vmatpush1.msra.mxu0 %v7259
    %7311 = vmatprep.subr.mxu0 0.0
    %7312 = vmatpush1.msra.mxu0 %v7260
    %7313 = vmatprep.subr.mxu0 0.0
    %7314 = vmatpush1.msra.mxu0 %v7261
    %7315 = vmatprep.subr.mxu0 0.0
    %7316 = vmatpush1.msra.mxu0 %v7262
    %7317 = vmatprep.subr.mxu0 0.0
    %7318 = vmatpush1.msra.mxu0 %v7263
    %7319 = vmatprep.subr.mxu0 0.0
    %7320 = vmatpush1.msra.mxu0 %v7264
    %7321 = vmatprep.subr.mxu0 0.0
    %7322 = vmatpush1.msra.mxu0 %v7265
    %7323 = vmatprep.subr.mxu0 0.0
    %7324 = vmatpush1.msra.mxu0 %v7266
    %7325 = vmatprep.subr.mxu0 0.0
    %7326 = vmatpush1.msra.mxu0 %v7267
    %7327 = vmatprep.subr.mxu0 0.0
    %7328 = vmatpush1.msra.mxu0 %v7268
    %7329 = vmatprep.subr.mxu0 0.0
    %7330 = vmatpush1.msra.mxu0 %v7269
    %7331 = vmatprep.subr.mxu0 0.0
    %7332 = vmatpush1.msra.mxu0 %v7270
    %7333 = vmatprep.subr.mxu0 0.0
    %7334 = vmatpush1.msra.mxu0 %v7271
    %7335 = vmatprep.subr.mxu0 0.0
    %7336 = vmatpush1.msra.mxu0 %v7272
    %7337 = vmatprep.mubr.f32.mxu0 %v7240
    %7338 = vmatmul.mubr.f32.gmra.mrb[0].mxu0 %v7239
    %v7339 = vpop.f32.mrb[0].mxu0
    %v7340 = vadd.f32 0.0, %v7339
    %v7341 = vpop.f32.mrb[0].mxu0
    %7342 = vdwg.mxu0
    %v7343 = vadd.f32 %v7230, %v7340
    %v7344 = vrot.slane %v6437, 7
    %v7345 = vrot.slane %v6469, 7
    %v7348 = vrot.slane %v6501, 6
    %v7349 = vrot.slane %v6533, 6
    %v7352 = vsel %vm6562, %v7344, %v7348
    %v7353 = vsel %vm6562, %v7345, %v7349
    %v7354 = vld [vmem:[%s3 + $0x700] sm:$0xff]
    %v7355 = vld [vmem:[%s3 + $0x708] sm:$0xff]
    %v7356 = vld [vmem:[%s3 + $0x710] sm:$0xff]
    %v7357 = vld [vmem:[%s3 + $0x718] sm:$0xff]
    %v7358 = vld [vmem:[%s3 + $0x720] sm:$0xff]
    %v7359 = vld [vmem:[%s3 + $0x728] sm:$0xff]
    %v7360 = vld [vmem:[%s3 + $0x730] sm:$0xff]
    %v7361 = vld [vmem:[%s3 + $0x738] sm:$0xff]
    %v7362 = vld [vmem:[%s3 + $0x740] sm:$0xff]
    %v7363 = vld [vmem:[%s3 + $0x748] sm:$0xff]
    %v7364 = vld [vmem:[%s3 + $0x750] sm:$0xff]
    %v7365 = vld [vmem:[%s3 + $0x758] sm:$0xff]
    %v7366 = vld [vmem:[%s3 + $0x760] sm:$0xff]
    %v7367 = vld [vmem:[%s3 + $0x768] sm:$0xff]
    %v7368 = vld [vmem:[%s3 + $0x770] sm:$0xff]
    %v7369 = vld [vmem:[%s3 + $0x778] sm:$0xff]
    %v7370 = vld [vmem:[%s3 + $0x780] sm:$0xff]
    %v7371 = vld [vmem:[%s3 + $0x788] sm:$0xff]
    %v7372 = vld [vmem:[%s3 + $0x790] sm:$0xff]
    %v7373 = vld [vmem:[%s3 + $0x798] sm:$0xff]
    %v7374 = vld [vmem:[%s3 + $0x7a0] sm:$0xff]
    %v7375 = vld [vmem:[%s3 + $0x7a8] sm:$0xff]
    %v7376 = vld [vmem:[%s3 + $0x7b0] sm:$0xff]
    %v7377 = vld [vmem:[%s3 + $0x7b8] sm:$0xff]
    %v7378 = vld [vmem:[%s3 + $0x7c0] sm:$0xff]
    %v7379 = vld [vmem:[%s3 + $0x7c8] sm:$0xff]
    %v7380 = vld [vmem:[%s3 + $0x7d0] sm:$0xff]
    %v7381 = vld [vmem:[%s3 + $0x7d8] sm:$0xff]
    %v7382 = vld [vmem:[%s3 + $0x7e0] sm:$0xff]
    %v7383 = vld [vmem:[%s3 + $0x7e8] sm:$0xff]
    %v7384 = vld [vmem:[%s3 + $0x7f0] sm:$0xff]
    %v7385 = vld [vmem:[%s3 + $0x7f8] sm:$0xff]
    %7386 = vmatprep.subr.mxu0 0.0
    %7387 = vmatpush1.msra.mxu0 %v7354
    %7388 = vmatprep.subr.mxu0 0.0
    %7389 = vmatpush1.msra.mxu0 %v7355
    %7390 = vmatprep.subr.mxu0 0.0
    %7391 = vmatpush1.msra.mxu0 %v7356
    %7392 = vmatprep.subr.mxu0 0.0
    %7393 = vmatpush1.msra.mxu0 %v7357
    %7394 = vmatprep.subr.mxu0 0.0
    %7395 = vmatpush1.msra.mxu0 %v7358
    %7396 = vmatprep.subr.mxu0 0.0
    %7397 = vmatpush1.msra.mxu0 %v7359
    %7398 = vmatprep.subr.mxu0 0.0
    %7399 = vmatpush1.msra.mxu0 %v7360
    %7400 = vmatprep.subr.mxu0 0.0
    %7401 = vmatpush1.msra.mxu0 %v7361
    %7402 = vmatprep.subr.mxu0 0.0
    %7403 = vmatpush1.msra.mxu0 %v7362
    %7404 = vmatprep.subr.mxu0 0.0
    %7405 = vmatpush1.msra.mxu0 %v7363
    %7406 = vmatprep.subr.mxu0 0.0
    %7407 = vmatpush1.msra.mxu0 %v7364
    %7408 = vmatprep.subr.mxu0 0.0
    %7409 = vmatpush1.msra.mxu0 %v7365
    %7410 = vmatprep.subr.mxu0 0.0
    %7411 = vmatpush1.msra.mxu0 %v7366
    %7412 = vmatprep.subr.mxu0 0.0
    %7413 = vmatpush1.msra.mxu0 %v7367
    %7414 = vmatprep.subr.mxu0 0.0
    %7415 = vmatpush1.msra.mxu0 %v7368
    %7416 = vmatprep.subr.mxu0 0.0
    %7417 = vmatpush1.msra.mxu0 %v7369
    %7418 = vmatprep.subr.mxu0 0.0
    %7419 = vmatpush1.msra.mxu0 %v7370
    %7420 = vmatprep.subr.mxu0 0.0
    %7421 = vmatpush1.msra.mxu0 %v7371
    %7422 = vmatprep.subr.mxu0 0.0
    %7423 = vmatpush1.msra.mxu0 %v7372
    %7424 = vmatprep.subr.mxu0 0.0
    %7425 = vmatpush1.msra.mxu0 %v7373
    %7426 = vmatprep.subr.mxu0 0.0
    %7427 = vmatpush1.msra.mxu0 %v7374
    %7428 = vmatprep.subr.mxu0 0.0
    %7429 = vmatpush1.msra.mxu0 %v7375
    %7430 = vmatprep.subr.mxu0 0.0
    %7431 = vmatpush1.msra.mxu0 %v7376
    %7432 = vmatprep.subr.mxu0 0.0
    %7433 = vmatpush1.msra.mxu0 %v7377
    %7434 = vmatprep.subr.mxu0 0.0
    %7435 = vmatpush1.msra.mxu0 %v7378
    %7436 = vmatprep.subr.mxu0 0.0
    %7437 = vmatpush1.msra.mxu0 %v7379
    %7438 = vmatprep.subr.mxu0 0.0
    %7439 = vmatpush1.msra.mxu0 %v7380
    %7440 = vmatprep.subr.mxu0 0.0
    %7441 = vmatpush1.msra.mxu0 %v7381
    %7442 = vmatprep.subr.mxu0 0.0
    %7443 = vmatpush1.msra.mxu0 %v7382
    %7444 = vmatprep.subr.mxu0 0.0
    %7445 = vmatpush1.msra.mxu0 %v7383
    %7446 = vmatprep.subr.mxu0 0.0
    %7447 = vmatpush1.msra.mxu0 %v7384
    %7448 = vmatprep.subr.mxu0 0.0
    %7449 = vmatpush1.msra.mxu0 %v7385
    %7450 = vmatprep.mubr.f32.mxu0 %v7353
    %7451 = vmatmul.mubr.f32.gmra.mrb[0].mxu0 %v7352
    %v7452 = vpop.f32.mrb[0].mxu0
    %v7453 = vadd.f32 0.0, %v7452
    %v7454 = vpop.f32.mrb[0].mxu0
    %7455 = vdwg.mxu0
    %v7456 = vadd.f32 %v7343, %v7453
    %vm7457 = vcmask 254976
    %7458 = vst.msk [vmem:[#allocation2] sm:$0x3] %vm7457, %v7456
    // Predicated region
    $region22: #{base_cnn_forward.1} parent=1 // pred_check
      _
    $region23: #{base_cnn_forward.1} parent=1 // pred_check_branch
      %7460 = sbr.rel (0) target = $region25
    $region24: #{base_cnn_forward.1} parent=1 // pred_region
      %s7462 = ssub.s32 32, 32
      %7463 = vsyncadd [#allocation3], %s7462
      %s7465 = sshll.u32 [#allocation2], 4
      %s7466 = int_to_ptr.vmem [resolvable:$true] %s7465
      %7468 = dma.vmem_to_hbm [thread:$0]  %s7466, 32, %s5, [#allocation3]
    $region25: #{base_cnn_forward.1} parent=1 // pred_fallthru
      _
    // Predicated region
    $region26: #{base_cnn_forward.1} parent=1 // pred_check
      _
    $region27: #{base_cnn_forward.1} parent=1 // pred_check_branch
      %7470 = sbr.rel (0) target = $region29
    $region28: #{base_cnn_forward.1} parent=1 // pred_region
      %7471 = dma.done [#allocation3], 32
    $region29: #{base_cnn_forward.1} parent=1 // pred_fallthru
      _
    %7472 = vsyncpa [#allocation3], 1

</llo_original>
